<compile_context>
chip_gen: v7x
topology: tpu7x:2x2x1
jax: 0.10.0
libtpu: 0.0.40
codegen_flags: <defaults>
</compile_context>

<pallas_src>
import functools

import jax
import jax.numpy as jnp
from jax import lax
from jax.experimental import pallas as pl
from jax.experimental.pallas import tpu as pltpu

# Model hyper-parameters (from the nn.Module __init__)
INPUT_SIZE = 10
HIDDEN = 10
NUM_LAYERS = 5

# Example data sizes
BATCH = 2
SEQ = 8

LANE = 128              # one lane-tile per feature slab / per gate
SUBLANE = 8             # vreg sublane height
GATES = 4 * LANE        # i, f, g, o each in its own 128-lane slab
BPAD = max(SUBLANE, ((BATCH + SUBLANE - 1) // SUBLANE) * SUBLANE)


def _lstm_kernel(x_ref, w_ih_ref, w_hh_ref, b_ref,
                 y_ref, hn_ref, cn_ref, seq_ref, *, seq_len, bpad):
    """Whole stacked-LSTM forward in one grid-less invocation (everything in VMEM)."""
    T, Bp = seq_len, bpad

    for l in range(NUM_LAYERS):
        src = x_ref if l == 0 else seq_ref                  # inter-layer acts via scratch
        dst = y_ref if l == NUM_LAYERS - 1 else seq_ref     # only last layer writes y_ref

        w_i = w_ih_ref[l]            # (128, 512) bf16
        w_h = w_hh_ref[l]            # (128, 512) bf16
        bias = b_ref[l]              # (1, 512)   f32

        # --- Hoisted input projection (off the serial recurrence path) -------
        # One batched bf16 matmul + one bias broadcast per layer.
        src_bf = src[...].astype(jnp.bfloat16)                                   # (T*Bp, 128)
        proj = jnp.dot(src_bf, w_i, preferred_element_type=jnp.float32) + bias   # (T*Bp, 512)

        h = jnp.zeros((Bp, LANE), jnp.float32)
        c = jnp.zeros((Bp, LANE), jnp.float32)

        # --- Fully unrolled time recurrence (T is small & static) ------------
        # Per step: one tiny bf16 MXU matmul + EUP gate nonlinearities + update.
        for t in range(T):
            r0 = t * Bp                                      # multiple of 8: aligned slices
            gates = proj[r0:r0 + Bp, :] + jnp.dot(
                h.astype(jnp.bfloat16), w_h, preferred_element_type=jnp.float32)  # (Bp, 512)
            # Lane-tile-aligned gate slabs -> free slices, no XLU lane shifts.
            i_g = jax.nn.sigmoid(gates[:, 0 * LANE:1 * LANE])
            f_g = jax.nn.sigmoid(gates[:, 1 * LANE:2 * LANE])
            g_g = jnp.tanh(gates[:, 2 * LANE:3 * LANE])
            o_g = jax.nn.sigmoid(gates[:, 3 * LANE:4 * LANE])
            c = f_g * c + i_g * g_g
            h = o_g * jnp.tanh(c)
            dst[r0:r0 + Bp, :] = h            # full (8, 128) vreg store, lane+sublane dense

        hn_ref[l] = h
        cn_ref[l] = c


def pack_params(params):
    """Pack per-layer PyTorch-layout LSTM params into the padded kernel layout."""
    H = HIDDEN
    w_ih_p = jnp.zeros((NUM_LAYERS, LANE, GATES), jnp.float32)
    w_hh_p = jnp.zeros((NUM_LAYERS, LANE, GATES), jnp.float32)
    b_p = jnp.zeros((NUM_LAYERS, 1, GATES), jnp.float32)
    for l, (w_ih, w_hh, b_ih, b_hh) in enumerate(params):
        in_sz = w_ih.shape[1]
        w_ih_t = w_ih.T                   # (in_sz, 4H)
        w_hh_t = w_hh.T                   # (H, 4H)
        bias = b_ih + b_hh                # (4H,)
        for g in range(4):
            w_ih_p = w_ih_p.at[l, :in_sz, g * LANE:g * LANE + H].set(
                w_ih_t[:, g * H:(g + 1) * H])
            w_hh_p = w_hh_p.at[l, :H, g * LANE:g * LANE + H].set(
                w_hh_t[:, g * H:(g + 1) * H])
            b_p = b_p.at[l, 0, g * LANE:g * LANE + H].set(bias[g * H:(g + 1) * H])
    # Weights in bf16 for single-pass MXU matmuls (f32 accumulation in-kernel).
    return w_ih_p.astype(jnp.bfloat16), w_hh_p.astype(jnp.bfloat16), b_p


def global_model_forward(x_btI, w_ih_p, w_hh_p, b_p):
    """x_btI: (B, T, I) float32 (PyTorch batch_first).  Returns (output, (h_n, c_n))."""
    B, T, I = x_btI.shape
    H = HIDDEN

    # time-major rows (row = t*BPAD + b): batch padded to the 8-sublane vreg height,
    # features zero-padded to 128 lanes.
    x_tb = jnp.transpose(x_btI, (1, 0, 2)).astype(jnp.float32)                # (T, B, I)
    x_pad = (jnp.zeros((T, BPAD, LANE), jnp.float32)
             .at[:, :B, :I].set(x_tb)
             .reshape(T * BPAD, LANE))

    vmem = pl.BlockSpec(memory_space=pltpu.MemorySpace.VMEM)
    kernel = functools.partial(_lstm_kernel, seq_len=T, bpad=BPAD)

    y_pad, hn_pad, cn_pad = pl.pallas_call(
        kernel,
        out_shape=(
            jax.ShapeDtypeStruct((T * BPAD, LANE), jnp.float32),
            jax.ShapeDtypeStruct((NUM_LAYERS, BPAD, LANE), jnp.float32),
            jax.ShapeDtypeStruct((NUM_LAYERS, BPAD, LANE), jnp.float32),
        ),
        in_specs=[vmem, vmem, vmem, vmem],
        out_specs=(vmem, vmem, vmem),
        scratch_shapes=[pltpu.VMEM((T * BPAD, LANE), jnp.float32)],  # inter-layer activations
    )(x_pad, w_ih_p, w_hh_p, b_p)

    output = jnp.transpose(y_pad.reshape(T, BPAD, LANE)[:, :B, :H], (1, 0, 2))  # (B, T, H)
    h_n = hn_pad[:, :B, :H]
    c_n = cn_pad[:, :B, :H]
    return output, (h_n, c_n)


def init_lstm_params(key):
    """PyTorch-shaped LSTM params: per layer (weight_ih (4H,in), weight_hh (4H,H), b_ih, b_hh),
    all U(-1/sqrt(H), 1/sqrt(H)) — same convention as nn.LSTM."""
    k = 1.0 / jnp.sqrt(jnp.float32(HIDDEN))
    keys = jax.random.split(key, 4 * NUM_LAYERS)
    params = []
    for l in range(NUM_LAYERS):
        in_sz = INPUT_SIZE if l == 0 else HIDDEN
        kw_i, kw_h, kb_i, kb_h = keys[4 * l:4 * l + 4]
        w_ih = jax.random.uniform(kw_i, (4 * HIDDEN, in_sz), jnp.float32, -k, k)
        w_hh = jax.random.uniform(kw_h, (4 * HIDDEN, HIDDEN), jnp.float32, -k, k)
        b_ih = jax.random.uniform(kb_i, (4 * HIDDEN,), jnp.float32, -k, k)
        b_hh = jax.random.uniform(kb_h, (4 * HIDDEN,), jnp.float32, -k, k)
        params.append((w_ih, w_hh, b_ih, b_hh))
    return params


def _reference_forward(x_btI, params):
    """Pure-JAX reference (lax.scan), matching the kernel's bf16-matmul numerics."""
    B, T, _ = x_btI.shape
    H = HIDDEN
    seq = jnp.transpose(x_btI, (1, 0, 2))            # (T, B, I)
    hns, cns = [], []
    for (w_ih, w_hh, b_ih, b_hh) in params:
        w_i = w_ih.T.astype(jnp.bfloat16)            # (I, 4H)
        w_h = w_hh.T.astype(jnp.bfloat16)            # (H, 4H)
        bias = (b_ih + b_hh)[None, :]

        def step(carry, xt, w_i=w_i, w_h=w_h, bias=bias):
            h, c = carry
            gates = (jnp.dot(xt.astype(jnp.bfloat16), w_i, preferred_element_type=jnp.float32)
                     + jnp.dot(h.astype(jnp.bfloat16), w_h, preferred_element_type=jnp.float32)
                     + bias)
            i_g = jax.nn.sigmoid(gates[:, 0 * H:1 * H])
            f_g = jax.nn.sigmoid(gates[:, 1 * H:2 * H])
            g_g = jnp.tanh(gates[:, 2 * H:3 * H])
            o_g = jax.nn.sigmoid(gates[:, 3 * H:4 * H])
            c_new = f_g * c + i_g * g_g
            h_new = o_g * jnp.tanh(c_new)
            return (h_new, c_new), h_new

        init = (jnp.zeros((B, H), jnp.float32), jnp.zeros((B, H), jnp.float32))
        (h_last, c_last), seq = lax.scan(step, init, seq)
        hns.append(h_last)
        cns.append(c_last)
    return jnp.transpose(seq, (1, 0, 2)), (jnp.stack(hns), jnp.stack(cns))


if __name__ == "__main__":
    key = jax.random.PRNGKey(0)
    k_x, k_p = jax.random.split(key)

    x = jax.random.normal(k_x, (BATCH, SEQ, INPUT_SIZE), jnp.float32)
    params = init_lstm_params(k_p)
    w_ih_p, w_hh_p, b_p = pack_params(params)

    out, (h_n, c_n) = global_model_forward(x, w_ih_p, w_hh_p, b_p)
    jax.block_until_ready((out, h_n, c_n))

    # Sanity check vs. pure-JAX reference
    ref_out, (ref_h, ref_c) = _reference_forward(x, params)
    assert out.shape == (BATCH, SEQ, HIDDEN)
    assert h_n.shape == (NUM_LAYERS, BATCH, HIDDEN)
    assert c_n.shape == (NUM_LAYERS, BATCH, HIDDEN)
    assert jnp.allclose(out, ref_out, rtol=1e-3, atol=1e-3)
    assert jnp.allclose(h_n, ref_h, rtol=1e-3, atol=1e-3)
    assert jnp.allclose(c_n, ref_c, rtol=1e-3, atol=1e-3)

    print("KERNEL_OK")
</pallas_src>

<mosaic_0001>
module attributes {stable_mosaic.version = 11 : i64} {
  func.func @_lstm_kernel(%arg0: memref<64x128xf32, #tpu.memory_space<vmem>>, %arg1: memref<5x128x512xbf16, #tpu.memory_space<vmem>>, %arg2: memref<5x128x512xbf16, #tpu.memory_space<vmem>>, %arg3: memref<5x1x512xf32, #tpu.memory_space<vmem>>, %arg4: memref<64x128xf32, #tpu.memory_space<vmem>>, %arg5: memref<5x8x128xf32, #tpu.memory_space<vmem>>, %arg6: memref<5x8x128xf32, #tpu.memory_space<vmem>>, %arg7: memref<64x128xf32, #tpu.memory_space<vmem>>) attributes {dimension_semantics = [], scalar_prefetch = 0 : i64, scratch_operands = 1 : i64, tpu.core_type = #tpu.core_type<tc>} {
    %c0 = arith.constant 0 : index
    %c0_0 = arith.constant 0 : index
    %c0_1 = arith.constant 0 : index
    %0 = vector.load %arg1[%c0, %c0_0, %c0_1] : memref<5x128x512xbf16, #tpu.memory_space<vmem>>, vector<1x128x512xbf16>
    %1 = vector.shape_cast %0 : vector<1x128x512xbf16> to vector<128x512xbf16>
    %c0_2 = arith.constant 0 : index
    %c0_3 = arith.constant 0 : index
    %c0_4 = arith.constant 0 : index
    %2 = vector.load %arg2[%c0_2, %c0_3, %c0_4] : memref<5x128x512xbf16, #tpu.memory_space<vmem>>, vector<1x128x512xbf16>
    %3 = vector.shape_cast %2 : vector<1x128x512xbf16> to vector<128x512xbf16>
    %c0_5 = arith.constant 0 : index
    %c0_6 = arith.constant 0 : index
    %c0_7 = arith.constant 0 : index
    %4 = vector.load %arg3[%c0_5, %c0_6, %c0_7] : memref<5x1x512xf32, #tpu.memory_space<vmem>>, vector<1x1x512xf32>
    %5 = vector.shape_cast %4 : vector<1x1x512xf32> to vector<1x512xf32>
    %c0_8 = arith.constant 0 : index
    %c0_9 = arith.constant 0 : index
    %6 = vector.load %arg0[%c0_8, %c0_9] : memref<64x128xf32, #tpu.memory_space<vmem>>, vector<64x128xf32>
    %7 = arith.truncf %6 : vector<64x128xf32> to vector<64x128xbf16>
    %cst = arith.constant dense<0.000000e+00> : vector<64x512xf32>
    %8 = tpu.matmul %7, %1, %cst {dimension_numbers = #tpu.dot_dimension_numbers<[1], [0], [0], [1], [0, 0, 1, 1], [], []>} : vector<64x128xbf16>, vector<128x512xbf16>, vector<64x512xf32> -> vector<64x512xf32>
    %9 = vector.broadcast %5 : vector<1x512xf32> to vector<64x512xf32>
    %10 = arith.addf %8, %9 : vector<64x512xf32>
    %cst_10 = arith.constant 0.000000e+00 : f32
    %11 = vector.broadcast %cst_10 : f32 to vector<8x128xf32>
    %cst_11 = arith.constant 0.000000e+00 : f32
    %12 = vector.broadcast %cst_11 : f32 to vector<8x128xf32>
    %13 = vector.extract_strided_slice %10 {offsets = [0, 0], sizes = [8, 512], strides = [1, 1]} : vector<64x512xf32> to vector<8x512xf32>
    %14 = arith.truncf %11 : vector<8x128xf32> to vector<8x128xbf16>
    %cst_12 = arith.constant dense<0.000000e+00> : vector<8x512xf32>
    %15 = tpu.matmul %14, %3, %cst_12 {dimension_numbers = #tpu.dot_dimension_numbers<[1], [0], [0], [1], [0, 0, 1, 1], [], []>} : vector<8x128xbf16>, vector<128x512xbf16>, vector<8x512xf32> -> vector<8x512xf32>
    %16 = arith.addf %13, %15 : vector<8x512xf32>
    %17 = vector.extract_strided_slice %16 {offsets = [0, 0], sizes = [8, 128], strides = [1, 1]} : vector<8x512xf32> to vector<8x128xf32>
    %18 = arith.negf %17 : vector<8x128xf32>
    %19 = math.exp %18 : vector<8x128xf32>
    %cst_13 = arith.constant 1.000000e+00 : f32
    %20 = vector.broadcast %cst_13 : f32 to vector<8x128xf32>
    %21 = arith.addf %20, %19 : vector<8x128xf32>
    %22 = arith.divf %20, %21 : vector<8x128xf32>
    %23 = vector.extract_strided_slice %16 {offsets = [0, 128], sizes = [8, 128], strides = [1, 1]} : vector<8x512xf32> to vector<8x128xf32>
    %24 = arith.negf %23 : vector<8x128xf32>
    %25 = math.exp %24 : vector<8x128xf32>
    %cst_14 = arith.constant 1.000000e+00 : f32
    %26 = vector.broadcast %cst_14 : f32 to vector<8x128xf32>
    %27 = arith.addf %26, %25 : vector<8x128xf32>
    %28 = arith.divf %26, %27 : vector<8x128xf32>
    %29 = vector.extract_strided_slice %16 {offsets = [0, 256], sizes = [8, 128], strides = [1, 1]} : vector<8x512xf32> to vector<8x128xf32>
    %30 = math.tanh %29 : vector<8x128xf32>
    %31 = vector.extract_strided_slice %16 {offsets = [0, 384], sizes = [8, 128], strides = [1, 1]} : vector<8x512xf32> to vector<8x128xf32>
    %32 = arith.negf %31 : vector<8x128xf32>
    %33 = math.exp %32 : vector<8x128xf32>
    %cst_15 = arith.constant 1.000000e+00 : f32
    %34 = vector.broadcast %cst_15 : f32 to vector<8x128xf32>
    %35 = arith.addf %34, %33 : vector<8x128xf32>
    %36 = arith.divf %34, %35 : vector<8x128xf32>
    %37 = arith.mulf %28, %12 : vector<8x128xf32>
    %38 = arith.mulf %22, %30 : vector<8x128xf32>
    %39 = arith.addf %37, %38 : vector<8x128xf32>
    %40 = math.tanh %39 : vector<8x128xf32>
    %41 = arith.mulf %36, %40 : vector<8x128xf32>
    %c0_16 = arith.constant 0 : index
    %c0_17 = arith.constant 0 : index
    %42 = vector.load %arg7[%c0_16, %c0_17] : memref<64x128xf32, #tpu.memory_space<vmem>>, vector<8x128xf32>
    tpu.vector_store %arg7[%c0_16, %c0_17], %41 {strides = array<i32>} : memref<64x128xf32, #tpu.memory_space<vmem>>, vector<8x128xf32>,
    %43 = vector.extract_strided_slice %10 {offsets = [8, 0], sizes = [8, 512], strides = [1, 1]} : vector<64x512xf32> to vector<8x512xf32>
    %44 = arith.truncf %41 : vector<8x128xf32> to vector<8x128xbf16>
    %cst_18 = arith.constant dense<0.000000e+00> : vector<8x512xf32>
    %45 = tpu.matmul %44, %3, %cst_18 {dimension_numbers = #tpu.dot_dimension_numbers<[1], [0], [0], [1], [0, 0, 1, 1], [], []>} : vector<8x128xbf16>, vector<128x512xbf16>, vector<8x512xf32> -> vector<8x512xf32>
    %46 = arith.addf %43, %45 : vector<8x512xf32>
    %47 = vector.extract_strided_slice %46 {offsets = [0, 0], sizes = [8, 128], strides = [1, 1]} : vector<8x512xf32> to vector<8x128xf32>
    %48 = arith.negf %47 : vector<8x128xf32>
    %49 = math.exp %48 : vector<8x128xf32>
    %cst_19 = arith.constant 1.000000e+00 : f32
    %50 = vector.broadcast %cst_19 : f32 to vector<8x128xf32>
    %51 = arith.addf %50, %49 : vector<8x128xf32>
    %52 = arith.divf %50, %51 : vector<8x128xf32>
    %53 = vector.extract_strided_slice %46 {offsets = [0, 128], sizes = [8, 128], strides = [1, 1]} : vector<8x512xf32> to vector<8x128xf32>
    %54 = arith.negf %53 : vector<8x128xf32>
    %55 = math.exp %54 : vector<8x128xf32>
    %cst_20 = arith.constant 1.000000e+00 : f32
    %56 = vector.broadcast %cst_20 : f32 to vector<8x128xf32>
    %57 = arith.addf %56, %55 : vector<8x128xf32>
    %58 = arith.divf %56, %57 : vector<8x128xf32>
    %59 = vector.extract_strided_slice %46 {offsets = [0, 256], sizes = [8, 128], strides = [1, 1]} : vector<8x512xf32> to vector<8x128xf32>
    %60 = math.tanh %59 : vector<8x128xf32>
    %61 = vector.extract_strided_slice %46 {offsets = [0, 384], sizes = [8, 128], strides = [1, 1]} : vector<8x512xf32> to vector<8x128xf32>
    %62 = arith.negf %61 : vector<8x128xf32>
    %63 = math.exp %62 : vector<8x128xf32>
    %cst_21 = arith.constant 1.000000e+00 : f32
    %64 = vector.broadcast %cst_21 : f32 to vector<8x128xf32>
    %65 = arith.addf %64, %63 : vector<8x128xf32>
    %66 = arith.divf %64, %65 : vector<8x128xf32>
    %67 = arith.mulf %58, %39 : vector<8x128xf32>
    %68 = arith.mulf %52, %60 : vector<8x128xf32>
    %69 = arith.addf %67, %68 : vector<8x128xf32>
    %70 = math.tanh %69 : vector<8x128xf32>
    %71 = arith.mulf %66, %70 : vector<8x128xf32>
    %c8 = arith.constant 8 : index
    %c0_22 = arith.constant 0 : index
    %72 = vector.load %arg7[%c8, %c0_22] : memref<64x128xf32, #tpu.memory_space<vmem>>, vector<8x128xf32>
    tpu.vector_store %arg7[%c8, %c0_22], %71 {strides = array<i32>} : memref<64x128xf32, #tpu.memory_space<vmem>>, vector<8x128xf32>,
    %73 = vector.extract_strided_slice %10 {offsets = [16, 0], sizes = [8, 512], strides = [1, 1]} : vector<64x512xf32> to vector<8x512xf32>
    %74 = arith.truncf %71 : vector<8x128xf32> to vector<8x128xbf16>
    %cst_23 = arith.constant dense<0.000000e+00> : vector<8x512xf32>
    %75 = tpu.matmul %74, %3, %cst_23 {dimension_numbers = #tpu.dot_dimension_numbers<[1], [0], [0], [1], [0, 0, 1, 1], [], []>} : vector<8x128xbf16>, vector<128x512xbf16>, vector<8x512xf32> -> vector<8x512xf32>
    %76 = arith.addf %73, %75 : vector<8x512xf32>
    %77 = vector.extract_strided_slice %76 {offsets = [0, 0], sizes = [8, 128], strides = [1, 1]} : vector<8x512xf32> to vector<8x128xf32>
    %78 = arith.negf %77 : vector<8x128xf32>
    %79 = math.exp %78 : vector<8x128xf32>
    %cst_24 = arith.constant 1.000000e+00 : f32
    %80 = vector.broadcast %cst_24 : f32 to vector<8x128xf32>
    %81 = arith.addf %80, %79 : vector<8x128xf32>
    %82 = arith.divf %80, %81 : vector<8x128xf32>
    %83 = vector.extract_strided_slice %76 {offsets = [0, 128], sizes = [8, 128], strides = [1, 1]} : vector<8x512xf32> to vector<8x128xf32>
    %84 = arith.negf %83 : vector<8x128xf32>
    %85 = math.exp %84 : vector<8x128xf32>
    %cst_25 = arith.constant 1.000000e+00 : f32
    %86 = vector.broadcast %cst_25 : f32 to vector<8x128xf32>
    %87 = arith.addf %86, %85 : vector<8x128xf32>
    %88 = arith.divf %86, %87 : vector<8x128xf32>
    %89 = vector.extract_strided_slice %76 {offsets = [0, 256], sizes = [8, 128], strides = [1, 1]} : vector<8x512xf32> to vector<8x128xf32>
    %90 = math.tanh %89 : vector<8x128xf32>
    %91 = vector.extract_strided_slice %76 {offsets = [0, 384], sizes = [8, 128], strides = [1, 1]} : vector<8x512xf32> to vector<8x128xf32>
    %92 = arith.negf %91 : vector<8x128xf32>
    %93 = math.exp %92 : vector<8x128xf32>
    %cst_26 = arith.constant 1.000000e+00 : f32
    %94 = vector.broadcast %cst_26 : f32 to vector<8x128xf32>
    %95 = arith.addf %94, %93 : vector<8x128xf32>
    %96 = arith.divf %94, %95 : vector<8x128xf32>
    %97 = arith.mulf %88, %69 : vector<8x128xf32>
    %98 = arith.mulf %82, %90 : vector<8x128xf32>
    %99 = arith.addf %97, %98 : vector<8x128xf32>
    %100 = math.tanh %99 : vector<8x128xf32>
    %101 = arith.mulf %96, %100 : vector<8x128xf32>
    %c16 = arith.constant 16 : index
    %c0_27 = arith.constant 0 : index
    %102 = vector.load %arg7[%c16, %c0_27] : memref<64x128xf32, #tpu.memory_space<vmem>>, vector<8x128xf32>
    tpu.vector_store %arg7[%c16, %c0_27], %101 {strides = array<i32>} : memref<64x128xf32, #tpu.memory_space<vmem>>, vector<8x128xf32>,
    %103 = vector.extract_strided_slice %10 {offsets = [24, 0], sizes = [8, 512], strides = [1, 1]} : vector<64x512xf32> to vector<8x512xf32>
    %104 = arith.truncf %101 : vector<8x128xf32> to vector<8x128xbf16>
    %cst_28 = arith.constant dense<0.000000e+00> : vector<8x512xf32>
    %105 = tpu.matmul %104, %3, %cst_28 {dimension_numbers = #tpu.dot_dimension_numbers<[1], [0], [0], [1], [0, 0, 1, 1], [], []>} : vector<8x128xbf16>, vector<128x512xbf16>, vector<8x512xf32> -> vector<8x512xf32>
    %106 = arith.addf %103, %105 : vector<8x512xf32>
    %107 = vector.extract_strided_slice %106 {offsets = [0, 0], sizes = [8, 128], strides = [1, 1]} : vector<8x512xf32> to vector<8x128xf32>
    %108 = arith.negf %107 : vector<8x128xf32>
    %109 = math.exp %108 : vector<8x128xf32>
    %cst_29 = arith.constant 1.000000e+00 : f32
    %110 = vector.broadcast %cst_29 : f32 to vector<8x128xf32>
    %111 = arith.addf %110, %109 : vector<8x128xf32>
    %112 = arith.divf %110, %111 : vector<8x128xf32>
    %113 = vector.extract_strided_slice %106 {offsets = [0, 128], sizes = [8, 128], strides = [1, 1]} : vector<8x512xf32> to vector<8x128xf32>
    %114 = arith.negf %113 : vector<8x128xf32>
    %115 = math.exp %114 : vector<8x128xf32>
    %cst_30 = arith.constant 1.000000e+00 : f32
    %116 = vector.broadcast %cst_30 : f32 to vector<8x128xf32>
    %117 = arith.addf %116, %115 : vector<8x128xf32>
    %118 = arith.divf %116, %117 : vector<8x128xf32>
    %119 = vector.extract_strided_slice %106 {offsets = [0, 256], sizes = [8, 128], strides = [1, 1]} : vector<8x512xf32> to vector<8x128xf32>
    %120 = math.tanh %119 : vector<8x128xf32>
    %121 = vector.extract_strided_slice %106 {offsets = [0, 384], sizes = [8, 128], strides = [1, 1]} : vector<8x512xf32> to vector<8x128xf32>
    %122 = arith.negf %121 : vector<8x128xf32>
    %123 = math.exp %122 : vector<8x128xf32>
    %cst_31 = arith.constant 1.000000e+00 : f32
    %124 = vector.broadcast %cst_31 : f32 to vector<8x128xf32>
    %125 = arith.addf %124, %123 : vector<8x128xf32>
    %126 = arith.divf %124, %125 : vector<8x128xf32>
    %127 = arith.mulf %118, %99 : vector<8x128xf32>
    %128 = arith.mulf %112, %120 : vector<8x128xf32>
    %129 = arith.addf %127, %128 : vector<8x128xf32>
    %130 = math.tanh %129 : vector<8x128xf32>
    %131 = arith.mulf %126, %130 : vector<8x128xf32>
    %c24 = arith.constant 24 : index
    %c0_32 = arith.constant 0 : index
    %132 = vector.load %arg7[%c24, %c0_32] : memref<64x128xf32, #tpu.memory_space<vmem>>, vector<8x128xf32>
    tpu.vector_store %arg7[%c24, %c0_32], %131 {strides = array<i32>} : memref<64x128xf32, #tpu.memory_space<vmem>>, vector<8x128xf32>,
    %133 = vector.extract_strided_slice %10 {offsets = [32, 0], sizes = [8, 512], strides = [1, 1]} : vector<64x512xf32> to vector<8x512xf32>
    %134 = arith.truncf %131 : vector<8x128xf32> to vector<8x128xbf16>
    %cst_33 = arith.constant dense<0.000000e+00> : vector<8x512xf32>
    %135 = tpu.matmul %134, %3, %cst_33 {dimension_numbers = #tpu.dot_dimension_numbers<[1], [0], [0], [1], [0, 0, 1, 1], [], []>} : vector<8x128xbf16>, vector<128x512xbf16>, vector<8x512xf32> -> vector<8x512xf32>
    %136 = arith.addf %133, %135 : vector<8x512xf32>
    %137 = vector.extract_strided_slice %136 {offsets = [0, 0], sizes = [8, 128], strides = [1, 1]} : vector<8x512xf32> to vector<8x128xf32>
    %138 = arith.negf %137 : vector<8x128xf32>
    %139 = math.exp %138 : vector<8x128xf32>
    %cst_34 = arith.constant 1.000000e+00 : f32
    %140 = vector.broadcast %cst_34 : f32 to vector<8x128xf32>
    %141 = arith.addf %140, %139 : vector<8x128xf32>
    %142 = arith.divf %140, %141 : vector<8x128xf32>
    %143 = vector.extract_strided_slice %136 {offsets = [0, 128], sizes = [8, 128], strides = [1, 1]} : vector<8x512xf32> to vector<8x128xf32>
    %144 = arith.negf %143 : vector<8x128xf32>
    %145 = math.exp %144 : vector<8x128xf32>
    %cst_35 = arith.constant 1.000000e+00 : f32
    %146 = vector.broadcast %cst_35 : f32 to vector<8x128xf32>
    %147 = arith.addf %146, %145 : vector<8x128xf32>
    %148 = arith.divf %146, %147 : vector<8x128xf32>
    %149 = vector.extract_strided_slice %136 {offsets = [0, 256], sizes = [8, 128], strides = [1, 1]} : vector<8x512xf32> to vector<8x128xf32>
    %150 = math.tanh %149 : vector<8x128xf32>
    %151 = vector.extract_strided_slice %136 {offsets = [0, 384], sizes = [8, 128], strides = [1, 1]} : vector<8x512xf32> to vector<8x128xf32>
    %152 = arith.negf %151 : vector<8x128xf32>
    %153 = math.exp %152 : vector<8x128xf32>
    %cst_36 = arith.constant 1.000000e+00 : f32
    %154 = vector.broadcast %cst_36 : f32 to vector<8x128xf32>
    %155 = arith.addf %154, %153 : vector<8x128xf32>
    %156 = arith.divf %154, %155 : vector<8x128xf32>
    %157 = arith.mulf %148, %129 : vector<8x128xf32>
    %158 = arith.mulf %142, %150 : vector<8x128xf32>
    %159 = arith.addf %157, %158 : vector<8x128xf32>
    %160 = math.tanh %159 : vector<8x128xf32>
    %161 = arith.mulf %156, %160 : vector<8x128xf32>
    %c32 = arith.constant 32 : index
    %c0_37 = arith.constant 0 : index
    %162 = vector.load %arg7[%c32, %c0_37] : memref<64x128xf32, #tpu.memory_space<vmem>>, vector<8x128xf32>
    tpu.vector_store %arg7[%c32, %c0_37], %161 {strides = array<i32>} : memref<64x128xf32, #tpu.memory_space<vmem>>, vector<8x128xf32>,
    %163 = vector.extract_strided_slice %10 {offsets = [40, 0], sizes = [8, 512], strides = [1, 1]} : vector<64x512xf32> to vector<8x512xf32>
    %164 = arith.truncf %161 : vector<8x128xf32> to vector<8x128xbf16>
    %cst_38 = arith.constant dense<0.000000e+00> : vector<8x512xf32>
    %165 = tpu.matmul %164, %3, %cst_38 {dimension_numbers = #tpu.dot_dimension_numbers<[1], [0], [0], [1], [0, 0, 1, 1], [], []>} : vector<8x128xbf16>, vector<128x512xbf16>, vector<8x512xf32> -> vector<8x512xf32>
    %166 = arith.addf %163, %165 : vector<8x512xf32>
    %167 = vector.extract_strided_slice %166 {offsets = [0, 0], sizes = [8, 128], strides = [1, 1]} : vector<8x512xf32> to vector<8x128xf32>
    %168 = arith.negf %167 : vector<8x128xf32>
    %169 = math.exp %168 : vector<8x128xf32>
    %cst_39 = arith.constant 1.000000e+00 : f32
    %170 = vector.broadcast %cst_39 : f32 to vector<8x128xf32>
    %171 = arith.addf %170, %169 : vector<8x128xf32>
    %172 = arith.divf %170, %171 : vector<8x128xf32>
    %173 = vector.extract_strided_slice %166 {offsets = [0, 128], sizes = [8, 128], strides = [1, 1]} : vector<8x512xf32> to vector<8x128xf32>
    %174 = arith.negf %173 : vector<8x128xf32>
    %175 = math.exp %174 : vector<8x128xf32>
    %cst_40 = arith.constant 1.000000e+00 : f32
    %176 = vector.broadcast %cst_40 : f32 to vector<8x128xf32>
    %177 = arith.addf %176, %175 : vector<8x128xf32>
    %178 = arith.divf %176, %177 : vector<8x128xf32>
    %179 = vector.extract_strided_slice %166 {offsets = [0, 256], sizes = [8, 128], strides = [1, 1]} : vector<8x512xf32> to vector<8x128xf32>
    %180 = math.tanh %179 : vector<8x128xf32>
    %181 = vector.extract_strided_slice %166 {offsets = [0, 384], sizes = [8, 128], strides = [1, 1]} : vector<8x512xf32> to vector<8x128xf32>
    %182 = arith.negf %181 : vector<8x128xf32>
    %183 = math.exp %182 : vector<8x128xf32>
    %cst_41 = arith.constant 1.000000e+00 : f32
    %184 = vector.broadcast %cst_41 : f32 to vector<8x128xf32>
    %185 = arith.addf %184, %183 : vector<8x128xf32>
    %186 = arith.divf %184, %185 : vector<8x128xf32>
    %187 = arith.mulf %178, %159 : vector<8x128xf32>
    %188 = arith.mulf %172, %180 : vector<8x128xf32>
    %189 = arith.addf %187, %188 : vector<8x128xf32>
    %190 = math.tanh %189 : vector<8x128xf32>
    %191 = arith.mulf %186, %190 : vector<8x128xf32>
    %c40 = arith.constant 40 : index
    %c0_42 = arith.constant 0 : index
    %192 = vector.load %arg7[%c40, %c0_42] : memref<64x128xf32, #tpu.memory_space<vmem>>, vector<8x128xf32>
    tpu.vector_store %arg7[%c40, %c0_42], %191 {strides = array<i32>} : memref<64x128xf32, #tpu.memory_space<vmem>>, vector<8x128xf32>,
    %193 = vector.extract_strided_slice %10 {offsets = [48, 0], sizes = [8, 512], strides = [1, 1]} : vector<64x512xf32> to vector<8x512xf32>
    %194 = arith.truncf %191 : vector<8x128xf32> to vector<8x128xbf16>
    %cst_43 = arith.constant dense<0.000000e+00> : vector<8x512xf32>
    %195 = tpu.matmul %194, %3, %cst_43 {dimension_numbers = #tpu.dot_dimension_numbers<[1], [0], [0], [1], [0, 0, 1, 1], [], []>} : vector<8x128xbf16>, vector<128x512xbf16>, vector<8x512xf32> -> vector<8x512xf32>
    %196 = arith.addf %193, %195 : vector<8x512xf32>
    %197 = vector.extract_strided_slice %196 {offsets = [0, 0], sizes = [8, 128], strides = [1, 1]} : vector<8x512xf32> to vector<8x128xf32>
    %198 = arith.negf %197 : vector<8x128xf32>
    %199 = math.exp %198 : vector<8x128xf32>
    %cst_44 = arith.constant 1.000000e+00 : f32
    %200 = vector.broadcast %cst_44 : f32 to vector<8x128xf32>
    %201 = arith.addf %200, %199 : vector<8x128xf32>
    %202 = arith.divf %200, %201 : vector<8x128xf32>
    %203 = vector.extract_strided_slice %196 {offsets = [0, 128], sizes = [8, 128], strides = [1, 1]} : vector<8x512xf32> to vector<8x128xf32>
    %204 = arith.negf %203 : vector<8x128xf32>
    %205 = math.exp %204 : vector<8x128xf32>
    %cst_45 = arith.constant 1.000000e+00 : f32
    %206 = vector.broadcast %cst_45 : f32 to vector<8x128xf32>
    %207 = arith.addf %206, %205 : vector<8x128xf32>
    %208 = arith.divf %206, %207 : vector<8x128xf32>
    %209 = vector.extract_strided_slice %196 {offsets = [0, 256], sizes = [8, 128], strides = [1, 1]} : vector<8x512xf32> to vector<8x128xf32>
    %210 = math.tanh %209 : vector<8x128xf32>
    %211 = vector.extract_strided_slice %196 {offsets = [0, 384], sizes = [8, 128], strides = [1, 1]} : vector<8x512xf32> to vector<8x128xf32>
    %212 = arith.negf %211 : vector<8x128xf32>
    %213 = math.exp %212 : vector<8x128xf32>
    %cst_46 = arith.constant 1.000000e+00 : f32
    %214 = vector.broadcast %cst_46 : f32 to vector<8x128xf32>
    %215 = arith.addf %214, %213 : vector<8x128xf32>
    %216 = arith.divf %214, %215 : vector<8x128xf32>
    %217 = arith.mulf %208, %189 : vector<8x128xf32>
    %218 = arith.mulf %202, %210 : vector<8x128xf32>
    %219 = arith.addf %217, %218 : vector<8x128xf32>
    %220 = math.tanh %219 : vector<8x128xf32>
    %221 = arith.mulf %216, %220 : vector<8x128xf32>
    %c48 = arith.constant 48 : index
    %c0_47 = arith.constant 0 : index
    %222 = vector.load %arg7[%c48, %c0_47] : memref<64x128xf32, #tpu.memory_space<vmem>>, vector<8x128xf32>
    tpu.vector_store %arg7[%c48, %c0_47], %221 {strides = array<i32>} : memref<64x128xf32, #tpu.memory_space<vmem>>, vector<8x128xf32>,
    %223 = vector.extract_strided_slice %10 {offsets = [56, 0], sizes = [8, 512], strides = [1, 1]} : vector<64x512xf32> to vector<8x512xf32>
    %224 = arith.truncf %221 : vector<8x128xf32> to vector<8x128xbf16>
    %cst_48 = arith.constant dense<0.000000e+00> : vector<8x512xf32>
    %225 = tpu.matmul %224, %3, %cst_48 {dimension_numbers = #tpu.dot_dimension_numbers<[1], [0], [0], [1], [0, 0, 1, 1], [], []>} : vector<8x128xbf16>, vector<128x512xbf16>, vector<8x512xf32> -> vector<8x512xf32>
    %226 = arith.addf %223, %225 : vector<8x512xf32>
    %227 = vector.extract_strided_slice %226 {offsets = [0, 0], sizes = [8, 128], strides = [1, 1]} : vector<8x512xf32> to vector<8x128xf32>
    %228 = arith.negf %227 : vector<8x128xf32>
    %229 = math.exp %228 : vector<8x128xf32>
    %cst_49 = arith.constant 1.000000e+00 : f32
    %230 = vector.broadcast %cst_49 : f32 to vector<8x128xf32>
    %231 = arith.addf %230, %229 : vector<8x128xf32>
    %232 = arith.divf %230, %231 : vector<8x128xf32>
    %233 = vector.extract_strided_slice %226 {offsets = [0, 128], sizes = [8, 128], strides = [1, 1]} : vector<8x512xf32> to vector<8x128xf32>
    %234 = arith.negf %233 : vector<8x128xf32>
    %235 = math.exp %234 : vector<8x128xf32>
    %cst_50 = arith.constant 1.000000e+00 : f32
    %236 = vector.broadcast %cst_50 : f32 to vector<8x128xf32>
    %237 = arith.addf %236, %235 : vector<8x128xf32>
    %238 = arith.divf %236, %237 : vector<8x128xf32>
    %239 = vector.extract_strided_slice %226 {offsets = [0, 256], sizes = [8, 128], strides = [1, 1]} : vector<8x512xf32> to vector<8x128xf32>
    %240 = math.tanh %239 : vector<8x128xf32>
    %241 = vector.extract_strided_slice %226 {offsets = [0, 384], sizes = [8, 128], strides = [1, 1]} : vector<8x512xf32> to vector<8x128xf32>
    %242 = arith.negf %241 : vector<8x128xf32>
    %243 = math.exp %242 : vector<8x128xf32>
    %cst_51 = arith.constant 1.000000e+00 : f32
    %244 = vector.broadcast %cst_51 : f32 to vector<8x128xf32>
    %245 = arith.addf %244, %243 : vector<8x128xf32>
    %246 = arith.divf %244, %245 : vector<8x128xf32>
    %247 = arith.mulf %238, %219 : vector<8x128xf32>
    %248 = arith.mulf %232, %240 : vector<8x128xf32>
    %249 = arith.addf %247, %248 : vector<8x128xf32>
    %250 = math.tanh %249 : vector<8x128xf32>
    %251 = arith.mulf %246, %250 : vector<8x128xf32>
    %c56 = arith.constant 56 : index
    %c0_52 = arith.constant 0 : index
    %252 = vector.load %arg7[%c56, %c0_52] : memref<64x128xf32, #tpu.memory_space<vmem>>, vector<8x128xf32>
    tpu.vector_store %arg7[%c56, %c0_52], %251 {strides = array<i32>} : memref<64x128xf32, #tpu.memory_space<vmem>>, vector<8x128xf32>,
    %c0_53 = arith.constant 0 : index
    %c0_54 = arith.constant 0 : index
    %c0_55 = arith.constant 0 : index
    %253 = vector.load %arg5[%c0_53, %c0_54, %c0_55] : memref<5x8x128xf32, #tpu.memory_space<vmem>>, vector<1x8x128xf32>
    %254 = vector.shape_cast %253 : vector<1x8x128xf32> to vector<8x128xf32>
    %255 = vector.shape_cast %251 : vector<8x128xf32> to vector<1x8x128xf32>
    tpu.vector_store %arg5[%c0_53, %c0_54, %c0_55], %255 {strides = array<i32>} : memref<5x8x128xf32, #tpu.memory_space<vmem>>, vector<1x8x128xf32>,
    %c0_56 = arith.constant 0 : index
    %c0_57 = arith.constant 0 : index
    %c0_58 = arith.constant 0 : index
    %256 = vector.load %arg6[%c0_56, %c0_57, %c0_58] : memref<5x8x128xf32, #tpu.memory_space<vmem>>, vector<1x8x128xf32>
    %257 = vector.shape_cast %256 : vector<1x8x128xf32> to vector<8x128xf32>
    %258 = vector.shape_cast %249 : vector<8x128xf32> to vector<1x8x128xf32>
    tpu.vector_store %arg6[%c0_56, %c0_57, %c0_58], %258 {strides = array<i32>} : memref<5x8x128xf32, #tpu.memory_space<vmem>>, vector<1x8x128xf32>,
    %c1 = arith.constant 1 : index
    %c0_59 = arith.constant 0 : index
    %c0_60 = arith.constant 0 : index
    %259 = vector.load %arg1[%c1, %c0_59, %c0_60] : memref<5x128x512xbf16, #tpu.memory_space<vmem>>, vector<1x128x512xbf16>
    %260 = vector.shape_cast %259 : vector<1x128x512xbf16> to vector<128x512xbf16>
    %c1_61 = arith.constant 1 : index
    %c0_62 = arith.constant 0 : index
    %c0_63 = arith.constant 0 : index
    %261 = vector.load %arg2[%c1_61, %c0_62, %c0_63] : memref<5x128x512xbf16, #tpu.memory_space<vmem>>, vector<1x128x512xbf16>
    %262 = vector.shape_cast %261 : vector<1x128x512xbf16> to vector<128x512xbf16>
    %c1_64 = arith.constant 1 : index
    %c0_65 = arith.constant 0 : index
    %c0_66 = arith.constant 0 : index
    %263 = vector.load %arg3[%c1_64, %c0_65, %c0_66] : memref<5x1x512xf32, #tpu.memory_space<vmem>>, vector<1x1x512xf32>
    %264 = vector.shape_cast %263 : vector<1x1x512xf32> to vector<1x512xf32>
    %c0_67 = arith.constant 0 : index
    %c0_68 = arith.constant 0 : index
    %265 = vector.load %arg7[%c0_67, %c0_68] : memref<64x128xf32, #tpu.memory_space<vmem>>, vector<64x128xf32>
    %266 = arith.truncf %265 : vector<64x128xf32> to vector<64x128xbf16>
    %cst_69 = arith.constant dense<0.000000e+00> : vector<64x512xf32>
    %267 = tpu.matmul %266, %260, %cst_69 {dimension_numbers = #tpu.dot_dimension_numbers<[1], [0], [0], [1], [0, 0, 1, 1], [], []>} : vector<64x128xbf16>, vector<128x512xbf16>, vector<64x512xf32> -> vector<64x512xf32>
    %268 = vector.broadcast %264 : vector<1x512xf32> to vector<64x512xf32>
    %269 = arith.addf %267, %268 : vector<64x512xf32>
    %cst_70 = arith.constant 0.000000e+00 : f32
    %270 = vector.broadcast %cst_70 : f32 to vector<8x128xf32>
    %cst_71 = arith.constant 0.000000e+00 : f32
    %271 = vector.broadcast %cst_71 : f32 to vector<8x128xf32>
    %272 = vector.extract_strided_slice %269 {offsets = [0, 0], sizes = [8, 512], strides = [1, 1]} : vector<64x512xf32> to vector<8x512xf32>
    %273 = arith.truncf %270 : vector<8x128xf32> to vector<8x128xbf16>
    %cst_72 = arith.constant dense<0.000000e+00> : vector<8x512xf32>
    %274 = tpu.matmul %273, %262, %cst_72 {dimension_numbers = #tpu.dot_dimension_numbers<[1], [0], [0], [1], [0, 0, 1, 1], [], []>} : vector<8x128xbf16>, vector<128x512xbf16>, vector<8x512xf32> -> vector<8x512xf32>
    %275 = arith.addf %272, %274 : vector<8x512xf32>
    %276 = vector.extract_strided_slice %275 {offsets = [0, 0], sizes = [8, 128], strides = [1, 1]} : vector<8x512xf32> to vector<8x128xf32>
    %277 = arith.negf %276 : vector<8x128xf32>
    %278 = math.exp %277 : vector<8x128xf32>
    %cst_73 = arith.constant 1.000000e+00 : f32
    %279 = vector.broadcast %cst_73 : f32 to vector<8x128xf32>
    %280 = arith.addf %279, %278 : vector<8x128xf32>
    %281 = arith.divf %279, %280 : vector<8x128xf32>
    %282 = vector.extract_strided_slice %275 {offsets = [0, 128], sizes = [8, 128], strides = [1, 1]} : vector<8x512xf32> to vector<8x128xf32>
    %283 = arith.negf %282 : vector<8x128xf32>
    %284 = math.exp %283 : vector<8x128xf32>
    %cst_74 = arith.constant 1.000000e+00 : f32
    %285 = vector.broadcast %cst_74 : f32 to vector<8x128xf32>
    %286 = arith.addf %285, %284 : vector<8x128xf32>
    %287 = arith.divf %285, %286 : vector<8x128xf32>
    %288 = vector.extract_strided_slice %275 {offsets = [0, 256], sizes = [8, 128], strides = [1, 1]} : vector<8x512xf32> to vector<8x128xf32>
    %289 = math.tanh %288 : vector<8x128xf32>
    %290 = vector.extract_strided_slice %275 {offsets = [0, 384], sizes = [8, 128], strides = [1, 1]} : vector<8x512xf32> to vector<8x128xf32>
    %291 = arith.negf %290 : vector<8x128xf32>
    %292 = math.exp %291 : vector<8x128xf32>
    %cst_75 = arith.constant 1.000000e+00 : f32
    %293 = vector.broadcast %cst_75 : f32 to vector<8x128xf32>
    %294 = arith.addf %293, %292 : vector<8x128xf32>
    %295 = arith.divf %293, %294 : vector<8x128xf32>
    %296 = arith.mulf %287, %271 : vector<8x128xf32>
    %297 = arith.mulf %281, %289 : vector<8x128xf32>
    %298 = arith.addf %296, %297 : vector<8x128xf32>
    %299 = math.tanh %298 : vector<8x128xf32>
    %300 = arith.mulf %295, %299 : vector<8x128xf32>
    %c0_76 = arith.constant 0 : index
    %c0_77 = arith.constant 0 : index
    %301 = vector.load %arg7[%c0_76, %c0_77] : memref<64x128xf32, #tpu.memory_space<vmem>>, vector<8x128xf32>
    tpu.vector_store %arg7[%c0_76, %c0_77], %300 {strides = array<i32>} : memref<64x128xf32, #tpu.memory_space<vmem>>, vector<8x128xf32>,
    %302 = vector.extract_strided_slice %269 {offsets = [8, 0], sizes = [8, 512], strides = [1, 1]} : vector<64x512xf32> to vector<8x512xf32>
    %303 = arith.truncf %300 : vector<8x128xf32> to vector<8x128xbf16>
    %cst_78 = arith.constant dense<0.000000e+00> : vector<8x512xf32>
    %304 = tpu.matmul %303, %262, %cst_78 {dimension_numbers = #tpu.dot_dimension_numbers<[1], [0], [0], [1], [0, 0, 1, 1], [], []>} : vector<8x128xbf16>, vector<128x512xbf16>, vector<8x512xf32> -> vector<8x512xf32>
    %305 = arith.addf %302, %304 : vector<8x512xf32>
    %306 = vector.extract_strided_slice %305 {offsets = [0, 0], sizes = [8, 128], strides = [1, 1]} : vector<8x512xf32> to vector<8x128xf32>
    %307 = arith.negf %306 : vector<8x128xf32>
    %308 = math.exp %307 : vector<8x128xf32>
    %cst_79 = arith.constant 1.000000e+00 : f32
    %309 = vector.broadcast %cst_79 : f32 to vector<8x128xf32>
    %310 = arith.addf %309, %308 : vector<8x128xf32>
    %311 = arith.divf %309, %310 : vector<8x128xf32>
    %312 = vector.extract_strided_slice %305 {offsets = [0, 128], sizes = [8, 128], strides = [1, 1]} : vector<8x512xf32> to vector<8x128xf32>
    %313 = arith.negf %312 : vector<8x128xf32>
    %314 = math.exp %313 : vector<8x128xf32>
    %cst_80 = arith.constant 1.000000e+00 : f32
    %315 = vector.broadcast %cst_80 : f32 to vector<8x128xf32>
    %316 = arith.addf %315, %314 : vector<8x128xf32>
    %317 = arith.divf %315, %316 : vector<8x128xf32>
    %318 = vector.extract_strided_slice %305 {offsets = [0, 256], sizes = [8, 128], strides = [1, 1]} : vector<8x512xf32> to vector<8x128xf32>
    %319 = math.tanh %318 : vector<8x128xf32>
    %320 = vector.extract_strided_slice %305 {offsets = [0, 384], sizes = [8, 128], strides = [1, 1]} : vector<8x512xf32> to vector<8x128xf32>
    %321 = arith.negf %320 : vector<8x128xf32>
    %322 = math.exp %321 : vector<8x128xf32>
    %cst_81 = arith.constant 1.000000e+00 : f32
    %323 = vector.broadcast %cst_81 : f32 to vector<8x128xf32>
    %324 = arith.addf %323, %322 : vector<8x128xf32>
    %325 = arith.divf %323, %324 : vector<8x128xf32>
    %326 = arith.mulf %317, %298 : vector<8x128xf32>
    %327 = arith.mulf %311, %319 : vector<8x128xf32>
    %328 = arith.addf %326, %327 : vector<8x128xf32>
    %329 = math.tanh %328 : vector<8x128xf32>
    %330 = arith.mulf %325, %329 : vector<8x128xf32>
    %c8_82 = arith.constant 8 : index
    %c0_83 = arith.constant 0 : index
    %331 = vector.load %arg7[%c8_82, %c0_83] : memref<64x128xf32, #tpu.memory_space<vmem>>, vector<8x128xf32>
    tpu.vector_store %arg7[%c8_82, %c0_83], %330 {strides = array<i32>} : memref<64x128xf32, #tpu.memory_space<vmem>>, vector<8x128xf32>,
    %332 = vector.extract_strided_slice %269 {offsets = [16, 0], sizes = [8, 512], strides = [1, 1]} : vector<64x512xf32> to vector<8x512xf32>
    %333 = arith.truncf %330 : vector<8x128xf32> to vector<8x128xbf16>
    %cst_84 = arith.constant dense<0.000000e+00> : vector<8x512xf32>
    %334 = tpu.matmul %333, %262, %cst_84 {dimension_numbers = #tpu.dot_dimension_numbers<[1], [0], [0], [1], [0, 0, 1, 1], [], []>} : vector<8x128xbf16>, vector<128x512xbf16>, vector<8x512xf32> -> vector<8x512xf32>
    %335 = arith.addf %332, %334 : vector<8x512xf32>
    %336 = vector.extract_strided_slice %335 {offsets = [0, 0], sizes = [8, 128], strides = [1, 1]} : vector<8x512xf32> to vector<8x128xf32>
    %337 = arith.negf %336 : vector<8x128xf32>
    %338 = math.exp %337 : vector<8x128xf32>
    %cst_85 = arith.constant 1.000000e+00 : f32
    %339 = vector.broadcast %cst_85 : f32 to vector<8x128xf32>
    %340 = arith.addf %339, %338 : vector<8x128xf32>
    %341 = arith.divf %339, %340 : vector<8x128xf32>
    %342 = vector.extract_strided_slice %335 {offsets = [0, 128], sizes = [8, 128], strides = [1, 1]} : vector<8x512xf32> to vector<8x128xf32>
    %343 = arith.negf %342 : vector<8x128xf32>
    %344 = math.exp %343 : vector<8x128xf32>
    %cst_86 = arith.constant 1.000000e+00 : f32
    %345 = vector.broadcast %cst_86 : f32 to vector<8x128xf32>
    %346 = arith.addf %345, %344 : vector<8x128xf32>
    %347 = arith.divf %345, %346 : vector<8x128xf32>
    %348 = vector.extract_strided_slice %335 {offsets = [0, 256], sizes = [8, 128], strides = [1, 1]} : vector<8x512xf32> to vector<8x128xf32>
    %349 = math.tanh %348 : vector<8x128xf32>
    %350 = vector.extract_strided_slice %335 {offsets = [0, 384], sizes = [8, 128], strides = [1, 1]} : vector<8x512xf32> to vector<8x128xf32>
    %351 = arith.negf %350 : vector<8x128xf32>
    %352 = math.exp %351 : vector<8x128xf32>
    %cst_87 = arith.constant 1.000000e+00 : f32
    %353 = vector.broadcast %cst_87 : f32 to vector<8x128xf32>
    %354 = arith.addf %353, %352 : vector<8x128xf32>
    %355 = arith.divf %353, %354 : vector<8x128xf32>
    %356 = arith.mulf %347, %328 : vector<8x128xf32>
    %357 = arith.mulf %341, %349 : vector<8x128xf32>
    %358 = arith.addf %356, %357 : vector<8x128xf32>
    %359 = math.tanh %358 : vector<8x128xf32>
    %360 = arith.mulf %355, %359 : vector<8x128xf32>
    %c16_88 = arith.constant 16 : index
    %c0_89 = arith.constant 0 : index
    %361 = vector.load %arg7[%c16_88, %c0_89] : memref<64x128xf32, #tpu.memory_space<vmem>>, vector<8x128xf32>
    tpu.vector_store %arg7[%c16_88, %c0_89], %360 {strides = array<i32>} : memref<64x128xf32, #tpu.memory_space<vmem>>, vector<8x128xf32>,
    %362 = vector.extract_strided_slice %269 {offsets = [24, 0], sizes = [8, 512], strides = [1, 1]} : vector<64x512xf32> to vector<8x512xf32>
    %363 = arith.truncf %360 : vector<8x128xf32> to vector<8x128xbf16>
    %cst_90 = arith.constant dense<0.000000e+00> : vector<8x512xf32>
    %364 = tpu.matmul %363, %262, %cst_90 {dimension_numbers = #tpu.dot_dimension_numbers<[1], [0], [0], [1], [0, 0, 1, 1], [], []>} : vector<8x128xbf16>, vector<128x512xbf16>, vector<8x512xf32> -> vector<8x512xf32>
    %365 = arith.addf %362, %364 : vector<8x512xf32>
    %366 = vector.extract_strided_slice %365 {offsets = [0, 0], sizes = [8, 128], strides = [1, 1]} : vector<8x512xf32> to vector<8x128xf32>
    %367 = arith.negf %366 : vector<8x128xf32>
    %368 = math.exp %367 : vector<8x128xf32>
    %cst_91 = arith.constant 1.000000e+00 : f32
    %369 = vector.broadcast %cst_91 : f32 to vector<8x128xf32>
    %370 = arith.addf %369, %368 : vector<8x128xf32>
    %371 = arith.divf %369, %370 : vector<8x128xf32>
    %372 = vector.extract_strided_slice %365 {offsets = [0, 128], sizes = [8, 128], strides = [1, 1]} : vector<8x512xf32> to vector<8x128xf32>
    %373 = arith.negf %372 : vector<8x128xf32>
    %374 = math.exp %373 : vector<8x128xf32>
    %cst_92 = arith.constant 1.000000e+00 : f32
    %375 = vector.broadcast %cst_92 : f32 to vector<8x128xf32>
    %376 = arith.addf %375, %374 : vector<8x128xf32>
    %377 = arith.divf %375, %376 : vector<8x128xf32>
    %378 = vector.extract_strided_slice %365 {offsets = [0, 256], sizes = [8, 128], strides = [1, 1]} : vector<8x512xf32> to vector<8x128xf32>
    %379 = math.tanh %378 : vector<8x128xf32>
    %380 = vector.extract_strided_slice %365 {offsets = [0, 384], sizes = [8, 128], strides = [1, 1]} : vector<8x512xf32> to vector<8x128xf32>
    %381 = arith.negf %380 : vector<8x128xf32>
    %382 = math.exp %381 : vector<8x128xf32>
    %cst_93 = arith.constant 1.000000e+00 : f32
    %383 = vector.broadcast %cst_93 : f32 to vector<8x128xf32>
    %384 = arith.addf %383, %382 : vector<8x128xf32>
    %385 = arith.divf %383, %384 : vector<8x128xf32>
    %386 = arith.mulf %377, %358 : vector<8x128xf32>
    %387 = arith.mulf %371, %379 : vector<8x128xf32>
    %388 = arith.addf %386, %387 : vector<8x128xf32>
    %389 = math.tanh %388 : vector<8x128xf32>
    %390 = arith.mulf %385, %389 : vector<8x128xf32>
    %c24_94 = arith.constant 24 : index
    %c0_95 = arith.constant 0 : index
    %391 = vector.load %arg7[%c24_94, %c0_95] : memref<64x128xf32, #tpu.memory_space<vmem>>, vector<8x128xf32>
    tpu.vector_store %arg7[%c24_94, %c0_95], %390 {strides = array<i32>} : memref<64x128xf32, #tpu.memory_space<vmem>>, vector<8x128xf32>,
    %392 = vector.extract_strided_slice %269 {offsets = [32, 0], sizes = [8, 512], strides = [1, 1]} : vector<64x512xf32> to vector<8x512xf32>
    %393 = arith.truncf %390 : vector<8x128xf32> to vector<8x128xbf16>
    %cst_96 = arith.constant dense<0.000000e+00> : vector<8x512xf32>
    %394 = tpu.matmul %393, %262, %cst_96 {dimension_numbers = #tpu.dot_dimension_numbers<[1], [0], [0], [1], [0, 0, 1, 1], [], []>} : vector<8x128xbf16>, vector<128x512xbf16>, vector<8x512xf32> -> vector<8x512xf32>
    %395 = arith.addf %392, %394 : vector<8x512xf32>
    %396 = vector.extract_strided_slice %395 {offsets = [0, 0], sizes = [8, 128], strides = [1, 1]} : vector<8x512xf32> to vector<8x128xf32>
    %397 = arith.negf %396 : vector<8x128xf32>
    %398 = math.exp %397 : vector<8x128xf32>
    %cst_97 = arith.constant 1.000000e+00 : f32
    %399 = vector.broadcast %cst_97 : f32 to vector<8x128xf32>
    %400 = arith.addf %399, %398 : vector<8x128xf32>
    %401 = arith.divf %399, %400 : vector<8x128xf32>
    %402 = vector.extract_strided_slice %395 {offsets = [0, 128], sizes = [8, 128], strides = [1, 1]} : vector<8x512xf32> to vector<8x128xf32>
    %403 = arith.negf %402 : vector<8x128xf32>
    %404 = math.exp %403 : vector<8x128xf32>
    %cst_98 = arith.constant 1.000000e+00 : f32
    %405 = vector.broadcast %cst_98 : f32 to vector<8x128xf32>
    %406 = arith.addf %405, %404 : vector<8x128xf32>
    %407 = arith.divf %405, %406 : vector<8x128xf32>
    %408 = vector.extract_strided_slice %395 {offsets = [0, 256], sizes = [8, 128], strides = [1, 1]} : vector<8x512xf32> to vector<8x128xf32>
    %409 = math.tanh %408 : vector<8x128xf32>
    %410 = vector.extract_strided_slice %395 {offsets = [0, 384], sizes = [8, 128], strides = [1, 1]} : vector<8x512xf32> to vector<8x128xf32>
    %411 = arith.negf %410 : vector<8x128xf32>
    %412 = math.exp %411 : vector<8x128xf32>
    %cst_99 = arith.constant 1.000000e+00 : f32
    %413 = vector.broadcast %cst_99 : f32 to vector<8x128xf32>
    %414 = arith.addf %413, %412 : vector<8x128xf32>
    %415 = arith.divf %413, %414 : vector<8x128xf32>
    %416 = arith.mulf %407, %388 : vector<8x128xf32>
    %417 = arith.mulf %401, %409 : vector<8x128xf32>
    %418 = arith.addf %416, %417 : vector<8x128xf32>
    %419 = math.tanh %418 : vector<8x128xf32>
    %420 = arith.mulf %415, %419 : vector<8x128xf32>
    %c32_100 = arith.constant 32 : index
    %c0_101 = arith.constant 0 : index
    %421 = vector.load %arg7[%c32_100, %c0_101] : memref<64x128xf32, #tpu.memory_space<vmem>>, vector<8x128xf32>
    tpu.vector_store %arg7[%c32_100, %c0_101], %420 {strides = array<i32>} : memref<64x128xf32, #tpu.memory_space<vmem>>, vector<8x128xf32>,
    %422 = vector.extract_strided_slice %269 {offsets = [40, 0], sizes = [8, 512], strides = [1, 1]} : vector<64x512xf32> to vector<8x512xf32>
    %423 = arith.truncf %420 : vector<8x128xf32> to vector<8x128xbf16>
    %cst_102 = arith.constant dense<0.000000e+00> : vector<8x512xf32>
    %424 = tpu.matmul %423, %262, %cst_102 {dimension_numbers = #tpu.dot_dimension_numbers<[1], [0], [0], [1], [0, 0, 1, 1], [], []>} : vector<8x128xbf16>, vector<128x512xbf16>, vector<8x512xf32> -> vector<8x512xf32>
    %425 = arith.addf %422, %424 : vector<8x512xf32>
    %426 = vector.extract_strided_slice %425 {offsets = [0, 0], sizes = [8, 128], strides = [1, 1]} : vector<8x512xf32> to vector<8x128xf32>
    %427 = arith.negf %426 : vector<8x128xf32>
    %428 = math.exp %427 : vector<8x128xf32>
    %cst_103 = arith.constant 1.000000e+00 : f32
    %429 = vector.broadcast %cst_103 : f32 to vector<8x128xf32>
    %430 = arith.addf %429, %428 : vector<8x128xf32>
    %431 = arith.divf %429, %430 : vector<8x128xf32>
    %432 = vector.extract_strided_slice %425 {offsets = [0, 128], sizes = [8, 128], strides = [1, 1]} : vector<8x512xf32> to vector<8x128xf32>
    %433 = arith.negf %432 : vector<8x128xf32>
    %434 = math.exp %433 : vector<8x128xf32>
    %cst_104 = arith.constant 1.000000e+00 : f32
    %435 = vector.broadcast %cst_104 : f32 to vector<8x128xf32>
    %436 = arith.addf %435, %434 : vector<8x128xf32>
    %437 = arith.divf %435, %436 : vector<8x128xf32>
    %438 = vector.extract_strided_slice %425 {offsets = [0, 256], sizes = [8, 128], strides = [1, 1]} : vector<8x512xf32> to vector<8x128xf32>
    %439 = math.tanh %438 : vector<8x128xf32>
    %440 = vector.extract_strided_slice %425 {offsets = [0, 384], sizes = [8, 128], strides = [1, 1]} : vector<8x512xf32> to vector<8x128xf32>
    %441 = arith.negf %440 : vector<8x128xf32>
    %442 = math.exp %441 : vector<8x128xf32>
    %cst_105 = arith.constant 1.000000e+00 : f32
    %443 = vector.broadcast %cst_105 : f32 to vector<8x128xf32>
    %444 = arith.addf %443, %442 : vector<8x128xf32>
    %445 = arith.divf %443, %444 : vector<8x128xf32>
    %446 = arith.mulf %437, %418 : vector<8x128xf32>
    %447 = arith.mulf %431, %439 : vector<8x128xf32>
    %448 = arith.addf %446, %447 : vector<8x128xf32>
    %449 = math.tanh %448 : vector<8x128xf32>
    %450 = arith.mulf %445, %449 : vector<8x128xf32>
    %c40_106 = arith.constant 40 : index
    %c0_107 = arith.constant 0 : index
    %451 = vector.load %arg7[%c40_106, %c0_107] : memref<64x128xf32, #tpu.memory_space<vmem>>, vector<8x128xf32>
    tpu.vector_store %arg7[%c40_106, %c0_107], %450 {strides = array<i32>} : memref<64x128xf32, #tpu.memory_space<vmem>>, vector<8x128xf32>,
    %452 = vector.extract_strided_slice %269 {offsets = [48, 0], sizes = [8, 512], strides = [1, 1]} : vector<64x512xf32> to vector<8x512xf32>
    %453 = arith.truncf %450 : vector<8x128xf32> to vector<8x128xbf16>
    %cst_108 = arith.constant dense<0.000000e+00> : vector<8x512xf32>
    %454 = tpu.matmul %453, %262, %cst_108 {dimension_numbers = #tpu.dot_dimension_numbers<[1], [0], [0], [1], [0, 0, 1, 1], [], []>} : vector<8x128xbf16>, vector<128x512xbf16>, vector<8x512xf32> -> vector<8x512xf32>
    %455 = arith.addf %452, %454 : vector<8x512xf32>
    %456 = vector.extract_strided_slice %455 {offsets = [0, 0], sizes = [8, 128], strides = [1, 1]} : vector<8x512xf32> to vector<8x128xf32>
    %457 = arith.negf %456 : vector<8x128xf32>
    %458 = math.exp %457 : vector<8x128xf32>
    %cst_109 = arith.constant 1.000000e+00 : f32
    %459 = vector.broadcast %cst_109 : f32 to vector<8x128xf32>
    %460 = arith.addf %459, %458 : vector<8x128xf32>
    %461 = arith.divf %459, %460 : vector<8x128xf32>
    %462 = vector.extract_strided_slice %455 {offsets = [0, 128], sizes = [8, 128], strides = [1, 1]} : vector<8x512xf32> to vector<8x128xf32>
    %463 = arith.negf %462 : vector<8x128xf32>
    %464 = math.exp %463 : vector<8x128xf32>
    %cst_110 = arith.constant 1.000000e+00 : f32
    %465 = vector.broadcast %cst_110 : f32 to vector<8x128xf32>
    %466 = arith.addf %465, %464 : vector<8x128xf32>
    %467 = arith.divf %465, %466 : vector<8x128xf32>
    %468 = vector.extract_strided_slice %455 {offsets = [0, 256], sizes = [8, 128], strides = [1, 1]} : vector<8x512xf32> to vector<8x128xf32>
    %469 = math.tanh %468 : vector<8x128xf32>
    %470 = vector.extract_strided_slice %455 {offsets = [0, 384], sizes = [8, 128], strides = [1, 1]} : vector<8x512xf32> to vector<8x128xf32>
    %471 = arith.negf %470 : vector<8x128xf32>
    %472 = math.exp %471 : vector<8x128xf32>
    %cst_111 = arith.constant 1.000000e+00 : f32
    %473 = vector.broadcast %cst_111 : f32 to vector<8x128xf32>
    %474 = arith.addf %473, %472 : vector<8x128xf32>
    %475 = arith.divf %473, %474 : vector<8x128xf32>
    %476 = arith.mulf %467, %448 : vector<8x128xf32>
    %477 = arith.mulf %461, %469 : vector<8x128xf32>
    %478 = arith.addf %476, %477 : vector<8x128xf32>
    %479 = math.tanh %478 : vector<8x128xf32>
    %480 = arith.mulf %475, %479 : vector<8x128xf32>
    %c48_112 = arith.constant 48 : index
    %c0_113 = arith.constant 0 : index
    %481 = vector.load %arg7[%c48_112, %c0_113] : memref<64x128xf32, #tpu.memory_space<vmem>>, vector<8x128xf32>
    tpu.vector_store %arg7[%c48_112, %c0_113], %480 {strides = array<i32>} : memref<64x128xf32, #tpu.memory_space<vmem>>, vector<8x128xf32>,
    %482 = vector.extract_strided_slice %269 {offsets = [56, 0], sizes = [8, 512], strides = [1, 1]} : vector<64x512xf32> to vector<8x512xf32>
    %483 = arith.truncf %480 : vector<8x128xf32> to vector<8x128xbf16>
    %cst_114 = arith.constant dense<0.000000e+00> : vector<8x512xf32>
    %484 = tpu.matmul %483, %262, %cst_114 {dimension_numbers = #tpu.dot_dimension_numbers<[1], [0], [0], [1], [0, 0, 1, 1], [], []>} : vector<8x128xbf16>, vector<128x512xbf16>, vector<8x512xf32> -> vector<8x512xf32>
    %485 = arith.addf %482, %484 : vector<8x512xf32>
    %486 = vector.extract_strided_slice %485 {offsets = [0, 0], sizes = [8, 128], strides = [1, 1]} : vector<8x512xf32> to vector<8x128xf32>
    %487 = arith.negf %486 : vector<8x128xf32>
    %488 = math.exp %487 : vector<8x128xf32>
    %cst_115 = arith.constant 1.000000e+00 : f32
    %489 = vector.broadcast %cst_115 : f32 to vector<8x128xf32>
    %490 = arith.addf %489, %488 : vector<8x128xf32>
    %491 = arith.divf %489, %490 : vector<8x128xf32>
    %492 = vector.extract_strided_slice %485 {offsets = [0, 128], sizes = [8, 128], strides = [1, 1]} : vector<8x512xf32> to vector<8x128xf32>
    %493 = arith.negf %492 : vector<8x128xf32>
    %494 = math.exp %493 : vector<8x128xf32>
    %cst_116 = arith.constant 1.000000e+00 : f32
    %495 = vector.broadcast %cst_116 : f32 to vector<8x128xf32>
    %496 = arith.addf %495, %494 : vector<8x128xf32>
    %497 = arith.divf %495, %496 : vector<8x128xf32>
    %498 = vector.extract_strided_slice %485 {offsets = [0, 256], sizes = [8, 128], strides = [1, 1]} : vector<8x512xf32> to vector<8x128xf32>
    %499 = math.tanh %498 : vector<8x128xf32>
    %500 = vector.extract_strided_slice %485 {offsets = [0, 384], sizes = [8, 128], strides = [1, 1]} : vector<8x512xf32> to vector<8x128xf32>
    %501 = arith.negf %500 : vector<8x128xf32>
    %502 = math.exp %501 : vector<8x128xf32>
    %cst_117 = arith.constant 1.000000e+00 : f32
    %503 = vector.broadcast %cst_117 : f32 to vector<8x128xf32>
    %504 = arith.addf %503, %502 : vector<8x128xf32>
    %505 = arith.divf %503, %504 : vector<8x128xf32>
    %506 = arith.mulf %497, %478 : vector<8x128xf32>
    %507 = arith.mulf %491, %499 : vector<8x128xf32>
    %508 = arith.addf %506, %507 : vector<8x128xf32>
    %509 = math.tanh %508 : vector<8x128xf32>
    %510 = arith.mulf %505, %509 : vector<8x128xf32>
    %c56_118 = arith.constant 56 : index
    %c0_119 = arith.constant 0 : index
    %511 = vector.load %arg7[%c56_118, %c0_119] : memref<64x128xf32, #tpu.memory_space<vmem>>, vector<8x128xf32>
    tpu.vector_store %arg7[%c56_118, %c0_119], %510 {strides = array<i32>} : memref<64x128xf32, #tpu.memory_space<vmem>>, vector<8x128xf32>,
    %c1_120 = arith.constant 1 : index
    %c0_121 = arith.constant 0 : index
    %c0_122 = arith.constant 0 : index
    %512 = vector.load %arg5[%c1_120, %c0_121, %c0_122] : memref<5x8x128xf32, #tpu.memory_space<vmem>>, vector<1x8x128xf32>
    %513 = vector.shape_cast %512 : vector<1x8x128xf32> to vector<8x128xf32>
    %514 = vector.shape_cast %510 : vector<8x128xf32> to vector<1x8x128xf32>
    tpu.vector_store %arg5[%c1_120, %c0_121, %c0_122], %514 {strides = array<i32>} : memref<5x8x128xf32, #tpu.memory_space<vmem>>, vector<1x8x128xf32>,
    %c1_123 = arith.constant 1 : index
    %c0_124 = arith.constant 0 : index
    %c0_125 = arith.constant 0 : index
    %515 = vector.load %arg6[%c1_123, %c0_124, %c0_125] : memref<5x8x128xf32, #tpu.memory_space<vmem>>, vector<1x8x128xf32>
    %516 = vector.shape_cast %515 : vector<1x8x128xf32> to vector<8x128xf32>
    %517 = vector.shape_cast %508 : vector<8x128xf32> to vector<1x8x128xf32>
    tpu.vector_store %arg6[%c1_123, %c0_124, %c0_125], %517 {strides = array<i32>} : memref<5x8x128xf32, #tpu.memory_space<vmem>>, vector<1x8x128xf32>,
    %c2 = arith.constant 2 : index
    %c0_126 = arith.constant 0 : index
    %c0_127 = arith.constant 0 : index
    %518 = vector.load %arg1[%c2, %c0_126, %c0_127] : memref<5x128x512xbf16, #tpu.memory_space<vmem>>, vector<1x128x512xbf16>
    %519 = vector.shape_cast %518 : vector<1x128x512xbf16> to vector<128x512xbf16>
    %c2_128 = arith.constant 2 : index
    %c0_129 = arith.constant 0 : index
    %c0_130 = arith.constant 0 : index
    %520 = vector.load %arg2[%c2_128, %c0_129, %c0_130] : memref<5x128x512xbf16, #tpu.memory_space<vmem>>, vector<1x128x512xbf16>
    %521 = vector.shape_cast %520 : vector<1x128x512xbf16> to vector<128x512xbf16>
    %c2_131 = arith.constant 2 : index
    %c0_132 = arith.constant 0 : index
    %c0_133 = arith.constant 0 : index
    %522 = vector.load %arg3[%c2_131, %c0_132, %c0_133] : memref<5x1x512xf32, #tpu.memory_space<vmem>>, vector<1x1x512xf32>
    %523 = vector.shape_cast %522 : vector<1x1x512xf32> to vector<1x512xf32>
    %c0_134 = arith.constant 0 : index
    %c0_135 = arith.constant 0 : index
    %524 = vector.load %arg7[%c0_134, %c0_135] : memref<64x128xf32, #tpu.memory_space<vmem>>, vector<64x128xf32>
    %525 = arith.truncf %524 : vector<64x128xf32> to vector<64x128xbf16>
    %cst_136 = arith.constant dense<0.000000e+00> : vector<64x512xf32>
    %526 = tpu.matmul %525, %519, %cst_136 {dimension_numbers = #tpu.dot_dimension_numbers<[1], [0], [0], [1], [0, 0, 1, 1], [], []>} : vector<64x128xbf16>, vector<128x512xbf16>, vector<64x512xf32> -> vector<64x512xf32>
    %527 = vector.broadcast %523 : vector<1x512xf32> to vector<64x512xf32>
    %528 = arith.addf %526, %527 : vector<64x512xf32>
    %cst_137 = arith.constant 0.000000e+00 : f32
    %529 = vector.broadcast %cst_137 : f32 to vector<8x128xf32>
    %cst_138 = arith.constant 0.000000e+00 : f32
    %530 = vector.broadcast %cst_138 : f32 to vector<8x128xf32>
    %531 = vector.extract_strided_slice %528 {offsets = [0, 0], sizes = [8, 512], strides = [1, 1]} : vector<64x512xf32> to vector<8x512xf32>
    %532 = arith.truncf %529 : vector<8x128xf32> to vector<8x128xbf16>
    %cst_139 = arith.constant dense<0.000000e+00> : vector<8x512xf32>
    %533 = tpu.matmul %532, %521, %cst_139 {dimension_numbers = #tpu.dot_dimension_numbers<[1], [0], [0], [1], [0, 0, 1, 1], [], []>} : vector<8x128xbf16>, vector<128x512xbf16>, vector<8x512xf32> -> vector<8x512xf32>
    %534 = arith.addf %531, %533 : vector<8x512xf32>
    %535 = vector.extract_strided_slice %534 {offsets = [0, 0], sizes = [8, 128], strides = [1, 1]} : vector<8x512xf32> to vector<8x128xf32>
    %536 = arith.negf %535 : vector<8x128xf32>
    %537 = math.exp %536 : vector<8x128xf32>
    %cst_140 = arith.constant 1.000000e+00 : f32
    %538 = vector.broadcast %cst_140 : f32 to vector<8x128xf32>
    %539 = arith.addf %538, %537 : vector<8x128xf32>
    %540 = arith.divf %538, %539 : vector<8x128xf32>
    %541 = vector.extract_strided_slice %534 {offsets = [0, 128], sizes = [8, 128], strides = [1, 1]} : vector<8x512xf32> to vector<8x128xf32>
    %542 = arith.negf %541 : vector<8x128xf32>
    %543 = math.exp %542 : vector<8x128xf32>
    %cst_141 = arith.constant 1.000000e+00 : f32
    %544 = vector.broadcast %cst_141 : f32 to vector<8x128xf32>
    %545 = arith.addf %544, %543 : vector<8x128xf32>
    %546 = arith.divf %544, %545 : vector<8x128xf32>
    %547 = vector.extract_strided_slice %534 {offsets = [0, 256], sizes = [8, 128], strides = [1, 1]} : vector<8x512xf32> to vector<8x128xf32>
    %548 = math.tanh %547 : vector<8x128xf32>
    %549 = vector.extract_strided_slice %534 {offsets = [0, 384], sizes = [8, 128], strides = [1, 1]} : vector<8x512xf32> to vector<8x128xf32>
    %550 = arith.negf %549 : vector<8x128xf32>
    %551 = math.exp %550 : vector<8x128xf32>
    %cst_142 = arith.constant 1.000000e+00 : f32
    %552 = vector.broadcast %cst_142 : f32 to vector<8x128xf32>
    %553 = arith.addf %552, %551 : vector<8x128xf32>
    %554 = arith.divf %552, %553 : vector<8x128xf32>
    %555 = arith.mulf %546, %530 : vector<8x128xf32>
    %556 = arith.mulf %540, %548 : vector<8x128xf32>
    %557 = arith.addf %555, %556 : vector<8x128xf32>
    %558 = math.tanh %557 : vector<8x128xf32>
    %559 = arith.mulf %554, %558 : vector<8x128xf32>
    %c0_143 = arith.constant 0 : index
    %c0_144 = arith.constant 0 : index
    %560 = vector.load %arg7[%c0_143, %c0_144] : memref<64x128xf32, #tpu.memory_space<vmem>>, vector<8x128xf32>
    tpu.vector_store %arg7[%c0_143, %c0_144], %559 {strides = array<i32>} : memref<64x128xf32, #tpu.memory_space<vmem>>, vector<8x128xf32>,
    %561 = vector.extract_strided_slice %528 {offsets = [8, 0], sizes = [8, 512], strides = [1, 1]} : vector<64x512xf32> to vector<8x512xf32>
    %562 = arith.truncf %559 : vector<8x128xf32> to vector<8x128xbf16>
    %cst_145 = arith.constant dense<0.000000e+00> : vector<8x512xf32>
    %563 = tpu.matmul %562, %521, %cst_145 {dimension_numbers = #tpu.dot_dimension_numbers<[1], [0], [0], [1], [0, 0, 1, 1], [], []>} : vector<8x128xbf16>, vector<128x512xbf16>, vector<8x512xf32> -> vector<8x512xf32>
    %564 = arith.addf %561, %563 : vector<8x512xf32>
    %565 = vector.extract_strided_slice %564 {offsets = [0, 0], sizes = [8, 128], strides = [1, 1]} : vector<8x512xf32> to vector<8x128xf32>
    %566 = arith.negf %565 : vector<8x128xf32>
    %567 = math.exp %566 : vector<8x128xf32>
    %cst_146 = arith.constant 1.000000e+00 : f32
    %568 = vector.broadcast %cst_146 : f32 to vector<8x128xf32>
    %569 = arith.addf %568, %567 : vector<8x128xf32>
    %570 = arith.divf %568, %569 : vector<8x128xf32>
    %571 = vector.extract_strided_slice %564 {offsets = [0, 128], sizes = [8, 128], strides = [1, 1]} : vector<8x512xf32> to vector<8x128xf32>
    %572 = arith.negf %571 : vector<8x128xf32>
    %573 = math.exp %572 : vector<8x128xf32>
    %cst_147 = arith.constant 1.000000e+00 : f32
    %574 = vector.broadcast %cst_147 : f32 to vector<8x128xf32>
    %575 = arith.addf %574, %573 : vector<8x128xf32>
    %576 = arith.divf %574, %575 : vector<8x128xf32>
    %577 = vector.extract_strided_slice %564 {offsets = [0, 256], sizes = [8, 128], strides = [1, 1]} : vector<8x512xf32> to vector<8x128xf32>
    %578 = math.tanh %577 : vector<8x128xf32>
    %579 = vector.extract_strided_slice %564 {offsets = [0, 384], sizes = [8, 128], strides = [1, 1]} : vector<8x512xf32> to vector<8x128xf32>
    %580 = arith.negf %579 : vector<8x128xf32>
    %581 = math.exp %580 : vector<8x128xf32>
    %cst_148 = arith.constant 1.000000e+00 : f32
    %582 = vector.broadcast %cst_148 : f32 to vector<8x128xf32>
    %583 = arith.addf %582, %581 : vector<8x128xf32>
    %584 = arith.divf %582, %583 : vector<8x128xf32>
    %585 = arith.mulf %576, %557 : vector<8x128xf32>
    %586 = arith.mulf %570, %578 : vector<8x128xf32>
    %587 = arith.addf %585, %586 : vector<8x128xf32>
    %588 = math.tanh %587 : vector<8x128xf32>
    %589 = arith.mulf %584, %588 : vector<8x128xf32>
    %c8_149 = arith.constant 8 : index
    %c0_150 = arith.constant 0 : index
    %590 = vector.load %arg7[%c8_149, %c0_150] : memref<64x128xf32, #tpu.memory_space<vmem>>, vector<8x128xf32>
    tpu.vector_store %arg7[%c8_149, %c0_150], %589 {strides = array<i32>} : memref<64x128xf32, #tpu.memory_space<vmem>>, vector<8x128xf32>,
    %591 = vector.extract_strided_slice %528 {offsets = [16, 0], sizes = [8, 512], strides = [1, 1]} : vector<64x512xf32> to vector<8x512xf32>
    %592 = arith.truncf %589 : vector<8x128xf32> to vector<8x128xbf16>
    %cst_151 = arith.constant dense<0.000000e+00> : vector<8x512xf32>
    %593 = tpu.matmul %592, %521, %cst_151 {dimension_numbers = #tpu.dot_dimension_numbers<[1], [0], [0], [1], [0, 0, 1, 1], [], []>} : vector<8x128xbf16>, vector<128x512xbf16>, vector<8x512xf32> -> vector<8x512xf32>
    %594 = arith.addf %591, %593 : vector<8x512xf32>
    %595 = vector.extract_strided_slice %594 {offsets = [0, 0], sizes = [8, 128], strides = [1, 1]} : vector<8x512xf32> to vector<8x128xf32>
    %596 = arith.negf %595 : vector<8x128xf32>
    %597 = math.exp %596 : vector<8x128xf32>
    %cst_152 = arith.constant 1.000000e+00 : f32
    %598 = vector.broadcast %cst_152 : f32 to vector<8x128xf32>
    %599 = arith.addf %598, %597 : vector<8x128xf32>
    %600 = arith.divf %598, %599 : vector<8x128xf32>
    %601 = vector.extract_strided_slice %594 {offsets = [0, 128], sizes = [8, 128], strides = [1, 1]} : vector<8x512xf32> to vector<8x128xf32>
    %602 = arith.negf %601 : vector<8x128xf32>
    %603 = math.exp %602 : vector<8x128xf32>
    %cst_153 = arith.constant 1.000000e+00 : f32
    %604 = vector.broadcast %cst_153 : f32 to vector<8x128xf32>
    %605 = arith.addf %604, %603 : vector<8x128xf32>
    %606 = arith.divf %604, %605 : vector<8x128xf32>
    %607 = vector.extract_strided_slice %594 {offsets = [0, 256], sizes = [8, 128], strides = [1, 1]} : vector<8x512xf32> to vector<8x128xf32>
    %608 = math.tanh %607 : vector<8x128xf32>
    %609 = vector.extract_strided_slice %594 {offsets = [0, 384], sizes = [8, 128], strides = [1, 1]} : vector<8x512xf32> to vector<8x128xf32>
    %610 = arith.negf %609 : vector<8x128xf32>
    %611 = math.exp %610 : vector<8x128xf32>
    %cst_154 = arith.constant 1.000000e+00 : f32
    %612 = vector.broadcast %cst_154 : f32 to vector<8x128xf32>
    %613 = arith.addf %612, %611 : vector<8x128xf32>
    %614 = arith.divf %612, %613 : vector<8x128xf32>
    %615 = arith.mulf %606, %587 : vector<8x128xf32>
    %616 = arith.mulf %600, %608 : vector<8x128xf32>
    %617 = arith.addf %615, %616 : vector<8x128xf32>
    %618 = math.tanh %617 : vector<8x128xf32>
    %619 = arith.mulf %614, %618 : vector<8x128xf32>
    %c16_155 = arith.constant 16 : index
    %c0_156 = arith.constant 0 : index
    %620 = vector.load %arg7[%c16_155, %c0_156] : memref<64x128xf32, #tpu.memory_space<vmem>>, vector<8x128xf32>
    tpu.vector_store %arg7[%c16_155, %c0_156], %619 {strides = array<i32>} : memref<64x128xf32, #tpu.memory_space<vmem>>, vector<8x128xf32>,
    %621 = vector.extract_strided_slice %528 {offsets = [24, 0], sizes = [8, 512], strides = [1, 1]} : vector<64x512xf32> to vector<8x512xf32>
    %622 = arith.truncf %619 : vector<8x128xf32> to vector<8x128xbf16>
    %cst_157 = arith.constant dense<0.000000e+00> : vector<8x512xf32>
    %623 = tpu.matmul %622, %521, %cst_157 {dimension_numbers = #tpu.dot_dimension_numbers<[1], [0], [0], [1], [0, 0, 1, 1], [], []>} : vector<8x128xbf16>, vector<128x512xbf16>, vector<8x512xf32> -> vector<8x512xf32>
    %624 = arith.addf %621, %623 : vector<8x512xf32>
    %625 = vector.extract_strided_slice %624 {offsets = [0, 0], sizes = [8, 128], strides = [1, 1]} : vector<8x512xf32> to vector<8x128xf32>
    %626 = arith.negf %625 : vector<8x128xf32>
    %627 = math.exp %626 : vector<8x128xf32>
    %cst_158 = arith.constant 1.000000e+00 : f32
    %628 = vector.broadcast %cst_158 : f32 to vector<8x128xf32>
    %629 = arith.addf %628, %627 : vector<8x128xf32>
    %630 = arith.divf %628, %629 : vector<8x128xf32>
    %631 = vector.extract_strided_slice %624 {offsets = [0, 128], sizes = [8, 128], strides = [1, 1]} : vector<8x512xf32> to vector<8x128xf32>
    %632 = arith.negf %631 : vector<8x128xf32>
    %633 = math.exp %632 : vector<8x128xf32>
    %cst_159 = arith.constant 1.000000e+00 : f32
    %634 = vector.broadcast %cst_159 : f32 to vector<8x128xf32>
    %635 = arith.addf %634, %633 : vector<8x128xf32>
    %636 = arith.divf %634, %635 : vector<8x128xf32>
    %637 = vector.extract_strided_slice %624 {offsets = [0, 256], sizes = [8, 128], strides = [1, 1]} : vector<8x512xf32> to vector<8x128xf32>
    %638 = math.tanh %637 : vector<8x128xf32>
    %639 = vector.extract_strided_slice %624 {offsets = [0, 384], sizes = [8, 128], strides = [1, 1]} : vector<8x512xf32> to vector<8x128xf32>
    %640 = arith.negf %639 : vector<8x128xf32>
    %641 = math.exp %640 : vector<8x128xf32>
    %cst_160 = arith.constant 1.000000e+00 : f32
    %642 = vector.broadcast %cst_160 : f32 to vector<8x128xf32>
    %643 = arith.addf %642, %641 : vector<8x128xf32>
    %644 = arith.divf %642, %643 : vector<8x128xf32>
    %645 = arith.mulf %636, %617 : vector<8x128xf32>
    %646 = arith.mulf %630, %638 : vector<8x128xf32>
    %647 = arith.addf %645, %646 : vector<8x128xf32>
    %648 = math.tanh %647 : vector<8x128xf32>
    %649 = arith.mulf %644, %648 : vector<8x128xf32>
    %c24_161 = arith.constant 24 : index
    %c0_162 = arith.constant 0 : index
    %650 = vector.load %arg7[%c24_161, %c0_162] : memref<64x128xf32, #tpu.memory_space<vmem>>, vector<8x128xf32>
    tpu.vector_store %arg7[%c24_161, %c0_162], %649 {strides = array<i32>} : memref<64x128xf32, #tpu.memory_space<vmem>>, vector<8x128xf32>,
    %651 = vector.extract_strided_slice %528 {offsets = [32, 0], sizes = [8, 512], strides = [1, 1]} : vector<64x512xf32> to vector<8x512xf32>
    %652 = arith.truncf %649 : vector<8x128xf32> to vector<8x128xbf16>
    %cst_163 = arith.constant dense<0.000000e+00> : vector<8x512xf32>
    %653 = tpu.matmul %652, %521, %cst_163 {dimension_numbers = #tpu.dot_dimension_numbers<[1], [0], [0], [1], [0, 0, 1, 1], [], []>} : vector<8x128xbf16>, vector<128x512xbf16>, vector<8x512xf32> -> vector<8x512xf32>
    %654 = arith.addf %651, %653 : vector<8x512xf32>
    %655 = vector.extract_strided_slice %654 {offsets = [0, 0], sizes = [8, 128], strides = [1, 1]} : vector<8x512xf32> to vector<8x128xf32>
    %656 = arith.negf %655 : vector<8x128xf32>
    %657 = math.exp %656 : vector<8x128xf32>
    %cst_164 = arith.constant 1.000000e+00 : f32
    %658 = vector.broadcast %cst_164 : f32 to vector<8x128xf32>
    %659 = arith.addf %658, %657 : vector<8x128xf32>
    %660 = arith.divf %658, %659 : vector<8x128xf32>
    %661 = vector.extract_strided_slice %654 {offsets = [0, 128], sizes = [8, 128], strides = [1, 1]} : vector<8x512xf32> to vector<8x128xf32>
    %662 = arith.negf %661 : vector<8x128xf32>
    %663 = math.exp %662 : vector<8x128xf32>
    %cst_165 = arith.constant 1.000000e+00 : f32
    %664 = vector.broadcast %cst_165 : f32 to vector<8x128xf32>
    %665 = arith.addf %664, %663 : vector<8x128xf32>
    %666 = arith.divf %664, %665 : vector<8x128xf32>
    %667 = vector.extract_strided_slice %654 {offsets = [0, 256], sizes = [8, 128], strides = [1, 1]} : vector<8x512xf32> to vector<8x128xf32>
    %668 = math.tanh %667 : vector<8x128xf32>
    %669 = vector.extract_strided_slice %654 {offsets = [0, 384], sizes = [8, 128], strides = [1, 1]} : vector<8x512xf32> to vector<8x128xf32>
    %670 = arith.negf %669 : vector<8x128xf32>
    %671 = math.exp %670 : vector<8x128xf32>
    %cst_166 = arith.constant 1.000000e+00 : f32
    %672 = vector.broadcast %cst_166 : f32 to vector<8x128xf32>
    %673 = arith.addf %672, %671 : vector<8x128xf32>
    %674 = arith.divf %672, %673 : vector<8x128xf32>
    %675 = arith.mulf %666, %647 : vector<8x128xf32>
    %676 = arith.mulf %660, %668 : vector<8x128xf32>
    %677 = arith.addf %675, %676 : vector<8x128xf32>
    %678 = math.tanh %677 : vector<8x128xf32>
    %679 = arith.mulf %674, %678 : vector<8x128xf32>
    %c32_167 = arith.constant 32 : index
    %c0_168 = arith.constant 0 : index
    %680 = vector.load %arg7[%c32_167, %c0_168] : memref<64x128xf32, #tpu.memory_space<vmem>>, vector<8x128xf32>
    tpu.vector_store %arg7[%c32_167, %c0_168], %679 {strides = array<i32>} : memref<64x128xf32, #tpu.memory_space<vmem>>, vector<8x128xf32>,
    %681 = vector.extract_strided_slice %528 {offsets = [40, 0], sizes = [8, 512], strides = [1, 1]} : vector<64x512xf32> to vector<8x512xf32>
    %682 = arith.truncf %679 : vector<8x128xf32> to vector<8x128xbf16>
    %cst_169 = arith.constant dense<0.000000e+00> : vector<8x512xf32>
    %683 = tpu.matmul %682, %521, %cst_169 {dimension_numbers = #tpu.dot_dimension_numbers<[1], [0], [0], [1], [0, 0, 1, 1], [], []>} : vector<8x128xbf16>, vector<128x512xbf16>, vector<8x512xf32> -> vector<8x512xf32>
    %684 = arith.addf %681, %683 : vector<8x512xf32>
    %685 = vector.extract_strided_slice %684 {offsets = [0, 0], sizes = [8, 128], strides = [1, 1]} : vector<8x512xf32> to vector<8x128xf32>
    %686 = arith.negf %685 : vector<8x128xf32>
    %687 = math.exp %686 : vector<8x128xf32>
    %cst_170 = arith.constant 1.000000e+00 : f32
    %688 = vector.broadcast %cst_170 : f32 to vector<8x128xf32>
    %689 = arith.addf %688, %687 : vector<8x128xf32>
    %690 = arith.divf %688, %689 : vector<8x128xf32>
    %691 = vector.extract_strided_slice %684 {offsets = [0, 128], sizes = [8, 128], strides = [1, 1]} : vector<8x512xf32> to vector<8x128xf32>
    %692 = arith.negf %691 : vector<8x128xf32>
    %693 = math.exp %692 : vector<8x128xf32>
    %cst_171 = arith.constant 1.000000e+00 : f32
    %694 = vector.broadcast %cst_171 : f32 to vector<8x128xf32>
    %695 = arith.addf %694, %693 : vector<8x128xf32>
    %696 = arith.divf %694, %695 : vector<8x128xf32>
    %697 = vector.extract_strided_slice %684 {offsets = [0, 256], sizes = [8, 128], strides = [1, 1]} : vector<8x512xf32> to vector<8x128xf32>
    %698 = math.tanh %697 : vector<8x128xf32>
    %699 = vector.extract_strided_slice %684 {offsets = [0, 384], sizes = [8, 128], strides = [1, 1]} : vector<8x512xf32> to vector<8x128xf32>
    %700 = arith.negf %699 : vector<8x128xf32>
    %701 = math.exp %700 : vector<8x128xf32>
    %cst_172 = arith.constant 1.000000e+00 : f32
    %702 = vector.broadcast %cst_172 : f32 to vector<8x128xf32>
    %703 = arith.addf %702, %701 : vector<8x128xf32>
    %704 = arith.divf %702, %703 : vector<8x128xf32>
    %705 = arith.mulf %696, %677 : vector<8x128xf32>
    %706 = arith.mulf %690, %698 : vector<8x128xf32>
    %707 = arith.addf %705, %706 : vector<8x128xf32>
    %708 = math.tanh %707 : vector<8x128xf32>
    %709 = arith.mulf %704, %708 : vector<8x128xf32>
    %c40_173 = arith.constant 40 : index
    %c0_174 = arith.constant 0 : index
    %710 = vector.load %arg7[%c40_173, %c0_174] : memref<64x128xf32, #tpu.memory_space<vmem>>, vector<8x128xf32>
    tpu.vector_store %arg7[%c40_173, %c0_174], %709 {strides = array<i32>} : memref<64x128xf32, #tpu.memory_space<vmem>>, vector<8x128xf32>,
    %711 = vector.extract_strided_slice %528 {offsets = [48, 0], sizes = [8, 512], strides = [1, 1]} : vector<64x512xf32> to vector<8x512xf32>
    %712 = arith.truncf %709 : vector<8x128xf32> to vector<8x128xbf16>
    %cst_175 = arith.constant dense<0.000000e+00> : vector<8x512xf32>
    %713 = tpu.matmul %712, %521, %cst_175 {dimension_numbers = #tpu.dot_dimension_numbers<[1], [0], [0], [1], [0, 0, 1, 1], [], []>} : vector<8x128xbf16>, vector<128x512xbf16>, vector<8x512xf32> -> vector<8x512xf32>
    %714 = arith.addf %711, %713 : vector<8x512xf32>
    %715 = vector.extract_strided_slice %714 {offsets = [0, 0], sizes = [8, 128], strides = [1, 1]} : vector<8x512xf32> to vector<8x128xf32>
    %716 = arith.negf %715 : vector<8x128xf32>
    %717 = math.exp %716 : vector<8x128xf32>
    %cst_176 = arith.constant 1.000000e+00 : f32
    %718 = vector.broadcast %cst_176 : f32 to vector<8x128xf32>
    %719 = arith.addf %718, %717 : vector<8x128xf32>
    %720 = arith.divf %718, %719 : vector<8x128xf32>
    %721 = vector.extract_strided_slice %714 {offsets = [0, 128], sizes = [8, 128], strides = [1, 1]} : vector<8x512xf32> to vector<8x128xf32>
    %722 = arith.negf %721 : vector<8x128xf32>
    %723 = math.exp %722 : vector<8x128xf32>
    %cst_177 = arith.constant 1.000000e+00 : f32
    %724 = vector.broadcast %cst_177 : f32 to vector<8x128xf32>
    %725 = arith.addf %724, %723 : vector<8x128xf32>
    %726 = arith.divf %724, %725 : vector<8x128xf32>
    %727 = vector.extract_strided_slice %714 {offsets = [0, 256], sizes = [8, 128], strides = [1, 1]} : vector<8x512xf32> to vector<8x128xf32>
    %728 = math.tanh %727 : vector<8x128xf32>
    %729 = vector.extract_strided_slice %714 {offsets = [0, 384], sizes = [8, 128], strides = [1, 1]} : vector<8x512xf32> to vector<8x128xf32>
    %730 = arith.negf %729 : vector<8x128xf32>
    %731 = math.exp %730 : vector<8x128xf32>
    %cst_178 = arith.constant 1.000000e+00 : f32
    %732 = vector.broadcast %cst_178 : f32 to vector<8x128xf32>
    %733 = arith.addf %732, %731 : vector<8x128xf32>
    %734 = arith.divf %732, %733 : vector<8x128xf32>
    %735 = arith.mulf %726, %707 : vector<8x128xf32>
    %736 = arith.mulf %720, %728 : vector<8x128xf32>
    %737 = arith.addf %735, %736 : vector<8x128xf32>
    %738 = math.tanh %737 : vector<8x128xf32>
    %739 = arith.mulf %734, %738 : vector<8x128xf32>
    %c48_179 = arith.constant 48 : index
    %c0_180 = arith.constant 0 : index
    %740 = vector.load %arg7[%c48_179, %c0_180] : memref<64x128xf32, #tpu.memory_space<vmem>>, vector<8x128xf32>
    tpu.vector_store %arg7[%c48_179, %c0_180], %739 {strides = array<i32>} : memref<64x128xf32, #tpu.memory_space<vmem>>, vector<8x128xf32>,
    %741 = vector.extract_strided_slice %528 {offsets = [56, 0], sizes = [8, 512], strides = [1, 1]} : vector<64x512xf32> to vector<8x512xf32>
    %742 = arith.truncf %739 : vector<8x128xf32> to vector<8x128xbf16>
    %cst_181 = arith.constant dense<0.000000e+00> : vector<8x512xf32>
    %743 = tpu.matmul %742, %521, %cst_181 {dimension_numbers = #tpu.dot_dimension_numbers<[1], [0], [0], [1], [0, 0, 1, 1], [], []>} : vector<8x128xbf16>, vector<128x512xbf16>, vector<8x512xf32> -> vector<8x512xf32>
    %744 = arith.addf %741, %743 : vector<8x512xf32>
    %745 = vector.extract_strided_slice %744 {offsets = [0, 0], sizes = [8, 128], strides = [1, 1]} : vector<8x512xf32> to vector<8x128xf32>
    %746 = arith.negf %745 : vector<8x128xf32>
    %747 = math.exp %746 : vector<8x128xf32>
    %cst_182 = arith.constant 1.000000e+00 : f32
    %748 = vector.broadcast %cst_182 : f32 to vector<8x128xf32>
    %749 = arith.addf %748, %747 : vector<8x128xf32>
    %750 = arith.divf %748, %749 : vector<8x128xf32>
    %751 = vector.extract_strided_slice %744 {offsets = [0, 128], sizes = [8, 128], strides = [1, 1]} : vector<8x512xf32> to vector<8x128xf32>
    %752 = arith.negf %751 : vector<8x128xf32>
    %753 = math.exp %752 : vector<8x128xf32>
    %cst_183 = arith.constant 1.000000e+00 : f32
    %754 = vector.broadcast %cst_183 : f32 to vector<8x128xf32>
    %755 = arith.addf %754, %753 : vector<8x128xf32>
    %756 = arith.divf %754, %755 : vector<8x128xf32>
    %757 = vector.extract_strided_slice %744 {offsets = [0, 256], sizes = [8, 128], strides = [1, 1]} : vector<8x512xf32> to vector<8x128xf32>
    %758 = math.tanh %757 : vector<8x128xf32>
    %759 = vector.extract_strided_slice %744 {offsets = [0, 384], sizes = [8, 128], strides = [1, 1]} : vector<8x512xf32> to vector<8x128xf32>
    %760 = arith.negf %759 : vector<8x128xf32>
    %761 = math.exp %760 : vector<8x128xf32>
    %cst_184 = arith.constant 1.000000e+00 : f32
    %762 = vector.broadcast %cst_184 : f32 to vector<8x128xf32>
    %763 = arith.addf %762, %761 : vector<8x128xf32>
    %764 = arith.divf %762, %763 : vector<8x128xf32>
    %765 = arith.mulf %756, %737 : vector<8x128xf32>
    %766 = arith.mulf %750, %758 : vector<8x128xf32>
    %767 = arith.addf %765, %766 : vector<8x128xf32>
    %768 = math.tanh %767 : vector<8x128xf32>
    %769 = arith.mulf %764, %768 : vector<8x128xf32>
    %c56_185 = arith.constant 56 : index
    %c0_186 = arith.constant 0 : index
    %770 = vector.load %arg7[%c56_185, %c0_186] : memref<64x128xf32, #tpu.memory_space<vmem>>, vector<8x128xf32>
    tpu.vector_store %arg7[%c56_185, %c0_186], %769 {strides = array<i32>} : memref<64x128xf32, #tpu.memory_space<vmem>>, vector<8x128xf32>,
    %c2_187 = arith.constant 2 : index
    %c0_188 = arith.constant 0 : index
    %c0_189 = arith.constant 0 : index
    %771 = vector.load %arg5[%c2_187, %c0_188, %c0_189] : memref<5x8x128xf32, #tpu.memory_space<vmem>>, vector<1x8x128xf32>
    %772 = vector.shape_cast %771 : vector<1x8x128xf32> to vector<8x128xf32>
    %773 = vector.shape_cast %769 : vector<8x128xf32> to vector<1x8x128xf32>
    tpu.vector_store %arg5[%c2_187, %c0_188, %c0_189], %773 {strides = array<i32>} : memref<5x8x128xf32, #tpu.memory_space<vmem>>, vector<1x8x128xf32>,
    %c2_190 = arith.constant 2 : index
    %c0_191 = arith.constant 0 : index
    %c0_192 = arith.constant 0 : index
    %774 = vector.load %arg6[%c2_190, %c0_191, %c0_192] : memref<5x8x128xf32, #tpu.memory_space<vmem>>, vector<1x8x128xf32>
    %775 = vector.shape_cast %774 : vector<1x8x128xf32> to vector<8x128xf32>
    %776 = vector.shape_cast %767 : vector<8x128xf32> to vector<1x8x128xf32>
    tpu.vector_store %arg6[%c2_190, %c0_191, %c0_192], %776 {strides = array<i32>} : memref<5x8x128xf32, #tpu.memory_space<vmem>>, vector<1x8x128xf32>,
    %c3 = arith.constant 3 : index
    %c0_193 = arith.constant 0 : index
    %c0_194 = arith.constant 0 : index
    %777 = vector.load %arg1[%c3, %c0_193, %c0_194] : memref<5x128x512xbf16, #tpu.memory_space<vmem>>, vector<1x128x512xbf16>
    %778 = vector.shape_cast %777 : vector<1x128x512xbf16> to vector<128x512xbf16>
    %c3_195 = arith.constant 3 : index
    %c0_196 = arith.constant 0 : index
    %c0_197 = arith.constant 0 : index
    %779 = vector.load %arg2[%c3_195, %c0_196, %c0_197] : memref<5x128x512xbf16, #tpu.memory_space<vmem>>, vector<1x128x512xbf16>
    %780 = vector.shape_cast %779 : vector<1x128x512xbf16> to vector<128x512xbf16>
    %c3_198 = arith.constant 3 : index
    %c0_199 = arith.constant 0 : index
    %c0_200 = arith.constant 0 : index
    %781 = vector.load %arg3[%c3_198, %c0_199, %c0_200] : memref<5x1x512xf32, #tpu.memory_space<vmem>>, vector<1x1x512xf32>
    %782 = vector.shape_cast %781 : vector<1x1x512xf32> to vector<1x512xf32>
    %c0_201 = arith.constant 0 : index
    %c0_202 = arith.constant 0 : index
    %783 = vector.load %arg7[%c0_201, %c0_202] : memref<64x128xf32, #tpu.memory_space<vmem>>, vector<64x128xf32>
    %784 = arith.truncf %783 : vector<64x128xf32> to vector<64x128xbf16>
    %cst_203 = arith.constant dense<0.000000e+00> : vector<64x512xf32>
    %785 = tpu.matmul %784, %778, %cst_203 {dimension_numbers = #tpu.dot_dimension_numbers<[1], [0], [0], [1], [0, 0, 1, 1], [], []>} : vector<64x128xbf16>, vector<128x512xbf16>, vector<64x512xf32> -> vector<64x512xf32>
    %786 = vector.broadcast %782 : vector<1x512xf32> to vector<64x512xf32>
    %787 = arith.addf %785, %786 : vector<64x512xf32>
    %cst_204 = arith.constant 0.000000e+00 : f32
    %788 = vector.broadcast %cst_204 : f32 to vector<8x128xf32>
    %cst_205 = arith.constant 0.000000e+00 : f32
    %789 = vector.broadcast %cst_205 : f32 to vector<8x128xf32>
    %790 = vector.extract_strided_slice %787 {offsets = [0, 0], sizes = [8, 512], strides = [1, 1]} : vector<64x512xf32> to vector<8x512xf32>
    %791 = arith.truncf %788 : vector<8x128xf32> to vector<8x128xbf16>
    %cst_206 = arith.constant dense<0.000000e+00> : vector<8x512xf32>
    %792 = tpu.matmul %791, %780, %cst_206 {dimension_numbers = #tpu.dot_dimension_numbers<[1], [0], [0], [1], [0, 0, 1, 1], [], []>} : vector<8x128xbf16>, vector<128x512xbf16>, vector<8x512xf32> -> vector<8x512xf32>
    %793 = arith.addf %790, %792 : vector<8x512xf32>
    %794 = vector.extract_strided_slice %793 {offsets = [0, 0], sizes = [8, 128], strides = [1, 1]} : vector<8x512xf32> to vector<8x128xf32>
    %795 = arith.negf %794 : vector<8x128xf32>
    %796 = math.exp %795 : vector<8x128xf32>
    %cst_207 = arith.constant 1.000000e+00 : f32
    %797 = vector.broadcast %cst_207 : f32 to vector<8x128xf32>
    %798 = arith.addf %797, %796 : vector<8x128xf32>
    %799 = arith.divf %797, %798 : vector<8x128xf32>
    %800 = vector.extract_strided_slice %793 {offsets = [0, 128], sizes = [8, 128], strides = [1, 1]} : vector<8x512xf32> to vector<8x128xf32>
    %801 = arith.negf %800 : vector<8x128xf32>
    %802 = math.exp %801 : vector<8x128xf32>
    %cst_208 = arith.constant 1.000000e+00 : f32
    %803 = vector.broadcast %cst_208 : f32 to vector<8x128xf32>
    %804 = arith.addf %803, %802 : vector<8x128xf32>
    %805 = arith.divf %803, %804 : vector<8x128xf32>
    %806 = vector.extract_strided_slice %793 {offsets = [0, 256], sizes = [8, 128], strides = [1, 1]} : vector<8x512xf32> to vector<8x128xf32>
    %807 = math.tanh %806 : vector<8x128xf32>
    %808 = vector.extract_strided_slice %793 {offsets = [0, 384], sizes = [8, 128], strides = [1, 1]} : vector<8x512xf32> to vector<8x128xf32>
    %809 = arith.negf %808 : vector<8x128xf32>
    %810 = math.exp %809 : vector<8x128xf32>
    %cst_209 = arith.constant 1.000000e+00 : f32
    %811 = vector.broadcast %cst_209 : f32 to vector<8x128xf32>
    %812 = arith.addf %811, %810 : vector<8x128xf32>
    %813 = arith.divf %811, %812 : vector<8x128xf32>
    %814 = arith.mulf %805, %789 : vector<8x128xf32>
    %815 = arith.mulf %799, %807 : vector<8x128xf32>
    %816 = arith.addf %814, %815 : vector<8x128xf32>
    %817 = math.tanh %816 : vector<8x128xf32>
    %818 = arith.mulf %813, %817 : vector<8x128xf32>
    %c0_210 = arith.constant 0 : index
    %c0_211 = arith.constant 0 : index
    %819 = vector.load %arg7[%c0_210, %c0_211] : memref<64x128xf32, #tpu.memory_space<vmem>>, vector<8x128xf32>
    tpu.vector_store %arg7[%c0_210, %c0_211], %818 {strides = array<i32>} : memref<64x128xf32, #tpu.memory_space<vmem>>, vector<8x128xf32>,
    %820 = vector.extract_strided_slice %787 {offsets = [8, 0], sizes = [8, 512], strides = [1, 1]} : vector<64x512xf32> to vector<8x512xf32>
    %821 = arith.truncf %818 : vector<8x128xf32> to vector<8x128xbf16>
    %cst_212 = arith.constant dense<0.000000e+00> : vector<8x512xf32>
    %822 = tpu.matmul %821, %780, %cst_212 {dimension_numbers = #tpu.dot_dimension_numbers<[1], [0], [0], [1], [0, 0, 1, 1], [], []>} : vector<8x128xbf16>, vector<128x512xbf16>, vector<8x512xf32> -> vector<8x512xf32>
    %823 = arith.addf %820, %822 : vector<8x512xf32>
    %824 = vector.extract_strided_slice %823 {offsets = [0, 0], sizes = [8, 128], strides = [1, 1]} : vector<8x512xf32> to vector<8x128xf32>
    %825 = arith.negf %824 : vector<8x128xf32>
    %826 = math.exp %825 : vector<8x128xf32>
    %cst_213 = arith.constant 1.000000e+00 : f32
    %827 = vector.broadcast %cst_213 : f32 to vector<8x128xf32>
    %828 = arith.addf %827, %826 : vector<8x128xf32>
    %829 = arith.divf %827, %828 : vector<8x128xf32>
    %830 = vector.extract_strided_slice %823 {offsets = [0, 128], sizes = [8, 128], strides = [1, 1]} : vector<8x512xf32> to vector<8x128xf32>
    %831 = arith.negf %830 : vector<8x128xf32>
    %832 = math.exp %831 : vector<8x128xf32>
    %cst_214 = arith.constant 1.000000e+00 : f32
    %833 = vector.broadcast %cst_214 : f32 to vector<8x128xf32>
    %834 = arith.addf %833, %832 : vector<8x128xf32>
    %835 = arith.divf %833, %834 : vector<8x128xf32>
    %836 = vector.extract_strided_slice %823 {offsets = [0, 256], sizes = [8, 128], strides = [1, 1]} : vector<8x512xf32> to vector<8x128xf32>
    %837 = math.tanh %836 : vector<8x128xf32>
    %838 = vector.extract_strided_slice %823 {offsets = [0, 384], sizes = [8, 128], strides = [1, 1]} : vector<8x512xf32> to vector<8x128xf32>
    %839 = arith.negf %838 : vector<8x128xf32>
    %840 = math.exp %839 : vector<8x128xf32>
    %cst_215 = arith.constant 1.000000e+00 : f32
    %841 = vector.broadcast %cst_215 : f32 to vector<8x128xf32>
    %842 = arith.addf %841, %840 : vector<8x128xf32>
    %843 = arith.divf %841, %842 : vector<8x128xf32>
    %844 = arith.mulf %835, %816 : vector<8x128xf32>
    %845 = arith.mulf %829, %837 : vector<8x128xf32>
    %846 = arith.addf %844, %845 : vector<8x128xf32>
    %847 = math.tanh %846 : vector<8x128xf32>
    %848 = arith.mulf %843, %847 : vector<8x128xf32>
    %c8_216 = arith.constant 8 : index
    %c0_217 = arith.constant 0 : index
    %849 = vector.load %arg7[%c8_216, %c0_217] : memref<64x128xf32, #tpu.memory_space<vmem>>, vector<8x128xf32>
    tpu.vector_store %arg7[%c8_216, %c0_217], %848 {strides = array<i32>} : memref<64x128xf32, #tpu.memory_space<vmem>>, vector<8x128xf32>,
    %850 = vector.extract_strided_slice %787 {offsets = [16, 0], sizes = [8, 512], strides = [1, 1]} : vector<64x512xf32> to vector<8x512xf32>
    %851 = arith.truncf %848 : vector<8x128xf32> to vector<8x128xbf16>
    %cst_218 = arith.constant dense<0.000000e+00> : vector<8x512xf32>
    %852 = tpu.matmul %851, %780, %cst_218 {dimension_numbers = #tpu.dot_dimension_numbers<[1], [0], [0], [1], [0, 0, 1, 1], [], []>} : vector<8x128xbf16>, vector<128x512xbf16>, vector<8x512xf32> -> vector<8x512xf32>
    %853 = arith.addf %850, %852 : vector<8x512xf32>
    %854 = vector.extract_strided_slice %853 {offsets = [0, 0], sizes = [8, 128], strides = [1, 1]} : vector<8x512xf32> to vector<8x128xf32>
    %855 = arith.negf %854 : vector<8x128xf32>
    %856 = math.exp %855 : vector<8x128xf32>
    %cst_219 = arith.constant 1.000000e+00 : f32
    %857 = vector.broadcast %cst_219 : f32 to vector<8x128xf32>
    %858 = arith.addf %857, %856 : vector<8x128xf32>
    %859 = arith.divf %857, %858 : vector<8x128xf32>
    %860 = vector.extract_strided_slice %853 {offsets = [0, 128], sizes = [8, 128], strides = [1, 1]} : vector<8x512xf32> to vector<8x128xf32>
    %861 = arith.negf %860 : vector<8x128xf32>
    %862 = math.exp %861 : vector<8x128xf32>
    %cst_220 = arith.constant 1.000000e+00 : f32
    %863 = vector.broadcast %cst_220 : f32 to vector<8x128xf32>
    %864 = arith.addf %863, %862 : vector<8x128xf32>
    %865 = arith.divf %863, %864 : vector<8x128xf32>
    %866 = vector.extract_strided_slice %853 {offsets = [0, 256], sizes = [8, 128], strides = [1, 1]} : vector<8x512xf32> to vector<8x128xf32>
    %867 = math.tanh %866 : vector<8x128xf32>
    %868 = vector.extract_strided_slice %853 {offsets = [0, 384], sizes = [8, 128], strides = [1, 1]} : vector<8x512xf32> to vector<8x128xf32>
    %869 = arith.negf %868 : vector<8x128xf32>
    %870 = math.exp %869 : vector<8x128xf32>
    %cst_221 = arith.constant 1.000000e+00 : f32
    %871 = vector.broadcast %cst_221 : f32 to vector<8x128xf32>
    %872 = arith.addf %871, %870 : vector<8x128xf32>
    %873 = arith.divf %871, %872 : vector<8x128xf32>
    %874 = arith.mulf %865, %846 : vector<8x128xf32>
    %875 = arith.mulf %859, %867 : vector<8x128xf32>
    %876 = arith.addf %874, %875 : vector<8x128xf32>
    %877 = math.tanh %876 : vector<8x128xf32>
    %878 = arith.mulf %873, %877 : vector<8x128xf32>
    %c16_222 = arith.constant 16 : index
    %c0_223 = arith.constant 0 : index
    %879 = vector.load %arg7[%c16_222, %c0_223] : memref<64x128xf32, #tpu.memory_space<vmem>>, vector<8x128xf32>
    tpu.vector_store %arg7[%c16_222, %c0_223], %878 {strides = array<i32>} : memref<64x128xf32, #tpu.memory_space<vmem>>, vector<8x128xf32>,
    %880 = vector.extract_strided_slice %787 {offsets = [24, 0], sizes = [8, 512], strides = [1, 1]} : vector<64x512xf32> to vector<8x512xf32>
    %881 = arith.truncf %878 : vector<8x128xf32> to vector<8x128xbf16>
    %cst_224 = arith.constant dense<0.000000e+00> : vector<8x512xf32>
    %882 = tpu.matmul %881, %780, %cst_224 {dimension_numbers = #tpu.dot_dimension_numbers<[1], [0], [0], [1], [0, 0, 1, 1], [], []>} : vector<8x128xbf16>, vector<128x512xbf16>, vector<8x512xf32> -> vector<8x512xf32>
    %883 = arith.addf %880, %882 : vector<8x512xf32>
    %884 = vector.extract_strided_slice %883 {offsets = [0, 0], sizes = [8, 128], strides = [1, 1]} : vector<8x512xf32> to vector<8x128xf32>
    %885 = arith.negf %884 : vector<8x128xf32>
    %886 = math.exp %885 : vector<8x128xf32>
    %cst_225 = arith.constant 1.000000e+00 : f32
    %887 = vector.broadcast %cst_225 : f32 to vector<8x128xf32>
    %888 = arith.addf %887, %886 : vector<8x128xf32>
    %889 = arith.divf %887, %888 : vector<8x128xf32>
    %890 = vector.extract_strided_slice %883 {offsets = [0, 128], sizes = [8, 128], strides = [1, 1]} : vector<8x512xf32> to vector<8x128xf32>
    %891 = arith.negf %890 : vector<8x128xf32>
    %892 = math.exp %891 : vector<8x128xf32>
    %cst_226 = arith.constant 1.000000e+00 : f32
    %893 = vector.broadcast %cst_226 : f32 to vector<8x128xf32>
    %894 = arith.addf %893, %892 : vector<8x128xf32>
    %895 = arith.divf %893, %894 : vector<8x128xf32>
    %896 = vector.extract_strided_slice %883 {offsets = [0, 256], sizes = [8, 128], strides = [1, 1]} : vector<8x512xf32> to vector<8x128xf32>
    %897 = math.tanh %896 : vector<8x128xf32>
    %898 = vector.extract_strided_slice %883 {offsets = [0, 384], sizes = [8, 128], strides = [1, 1]} : vector<8x512xf32> to vector<8x128xf32>
    %899 = arith.negf %898 : vector<8x128xf32>
    %900 = math.exp %899 : vector<8x128xf32>
    %cst_227 = arith.constant 1.000000e+00 : f32
    %901 = vector.broadcast %cst_227 : f32 to vector<8x128xf32>
    %902 = arith.addf %901, %900 : vector<8x128xf32>
    %903 = arith.divf %901, %902 : vector<8x128xf32>
    %904 = arith.mulf %895, %876 : vector<8x128xf32>
    %905 = arith.mulf %889, %897 : vector<8x128xf32>
    %906 = arith.addf %904, %905 : vector<8x128xf32>
    %907 = math.tanh %906 : vector<8x128xf32>
    %908 = arith.mulf %903, %907 : vector<8x128xf32>
    %c24_228 = arith.constant 24 : index
    %c0_229 = arith.constant 0 : index
    %909 = vector.load %arg7[%c24_228, %c0_229] : memref<64x128xf32, #tpu.memory_space<vmem>>, vector<8x128xf32>
    tpu.vector_store %arg7[%c24_228, %c0_229], %908 {strides = array<i32>} : memref<64x128xf32, #tpu.memory_space<vmem>>, vector<8x128xf32>,
    %910 = vector.extract_strided_slice %787 {offsets = [32, 0], sizes = [8, 512], strides = [1, 1]} : vector<64x512xf32> to vector<8x512xf32>
    %911 = arith.truncf %908 : vector<8x128xf32> to vector<8x128xbf16>
    %cst_230 = arith.constant dense<0.000000e+00> : vector<8x512xf32>
    %912 = tpu.matmul %911, %780, %cst_230 {dimension_numbers = #tpu.dot_dimension_numbers<[1], [0], [0], [1], [0, 0, 1, 1], [], []>} : vector<8x128xbf16>, vector<128x512xbf16>, vector<8x512xf32> -> vector<8x512xf32>
    %913 = arith.addf %910, %912 : vector<8x512xf32>
    %914 = vector.extract_strided_slice %913 {offsets = [0, 0], sizes = [8, 128], strides = [1, 1]} : vector<8x512xf32> to vector<8x128xf32>
    %915 = arith.negf %914 : vector<8x128xf32>
    %916 = math.exp %915 : vector<8x128xf32>
    %cst_231 = arith.constant 1.000000e+00 : f32
    %917 = vector.broadcast %cst_231 : f32 to vector<8x128xf32>
    %918 = arith.addf %917, %916 : vector<8x128xf32>
    %919 = arith.divf %917, %918 : vector<8x128xf32>
    %920 = vector.extract_strided_slice %913 {offsets = [0, 128], sizes = [8, 128], strides = [1, 1]} : vector<8x512xf32> to vector<8x128xf32>
    %921 = arith.negf %920 : vector<8x128xf32>
    %922 = math.exp %921 : vector<8x128xf32>
    %cst_232 = arith.constant 1.000000e+00 : f32
    %923 = vector.broadcast %cst_232 : f32 to vector<8x128xf32>
    %924 = arith.addf %923, %922 : vector<8x128xf32>
    %925 = arith.divf %923, %924 : vector<8x128xf32>
    %926 = vector.extract_strided_slice %913 {offsets = [0, 256], sizes = [8, 128], strides = [1, 1]} : vector<8x512xf32> to vector<8x128xf32>
    %927 = math.tanh %926 : vector<8x128xf32>
    %928 = vector.extract_strided_slice %913 {offsets = [0, 384], sizes = [8, 128], strides = [1, 1]} : vector<8x512xf32> to vector<8x128xf32>
    %929 = arith.negf %928 : vector<8x128xf32>
    %930 = math.exp %929 : vector<8x128xf32>
    %cst_233 = arith.constant 1.000000e+00 : f32
    %931 = vector.broadcast %cst_233 : f32 to vector<8x128xf32>
    %932 = arith.addf %931, %930 : vector<8x128xf32>
    %933 = arith.divf %931, %932 : vector<8x128xf32>
    %934 = arith.mulf %925, %906 : vector<8x128xf32>
    %935 = arith.mulf %919, %927 : vector<8x128xf32>
    %936 = arith.addf %934, %935 : vector<8x128xf32>
    %937 = math.tanh %936 : vector<8x128xf32>
    %938 = arith.mulf %933, %937 : vector<8x128xf32>
    %c32_234 = arith.constant 32 : index
    %c0_235 = arith.constant 0 : index
    %939 = vector.load %arg7[%c32_234, %c0_235] : memref<64x128xf32, #tpu.memory_space<vmem>>, vector<8x128xf32>
    tpu.vector_store %arg7[%c32_234, %c0_235], %938 {strides = array<i32>} : memref<64x128xf32, #tpu.memory_space<vmem>>, vector<8x128xf32>,
    %940 = vector.extract_strided_slice %787 {offsets = [40, 0], sizes = [8, 512], strides = [1, 1]} : vector<64x512xf32> to vector<8x512xf32>
    %941 = arith.truncf %938 : vector<8x128xf32> to vector<8x128xbf16>
    %cst_236 = arith.constant dense<0.000000e+00> : vector<8x512xf32>
    %942 = tpu.matmul %941, %780, %cst_236 {dimension_numbers = #tpu.dot_dimension_numbers<[1], [0], [0], [1], [0, 0, 1, 1], [], []>} : vector<8x128xbf16>, vector<128x512xbf16>, vector<8x512xf32> -> vector<8x512xf32>
    %943 = arith.addf %940, %942 : vector<8x512xf32>
    %944 = vector.extract_strided_slice %943 {offsets = [0, 0], sizes = [8, 128], strides = [1, 1]} : vector<8x512xf32> to vector<8x128xf32>
    %945 = arith.negf %944 : vector<8x128xf32>
    %946 = math.exp %945 : vector<8x128xf32>
    %cst_237 = arith.constant 1.000000e+00 : f32
    %947 = vector.broadcast %cst_237 : f32 to vector<8x128xf32>
    %948 = arith.addf %947, %946 : vector<8x128xf32>
    %949 = arith.divf %947, %948 : vector<8x128xf32>
    %950 = vector.extract_strided_slice %943 {offsets = [0, 128], sizes = [8, 128], strides = [1, 1]} : vector<8x512xf32> to vector<8x128xf32>
    %951 = arith.negf %950 : vector<8x128xf32>
    %952 = math.exp %951 : vector<8x128xf32>
    %cst_238 = arith.constant 1.000000e+00 : f32
    %953 = vector.broadcast %cst_238 : f32 to vector<8x128xf32>
    %954 = arith.addf %953, %952 : vector<8x128xf32>
    %955 = arith.divf %953, %954 : vector<8x128xf32>
    %956 = vector.extract_strided_slice %943 {offsets = [0, 256], sizes = [8, 128], strides = [1, 1]} : vector<8x512xf32> to vector<8x128xf32>
    %957 = math.tanh %956 : vector<8x128xf32>
    %958 = vector.extract_strided_slice %943 {offsets = [0, 384], sizes = [8, 128], strides = [1, 1]} : vector<8x512xf32> to vector<8x128xf32>
    %959 = arith.negf %958 : vector<8x128xf32>
    %960 = math.exp %959 : vector<8x128xf32>
    %cst_239 = arith.constant 1.000000e+00 : f32
    %961 = vector.broadcast %cst_239 : f32 to vector<8x128xf32>
    %962 = arith.addf %961, %960 : vector<8x128xf32>
    %963 = arith.divf %961, %962 : vector<8x128xf32>
    %964 = arith.mulf %955, %936 : vector<8x128xf32>
    %965 = arith.mulf %949, %957 : vector<8x128xf32>
    %966 = arith.addf %964, %965 : vector<8x128xf32>
    %967 = math.tanh %966 : vector<8x128xf32>
    %968 = arith.mulf %963, %967 : vector<8x128xf32>
    %c40_240 = arith.constant 40 : index
    %c0_241 = arith.constant 0 : index
    %969 = vector.load %arg7[%c40_240, %c0_241] : memref<64x128xf32, #tpu.memory_space<vmem>>, vector<8x128xf32>
    tpu.vector_store %arg7[%c40_240, %c0_241], %968 {strides = array<i32>} : memref<64x128xf32, #tpu.memory_space<vmem>>, vector<8x128xf32>,
    %970 = vector.extract_strided_slice %787 {offsets = [48, 0], sizes = [8, 512], strides = [1, 1]} : vector<64x512xf32> to vector<8x512xf32>
    %971 = arith.truncf %968 : vector<8x128xf32> to vector<8x128xbf16>
    %cst_242 = arith.constant dense<0.000000e+00> : vector<8x512xf32>
    %972 = tpu.matmul %971, %780, %cst_242 {dimension_numbers = #tpu.dot_dimension_numbers<[1], [0], [0], [1], [0, 0, 1, 1], [], []>} : vector<8x128xbf16>, vector<128x512xbf16>, vector<8x512xf32> -> vector<8x512xf32>
    %973 = arith.addf %970, %972 : vector<8x512xf32>
    %974 = vector.extract_strided_slice %973 {offsets = [0, 0], sizes = [8, 128], strides = [1, 1]} : vector<8x512xf32> to vector<8x128xf32>
    %975 = arith.negf %974 : vector<8x128xf32>
    %976 = math.exp %975 : vector<8x128xf32>
    %cst_243 = arith.constant 1.000000e+00 : f32
    %977 = vector.broadcast %cst_243 : f32 to vector<8x128xf32>
    %978 = arith.addf %977, %976 : vector<8x128xf32>
    %979 = arith.divf %977, %978 : vector<8x128xf32>
    %980 = vector.extract_strided_slice %973 {offsets = [0, 128], sizes = [8, 128], strides = [1, 1]} : vector<8x512xf32> to vector<8x128xf32>
    %981 = arith.negf %980 : vector<8x128xf32>
    %982 = math.exp %981 : vector<8x128xf32>
    %cst_244 = arith.constant 1.000000e+00 : f32
    %983 = vector.broadcast %cst_244 : f32 to vector<8x128xf32>
    %984 = arith.addf %983, %982 : vector<8x128xf32>
    %985 = arith.divf %983, %984 : vector<8x128xf32>
    %986 = vector.extract_strided_slice %973 {offsets = [0, 256], sizes = [8, 128], strides = [1, 1]} : vector<8x512xf32> to vector<8x128xf32>
    %987 = math.tanh %986 : vector<8x128xf32>
    %988 = vector.extract_strided_slice %973 {offsets = [0, 384], sizes = [8, 128], strides = [1, 1]} : vector<8x512xf32> to vector<8x128xf32>
    %989 = arith.negf %988 : vector<8x128xf32>
    %990 = math.exp %989 : vector<8x128xf32>
    %cst_245 = arith.constant 1.000000e+00 : f32
    %991 = vector.broadcast %cst_245 : f32 to vector<8x128xf32>
    %992 = arith.addf %991, %990 : vector<8x128xf32>
    %993 = arith.divf %991, %992 : vector<8x128xf32>
    %994 = arith.mulf %985, %966 : vector<8x128xf32>
    %995 = arith.mulf %979, %987 : vector<8x128xf32>
    %996 = arith.addf %994, %995 : vector<8x128xf32>
    %997 = math.tanh %996 : vector<8x128xf32>
    %998 = arith.mulf %993, %997 : vector<8x128xf32>
    %c48_246 = arith.constant 48 : index
    %c0_247 = arith.constant 0 : index
    %999 = vector.load %arg7[%c48_246, %c0_247] : memref<64x128xf32, #tpu.memory_space<vmem>>, vector<8x128xf32>
    tpu.vector_store %arg7[%c48_246, %c0_247], %998 {strides = array<i32>} : memref<64x128xf32, #tpu.memory_space<vmem>>, vector<8x128xf32>,
    %1000 = vector.extract_strided_slice %787 {offsets = [56, 0], sizes = [8, 512], strides = [1, 1]} : vector<64x512xf32> to vector<8x512xf32>
    %1001 = arith.truncf %998 : vector<8x128xf32> to vector<8x128xbf16>
    %cst_248 = arith.constant dense<0.000000e+00> : vector<8x512xf32>
    %1002 = tpu.matmul %1001, %780, %cst_248 {dimension_numbers = #tpu.dot_dimension_numbers<[1], [0], [0], [1], [0, 0, 1, 1], [], []>} : vector<8x128xbf16>, vector<128x512xbf16>, vector<8x512xf32> -> vector<8x512xf32>
    %1003 = arith.addf %1000, %1002 : vector<8x512xf32>
    %1004 = vector.extract_strided_slice %1003 {offsets = [0, 0], sizes = [8, 128], strides = [1, 1]} : vector<8x512xf32> to vector<8x128xf32>
    %1005 = arith.negf %1004 : vector<8x128xf32>
    %1006 = math.exp %1005 : vector<8x128xf32>
    %cst_249 = arith.constant 1.000000e+00 : f32
    %1007 = vector.broadcast %cst_249 : f32 to vector<8x128xf32>
    %1008 = arith.addf %1007, %1006 : vector<8x128xf32>
    %1009 = arith.divf %1007, %1008 : vector<8x128xf32>
    %1010 = vector.extract_strided_slice %1003 {offsets = [0, 128], sizes = [8, 128], strides = [1, 1]} : vector<8x512xf32> to vector<8x128xf32>
    %1011 = arith.negf %1010 : vector<8x128xf32>
    %1012 = math.exp %1011 : vector<8x128xf32>
    %cst_250 = arith.constant 1.000000e+00 : f32
    %1013 = vector.broadcast %cst_250 : f32 to vector<8x128xf32>
    %1014 = arith.addf %1013, %1012 : vector<8x128xf32>
    %1015 = arith.divf %1013, %1014 : vector<8x128xf32>
    %1016 = vector.extract_strided_slice %1003 {offsets = [0, 256], sizes = [8, 128], strides = [1, 1]} : vector<8x512xf32> to vector<8x128xf32>
    %1017 = math.tanh %1016 : vector<8x128xf32>
    %1018 = vector.extract_strided_slice %1003 {offsets = [0, 384], sizes = [8, 128], strides = [1, 1]} : vector<8x512xf32> to vector<8x128xf32>
    %1019 = arith.negf %1018 : vector<8x128xf32>
    %1020 = math.exp %1019 : vector<8x128xf32>
    %cst_251 = arith.constant 1.000000e+00 : f32
    %1021 = vector.broadcast %cst_251 : f32 to vector<8x128xf32>
    %1022 = arith.addf %1021, %1020 : vector<8x128xf32>
    %1023 = arith.divf %1021, %1022 : vector<8x128xf32>
    %1024 = arith.mulf %1015, %996 : vector<8x128xf32>
    %1025 = arith.mulf %1009, %1017 : vector<8x128xf32>
    %1026 = arith.addf %1024, %1025 : vector<8x128xf32>
    %1027 = math.tanh %1026 : vector<8x128xf32>
    %1028 = arith.mulf %1023, %1027 : vector<8x128xf32>
    %c56_252 = arith.constant 56 : index
    %c0_253 = arith.constant 0 : index
    %1029 = vector.load %arg7[%c56_252, %c0_253] : memref<64x128xf32, #tpu.memory_space<vmem>>, vector<8x128xf32>
    tpu.vector_store %arg7[%c56_252, %c0_253], %1028 {strides = array<i32>} : memref<64x128xf32, #tpu.memory_space<vmem>>, vector<8x128xf32>,
    %c3_254 = arith.constant 3 : index
    %c0_255 = arith.constant 0 : index
    %c0_256 = arith.constant 0 : index
    %1030 = vector.load %arg5[%c3_254, %c0_255, %c0_256] : memref<5x8x128xf32, #tpu.memory_space<vmem>>, vector<1x8x128xf32>
    %1031 = vector.shape_cast %1030 : vector<1x8x128xf32> to vector<8x128xf32>
    %1032 = vector.shape_cast %1028 : vector<8x128xf32> to vector<1x8x128xf32>
    tpu.vector_store %arg5[%c3_254, %c0_255, %c0_256], %1032 {strides = array<i32>} : memref<5x8x128xf32, #tpu.memory_space<vmem>>, vector<1x8x128xf32>,
    %c3_257 = arith.constant 3 : index
    %c0_258 = arith.constant 0 : index
    %c0_259 = arith.constant 0 : index
    %1033 = vector.load %arg6[%c3_257, %c0_258, %c0_259] : memref<5x8x128xf32, #tpu.memory_space<vmem>>, vector<1x8x128xf32>
    %1034 = vector.shape_cast %1033 : vector<1x8x128xf32> to vector<8x128xf32>
    %1035 = vector.shape_cast %1026 : vector<8x128xf32> to vector<1x8x128xf32>
    tpu.vector_store %arg6[%c3_257, %c0_258, %c0_259], %1035 {strides = array<i32>} : memref<5x8x128xf32, #tpu.memory_space<vmem>>, vector<1x8x128xf32>,
    %c4 = arith.constant 4 : index
    %c0_260 = arith.constant 0 : index
    %c0_261 = arith.constant 0 : index
    %1036 = vector.load %arg1[%c4, %c0_260, %c0_261] : memref<5x128x512xbf16, #tpu.memory_space<vmem>>, vector<1x128x512xbf16>
    %1037 = vector.shape_cast %1036 : vector<1x128x512xbf16> to vector<128x512xbf16>
    %c4_262 = arith.constant 4 : index
    %c0_263 = arith.constant 0 : index
    %c0_264 = arith.constant 0 : index
    %1038 = vector.load %arg2[%c4_262, %c0_263, %c0_264] : memref<5x128x512xbf16, #tpu.memory_space<vmem>>, vector<1x128x512xbf16>
    %1039 = vector.shape_cast %1038 : vector<1x128x512xbf16> to vector<128x512xbf16>
    %c4_265 = arith.constant 4 : index
    %c0_266 = arith.constant 0 : index
    %c0_267 = arith.constant 0 : index
    %1040 = vector.load %arg3[%c4_265, %c0_266, %c0_267] : memref<5x1x512xf32, #tpu.memory_space<vmem>>, vector<1x1x512xf32>
    %1041 = vector.shape_cast %1040 : vector<1x1x512xf32> to vector<1x512xf32>
    %c0_268 = arith.constant 0 : index
    %c0_269 = arith.constant 0 : index
    %1042 = vector.load %arg7[%c0_268, %c0_269] : memref<64x128xf32, #tpu.memory_space<vmem>>, vector<64x128xf32>
    %1043 = arith.truncf %1042 : vector<64x128xf32> to vector<64x128xbf16>
    %cst_270 = arith.constant dense<0.000000e+00> : vector<64x512xf32>
    %1044 = tpu.matmul %1043, %1037, %cst_270 {dimension_numbers = #tpu.dot_dimension_numbers<[1], [0], [0], [1], [0, 0, 1, 1], [], []>} : vector<64x128xbf16>, vector<128x512xbf16>, vector<64x512xf32> -> vector<64x512xf32>
    %1045 = vector.broadcast %1041 : vector<1x512xf32> to vector<64x512xf32>
    %1046 = arith.addf %1044, %1045 : vector<64x512xf32>
    %cst_271 = arith.constant 0.000000e+00 : f32
    %1047 = vector.broadcast %cst_271 : f32 to vector<8x128xf32>
    %cst_272 = arith.constant 0.000000e+00 : f32
    %1048 = vector.broadcast %cst_272 : f32 to vector<8x128xf32>
    %1049 = vector.extract_strided_slice %1046 {offsets = [0, 0], sizes = [8, 512], strides = [1, 1]} : vector<64x512xf32> to vector<8x512xf32>
    %1050 = arith.truncf %1047 : vector<8x128xf32> to vector<8x128xbf16>
    %cst_273 = arith.constant dense<0.000000e+00> : vector<8x512xf32>
    %1051 = tpu.matmul %1050, %1039, %cst_273 {dimension_numbers = #tpu.dot_dimension_numbers<[1], [0], [0], [1], [0, 0, 1, 1], [], []>} : vector<8x128xbf16>, vector<128x512xbf16>, vector<8x512xf32> -> vector<8x512xf32>
    %1052 = arith.addf %1049, %1051 : vector<8x512xf32>
    %1053 = vector.extract_strided_slice %1052 {offsets = [0, 0], sizes = [8, 128], strides = [1, 1]} : vector<8x512xf32> to vector<8x128xf32>
    %1054 = arith.negf %1053 : vector<8x128xf32>
    %1055 = math.exp %1054 : vector<8x128xf32>
    %cst_274 = arith.constant 1.000000e+00 : f32
    %1056 = vector.broadcast %cst_274 : f32 to vector<8x128xf32>
    %1057 = arith.addf %1056, %1055 : vector<8x128xf32>
    %1058 = arith.divf %1056, %1057 : vector<8x128xf32>
    %1059 = vector.extract_strided_slice %1052 {offsets = [0, 128], sizes = [8, 128], strides = [1, 1]} : vector<8x512xf32> to vector<8x128xf32>
    %1060 = arith.negf %1059 : vector<8x128xf32>
    %1061 = math.exp %1060 : vector<8x128xf32>
    %cst_275 = arith.constant 1.000000e+00 : f32
    %1062 = vector.broadcast %cst_275 : f32 to vector<8x128xf32>
    %1063 = arith.addf %1062, %1061 : vector<8x128xf32>
    %1064 = arith.divf %1062, %1063 : vector<8x128xf32>
    %1065 = vector.extract_strided_slice %1052 {offsets = [0, 256], sizes = [8, 128], strides = [1, 1]} : vector<8x512xf32> to vector<8x128xf32>
    %1066 = math.tanh %1065 : vector<8x128xf32>
    %1067 = vector.extract_strided_slice %1052 {offsets = [0, 384], sizes = [8, 128], strides = [1, 1]} : vector<8x512xf32> to vector<8x128xf32>
    %1068 = arith.negf %1067 : vector<8x128xf32>
    %1069 = math.exp %1068 : vector<8x128xf32>
    %cst_276 = arith.constant 1.000000e+00 : f32
    %1070 = vector.broadcast %cst_276 : f32 to vector<8x128xf32>
    %1071 = arith.addf %1070, %1069 : vector<8x128xf32>
    %1072 = arith.divf %1070, %1071 : vector<8x128xf32>
    %1073 = arith.mulf %1064, %1048 : vector<8x128xf32>
    %1074 = arith.mulf %1058, %1066 : vector<8x128xf32>
    %1075 = arith.addf %1073, %1074 : vector<8x128xf32>
    %1076 = math.tanh %1075 : vector<8x128xf32>
    %1077 = arith.mulf %1072, %1076 : vector<8x128xf32>
    %c0_277 = arith.constant 0 : index
    %c0_278 = arith.constant 0 : index
    %1078 = vector.load %arg4[%c0_277, %c0_278] : memref<64x128xf32, #tpu.memory_space<vmem>>, vector<8x128xf32>
    tpu.vector_store %arg4[%c0_277, %c0_278], %1077 {strides = array<i32>} : memref<64x128xf32, #tpu.memory_space<vmem>>, vector<8x128xf32>,
    %1079 = vector.extract_strided_slice %1046 {offsets = [8, 0], sizes = [8, 512], strides = [1, 1]} : vector<64x512xf32> to vector<8x512xf32>
    %1080 = arith.truncf %1077 : vector<8x128xf32> to vector<8x128xbf16>
    %cst_279 = arith.constant dense<0.000000e+00> : vector<8x512xf32>
    %1081 = tpu.matmul %1080, %1039, %cst_279 {dimension_numbers = #tpu.dot_dimension_numbers<[1], [0], [0], [1], [0, 0, 1, 1], [], []>} : vector<8x128xbf16>, vector<128x512xbf16>, vector<8x512xf32> -> vector<8x512xf32>
    %1082 = arith.addf %1079, %1081 : vector<8x512xf32>
    %1083 = vector.extract_strided_slice %1082 {offsets = [0, 0], sizes = [8, 128], strides = [1, 1]} : vector<8x512xf32> to vector<8x128xf32>
    %1084 = arith.negf %1083 : vector<8x128xf32>
    %1085 = math.exp %1084 : vector<8x128xf32>
    %cst_280 = arith.constant 1.000000e+00 : f32
    %1086 = vector.broadcast %cst_280 : f32 to vector<8x128xf32>
    %1087 = arith.addf %1086, %1085 : vector<8x128xf32>
    %1088 = arith.divf %1086, %1087 : vector<8x128xf32>
    %1089 = vector.extract_strided_slice %1082 {offsets = [0, 128], sizes = [8, 128], strides = [1, 1]} : vector<8x512xf32> to vector<8x128xf32>
    %1090 = arith.negf %1089 : vector<8x128xf32>
    %1091 = math.exp %1090 : vector<8x128xf32>
    %cst_281 = arith.constant 1.000000e+00 : f32
    %1092 = vector.broadcast %cst_281 : f32 to vector<8x128xf32>
    %1093 = arith.addf %1092, %1091 : vector<8x128xf32>
    %1094 = arith.divf %1092, %1093 : vector<8x128xf32>
    %1095 = vector.extract_strided_slice %1082 {offsets = [0, 256], sizes = [8, 128], strides = [1, 1]} : vector<8x512xf32> to vector<8x128xf32>
    %1096 = math.tanh %1095 : vector<8x128xf32>
    %1097 = vector.extract_strided_slice %1082 {offsets = [0, 384], sizes = [8, 128], strides = [1, 1]} : vector<8x512xf32> to vector<8x128xf32>
    %1098 = arith.negf %1097 : vector<8x128xf32>
    %1099 = math.exp %1098 : vector<8x128xf32>
    %cst_282 = arith.constant 1.000000e+00 : f32
    %1100 = vector.broadcast %cst_282 : f32 to vector<8x128xf32>
    %1101 = arith.addf %1100, %1099 : vector<8x128xf32>
    %1102 = arith.divf %1100, %1101 : vector<8x128xf32>
    %1103 = arith.mulf %1094, %1075 : vector<8x128xf32>
    %1104 = arith.mulf %1088, %1096 : vector<8x128xf32>
    %1105 = arith.addf %1103, %1104 : vector<8x128xf32>
    %1106 = math.tanh %1105 : vector<8x128xf32>
    %1107 = arith.mulf %1102, %1106 : vector<8x128xf32>
    %c8_283 = arith.constant 8 : index
    %c0_284 = arith.constant 0 : index
    %1108 = vector.load %arg4[%c8_283, %c0_284] : memref<64x128xf32, #tpu.memory_space<vmem>>, vector<8x128xf32>
    tpu.vector_store %arg4[%c8_283, %c0_284], %1107 {strides = array<i32>} : memref<64x128xf32, #tpu.memory_space<vmem>>, vector<8x128xf32>,
    %1109 = vector.extract_strided_slice %1046 {offsets = [16, 0], sizes = [8, 512], strides = [1, 1]} : vector<64x512xf32> to vector<8x512xf32>
    %1110 = arith.truncf %1107 : vector<8x128xf32> to vector<8x128xbf16>
    %cst_285 = arith.constant dense<0.000000e+00> : vector<8x512xf32>
    %1111 = tpu.matmul %1110, %1039, %cst_285 {dimension_numbers = #tpu.dot_dimension_numbers<[1], [0], [0], [1], [0, 0, 1, 1], [], []>} : vector<8x128xbf16>, vector<128x512xbf16>, vector<8x512xf32> -> vector<8x512xf32>
    %1112 = arith.addf %1109, %1111 : vector<8x512xf32>
    %1113 = vector.extract_strided_slice %1112 {offsets = [0, 0], sizes = [8, 128], strides = [1, 1]} : vector<8x512xf32> to vector<8x128xf32>
    %1114 = arith.negf %1113 : vector<8x128xf32>
    %1115 = math.exp %1114 : vector<8x128xf32>
    %cst_286 = arith.constant 1.000000e+00 : f32
    %1116 = vector.broadcast %cst_286 : f32 to vector<8x128xf32>
    %1117 = arith.addf %1116, %1115 : vector<8x128xf32>
    %1118 = arith.divf %1116, %1117 : vector<8x128xf32>
    %1119 = vector.extract_strided_slice %1112 {offsets = [0, 128], sizes = [8, 128], strides = [1, 1]} : vector<8x512xf32> to vector<8x128xf32>
    %1120 = arith.negf %1119 : vector<8x128xf32>
    %1121 = math.exp %1120 : vector<8x128xf32>
    %cst_287 = arith.constant 1.000000e+00 : f32
    %1122 = vector.broadcast %cst_287 : f32 to vector<8x128xf32>
    %1123 = arith.addf %1122, %1121 : vector<8x128xf32>
    %1124 = arith.divf %1122, %1123 : vector<8x128xf32>
    %1125 = vector.extract_strided_slice %1112 {offsets = [0, 256], sizes = [8, 128], strides = [1, 1]} : vector<8x512xf32> to vector<8x128xf32>
    %1126 = math.tanh %1125 : vector<8x128xf32>
    %1127 = vector.extract_strided_slice %1112 {offsets = [0, 384], sizes = [8, 128], strides = [1, 1]} : vector<8x512xf32> to vector<8x128xf32>
    %1128 = arith.negf %1127 : vector<8x128xf32>
    %1129 = math.exp %1128 : vector<8x128xf32>
    %cst_288 = arith.constant 1.000000e+00 : f32
    %1130 = vector.broadcast %cst_288 : f32 to vector<8x128xf32>
    %1131 = arith.addf %1130, %1129 : vector<8x128xf32>
    %1132 = arith.divf %1130, %1131 : vector<8x128xf32>
    %1133 = arith.mulf %1124, %1105 : vector<8x128xf32>
    %1134 = arith.mulf %1118, %1126 : vector<8x128xf32>
    %1135 = arith.addf %1133, %1134 : vector<8x128xf32>
    %1136 = math.tanh %1135 : vector<8x128xf32>
    %1137 = arith.mulf %1132, %1136 : vector<8x128xf32>
    %c16_289 = arith.constant 16 : index
    %c0_290 = arith.constant 0 : index
    %1138 = vector.load %arg4[%c16_289, %c0_290] : memref<64x128xf32, #tpu.memory_space<vmem>>, vector<8x128xf32>
    tpu.vector_store %arg4[%c16_289, %c0_290], %1137 {strides = array<i32>} : memref<64x128xf32, #tpu.memory_space<vmem>>, vector<8x128xf32>,
    %1139 = vector.extract_strided_slice %1046 {offsets = [24, 0], sizes = [8, 512], strides = [1, 1]} : vector<64x512xf32> to vector<8x512xf32>
    %1140 = arith.truncf %1137 : vector<8x128xf32> to vector<8x128xbf16>
    %cst_291 = arith.constant dense<0.000000e+00> : vector<8x512xf32>
    %1141 = tpu.matmul %1140, %1039, %cst_291 {dimension_numbers = #tpu.dot_dimension_numbers<[1], [0], [0], [1], [0, 0, 1, 1], [], []>} : vector<8x128xbf16>, vector<128x512xbf16>, vector<8x512xf32> -> vector<8x512xf32>
    %1142 = arith.addf %1139, %1141 : vector<8x512xf32>
    %1143 = vector.extract_strided_slice %1142 {offsets = [0, 0], sizes = [8, 128], strides = [1, 1]} : vector<8x512xf32> to vector<8x128xf32>
    %1144 = arith.negf %1143 : vector<8x128xf32>
    %1145 = math.exp %1144 : vector<8x128xf32>
    %cst_292 = arith.constant 1.000000e+00 : f32
    %1146 = vector.broadcast %cst_292 : f32 to vector<8x128xf32>
    %1147 = arith.addf %1146, %1145 : vector<8x128xf32>
    %1148 = arith.divf %1146, %1147 : vector<8x128xf32>
    %1149 = vector.extract_strided_slice %1142 {offsets = [0, 128], sizes = [8, 128], strides = [1, 1]} : vector<8x512xf32> to vector<8x128xf32>
    %1150 = arith.negf %1149 : vector<8x128xf32>
    %1151 = math.exp %1150 : vector<8x128xf32>
    %cst_293 = arith.constant 1.000000e+00 : f32
    %1152 = vector.broadcast %cst_293 : f32 to vector<8x128xf32>
    %1153 = arith.addf %1152, %1151 : vector<8x128xf32>
    %1154 = arith.divf %1152, %1153 : vector<8x128xf32>
    %1155 = vector.extract_strided_slice %1142 {offsets = [0, 256], sizes = [8, 128], strides = [1, 1]} : vector<8x512xf32> to vector<8x128xf32>
    %1156 = math.tanh %1155 : vector<8x128xf32>
    %1157 = vector.extract_strided_slice %1142 {offsets = [0, 384], sizes = [8, 128], strides = [1, 1]} : vector<8x512xf32> to vector<8x128xf32>
    %1158 = arith.negf %1157 : vector<8x128xf32>
    %1159 = math.exp %1158 : vector<8x128xf32>
    %cst_294 = arith.constant 1.000000e+00 : f32
    %1160 = vector.broadcast %cst_294 : f32 to vector<8x128xf32>
    %1161 = arith.addf %1160, %1159 : vector<8x128xf32>
    %1162 = arith.divf %1160, %1161 : vector<8x128xf32>
    %1163 = arith.mulf %1154, %1135 : vector<8x128xf32>
    %1164 = arith.mulf %1148, %1156 : vector<8x128xf32>
    %1165 = arith.addf %1163, %1164 : vector<8x128xf32>
    %1166 = math.tanh %1165 : vector<8x128xf32>
    %1167 = arith.mulf %1162, %1166 : vector<8x128xf32>
    %c24_295 = arith.constant 24 : index
    %c0_296 = arith.constant 0 : index
    %1168 = vector.load %arg4[%c24_295, %c0_296] : memref<64x128xf32, #tpu.memory_space<vmem>>, vector<8x128xf32>
    tpu.vector_store %arg4[%c24_295, %c0_296], %1167 {strides = array<i32>} : memref<64x128xf32, #tpu.memory_space<vmem>>, vector<8x128xf32>,
    %1169 = vector.extract_strided_slice %1046 {offsets = [32, 0], sizes = [8, 512], strides = [1, 1]} : vector<64x512xf32> to vector<8x512xf32>
    %1170 = arith.truncf %1167 : vector<8x128xf32> to vector<8x128xbf16>
    %cst_297 = arith.constant dense<0.000000e+00> : vector<8x512xf32>
    %1171 = tpu.matmul %1170, %1039, %cst_297 {dimension_numbers = #tpu.dot_dimension_numbers<[1], [0], [0], [1], [0, 0, 1, 1], [], []>} : vector<8x128xbf16>, vector<128x512xbf16>, vector<8x512xf32> -> vector<8x512xf32>
    %1172 = arith.addf %1169, %1171 : vector<8x512xf32>
    %1173 = vector.extract_strided_slice %1172 {offsets = [0, 0], sizes = [8, 128], strides = [1, 1]} : vector<8x512xf32> to vector<8x128xf32>
    %1174 = arith.negf %1173 : vector<8x128xf32>
    %1175 = math.exp %1174 : vector<8x128xf32>
    %cst_298 = arith.constant 1.000000e+00 : f32
    %1176 = vector.broadcast %cst_298 : f32 to vector<8x128xf32>
    %1177 = arith.addf %1176, %1175 : vector<8x128xf32>
    %1178 = arith.divf %1176, %1177 : vector<8x128xf32>
    %1179 = vector.extract_strided_slice %1172 {offsets = [0, 128], sizes = [8, 128], strides = [1, 1]} : vector<8x512xf32> to vector<8x128xf32>
    %1180 = arith.negf %1179 : vector<8x128xf32>
    %1181 = math.exp %1180 : vector<8x128xf32>
    %cst_299 = arith.constant 1.000000e+00 : f32
    %1182 = vector.broadcast %cst_299 : f32 to vector<8x128xf32>
    %1183 = arith.addf %1182, %1181 : vector<8x128xf32>
    %1184 = arith.divf %1182, %1183 : vector<8x128xf32>
    %1185 = vector.extract_strided_slice %1172 {offsets = [0, 256], sizes = [8, 128], strides = [1, 1]} : vector<8x512xf32> to vector<8x128xf32>
    %1186 = math.tanh %1185 : vector<8x128xf32>
    %1187 = vector.extract_strided_slice %1172 {offsets = [0, 384], sizes = [8, 128], strides = [1, 1]} : vector<8x512xf32> to vector<8x128xf32>
    %1188 = arith.negf %1187 : vector<8x128xf32>
    %1189 = math.exp %1188 : vector<8x128xf32>
    %cst_300 = arith.constant 1.000000e+00 : f32
    %1190 = vector.broadcast %cst_300 : f32 to vector<8x128xf32>
    %1191 = arith.addf %1190, %1189 : vector<8x128xf32>
    %1192 = arith.divf %1190, %1191 : vector<8x128xf32>
    %1193 = arith.mulf %1184, %1165 : vector<8x128xf32>
    %1194 = arith.mulf %1178, %1186 : vector<8x128xf32>
    %1195 = arith.addf %1193, %1194 : vector<8x128xf32>
    %1196 = math.tanh %1195 : vector<8x128xf32>
    %1197 = arith.mulf %1192, %1196 : vector<8x128xf32>
    %c32_301 = arith.constant 32 : index
    %c0_302 = arith.constant 0 : index
    %1198 = vector.load %arg4[%c32_301, %c0_302] : memref<64x128xf32, #tpu.memory_space<vmem>>, vector<8x128xf32>
    tpu.vector_store %arg4[%c32_301, %c0_302], %1197 {strides = array<i32>} : memref<64x128xf32, #tpu.memory_space<vmem>>, vector<8x128xf32>,
    %1199 = vector.extract_strided_slice %1046 {offsets = [40, 0], sizes = [8, 512], strides = [1, 1]} : vector<64x512xf32> to vector<8x512xf32>
    %1200 = arith.truncf %1197 : vector<8x128xf32> to vector<8x128xbf16>
    %cst_303 = arith.constant dense<0.000000e+00> : vector<8x512xf32>
    %1201 = tpu.matmul %1200, %1039, %cst_303 {dimension_numbers = #tpu.dot_dimension_numbers<[1], [0], [0], [1], [0, 0, 1, 1], [], []>} : vector<8x128xbf16>, vector<128x512xbf16>, vector<8x512xf32> -> vector<8x512xf32>
    %1202 = arith.addf %1199, %1201 : vector<8x512xf32>
    %1203 = vector.extract_strided_slice %1202 {offsets = [0, 0], sizes = [8, 128], strides = [1, 1]} : vector<8x512xf32> to vector<8x128xf32>
    %1204 = arith.negf %1203 : vector<8x128xf32>
    %1205 = math.exp %1204 : vector<8x128xf32>
    %cst_304 = arith.constant 1.000000e+00 : f32
    %1206 = vector.broadcast %cst_304 : f32 to vector<8x128xf32>
    %1207 = arith.addf %1206, %1205 : vector<8x128xf32>
    %1208 = arith.divf %1206, %1207 : vector<8x128xf32>
    %1209 = vector.extract_strided_slice %1202 {offsets = [0, 128], sizes = [8, 128], strides = [1, 1]} : vector<8x512xf32> to vector<8x128xf32>
    %1210 = arith.negf %1209 : vector<8x128xf32>
    %1211 = math.exp %1210 : vector<8x128xf32>
    %cst_305 = arith.constant 1.000000e+00 : f32
    %1212 = vector.broadcast %cst_305 : f32 to vector<8x128xf32>
    %1213 = arith.addf %1212, %1211 : vector<8x128xf32>
    %1214 = arith.divf %1212, %1213 : vector<8x128xf32>
    %1215 = vector.extract_strided_slice %1202 {offsets = [0, 256], sizes = [8, 128], strides = [1, 1]} : vector<8x512xf32> to vector<8x128xf32>
    %1216 = math.tanh %1215 : vector<8x128xf32>
    %1217 = vector.extract_strided_slice %1202 {offsets = [0, 384], sizes = [8, 128], strides = [1, 1]} : vector<8x512xf32> to vector<8x128xf32>
    %1218 = arith.negf %1217 : vector<8x128xf32>
    %1219 = math.exp %1218 : vector<8x128xf32>
    %cst_306 = arith.constant 1.000000e+00 : f32
    %1220 = vector.broadcast %cst_306 : f32 to vector<8x128xf32>
    %1221 = arith.addf %1220, %1219 : vector<8x128xf32>
    %1222 = arith.divf %1220, %1221 : vector<8x128xf32>
    %1223 = arith.mulf %1214, %1195 : vector<8x128xf32>
    %1224 = arith.mulf %1208, %1216 : vector<8x128xf32>
    %1225 = arith.addf %1223, %1224 : vector<8x128xf32>
    %1226 = math.tanh %1225 : vector<8x128xf32>
    %1227 = arith.mulf %1222, %1226 : vector<8x128xf32>
    %c40_307 = arith.constant 40 : index
    %c0_308 = arith.constant 0 : index
    %1228 = vector.load %arg4[%c40_307, %c0_308] : memref<64x128xf32, #tpu.memory_space<vmem>>, vector<8x128xf32>
    tpu.vector_store %arg4[%c40_307, %c0_308], %1227 {strides = array<i32>} : memref<64x128xf32, #tpu.memory_space<vmem>>, vector<8x128xf32>,
    %1229 = vector.extract_strided_slice %1046 {offsets = [48, 0], sizes = [8, 512], strides = [1, 1]} : vector<64x512xf32> to vector<8x512xf32>
    %1230 = arith.truncf %1227 : vector<8x128xf32> to vector<8x128xbf16>
    %cst_309 = arith.constant dense<0.000000e+00> : vector<8x512xf32>
    %1231 = tpu.matmul %1230, %1039, %cst_309 {dimension_numbers = #tpu.dot_dimension_numbers<[1], [0], [0], [1], [0, 0, 1, 1], [], []>} : vector<8x128xbf16>, vector<128x512xbf16>, vector<8x512xf32> -> vector<8x512xf32>
    %1232 = arith.addf %1229, %1231 : vector<8x512xf32>
    %1233 = vector.extract_strided_slice %1232 {offsets = [0, 0], sizes = [8, 128], strides = [1, 1]} : vector<8x512xf32> to vector<8x128xf32>
    %1234 = arith.negf %1233 : vector<8x128xf32>
    %1235 = math.exp %1234 : vector<8x128xf32>
    %cst_310 = arith.constant 1.000000e+00 : f32
    %1236 = vector.broadcast %cst_310 : f32 to vector<8x128xf32>
    %1237 = arith.addf %1236, %1235 : vector<8x128xf32>
    %1238 = arith.divf %1236, %1237 : vector<8x128xf32>
    %1239 = vector.extract_strided_slice %1232 {offsets = [0, 128], sizes = [8, 128], strides = [1, 1]} : vector<8x512xf32> to vector<8x128xf32>
    %1240 = arith.negf %1239 : vector<8x128xf32>
    %1241 = math.exp %1240 : vector<8x128xf32>
    %cst_311 = arith.constant 1.000000e+00 : f32
    %1242 = vector.broadcast %cst_311 : f32 to vector<8x128xf32>
    %1243 = arith.addf %1242, %1241 : vector<8x128xf32>
    %1244 = arith.divf %1242, %1243 : vector<8x128xf32>
    %1245 = vector.extract_strided_slice %1232 {offsets = [0, 256], sizes = [8, 128], strides = [1, 1]} : vector<8x512xf32> to vector<8x128xf32>
    %1246 = math.tanh %1245 : vector<8x128xf32>
    %1247 = vector.extract_strided_slice %1232 {offsets = [0, 384], sizes = [8, 128], strides = [1, 1]} : vector<8x512xf32> to vector<8x128xf32>
    %1248 = arith.negf %1247 : vector<8x128xf32>
    %1249 = math.exp %1248 : vector<8x128xf32>
    %cst_312 = arith.constant 1.000000e+00 : f32
    %1250 = vector.broadcast %cst_312 : f32 to vector<8x128xf32>
    %1251 = arith.addf %1250, %1249 : vector<8x128xf32>
    %1252 = arith.divf %1250, %1251 : vector<8x128xf32>
    %1253 = arith.mulf %1244, %1225 : vector<8x128xf32>
    %1254 = arith.mulf %1238, %1246 : vector<8x128xf32>
    %1255 = arith.addf %1253, %1254 : vector<8x128xf32>
    %1256 = math.tanh %1255 : vector<8x128xf32>
    %1257 = arith.mulf %1252, %1256 : vector<8x128xf32>
    %c48_313 = arith.constant 48 : index
    %c0_314 = arith.constant 0 : index
    %1258 = vector.load %arg4[%c48_313, %c0_314] : memref<64x128xf32, #tpu.memory_space<vmem>>, vector<8x128xf32>
    tpu.vector_store %arg4[%c48_313, %c0_314], %1257 {strides = array<i32>} : memref<64x128xf32, #tpu.memory_space<vmem>>, vector<8x128xf32>,
    %1259 = vector.extract_strided_slice %1046 {offsets = [56, 0], sizes = [8, 512], strides = [1, 1]} : vector<64x512xf32> to vector<8x512xf32>
    %1260 = arith.truncf %1257 : vector<8x128xf32> to vector<8x128xbf16>
    %cst_315 = arith.constant dense<0.000000e+00> : vector<8x512xf32>
    %1261 = tpu.matmul %1260, %1039, %cst_315 {dimension_numbers = #tpu.dot_dimension_numbers<[1], [0], [0], [1], [0, 0, 1, 1], [], []>} : vector<8x128xbf16>, vector<128x512xbf16>, vector<8x512xf32> -> vector<8x512xf32>
    %1262 = arith.addf %1259, %1261 : vector<8x512xf32>
    %1263 = vector.extract_strided_slice %1262 {offsets = [0, 0], sizes = [8, 128], strides = [1, 1]} : vector<8x512xf32> to vector<8x128xf32>
    %1264 = arith.negf %1263 : vector<8x128xf32>
    %1265 = math.exp %1264 : vector<8x128xf32>
    %cst_316 = arith.constant 1.000000e+00 : f32
    %1266 = vector.broadcast %cst_316 : f32 to vector<8x128xf32>
    %1267 = arith.addf %1266, %1265 : vector<8x128xf32>
    %1268 = arith.divf %1266, %1267 : vector<8x128xf32>
    %1269 = vector.extract_strided_slice %1262 {offsets = [0, 128], sizes = [8, 128], strides = [1, 1]} : vector<8x512xf32> to vector<8x128xf32>
    %1270 = arith.negf %1269 : vector<8x128xf32>
    %1271 = math.exp %1270 : vector<8x128xf32>
    %cst_317 = arith.constant 1.000000e+00 : f32
    %1272 = vector.broadcast %cst_317 : f32 to vector<8x128xf32>
    %1273 = arith.addf %1272, %1271 : vector<8x128xf32>
    %1274 = arith.divf %1272, %1273 : vector<8x128xf32>
    %1275 = vector.extract_strided_slice %1262 {offsets = [0, 256], sizes = [8, 128], strides = [1, 1]} : vector<8x512xf32> to vector<8x128xf32>
    %1276 = math.tanh %1275 : vector<8x128xf32>
    %1277 = vector.extract_strided_slice %1262 {offsets = [0, 384], sizes = [8, 128], strides = [1, 1]} : vector<8x512xf32> to vector<8x128xf32>
    %1278 = arith.negf %1277 : vector<8x128xf32>
    %1279 = math.exp %1278 : vector<8x128xf32>
    %cst_318 = arith.constant 1.000000e+00 : f32
    %1280 = vector.broadcast %cst_318 : f32 to vector<8x128xf32>
    %1281 = arith.addf %1280, %1279 : vector<8x128xf32>
    %1282 = arith.divf %1280, %1281 : vector<8x128xf32>
    %1283 = arith.mulf %1274, %1255 : vector<8x128xf32>
    %1284 = arith.mulf %1268, %1276 : vector<8x128xf32>
    %1285 = arith.addf %1283, %1284 : vector<8x128xf32>
    %1286 = math.tanh %1285 : vector<8x128xf32>
    %1287 = arith.mulf %1282, %1286 : vector<8x128xf32>
    %c56_319 = arith.constant 56 : index
    %c0_320 = arith.constant 0 : index
    %1288 = vector.load %arg4[%c56_319, %c0_320] : memref<64x128xf32, #tpu.memory_space<vmem>>, vector<8x128xf32>
    tpu.vector_store %arg4[%c56_319, %c0_320], %1287 {strides = array<i32>} : memref<64x128xf32, #tpu.memory_space<vmem>>, vector<8x128xf32>,
    %c4_321 = arith.constant 4 : index
    %c0_322 = arith.constant 0 : index
    %c0_323 = arith.constant 0 : index
    %1289 = vector.load %arg5[%c4_321, %c0_322, %c0_323] : memref<5x8x128xf32, #tpu.memory_space<vmem>>, vector<1x8x128xf32>
    %1290 = vector.shape_cast %1289 : vector<1x8x128xf32> to vector<8x128xf32>
    %1291 = vector.shape_cast %1287 : vector<8x128xf32> to vector<1x8x128xf32>
    tpu.vector_store %arg5[%c4_321, %c0_322, %c0_323], %1291 {strides = array<i32>} : memref<5x8x128xf32, #tpu.memory_space<vmem>>, vector<1x8x128xf32>,
    %c4_324 = arith.constant 4 : index
    %c0_325 = arith.constant 0 : index
    %c0_326 = arith.constant 0 : index
    %1292 = vector.load %arg6[%c4_324, %c0_325, %c0_326] : memref<5x8x128xf32, #tpu.memory_space<vmem>>, vector<1x8x128xf32>
    %1293 = vector.shape_cast %1292 : vector<1x8x128xf32> to vector<8x128xf32>
    %1294 = vector.shape_cast %1285 : vector<8x128xf32> to vector<1x8x128xf32>
    tpu.vector_store %arg6[%c4_324, %c0_325, %c0_326], %1294 {strides = array<i32>} : memref<5x8x128xf32, #tpu.memory_space<vmem>>, vector<1x8x128xf32>,
    return
  }
}

</mosaic_0001>

<llo_original>
// kernel: tpu_custom_call.1
$region0: #{tpu_custom_call.1}
  #allocation0 [shape = 'u32[]', space=smem, size = 0x4, offset = 0x4, fixed_abs, tag = 'smem constant byte address 0x4 - core index']
  #allocation1 [shape = 'u32[144,128]{1,0:T(1,128)}', space=vmem, size = 0x12000, scoped, tag = 'internal scratch']
  #allocation2 [shape = 'f32[64,128]{1,0:T(8,128)}', space=vmem, size = 0x8000, scoped, tag = 'scratch operand']
  %s0 = inlined_call_operand.hbm [shape: f32[64,128], index: 0, kind: input, shape index: {}]
  %s1 = inlined_call_operand.hbm [shape: bf16[5,128,512], index: 1, kind: input, shape index: {}]
  %s2 = inlined_call_operand.hbm [shape: bf16[5,128,512], index: 2, kind: input, shape index: {}]
  %s3 = inlined_call_operand.hbm [shape: f32[5,1,512], index: 3, kind: input, shape index: {}]
  %s4 = inlined_call_operand.hbm [shape: f32[64,128], index: 4, kind: output, shape index: {0}]
  %s5 = inlined_call_operand.hbm [shape: f32[5,8,128], index: 5, kind: output, shape index: {1}]
  %s6 = inlined_call_operand.hbm [shape: f32[5,8,128], index: 6, kind: output, shape index: {2}]
  %7 = xla_tuple %s4, %s5, %s6
  %s8 = sld [smem:[#allocation0]]
  $region58: #{tpu_custom_call.1} parent=0
    _
  %s10 = ssub.s32 1, %s8
  %s11 = scalar_select 0, %s10, %s8
  $region1: #{tpu_custom_call.1} parent=0
    #allocation3 [shape = 'u8[32768]{0}', space=vmem, size = 0x8000, scoped, tag = 'input window, operand 0, single buffered']
    #allocation4 [shape = 's32[1]{0}', space=sflag, size = 0x4, scoped, tag = 'scoped memory for tpu_custom_call.1']
    #allocation5 [shape = 's32[1]{0}', space=sflag, size = 0x4, scoped, tag = 'scoped memory for tpu_custom_call.1']
    #allocation6 [shape = 'u8[655360]{0}', space=vmem, size = 0xa0000, scoped, tag = 'input window, operand 1, single buffered']
    #allocation7 [shape = 's32[1]{0}', space=sflag, size = 0x4, scoped, tag = 'scoped memory for tpu_custom_call.1']
    #allocation8 [shape = 'u8[655360]{0}', space=vmem, size = 0xa0000, scoped, tag = 'input window, operand 2, single buffered']
    #allocation9 [shape = 'u8[10240]{0}', space=vmem, size = 0x2800, scoped, tag = 'input window, operand 3, single buffered']
    #allocation10 [shape = 's32[1]{0}', space=sflag, size = 0x4, scoped, tag = 'scoped memory for tpu_custom_call.1']
    #allocation11 [shape = 'u8[32768]{0}', space=vmem, size = 0x8000, scoped, tag = 'output window, operand 0, single buffered']
    #allocation12 [shape = 'u8[20480]{0}', space=vmem, size = 0x5000, scoped, tag = 'output window, operand 1, single buffered']
    #allocation13 [shape = 's32[1]{0}', space=sflag, size = 0x4, scoped, tag = 'scoped memory for tpu_custom_call.1']
    #allocation14 [shape = 'u8[20480]{0}', space=vmem, size = 0x5000, scoped, tag = 'output window, operand 2, single buffered']
    %12 = vsyncpa [#allocation4], 0
    %13 = vsyncpa [#allocation7], 0
    %14 = vsyncpa [#allocation10], 0
    %15 = vsyncpa [#allocation5], 0
    %16 = vsyncpa [#allocation13], 0
    // Predicated region
    $region2: #{tpu_custom_call.1} parent=1 // pred_check
      _
    $region3: #{tpu_custom_call.1} parent=1 // pred_check_branch
      %18 = sbr.rel (0) target = $region5
    $region4: #{tpu_custom_call.1} parent=1 // pred_region
      %s20 = ssub.s32 1024, 1024
      %21 = vsyncadd [#allocation4], %s20
      %s22 = sshll.u32 [#allocation3], 4
      %s23 = int_to_ptr.vmem [resolvable:$true] %s22
      %28 = dma.hbm_to_vmem [thread:$0]  %s0, 1024, %s23, [#allocation4], 128, 128, 8
    $region5: #{tpu_custom_call.1} parent=1 // pred_fallthru
      _
    // Predicated region
    $region6: #{tpu_custom_call.1} parent=1 // pred_check
      _
    $region7: #{tpu_custom_call.1} parent=1 // pred_check_branch
      %30 = sbr.rel (0) target = $region9
    $region8: #{tpu_custom_call.1} parent=1 // pred_region
      %s32 = ssub.s32 20480, 20480
      %33 = vsyncadd [#allocation7], %s32
      %s34 = sshll.u32 [#allocation6], 4
      %s35 = int_to_ptr.vmem [resolvable:$true] %s34
      %40 = dma.hbm_to_vmem [thread:$0]  %s1, 20480, %s35, [#allocation7], 256, 256, 16
    $region9: #{tpu_custom_call.1} parent=1 // pred_fallthru
      _
    // Predicated region
    $region10: #{tpu_custom_call.1} parent=1 // pred_check
      _
    $region11: #{tpu_custom_call.1} parent=1 // pred_check_branch
      %42 = sbr.rel (0) target = $region13
    $region12: #{tpu_custom_call.1} parent=1 // pred_region
      %s44 = ssub.s32 20480, 20480
      %45 = vsyncadd [#allocation7], %s44
      %s46 = sshll.u32 [#allocation8], 4
      %s47 = int_to_ptr.vmem [resolvable:$true] %s46
      %52 = dma.hbm_to_vmem [thread:$0]  %s2, 20480, %s47, [#allocation7], 256, 256, 16
    $region13: #{tpu_custom_call.1} parent=1 // pred_fallthru
      _
    // Predicated region
    $region14: #{tpu_custom_call.1} parent=1 // pred_check
      _
    $region15: #{tpu_custom_call.1} parent=1 // pred_check_branch
      %54 = sbr.rel (0) target = $region17
    $region16: #{tpu_custom_call.1} parent=1 // pred_region
      %s56 = ssub.s32 320, 320
      %57 = vsyncadd [#allocation10], %s56
      %s58 = sshll.u32 [#allocation9], 4
      %s59 = int_to_ptr.vmem [resolvable:$true] %s58
      %64 = dma.hbm_to_vmem [thread:$0]  %s3, 320, %s59, [#allocation10], 64, 64, 4
    $region17: #{tpu_custom_call.1} parent=1 // pred_fallthru
      _
    // Predicated region
    $region18: #{tpu_custom_call.1} parent=1 // pred_check
      _
    $region19: #{tpu_custom_call.1} parent=1 // pred_check_branch
      %66 = sbr.rel (0) target = $region21
    $region20: #{tpu_custom_call.1} parent=1 // pred_region
      %67 = dma.done [#allocation4], 1024
    $region21: #{tpu_custom_call.1} parent=1 // pred_fallthru
      _
    // Predicated region
    $region22: #{tpu_custom_call.1} parent=1 // pred_check
      _
    $region23: #{tpu_custom_call.1} parent=1 // pred_check_branch
      %69 = sbr.rel (0) target = $region25
    $region24: #{tpu_custom_call.1} parent=1 // pred_region
      %70 = dma.done [#allocation7], 20480
    $region25: #{tpu_custom_call.1} parent=1 // pred_fallthru
      _
    // Predicated region
    $region26: #{tpu_custom_call.1} parent=1 // pred_check
      _
    $region27: #{tpu_custom_call.1} parent=1 // pred_check_branch
      %72 = sbr.rel (0) target = $region29
    $region28: #{tpu_custom_call.1} parent=1 // pred_region
      %73 = dma.done [#allocation7], 20480
    $region29: #{tpu_custom_call.1} parent=1 // pred_fallthru
      _
    // Predicated region
    $region30: #{tpu_custom_call.1} parent=1 // pred_check
      _
    $region31: #{tpu_custom_call.1} parent=1 // pred_check_branch
      %75 = sbr.rel (0) target = $region33
    $region32: #{tpu_custom_call.1} parent=1 // pred_region
      %76 = dma.done [#allocation10], 320
    $region33: #{tpu_custom_call.1} parent=1 // pred_fallthru
      _
    %v78 = vld [vmem:[#allocation6] sm:$0xff]
    %v79 = vld [vmem:[#allocation6 + $0x8] sm:$0xff]
    %v80 = vld [vmem:[#allocation6 + $0x10] sm:$0xff]
    %v81 = vld [vmem:[#allocation6 + $0x18] sm:$0xff]
    %v82 = vld [vmem:[#allocation6 + $0x20] sm:$0xff]
    %v83 = vld [vmem:[#allocation6 + $0x28] sm:$0xff]
    %v84 = vld [vmem:[#allocation6 + $0x30] sm:$0xff]
    %v85 = vld [vmem:[#allocation6 + $0x38] sm:$0xff]
    %v86 = vld [vmem:[#allocation6 + $0x40] sm:$0xff]
    %v87 = vld [vmem:[#allocation6 + $0x48] sm:$0xff]
    %v88 = vld [vmem:[#allocation6 + $0x50] sm:$0xff]
    %v89 = vld [vmem:[#allocation6 + $0x58] sm:$0xff]
    %v90 = vld [vmem:[#allocation6 + $0x60] sm:$0xff]
    %v91 = vld [vmem:[#allocation6 + $0x68] sm:$0xff]
    %v92 = vld [vmem:[#allocation6 + $0x70] sm:$0xff]
    %v93 = vld [vmem:[#allocation6 + $0x78] sm:$0xff]
    %v94 = vld [vmem:[#allocation6 + $0x80] sm:$0xff]
    %v95 = vld [vmem:[#allocation6 + $0x88] sm:$0xff]
    %v96 = vld [vmem:[#allocation6 + $0x90] sm:$0xff]
    %v97 = vld [vmem:[#allocation6 + $0x98] sm:$0xff]
    %v98 = vld [vmem:[#allocation6 + $0xa0] sm:$0xff]
    %v99 = vld [vmem:[#allocation6 + $0xa8] sm:$0xff]
    %v100 = vld [vmem:[#allocation6 + $0xb0] sm:$0xff]
    %v101 = vld [vmem:[#allocation6 + $0xb8] sm:$0xff]
    %v102 = vld [vmem:[#allocation6 + $0xc0] sm:$0xff]
    %v103 = vld [vmem:[#allocation6 + $0xc8] sm:$0xff]
    %v104 = vld [vmem:[#allocation6 + $0xd0] sm:$0xff]
    %v105 = vld [vmem:[#allocation6 + $0xd8] sm:$0xff]
    %v106 = vld [vmem:[#allocation6 + $0xe0] sm:$0xff]
    %v107 = vld [vmem:[#allocation6 + $0xe8] sm:$0xff]
    %v108 = vld [vmem:[#allocation6 + $0xf0] sm:$0xff]
    %v109 = vld [vmem:[#allocation6 + $0xf8] sm:$0xff]
    %v110 = vld [vmem:[#allocation8] sm:$0xff]
    %v111 = vld [vmem:[#allocation8 + $0x8] sm:$0xff]
    %v112 = vld [vmem:[#allocation8 + $0x10] sm:$0xff]
    %v113 = vld [vmem:[#allocation8 + $0x18] sm:$0xff]
    %v114 = vld [vmem:[#allocation8 + $0x20] sm:$0xff]
    %v115 = vld [vmem:[#allocation8 + $0x28] sm:$0xff]
    %v116 = vld [vmem:[#allocation8 + $0x30] sm:$0xff]
    %v117 = vld [vmem:[#allocation8 + $0x38] sm:$0xff]
    %v118 = vld [vmem:[#allocation8 + $0x40] sm:$0xff]
    %v119 = vld [vmem:[#allocation8 + $0x48] sm:$0xff]
    %v120 = vld [vmem:[#allocation8 + $0x50] sm:$0xff]
    %v121 = vld [vmem:[#allocation8 + $0x58] sm:$0xff]
    %v122 = vld [vmem:[#allocation8 + $0x60] sm:$0xff]
    %v123 = vld [vmem:[#allocation8 + $0x68] sm:$0xff]
    %v124 = vld [vmem:[#allocation8 + $0x70] sm:$0xff]
    %v125 = vld [vmem:[#allocation8 + $0x78] sm:$0xff]
    %v126 = vld [vmem:[#allocation8 + $0x80] sm:$0xff]
    %v127 = vld [vmem:[#allocation8 + $0x88] sm:$0xff]
    %v128 = vld [vmem:[#allocation8 + $0x90] sm:$0xff]
    %v129 = vld [vmem:[#allocation8 + $0x98] sm:$0xff]
    %v130 = vld [vmem:[#allocation8 + $0xa0] sm:$0xff]
    %v131 = vld [vmem:[#allocation8 + $0xa8] sm:$0xff]
    %v132 = vld [vmem:[#allocation8 + $0xb0] sm:$0xff]
    %v133 = vld [vmem:[#allocation8 + $0xb8] sm:$0xff]
    %v134 = vld [vmem:[#allocation8 + $0xc0] sm:$0xff]
    %v135 = vld [vmem:[#allocation8 + $0xc8] sm:$0xff]
    %v136 = vld [vmem:[#allocation8 + $0xd0] sm:$0xff]
    %v137 = vld [vmem:[#allocation8 + $0xd8] sm:$0xff]
    %v138 = vld [vmem:[#allocation8 + $0xe0] sm:$0xff]
    %v139 = vld [vmem:[#allocation8 + $0xe8] sm:$0xff]
    %v140 = vld [vmem:[#allocation8 + $0xf0] sm:$0xff]
    %v141 = vld [vmem:[#allocation8 + $0xf8] sm:$0xff]
    %v142 = vld [vmem:[#allocation9] sm:$0xf]
    %v143 = vld [vmem:[#allocation3] sm:$0xff]
    %v144 = vld [vmem:[#allocation3 + $0x8] sm:$0xff]
    %v145 = vld [vmem:[#allocation3 + $0x10] sm:$0xff]
    %v146 = vld [vmem:[#allocation3 + $0x18] sm:$0xff]
    %v147 = vld [vmem:[#allocation3 + $0x20] sm:$0xff]
    %v148 = vld [vmem:[#allocation3 + $0x28] sm:$0xff]
    %v149 = vld [vmem:[#allocation3 + $0x30] sm:$0xff]
    %v150 = vld [vmem:[#allocation3 + $0x38] sm:$0xff]
    %v151 = vpack.c.bf16 %v144, %v143
    %v152 = vpack.c.bf16 %v146, %v145
    %v153 = vpack.c.bf16 %v148, %v147
    %v154 = vpack.c.bf16 %v150, %v149
    %v156 = vlaneseq
    %v157 = vshrl.u32 %v156, 7
    %v158 = vsub.s32 0, %v157
    %v159 = vrot.slane %v142, %v158
    %v160 = vlaneseq
    %v161 = vshrl.u32 %v160, 7
    %v162 = vsub.s32 1, %v161
    %v163 = vrot.slane %v142, %v162
    %v164 = vlaneseq
    %v165 = vshrl.u32 %v164, 7
    %v166 = vsub.s32 2, %v165
    %v167 = vrot.slane %v142, %v166
    %v168 = vlaneseq
    %v169 = vshrl.u32 %v168, 7
    %v170 = vsub.s32 3, %v169
    %v171 = vrot.slane %v142, %v170
    %v208 = vunpack.c.l.b16 %v78
    %v209 = vunpack.c.h.b16 %v78
    %v210 = vunpack.c.l.b16 %v79
    %v211 = vunpack.c.h.b16 %v79
    %v212 = vunpack.c.l.b16 %v80
    %v213 = vunpack.c.h.b16 %v80
    %v214 = vunpack.c.l.b16 %v81
    %v215 = vunpack.c.h.b16 %v81
    %v216 = vunpack.c.l.b16 %v82
    %v217 = vunpack.c.h.b16 %v82
    %v218 = vunpack.c.l.b16 %v83
    %v219 = vunpack.c.h.b16 %v83
    %v220 = vunpack.c.l.b16 %v84
    %v221 = vunpack.c.h.b16 %v84
    %v222 = vunpack.c.l.b16 %v85
    %v223 = vunpack.c.h.b16 %v85
    %v224 = vunpack.c.l.b16 %v86
    %v225 = vunpack.c.h.b16 %v86
    %v226 = vunpack.c.l.b16 %v87
    %v227 = vunpack.c.h.b16 %v87
    %v228 = vunpack.c.l.b16 %v88
    %v229 = vunpack.c.h.b16 %v88
    %v230 = vunpack.c.l.b16 %v89
    %v231 = vunpack.c.h.b16 %v89
    %v232 = vunpack.c.l.b16 %v90
    %v233 = vunpack.c.h.b16 %v90
    %v234 = vunpack.c.l.b16 %v91
    %v235 = vunpack.c.h.b16 %v91
    %v236 = vunpack.c.l.b16 %v92
    %v237 = vunpack.c.h.b16 %v92
    %v238 = vunpack.c.l.b16 %v93
    %v239 = vunpack.c.h.b16 %v93
    %v240 = vunpack.c.l.b16 %v94
    %v241 = vunpack.c.h.b16 %v94
    %v242 = vunpack.c.l.b16 %v95
    %v243 = vunpack.c.h.b16 %v95
    %v244 = vunpack.c.l.b16 %v96
    %v245 = vunpack.c.h.b16 %v96
    %v246 = vunpack.c.l.b16 %v97
    %v247 = vunpack.c.h.b16 %v97
    %v248 = vunpack.c.l.b16 %v98
    %v249 = vunpack.c.h.b16 %v98
    %v250 = vunpack.c.l.b16 %v99
    %v251 = vunpack.c.h.b16 %v99
    %v252 = vunpack.c.l.b16 %v100
    %v253 = vunpack.c.h.b16 %v100
    %v254 = vunpack.c.l.b16 %v101
    %v255 = vunpack.c.h.b16 %v101
    %v256 = vunpack.c.l.b16 %v102
    %v257 = vunpack.c.h.b16 %v102
    %v258 = vunpack.c.l.b16 %v103
    %v259 = vunpack.c.h.b16 %v103
    %v260 = vunpack.c.l.b16 %v104
    %v261 = vunpack.c.h.b16 %v104
    %v262 = vunpack.c.l.b16 %v105
    %v263 = vunpack.c.h.b16 %v105
    %v264 = vunpack.c.l.b16 %v106
    %v265 = vunpack.c.h.b16 %v106
    %v266 = vunpack.c.l.b16 %v107
    %v267 = vunpack.c.h.b16 %v107
    %v268 = vunpack.c.l.b16 %v108
    %v269 = vunpack.c.h.b16 %v108
    %v270 = vunpack.c.l.b16 %v109
    %v271 = vunpack.c.h.b16 %v109
    %v272 = vpack.c.b16 %v212, %v208
    %v273 = vpack.c.b16 %v213, %v209
    %v274 = vpack.c.b16 %v214, %v210
    %v275 = vpack.c.b16 %v215, %v211
    %v276 = vpack.c.b16 %v220, %v216
    %v277 = vpack.c.b16 %v221, %v217
    %v278 = vpack.c.b16 %v222, %v218
    %v279 = vpack.c.b16 %v223, %v219
    %v280 = vpack.c.b16 %v228, %v224
    %v281 = vpack.c.b16 %v229, %v225
    %v282 = vpack.c.b16 %v230, %v226
    %v283 = vpack.c.b16 %v231, %v227
    %v284 = vpack.c.b16 %v236, %v232
    %v285 = vpack.c.b16 %v237, %v233
    %v286 = vpack.c.b16 %v238, %v234
    %v287 = vpack.c.b16 %v239, %v235
    %v288 = vpack.c.b16 %v244, %v240
    %v289 = vpack.c.b16 %v245, %v241
    %v290 = vpack.c.b16 %v246, %v242
    %v291 = vpack.c.b16 %v247, %v243
    %v292 = vpack.c.b16 %v252, %v248
    %v293 = vpack.c.b16 %v253, %v249
    %v294 = vpack.c.b16 %v254, %v250
    %v295 = vpack.c.b16 %v255, %v251
    %v296 = vpack.c.b16 %v260, %v256
    %v297 = vpack.c.b16 %v261, %v257
    %v298 = vpack.c.b16 %v262, %v258
    %v299 = vpack.c.b16 %v263, %v259
    %v300 = vpack.c.b16 %v268, %v264
    %v301 = vpack.c.b16 %v269, %v265
    %v302 = vpack.c.b16 %v270, %v266
    %v303 = vpack.c.b16 %v271, %v267
    %336 = vmatprep.subr.bf16.mxu0 %v273
    %337 = vmatpush1.bf16.msra.mxu0 %v272
    %338 = vmatprep.subr.bf16.mxu0 %v277
    %339 = vmatpush1.bf16.msra.mxu0 %v276
    %340 = vmatprep.subr.bf16.mxu0 %v281
    %341 = vmatpush1.bf16.msra.mxu0 %v280
    %342 = vmatprep.subr.bf16.mxu0 %v285
    %343 = vmatpush1.bf16.msra.mxu0 %v284
    %344 = vmatprep.subr.bf16.mxu0 %v289
    %345 = vmatpush1.bf16.msra.mxu0 %v288
    %346 = vmatprep.subr.bf16.mxu0 %v293
    %347 = vmatpush1.bf16.msra.mxu0 %v292
    %348 = vmatprep.subr.bf16.mxu0 %v297
    %349 = vmatpush1.bf16.msra.mxu0 %v296
    %350 = vmatprep.subr.bf16.mxu0 %v301
    %351 = vmatpush1.bf16.msra.mxu0 %v300
    %352 = vmatprep.subr.bf16.mxu0 0
    %353 = vmatpush1.bf16.msra.mxu0 0
    %354 = vmatprep.subr.bf16.mxu0 0
    %355 = vmatpush1.bf16.msra.mxu0 0
    %356 = vmatprep.subr.bf16.mxu0 0
    %357 = vmatpush1.bf16.msra.mxu0 0
    %358 = vmatprep.subr.bf16.mxu0 0
    %359 = vmatpush1.bf16.msra.mxu0 0
    %360 = vmatprep.subr.bf16.mxu0 0
    %361 = vmatpush1.bf16.msra.mxu0 0
    %362 = vmatprep.subr.bf16.mxu0 0
    %363 = vmatpush1.bf16.msra.mxu0 0
    %364 = vmatprep.subr.bf16.mxu0 0
    %365 = vmatpush1.bf16.msra.mxu0 0
    %366 = vmatprep.subr.bf16.mxu0 0
    %367 = vmatpush1.bf16.msra.mxu0 0
    %368 = vmatprep.mubr.bf16.mxu0 0
    %369 = vmatmul.mubr.bf16.gmra.mrb[0].mxu0 %v151
    %v370 = vpop.f32.mrb[0].mxu0
    %v371 = vadd.f32 %v159, %v370
    %v372 = vpop.f32.mrb[0].mxu0
    %v373 = vadd.f32 %v163, %v372
    %v374 = vpop.f32.mrb[0].mxu0
    %v375 = vadd.f32 %v159, %v374
    %v376 = vpop.f32.mrb[0].mxu0
    %v377 = vadd.f32 %v163, %v376
    %378 = vmatprep.mubr.bf16.mxu0 0
    %379 = vmatmul.mubr.bf16.gmra.mrb[0].mxu0 %v152
    %v380 = vpop.f32.mrb[0].mxu0
    %v381 = vadd.f32 %v159, %v380
    %v382 = vpop.f32.mrb[0].mxu0
    %v383 = vadd.f32 %v163, %v382
    %v384 = vpop.f32.mrb[0].mxu0
    %v385 = vadd.f32 %v159, %v384
    %v386 = vpop.f32.mrb[0].mxu0
    %v387 = vadd.f32 %v163, %v386
    %388 = vmatprep.mubr.bf16.mxu0 0
    %389 = vmatmul.mubr.bf16.gmra.mrb[0].mxu0 %v153
    %v390 = vpop.f32.mrb[0].mxu0
    %v391 = vadd.f32 %v159, %v390
    %v392 = vpop.f32.mrb[0].mxu0
    %v393 = vadd.f32 %v163, %v392
    %v394 = vpop.f32.mrb[0].mxu0
    %v395 = vadd.f32 %v159, %v394
    %v396 = vpop.f32.mrb[0].mxu0
    %v397 = vadd.f32 %v163, %v396
    %398 = vmatprep.mubr.bf16.mxu0 0
    %399 = vmatmul.mubr.bf16.gmra.mrb[0].mxu0 %v154
    %v400 = vpop.f32.mrb[0].mxu0
    %v401 = vadd.f32 %v159, %v400
    %v402 = vpop.f32.mrb[0].mxu0
    %v403 = vadd.f32 %v163, %v402
    %v404 = vpop.f32.mrb[0].mxu0
    %v405 = vadd.f32 %v159, %v404
    %v406 = vpop.f32.mrb[0].mxu0
    %v407 = vadd.f32 %v163, %v406
    %408 = vdwg.mxu0
    %409 = vmatprep.subr.bf16.mxu0 %v275
    %410 = vmatpush1.bf16.msra.mxu0 %v274
    %411 = vmatprep.subr.bf16.mxu0 %v279
    %412 = vmatpush1.bf16.msra.mxu0 %v278
    %413 = vmatprep.subr.bf16.mxu0 %v283
    %414 = vmatpush1.bf16.msra.mxu0 %v282
    %415 = vmatprep.subr.bf16.mxu0 %v287
    %416 = vmatpush1.bf16.msra.mxu0 %v286
    %417 = vmatprep.subr.bf16.mxu0 %v291
    %418 = vmatpush1.bf16.msra.mxu0 %v290
    %419 = vmatprep.subr.bf16.mxu0 %v295
    %420 = vmatpush1.bf16.msra.mxu0 %v294
    %421 = vmatprep.subr.bf16.mxu0 %v299
    %422 = vmatpush1.bf16.msra.mxu0 %v298
    %423 = vmatprep.subr.bf16.mxu0 %v303
    %424 = vmatpush1.bf16.msra.mxu0 %v302
    %425 = vmatprep.subr.bf16.mxu0 0
    %426 = vmatpush1.bf16.msra.mxu0 0
    %427 = vmatprep.subr.bf16.mxu0 0
    %428 = vmatpush1.bf16.msra.mxu0 0
    %429 = vmatprep.subr.bf16.mxu0 0
    %430 = vmatpush1.bf16.msra.mxu0 0
    %431 = vmatprep.subr.bf16.mxu0 0
    %432 = vmatpush1.bf16.msra.mxu0 0
    %433 = vmatprep.subr.bf16.mxu0 0
    %434 = vmatpush1.bf16.msra.mxu0 0
    %435 = vmatprep.subr.bf16.mxu0 0
    %436 = vmatpush1.bf16.msra.mxu0 0
    %437 = vmatprep.subr.bf16.mxu0 0
    %438 = vmatpush1.bf16.msra.mxu0 0
    %439 = vmatprep.subr.bf16.mxu0 0
    %440 = vmatpush1.bf16.msra.mxu0 0
    %441 = vmatprep.mubr.bf16.mxu0 0
    %442 = vmatmul.mubr.bf16.gmra.mrb[0].mxu0 %v151
    %v443 = vpop.f32.mrb[0].mxu0
    %v444 = vadd.f32 %v167, %v443
    %v445 = vpop.f32.mrb[0].mxu0
    %v446 = vadd.f32 %v171, %v445
    %v447 = vpop.f32.mrb[0].mxu0
    %v448 = vadd.f32 %v167, %v447
    %v449 = vpop.f32.mrb[0].mxu0
    %v450 = vadd.f32 %v171, %v449
    %451 = vmatprep.mubr.bf16.mxu0 0
    %452 = vmatmul.mubr.bf16.gmra.mrb[0].mxu0 %v152
    %v453 = vpop.f32.mrb[0].mxu0
    %v454 = vadd.f32 %v167, %v453
    %v455 = vpop.f32.mrb[0].mxu0
    %v456 = vadd.f32 %v171, %v455
    %v457 = vpop.f32.mrb[0].mxu0
    %v458 = vadd.f32 %v167, %v457
    %v459 = vpop.f32.mrb[0].mxu0
    %v460 = vadd.f32 %v171, %v459
    %461 = vmatprep.mubr.bf16.mxu0 0
    %462 = vmatmul.mubr.bf16.gmra.mrb[0].mxu0 %v153
    %v463 = vpop.f32.mrb[0].mxu0
    %v464 = vadd.f32 %v167, %v463
    %v465 = vpop.f32.mrb[0].mxu0
    %v466 = vadd.f32 %v171, %v465
    %v467 = vpop.f32.mrb[0].mxu0
    %v468 = vadd.f32 %v167, %v467
    %v469 = vpop.f32.mrb[0].mxu0
    %v470 = vadd.f32 %v171, %v469
    %471 = vmatprep.mubr.bf16.mxu0 0
    %472 = vmatmul.mubr.bf16.gmra.mrb[0].mxu0 %v154
    %v473 = vpop.f32.mrb[0].mxu0
    %v474 = vadd.f32 %v167, %v473
    %v475 = vpop.f32.mrb[0].mxu0
    %v476 = vadd.f32 %v171, %v475
    %v477 = vpop.f32.mrb[0].mxu0
    %v478 = vadd.f32 %v167, %v477
    %v479 = vpop.f32.mrb[0].mxu0
    %v480 = vadd.f32 %v171, %v479
    %481 = vdwg.mxu0
    %v514 = vunpack.c.l.b16 %v110
    %v515 = vunpack.c.h.b16 %v110
    %v516 = vunpack.c.l.b16 %v111
    %v517 = vunpack.c.h.b16 %v111
    %v518 = vunpack.c.l.b16 %v112
    %v519 = vunpack.c.h.b16 %v112
    %v520 = vunpack.c.l.b16 %v113
    %v521 = vunpack.c.h.b16 %v113
    %v522 = vunpack.c.l.b16 %v114
    %v523 = vunpack.c.h.b16 %v114
    %v524 = vunpack.c.l.b16 %v115
    %v525 = vunpack.c.h.b16 %v115
    %v526 = vunpack.c.l.b16 %v116
    %v527 = vunpack.c.h.b16 %v116
    %v528 = vunpack.c.l.b16 %v117
    %v529 = vunpack.c.h.b16 %v117
    %v530 = vunpack.c.l.b16 %v118
    %v531 = vunpack.c.h.b16 %v118
    %v532 = vunpack.c.l.b16 %v119
    %v533 = vunpack.c.h.b16 %v119
    %v534 = vunpack.c.l.b16 %v120
    %v535 = vunpack.c.h.b16 %v120
    %v536 = vunpack.c.l.b16 %v121
    %v537 = vunpack.c.h.b16 %v121
    %v538 = vunpack.c.l.b16 %v122
    %v539 = vunpack.c.h.b16 %v122
    %v540 = vunpack.c.l.b16 %v123
    %v541 = vunpack.c.h.b16 %v123
    %v542 = vunpack.c.l.b16 %v124
    %v543 = vunpack.c.h.b16 %v124
    %v544 = vunpack.c.l.b16 %v125
    %v545 = vunpack.c.h.b16 %v125
    %v546 = vunpack.c.l.b16 %v126
    %v547 = vunpack.c.h.b16 %v126
    %v548 = vunpack.c.l.b16 %v127
    %v549 = vunpack.c.h.b16 %v127
    %v550 = vunpack.c.l.b16 %v128
    %v551 = vunpack.c.h.b16 %v128
    %v552 = vunpack.c.l.b16 %v129
    %v553 = vunpack.c.h.b16 %v129
    %v554 = vunpack.c.l.b16 %v130
    %v555 = vunpack.c.h.b16 %v130
    %v556 = vunpack.c.l.b16 %v131
    %v557 = vunpack.c.h.b16 %v131
    %v558 = vunpack.c.l.b16 %v132
    %v559 = vunpack.c.h.b16 %v132
    %v560 = vunpack.c.l.b16 %v133
    %v561 = vunpack.c.h.b16 %v133
    %v562 = vunpack.c.l.b16 %v134
    %v563 = vunpack.c.h.b16 %v134
    %v564 = vunpack.c.l.b16 %v135
    %v565 = vunpack.c.h.b16 %v135
    %v566 = vunpack.c.l.b16 %v136
    %v567 = vunpack.c.h.b16 %v136
    %v568 = vunpack.c.l.b16 %v137
    %v569 = vunpack.c.h.b16 %v137
    %v570 = vunpack.c.l.b16 %v138
    %v571 = vunpack.c.h.b16 %v138
    %v572 = vunpack.c.l.b16 %v139
    %v573 = vunpack.c.h.b16 %v139
    %v574 = vunpack.c.l.b16 %v140
    %v575 = vunpack.c.h.b16 %v140
    %v576 = vunpack.c.l.b16 %v141
    %v577 = vunpack.c.h.b16 %v141
    %v578 = vpack.c.b16 %v518, %v514
    %v579 = vpack.c.b16 %v519, %v515
    %v580 = vpack.c.b16 %v520, %v516
    %v581 = vpack.c.b16 %v521, %v517
    %v582 = vpack.c.b16 %v526, %v522
    %v583 = vpack.c.b16 %v527, %v523
    %v584 = vpack.c.b16 %v528, %v524
    %v585 = vpack.c.b16 %v529, %v525
    %v586 = vpack.c.b16 %v534, %v530
    %v587 = vpack.c.b16 %v535, %v531
    %v588 = vpack.c.b16 %v536, %v532
    %v589 = vpack.c.b16 %v537, %v533
    %v590 = vpack.c.b16 %v542, %v538
    %v591 = vpack.c.b16 %v543, %v539
    %v592 = vpack.c.b16 %v544, %v540
    %v593 = vpack.c.b16 %v545, %v541
    %v594 = vpack.c.b16 %v550, %v546
    %v595 = vpack.c.b16 %v551, %v547
    %v596 = vpack.c.b16 %v552, %v548
    %v597 = vpack.c.b16 %v553, %v549
    %v598 = vpack.c.b16 %v558, %v554
    %v599 = vpack.c.b16 %v559, %v555
    %v600 = vpack.c.b16 %v560, %v556
    %v601 = vpack.c.b16 %v561, %v557
    %v602 = vpack.c.b16 %v566, %v562
    %v603 = vpack.c.b16 %v567, %v563
    %v604 = vpack.c.b16 %v568, %v564
    %v605 = vpack.c.b16 %v569, %v565
    %v606 = vpack.c.b16 %v574, %v570
    %v607 = vpack.c.b16 %v575, %v571
    %v608 = vpack.c.b16 %v576, %v572
    %v609 = vpack.c.b16 %v577, %v573
    %642 = vmatprep.subr.bf16.mxu0 %v579
    %643 = vmatpush1.bf16.msra.mxu0 %v578
    %644 = vmatprep.subr.bf16.mxu0 %v583
    %645 = vmatpush1.bf16.msra.mxu0 %v582
    %646 = vmatprep.subr.bf16.mxu0 %v587
    %647 = vmatpush1.bf16.msra.mxu0 %v586
    %648 = vmatprep.subr.bf16.mxu0 %v591
    %649 = vmatpush1.bf16.msra.mxu0 %v590
    %650 = vmatprep.subr.bf16.mxu0 %v595
    %651 = vmatpush1.bf16.msra.mxu0 %v594
    %652 = vmatprep.subr.bf16.mxu0 %v599
    %653 = vmatpush1.bf16.msra.mxu0 %v598
    %654 = vmatprep.subr.bf16.mxu0 %v603
    %655 = vmatpush1.bf16.msra.mxu0 %v602
    %656 = vmatprep.subr.bf16.mxu0 %v607
    %657 = vmatpush1.bf16.msra.mxu0 %v606
    %658 = vmatprep.subr.bf16.mxu0 0
    %659 = vmatpush1.bf16.msra.mxu0 0
    %660 = vmatprep.subr.bf16.mxu0 0
    %661 = vmatpush1.bf16.msra.mxu0 0
    %662 = vmatprep.subr.bf16.mxu0 0
    %663 = vmatpush1.bf16.msra.mxu0 0
    %664 = vmatprep.subr.bf16.mxu0 0
    %665 = vmatpush1.bf16.msra.mxu0 0
    %666 = vmatprep.subr.bf16.mxu0 0
    %667 = vmatpush1.bf16.msra.mxu0 0
    %668 = vmatprep.subr.bf16.mxu0 0
    %669 = vmatpush1.bf16.msra.mxu0 0
    %670 = vmatprep.subr.bf16.mxu0 0
    %671 = vmatpush1.bf16.msra.mxu0 0
    %672 = vmatprep.subr.bf16.mxu0 0
    %673 = vmatpush1.bf16.msra.mxu0 0
    %674 = vmatprep.mubr.bf16.mxu0 0
    %675 = vmatmul.mubr.bf16.gmra.mrb[0].mxu0 0
    %v676 = vpop.f32.mrb[0].mxu0
    %v677 = vadd.f32 0.0, %v676
    %v678 = vpop.f32.mrb[0].mxu0
    %v679 = vadd.f32 0.0, %v678
    %v680 = vpop.f32.mrb[0].mxu0
    %v681 = vpop.f32.mrb[0].mxu0
    %682 = vdwg.mxu0
    %683 = vmatprep.subr.bf16.mxu0 %v581
    %684 = vmatpush1.bf16.msra.mxu0 %v580
    %685 = vmatprep.subr.bf16.mxu0 %v585
    %686 = vmatpush1.bf16.msra.mxu0 %v584
    %687 = vmatprep.subr.bf16.mxu0 %v589
    %688 = vmatpush1.bf16.msra.mxu0 %v588
    %689 = vmatprep.subr.bf16.mxu0 %v593
    %690 = vmatpush1.bf16.msra.mxu0 %v592
    %691 = vmatprep.subr.bf16.mxu0 %v597
    %692 = vmatpush1.bf16.msra.mxu0 %v596
    %693 = vmatprep.subr.bf16.mxu0 %v601
    %694 = vmatpush1.bf16.msra.mxu0 %v600
    %695 = vmatprep.subr.bf16.mxu0 %v605
    %696 = vmatpush1.bf16.msra.mxu0 %v604
    %697 = vmatprep.subr.bf16.mxu0 %v609
    %698 = vmatpush1.bf16.msra.mxu0 %v608
    %699 = vmatprep.subr.bf16.mxu0 0
    %700 = vmatpush1.bf16.msra.mxu0 0
    %701 = vmatprep.subr.bf16.mxu0 0
    %702 = vmatpush1.bf16.msra.mxu0 0
    %703 = vmatprep.subr.bf16.mxu0 0
    %704 = vmatpush1.bf16.msra.mxu0 0
    %705 = vmatprep.subr.bf16.mxu0 0
    %706 = vmatpush1.bf16.msra.mxu0 0
    %707 = vmatprep.subr.bf16.mxu0 0
    %708 = vmatpush1.bf16.msra.mxu0 0
    %709 = vmatprep.subr.bf16.mxu0 0
    %710 = vmatpush1.bf16.msra.mxu0 0
    %711 = vmatprep.subr.bf16.mxu0 0
    %712 = vmatpush1.bf16.msra.mxu0 0
    %713 = vmatprep.subr.bf16.mxu0 0
    %714 = vmatpush1.bf16.msra.mxu0 0
    %715 = vmatprep.mubr.bf16.mxu0 0
    %716 = vmatmul.mubr.bf16.gmra.mrb[0].mxu0 0
    %v717 = vpop.f32.mrb[0].mxu0
    %v718 = vadd.f32 0.0, %v717
    %v719 = vpop.f32.mrb[0].mxu0
    %v720 = vadd.f32 0.0, %v719
    %v721 = vpop.f32.mrb[0].mxu0
    %v722 = vpop.f32.mrb[0].mxu0
    %723 = vdwg.mxu0
    %v724 = vadd.f32 %v371, %v677
    %v725 = vadd.f32 %v373, %v679
    %v726 = vadd.f32 %v444, %v718
    %v727 = vadd.f32 %v446, %v720
    %v728 = vxor.u32 %v724, 2147483648
    %v729 = vmul.f32 %v728, 1.442695
    %v730 = vpow.pop %v729
    %v731 = vadd.f32 %v730, 1.0
    %v732 = vrcp.pop %v731
    %v733 = vmul.f32 1.0, %v732
    %v734 = vxor.u32 %v725, 2147483648
    %v735 = vmul.f32 %v734, 1.442695
    %v736 = vpow.pop %v735
    %v737 = vadd.f32 %v736, 1.0
    %v738 = vrcp.pop %v737
    %v739 = vmul.f32 1.0, %v738
    %v740 = vtanh.pop %v726
    %v741 = vxor.u32 %v727, 2147483648
    %v742 = vmul.f32 %v741, 1.442695
    %v743 = vpow.pop %v742
    %v744 = vadd.f32 %v743, 1.0
    %v745 = vrcp.pop %v744
    %v746 = vmul.f32 1.0, %v745
    %v747 = vmul.f32 %v739, 0.0
    %v748 = vmul.f32 %v733, %v740
    %v749 = vadd.f32 %v747, %v748
    %v750 = vtanh.pop %v749
    %v751 = vmul.f32 %v746, %v750
    %752 = vst [vmem:[#allocation2] sm:$0xff] %v751
    %v753 = vpack.c.bf16 %v751, %v751
    %754 = vmatprep.subr.bf16.mxu0 %v579
    %755 = vmatpush1.bf16.msra.mxu0 %v578
    %756 = vmatprep.subr.bf16.mxu0 %v583
    %757 = vmatpush1.bf16.msra.mxu0 %v582
    %758 = vmatprep.subr.bf16.mxu0 %v587
    %759 = vmatpush1.bf16.msra.mxu0 %v586
    %760 = vmatprep.subr.bf16.mxu0 %v591
    %761 = vmatpush1.bf16.msra.mxu0 %v590
    %762 = vmatprep.subr.bf16.mxu0 %v595
    %763 = vmatpush1.bf16.msra.mxu0 %v594
    %764 = vmatprep.subr.bf16.mxu0 %v599
    %765 = vmatpush1.bf16.msra.mxu0 %v598
    %766 = vmatprep.subr.bf16.mxu0 %v603
    %767 = vmatpush1.bf16.msra.mxu0 %v602
    %768 = vmatprep.subr.bf16.mxu0 %v607
    %769 = vmatpush1.bf16.msra.mxu0 %v606
    %770 = vmatprep.subr.bf16.mxu0 0
    %771 = vmatpush1.bf16.msra.mxu0 0
    %772 = vmatprep.subr.bf16.mxu0 0
    %773 = vmatpush1.bf16.msra.mxu0 0
    %774 = vmatprep.subr.bf16.mxu0 0
    %775 = vmatpush1.bf16.msra.mxu0 0
    %776 = vmatprep.subr.bf16.mxu0 0
    %777 = vmatpush1.bf16.msra.mxu0 0
    %778 = vmatprep.subr.bf16.mxu0 0
    %779 = vmatpush1.bf16.msra.mxu0 0
    %780 = vmatprep.subr.bf16.mxu0 0
    %781 = vmatpush1.bf16.msra.mxu0 0
    %782 = vmatprep.subr.bf16.mxu0 0
    %783 = vmatpush1.bf16.msra.mxu0 0
    %784 = vmatprep.subr.bf16.mxu0 0
    %785 = vmatpush1.bf16.msra.mxu0 0
    %786 = vmatprep.mubr.bf16.mxu0 0
    %787 = vmatmul.mubr.bf16.gmra.mrb[0].mxu0 %v753
    %v788 = vpop.f32.mrb[0].mxu0
    %v789 = vadd.f32 0.0, %v788
    %v790 = vpop.f32.mrb[0].mxu0
    %v791 = vadd.f32 0.0, %v790
    %v792 = vpop.f32.mrb[0].mxu0
    %v793 = vpop.f32.mrb[0].mxu0
    %794 = vdwg.mxu0
    %795 = vmatprep.subr.bf16.mxu0 %v581
    %796 = vmatpush1.bf16.msra.mxu0 %v580
    %797 = vmatprep.subr.bf16.mxu0 %v585
    %798 = vmatpush1.bf16.msra.mxu0 %v584
    %799 = vmatprep.subr.bf16.mxu0 %v589
    %800 = vmatpush1.bf16.msra.mxu0 %v588
    %801 = vmatprep.subr.bf16.mxu0 %v593
    %802 = vmatpush1.bf16.msra.mxu0 %v592
    %803 = vmatprep.subr.bf16.mxu0 %v597
    %804 = vmatpush1.bf16.msra.mxu0 %v596
    %805 = vmatprep.subr.bf16.mxu0 %v601
    %806 = vmatpush1.bf16.msra.mxu0 %v600
    %807 = vmatprep.subr.bf16.mxu0 %v605
    %808 = vmatpush1.bf16.msra.mxu0 %v604
    %809 = vmatprep.subr.bf16.mxu0 %v609
    %810 = vmatpush1.bf16.msra.mxu0 %v608
    %811 = vmatprep.subr.bf16.mxu0 0
    %812 = vmatpush1.bf16.msra.mxu0 0
    %813 = vmatprep.subr.bf16.mxu0 0
    %814 = vmatpush1.bf16.msra.mxu0 0
    %815 = vmatprep.subr.bf16.mxu0 0
    %816 = vmatpush1.bf16.msra.mxu0 0
    %817 = vmatprep.subr.bf16.mxu0 0
    %818 = vmatpush1.bf16.msra.mxu0 0
    %819 = vmatprep.subr.bf16.mxu0 0
    %820 = vmatpush1.bf16.msra.mxu0 0
    %821 = vmatprep.subr.bf16.mxu0 0
    %822 = vmatpush1.bf16.msra.mxu0 0
    %823 = vmatprep.subr.bf16.mxu0 0
    %824 = vmatpush1.bf16.msra.mxu0 0
    %825 = vmatprep.subr.bf16.mxu0 0
    %826 = vmatpush1.bf16.msra.mxu0 0
    %827 = vmatprep.mubr.bf16.mxu0 0
    %828 = vmatmul.mubr.bf16.gmra.mrb[0].mxu0 %v753
    %v829 = vpop.f32.mrb[0].mxu0
    %v830 = vadd.f32 0.0, %v829
    %v831 = vpop.f32.mrb[0].mxu0
    %v832 = vadd.f32 0.0, %v831
    %v833 = vpop.f32.mrb[0].mxu0
    %v834 = vpop.f32.mrb[0].mxu0
    %835 = vdwg.mxu0
    %v836 = vadd.f32 %v375, %v789
    %v837 = vadd.f32 %v377, %v791
    %v838 = vadd.f32 %v448, %v830
    %v839 = vadd.f32 %v450, %v832
    %v840 = vxor.u32 %v836, 2147483648
    %v841 = vmul.f32 %v840, 1.442695
    %v842 = vpow.pop %v841
    %v843 = vadd.f32 %v842, 1.0
    %v844 = vrcp.pop %v843
    %v845 = vmul.f32 1.0, %v844
    %v846 = vxor.u32 %v837, 2147483648
    %v847 = vmul.f32 %v846, 1.442695
    %v848 = vpow.pop %v847
    %v849 = vadd.f32 %v848, 1.0
    %v850 = vrcp.pop %v849
    %v851 = vmul.f32 1.0, %v850
    %v852 = vtanh.pop %v838
    %v853 = vxor.u32 %v839, 2147483648
    %v854 = vmul.f32 %v853, 1.442695
    %v855 = vpow.pop %v854
    %v856 = vadd.f32 %v855, 1.0
    %v857 = vrcp.pop %v856
    %v858 = vmul.f32 1.0, %v857
    %v859 = vmul.f32 %v851, %v749
    %v860 = vmul.f32 %v845, %v852
    %v861 = vadd.f32 %v859, %v860
    %v862 = vtanh.pop %v861
    %v863 = vmul.f32 %v858, %v862
    %864 = vst [vmem:[#allocation2 + $0x8] sm:$0xff] %v863
    %v865 = vpack.c.bf16 %v863, %v863
    %866 = vmatprep.subr.bf16.mxu0 %v579
    %867 = vmatpush1.bf16.msra.mxu0 %v578
    %868 = vmatprep.subr.bf16.mxu0 %v583
    %869 = vmatpush1.bf16.msra.mxu0 %v582
    %870 = vmatprep.subr.bf16.mxu0 %v587
    %871 = vmatpush1.bf16.msra.mxu0 %v586
    %872 = vmatprep.subr.bf16.mxu0 %v591
    %873 = vmatpush1.bf16.msra.mxu0 %v590
    %874 = vmatprep.subr.bf16.mxu0 %v595
    %875 = vmatpush1.bf16.msra.mxu0 %v594
    %876 = vmatprep.subr.bf16.mxu0 %v599
    %877 = vmatpush1.bf16.msra.mxu0 %v598
    %878 = vmatprep.subr.bf16.mxu0 %v603
    %879 = vmatpush1.bf16.msra.mxu0 %v602
    %880 = vmatprep.subr.bf16.mxu0 %v607
    %881 = vmatpush1.bf16.msra.mxu0 %v606
    %882 = vmatprep.subr.bf16.mxu0 0
    %883 = vmatpush1.bf16.msra.mxu0 0
    %884 = vmatprep.subr.bf16.mxu0 0
    %885 = vmatpush1.bf16.msra.mxu0 0
    %886 = vmatprep.subr.bf16.mxu0 0
    %887 = vmatpush1.bf16.msra.mxu0 0
    %888 = vmatprep.subr.bf16.mxu0 0
    %889 = vmatpush1.bf16.msra.mxu0 0
    %890 = vmatprep.subr.bf16.mxu0 0
    %891 = vmatpush1.bf16.msra.mxu0 0
    %892 = vmatprep.subr.bf16.mxu0 0
    %893 = vmatpush1.bf16.msra.mxu0 0
    %894 = vmatprep.subr.bf16.mxu0 0
    %895 = vmatpush1.bf16.msra.mxu0 0
    %896 = vmatprep.subr.bf16.mxu0 0
    %897 = vmatpush1.bf16.msra.mxu0 0
    %898 = vmatprep.mubr.bf16.mxu0 0
    %899 = vmatmul.mubr.bf16.gmra.mrb[0].mxu0 %v865
    %v900 = vpop.f32.mrb[0].mxu0
    %v901 = vadd.f32 0.0, %v900
    %v902 = vpop.f32.mrb[0].mxu0
    %v903 = vadd.f32 0.0, %v902
    %v904 = vpop.f32.mrb[0].mxu0
    %v905 = vpop.f32.mrb[0].mxu0
    %906 = vdwg.mxu0
    %907 = vmatprep.subr.bf16.mxu0 %v581
    %908 = vmatpush1.bf16.msra.mxu0 %v580
    %909 = vmatprep.subr.bf16.mxu0 %v585
    %910 = vmatpush1.bf16.msra.mxu0 %v584
    %911 = vmatprep.subr.bf16.mxu0 %v589
    %912 = vmatpush1.bf16.msra.mxu0 %v588
    %913 = vmatprep.subr.bf16.mxu0 %v593
    %914 = vmatpush1.bf16.msra.mxu0 %v592
    %915 = vmatprep.subr.bf16.mxu0 %v597
    %916 = vmatpush1.bf16.msra.mxu0 %v596
    %917 = vmatprep.subr.bf16.mxu0 %v601
    %918 = vmatpush1.bf16.msra.mxu0 %v600
    %919 = vmatprep.subr.bf16.mxu0 %v605
    %920 = vmatpush1.bf16.msra.mxu0 %v604
    %921 = vmatprep.subr.bf16.mxu0 %v609
    %922 = vmatpush1.bf16.msra.mxu0 %v608
    %923 = vmatprep.subr.bf16.mxu0 0
    %924 = vmatpush1.bf16.msra.mxu0 0
    %925 = vmatprep.subr.bf16.mxu0 0
    %926 = vmatpush1.bf16.msra.mxu0 0
    %927 = vmatprep.subr.bf16.mxu0 0
    %928 = vmatpush1.bf16.msra.mxu0 0
    %929 = vmatprep.subr.bf16.mxu0 0
    %930 = vmatpush1.bf16.msra.mxu0 0
    %931 = vmatprep.subr.bf16.mxu0 0
    %932 = vmatpush1.bf16.msra.mxu0 0
    %933 = vmatprep.subr.bf16.mxu0 0
    %934 = vmatpush1.bf16.msra.mxu0 0
    %935 = vmatprep.subr.bf16.mxu0 0
    %936 = vmatpush1.bf16.msra.mxu0 0
    %937 = vmatprep.subr.bf16.mxu0 0
    %938 = vmatpush1.bf16.msra.mxu0 0
    %939 = vmatprep.mubr.bf16.mxu0 0
    %940 = vmatmul.mubr.bf16.gmra.mrb[0].mxu0 %v865
    %v941 = vpop.f32.mrb[0].mxu0
    %v942 = vadd.f32 0.0, %v941
    %v943 = vpop.f32.mrb[0].mxu0
    %v944 = vadd.f32 0.0, %v943
    %v945 = vpop.f32.mrb[0].mxu0
    %v946 = vpop.f32.mrb[0].mxu0
    %947 = vdwg.mxu0
    %v948 = vadd.f32 %v381, %v901
    %v949 = vadd.f32 %v383, %v903
    %v950 = vadd.f32 %v454, %v942
    %v951 = vadd.f32 %v456, %v944
    %v952 = vxor.u32 %v948, 2147483648
    %v953 = vmul.f32 %v952, 1.442695
    %v954 = vpow.pop %v953
    %v955 = vadd.f32 %v954, 1.0
    %v956 = vrcp.pop %v955
    %v957 = vmul.f32 1.0, %v956
    %v958 = vxor.u32 %v949, 2147483648
    %v959 = vmul.f32 %v958, 1.442695
    %v960 = vpow.pop %v959
    %v961 = vadd.f32 %v960, 1.0
    %v962 = vrcp.pop %v961
    %v963 = vmul.f32 1.0, %v962
    %v964 = vtanh.pop %v950
    %v965 = vxor.u32 %v951, 2147483648
    %v966 = vmul.f32 %v965, 1.442695
    %v967 = vpow.pop %v966
    %v968 = vadd.f32 %v967, 1.0
    %v969 = vrcp.pop %v968
    %v970 = vmul.f32 1.0, %v969
    %v971 = vmul.f32 %v963, %v861
    %v972 = vmul.f32 %v957, %v964
    %v973 = vadd.f32 %v971, %v972
    %v974 = vtanh.pop %v973
    %v975 = vmul.f32 %v970, %v974
    %976 = vst [vmem:[#allocation2 + $0x10] sm:$0xff] %v975
    %v977 = vpack.c.bf16 %v975, %v975
    %978 = vmatprep.subr.bf16.mxu0 %v579
    %979 = vmatpush1.bf16.msra.mxu0 %v578
    %980 = vmatprep.subr.bf16.mxu0 %v583
    %981 = vmatpush1.bf16.msra.mxu0 %v582
    %982 = vmatprep.subr.bf16.mxu0 %v587
    %983 = vmatpush1.bf16.msra.mxu0 %v586
    %984 = vmatprep.subr.bf16.mxu0 %v591
    %985 = vmatpush1.bf16.msra.mxu0 %v590
    %986 = vmatprep.subr.bf16.mxu0 %v595
    %987 = vmatpush1.bf16.msra.mxu0 %v594
    %988 = vmatprep.subr.bf16.mxu0 %v599
    %989 = vmatpush1.bf16.msra.mxu0 %v598
    %990 = vmatprep.subr.bf16.mxu0 %v603
    %991 = vmatpush1.bf16.msra.mxu0 %v602
    %992 = vmatprep.subr.bf16.mxu0 %v607
    %993 = vmatpush1.bf16.msra.mxu0 %v606
    %994 = vmatprep.subr.bf16.mxu0 0
    %995 = vmatpush1.bf16.msra.mxu0 0
    %996 = vmatprep.subr.bf16.mxu0 0
    %997 = vmatpush1.bf16.msra.mxu0 0
    %998 = vmatprep.subr.bf16.mxu0 0
    %999 = vmatpush1.bf16.msra.mxu0 0
    %1000 = vmatprep.subr.bf16.mxu0 0
    %1001 = vmatpush1.bf16.msra.mxu0 0
    %1002 = vmatprep.subr.bf16.mxu0 0
    %1003 = vmatpush1.bf16.msra.mxu0 0
    %1004 = vmatprep.subr.bf16.mxu0 0
    %1005 = vmatpush1.bf16.msra.mxu0 0
    %1006 = vmatprep.subr.bf16.mxu0 0
    %1007 = vmatpush1.bf16.msra.mxu0 0
    %1008 = vmatprep.subr.bf16.mxu0 0
    %1009 = vmatpush1.bf16.msra.mxu0 0
    %1010 = vmatprep.mubr.bf16.mxu0 0
    %1011 = vmatmul.mubr.bf16.gmra.mrb[0].mxu0 %v977
    %v1012 = vpop.f32.mrb[0].mxu0
    %v1013 = vadd.f32 0.0, %v1012
    %v1014 = vpop.f32.mrb[0].mxu0
    %v1015 = vadd.f32 0.0, %v1014
    %v1016 = vpop.f32.mrb[0].mxu0
    %v1017 = vpop.f32.mrb[0].mxu0
    %1018 = vdwg.mxu0
    %1019 = vmatprep.subr.bf16.mxu0 %v581
    %1020 = vmatpush1.bf16.msra.mxu0 %v580
    %1021 = vmatprep.subr.bf16.mxu0 %v585
    %1022 = vmatpush1.bf16.msra.mxu0 %v584
    %1023 = vmatprep.subr.bf16.mxu0 %v589
    %1024 = vmatpush1.bf16.msra.mxu0 %v588
    %1025 = vmatprep.subr.bf16.mxu0 %v593
    %1026 = vmatpush1.bf16.msra.mxu0 %v592
    %1027 = vmatprep.subr.bf16.mxu0 %v597
    %1028 = vmatpush1.bf16.msra.mxu0 %v596
    %1029 = vmatprep.subr.bf16.mxu0 %v601
    %1030 = vmatpush1.bf16.msra.mxu0 %v600
    %1031 = vmatprep.subr.bf16.mxu0 %v605
    %1032 = vmatpush1.bf16.msra.mxu0 %v604
    %1033 = vmatprep.subr.bf16.mxu0 %v609
    %1034 = vmatpush1.bf16.msra.mxu0 %v608
    %1035 = vmatprep.subr.bf16.mxu0 0
    %1036 = vmatpush1.bf16.msra.mxu0 0
    %1037 = vmatprep.subr.bf16.mxu0 0
    %1038 = vmatpush1.bf16.msra.mxu0 0
    %1039 = vmatprep.subr.bf16.mxu0 0
    %1040 = vmatpush1.bf16.msra.mxu0 0
    %1041 = vmatprep.subr.bf16.mxu0 0
    %1042 = vmatpush1.bf16.msra.mxu0 0
    %1043 = vmatprep.subr.bf16.mxu0 0
    %1044 = vmatpush1.bf16.msra.mxu0 0
    %1045 = vmatprep.subr.bf16.mxu0 0
    %1046 = vmatpush1.bf16.msra.mxu0 0
    %1047 = vmatprep.subr.bf16.mxu0 0
    %1048 = vmatpush1.bf16.msra.mxu0 0
    %1049 = vmatprep.subr.bf16.mxu0 0
    %1050 = vmatpush1.bf16.msra.mxu0 0
    %1051 = vmatprep.mubr.bf16.mxu0 0
    %1052 = vmatmul.mubr.bf16.gmra.mrb[0].mxu0 %v977
    %v1053 = vpop.f32.mrb[0].mxu0
    %v1054 = vadd.f32 0.0, %v1053
    %v1055 = vpop.f32.mrb[0].mxu0
    %v1056 = vadd.f32 0.0, %v1055
    %v1057 = vpop.f32.mrb[0].mxu0
    %v1058 = vpop.f32.mrb[0].mxu0
    %1059 = vdwg.mxu0
    %v1060 = vadd.f32 %v385, %v1013
    %v1061 = vadd.f32 %v387, %v1015
    %v1062 = vadd.f32 %v458, %v1054
    %v1063 = vadd.f32 %v460, %v1056
    %v1064 = vxor.u32 %v1060, 2147483648
    %v1065 = vmul.f32 %v1064, 1.442695
    %v1066 = vpow.pop %v1065
    %v1067 = vadd.f32 %v1066, 1.0
    %v1068 = vrcp.pop %v1067
    %v1069 = vmul.f32 1.0, %v1068
    %v1070 = vxor.u32 %v1061, 2147483648
    %v1071 = vmul.f32 %v1070, 1.442695
    %v1072 = vpow.pop %v1071
    %v1073 = vadd.f32 %v1072, 1.0
    %v1074 = vrcp.pop %v1073
    %v1075 = vmul.f32 1.0, %v1074
    %v1076 = vtanh.pop %v1062
    %v1077 = vxor.u32 %v1063, 2147483648
    %v1078 = vmul.f32 %v1077, 1.442695
    %v1079 = vpow.pop %v1078
    %v1080 = vadd.f32 %v1079, 1.0
    %v1081 = vrcp.pop %v1080
    %v1082 = vmul.f32 1.0, %v1081
    %v1083 = vmul.f32 %v1075, %v973
    %v1084 = vmul.f32 %v1069, %v1076
    %v1085 = vadd.f32 %v1083, %v1084
    %v1086 = vtanh.pop %v1085
    %v1087 = vmul.f32 %v1082, %v1086
    %1088 = vst [vmem:[#allocation2 + $0x18] sm:$0xff] %v1087
    %v1089 = vpack.c.bf16 %v1087, %v1087
    %1090 = vmatprep.subr.bf16.mxu0 %v579
    %1091 = vmatpush1.bf16.msra.mxu0 %v578
    %1092 = vmatprep.subr.bf16.mxu0 %v583
    %1093 = vmatpush1.bf16.msra.mxu0 %v582
    %1094 = vmatprep.subr.bf16.mxu0 %v587
    %1095 = vmatpush1.bf16.msra.mxu0 %v586
    %1096 = vmatprep.subr.bf16.mxu0 %v591
    %1097 = vmatpush1.bf16.msra.mxu0 %v590
    %1098 = vmatprep.subr.bf16.mxu0 %v595
    %1099 = vmatpush1.bf16.msra.mxu0 %v594
    %1100 = vmatprep.subr.bf16.mxu0 %v599
    %1101 = vmatpush1.bf16.msra.mxu0 %v598
    %1102 = vmatprep.subr.bf16.mxu0 %v603
    %1103 = vmatpush1.bf16.msra.mxu0 %v602
    %1104 = vmatprep.subr.bf16.mxu0 %v607
    %1105 = vmatpush1.bf16.msra.mxu0 %v606
    %1106 = vmatprep.subr.bf16.mxu0 0
    %1107 = vmatpush1.bf16.msra.mxu0 0
    %1108 = vmatprep.subr.bf16.mxu0 0
    %1109 = vmatpush1.bf16.msra.mxu0 0
    %1110 = vmatprep.subr.bf16.mxu0 0
    %1111 = vmatpush1.bf16.msra.mxu0 0
    %1112 = vmatprep.subr.bf16.mxu0 0
    %1113 = vmatpush1.bf16.msra.mxu0 0
    %1114 = vmatprep.subr.bf16.mxu0 0
    %1115 = vmatpush1.bf16.msra.mxu0 0
    %1116 = vmatprep.subr.bf16.mxu0 0
    %1117 = vmatpush1.bf16.msra.mxu0 0
    %1118 = vmatprep.subr.bf16.mxu0 0
    %1119 = vmatpush1.bf16.msra.mxu0 0
    %1120 = vmatprep.subr.bf16.mxu0 0
    %1121 = vmatpush1.bf16.msra.mxu0 0
    %1122 = vmatprep.mubr.bf16.mxu0 0
    %1123 = vmatmul.mubr.bf16.gmra.mrb[0].mxu0 %v1089
    %v1124 = vpop.f32.mrb[0].mxu0
    %v1125 = vadd.f32 0.0, %v1124
    %v1126 = vpop.f32.mrb[0].mxu0
    %v1127 = vadd.f32 0.0, %v1126
    %v1128 = vpop.f32.mrb[0].mxu0
    %v1129 = vpop.f32.mrb[0].mxu0
    %1130 = vdwg.mxu0
    %1131 = vmatprep.subr.bf16.mxu0 %v581
    %1132 = vmatpush1.bf16.msra.mxu0 %v580
    %1133 = vmatprep.subr.bf16.mxu0 %v585
    %1134 = vmatpush1.bf16.msra.mxu0 %v584
    %1135 = vmatprep.subr.bf16.mxu0 %v589
    %1136 = vmatpush1.bf16.msra.mxu0 %v588
    %1137 = vmatprep.subr.bf16.mxu0 %v593
    %1138 = vmatpush1.bf16.msra.mxu0 %v592
    %1139 = vmatprep.subr.bf16.mxu0 %v597
    %1140 = vmatpush1.bf16.msra.mxu0 %v596
    %1141 = vmatprep.subr.bf16.mxu0 %v601
    %1142 = vmatpush1.bf16.msra.mxu0 %v600
    %1143 = vmatprep.subr.bf16.mxu0 %v605
    %1144 = vmatpush1.bf16.msra.mxu0 %v604
    %1145 = vmatprep.subr.bf16.mxu0 %v609
    %1146 = vmatpush1.bf16.msra.mxu0 %v608
    %1147 = vmatprep.subr.bf16.mxu0 0
    %1148 = vmatpush1.bf16.msra.mxu0 0
    %1149 = vmatprep.subr.bf16.mxu0 0
    %1150 = vmatpush1.bf16.msra.mxu0 0
    %1151 = vmatprep.subr.bf16.mxu0 0
    %1152 = vmatpush1.bf16.msra.mxu0 0
    %1153 = vmatprep.subr.bf16.mxu0 0
    %1154 = vmatpush1.bf16.msra.mxu0 0
    %1155 = vmatprep.subr.bf16.mxu0 0
    %1156 = vmatpush1.bf16.msra.mxu0 0
    %1157 = vmatprep.subr.bf16.mxu0 0
    %1158 = vmatpush1.bf16.msra.mxu0 0
    %1159 = vmatprep.subr.bf16.mxu0 0
    %1160 = vmatpush1.bf16.msra.mxu0 0
    %1161 = vmatprep.subr.bf16.mxu0 0
    %1162 = vmatpush1.bf16.msra.mxu0 0
    %1163 = vmatprep.mubr.bf16.mxu0 0
    %1164 = vmatmul.mubr.bf16.gmra.mrb[0].mxu0 %v1089
    %v1165 = vpop.f32.mrb[0].mxu0
    %v1166 = vadd.f32 0.0, %v1165
    %v1167 = vpop.f32.mrb[0].mxu0
    %v1168 = vadd.f32 0.0, %v1167
    %v1169 = vpop.f32.mrb[0].mxu0
    %v1170 = vpop.f32.mrb[0].mxu0
    %1171 = vdwg.mxu0
    %v1172 = vadd.f32 %v391, %v1125
    %v1173 = vadd.f32 %v393, %v1127
    %v1174 = vadd.f32 %v464, %v1166
    %v1175 = vadd.f32 %v466, %v1168
    %v1176 = vxor.u32 %v1172, 2147483648
    %v1177 = vmul.f32 %v1176, 1.442695
    %v1178 = vpow.pop %v1177
    %v1179 = vadd.f32 %v1178, 1.0
    %v1180 = vrcp.pop %v1179
    %v1181 = vmul.f32 1.0, %v1180
    %v1182 = vxor.u32 %v1173, 2147483648
    %v1183 = vmul.f32 %v1182, 1.442695
    %v1184 = vpow.pop %v1183
    %v1185 = vadd.f32 %v1184, 1.0
    %v1186 = vrcp.pop %v1185
    %v1187 = vmul.f32 1.0, %v1186
    %v1188 = vtanh.pop %v1174
    %v1189 = vxor.u32 %v1175, 2147483648
    %v1190 = vmul.f32 %v1189, 1.442695
    %v1191 = vpow.pop %v1190
    %v1192 = vadd.f32 %v1191, 1.0
    %v1193 = vrcp.pop %v1192
    %v1194 = vmul.f32 1.0, %v1193
    %v1195 = vmul.f32 %v1187, %v1085
    %v1196 = vmul.f32 %v1181, %v1188
    %v1197 = vadd.f32 %v1195, %v1196
    %v1198 = vtanh.pop %v1197
    %v1199 = vmul.f32 %v1194, %v1198
    %1200 = vst [vmem:[#allocation2 + $0x20] sm:$0xff] %v1199
    %v1201 = vpack.c.bf16 %v1199, %v1199
    %1202 = vmatprep.subr.bf16.mxu0 %v579
    %1203 = vmatpush1.bf16.msra.mxu0 %v578
    %1204 = vmatprep.subr.bf16.mxu0 %v583
    %1205 = vmatpush1.bf16.msra.mxu0 %v582
    %1206 = vmatprep.subr.bf16.mxu0 %v587
    %1207 = vmatpush1.bf16.msra.mxu0 %v586
    %1208 = vmatprep.subr.bf16.mxu0 %v591
    %1209 = vmatpush1.bf16.msra.mxu0 %v590
    %1210 = vmatprep.subr.bf16.mxu0 %v595
    %1211 = vmatpush1.bf16.msra.mxu0 %v594
    %1212 = vmatprep.subr.bf16.mxu0 %v599
    %1213 = vmatpush1.bf16.msra.mxu0 %v598
    %1214 = vmatprep.subr.bf16.mxu0 %v603
    %1215 = vmatpush1.bf16.msra.mxu0 %v602
    %1216 = vmatprep.subr.bf16.mxu0 %v607
    %1217 = vmatpush1.bf16.msra.mxu0 %v606
    %1218 = vmatprep.subr.bf16.mxu0 0
    %1219 = vmatpush1.bf16.msra.mxu0 0
    %1220 = vmatprep.subr.bf16.mxu0 0
    %1221 = vmatpush1.bf16.msra.mxu0 0
    %1222 = vmatprep.subr.bf16.mxu0 0
    %1223 = vmatpush1.bf16.msra.mxu0 0
    %1224 = vmatprep.subr.bf16.mxu0 0
    %1225 = vmatpush1.bf16.msra.mxu0 0
    %1226 = vmatprep.subr.bf16.mxu0 0
    %1227 = vmatpush1.bf16.msra.mxu0 0
    %1228 = vmatprep.subr.bf16.mxu0 0
    %1229 = vmatpush1.bf16.msra.mxu0 0
    %1230 = vmatprep.subr.bf16.mxu0 0
    %1231 = vmatpush1.bf16.msra.mxu0 0
    %1232 = vmatprep.subr.bf16.mxu0 0
    %1233 = vmatpush1.bf16.msra.mxu0 0
    %1234 = vmatprep.mubr.bf16.mxu0 0
    %1235 = vmatmul.mubr.bf16.gmra.mrb[0].mxu0 %v1201
    %v1236 = vpop.f32.mrb[0].mxu0
    %v1237 = vadd.f32 0.0, %v1236
    %v1238 = vpop.f32.mrb[0].mxu0
    %v1239 = vadd.f32 0.0, %v1238
    %v1240 = vpop.f32.mrb[0].mxu0
    %v1241 = vpop.f32.mrb[0].mxu0
    %1242 = vdwg.mxu0
    %1243 = vmatprep.subr.bf16.mxu0 %v581
    %1244 = vmatpush1.bf16.msra.mxu0 %v580
    %1245 = vmatprep.subr.bf16.mxu0 %v585
    %1246 = vmatpush1.bf16.msra.mxu0 %v584
    %1247 = vmatprep.subr.bf16.mxu0 %v589
    %1248 = vmatpush1.bf16.msra.mxu0 %v588
    %1249 = vmatprep.subr.bf16.mxu0 %v593
    %1250 = vmatpush1.bf16.msra.mxu0 %v592
    %1251 = vmatprep.subr.bf16.mxu0 %v597
    %1252 = vmatpush1.bf16.msra.mxu0 %v596
    %1253 = vmatprep.subr.bf16.mxu0 %v601
    %1254 = vmatpush1.bf16.msra.mxu0 %v600
    %1255 = vmatprep.subr.bf16.mxu0 %v605
    %1256 = vmatpush1.bf16.msra.mxu0 %v604
    %1257 = vmatprep.subr.bf16.mxu0 %v609
    %1258 = vmatpush1.bf16.msra.mxu0 %v608
    %1259 = vmatprep.subr.bf16.mxu0 0
    %1260 = vmatpush1.bf16.msra.mxu0 0
    %1261 = vmatprep.subr.bf16.mxu0 0
    %1262 = vmatpush1.bf16.msra.mxu0 0
    %1263 = vmatprep.subr.bf16.mxu0 0
    %1264 = vmatpush1.bf16.msra.mxu0 0
    %1265 = vmatprep.subr.bf16.mxu0 0
    %1266 = vmatpush1.bf16.msra.mxu0 0
    %1267 = vmatprep.subr.bf16.mxu0 0
    %1268 = vmatpush1.bf16.msra.mxu0 0
    %1269 = vmatprep.subr.bf16.mxu0 0
    %1270 = vmatpush1.bf16.msra.mxu0 0
    %1271 = vmatprep.subr.bf16.mxu0 0
    %1272 = vmatpush1.bf16.msra.mxu0 0
    %1273 = vmatprep.subr.bf16.mxu0 0
    %1274 = vmatpush1.bf16.msra.mxu0 0
    %1275 = vmatprep.mubr.bf16.mxu0 0
    %1276 = vmatmul.mubr.bf16.gmra.mrb[0].mxu0 %v1201
    %v1277 = vpop.f32.mrb[0].mxu0
    %v1278 = vadd.f32 0.0, %v1277
    %v1279 = vpop.f32.mrb[0].mxu0
    %v1280 = vadd.f32 0.0, %v1279
    %v1281 = vpop.f32.mrb[0].mxu0
    %v1282 = vpop.f32.mrb[0].mxu0
    %1283 = vdwg.mxu0
    %v1284 = vadd.f32 %v395, %v1237
    %v1285 = vadd.f32 %v397, %v1239
    %v1286 = vadd.f32 %v468, %v1278
    %v1287 = vadd.f32 %v470, %v1280
    %v1288 = vxor.u32 %v1284, 2147483648
    %v1289 = vmul.f32 %v1288, 1.442695
    %v1290 = vpow.pop %v1289
    %v1291 = vadd.f32 %v1290, 1.0
    %v1292 = vrcp.pop %v1291
    %v1293 = vmul.f32 1.0, %v1292
    %v1294 = vxor.u32 %v1285, 2147483648
    %v1295 = vmul.f32 %v1294, 1.442695
    %v1296 = vpow.pop %v1295
    %v1297 = vadd.f32 %v1296, 1.0
    %v1298 = vrcp.pop %v1297
    %v1299 = vmul.f32 1.0, %v1298
    %v1300 = vtanh.pop %v1286
    %v1301 = vxor.u32 %v1287, 2147483648
    %v1302 = vmul.f32 %v1301, 1.442695
    %v1303 = vpow.pop %v1302
    %v1304 = vadd.f32 %v1303, 1.0
    %v1305 = vrcp.pop %v1304
    %v1306 = vmul.f32 1.0, %v1305
    %v1307 = vmul.f32 %v1299, %v1197
    %v1308 = vmul.f32 %v1293, %v1300
    %v1309 = vadd.f32 %v1307, %v1308
    %v1310 = vtanh.pop %v1309
    %v1311 = vmul.f32 %v1306, %v1310
    %1312 = vst [vmem:[#allocation2 + $0x28] sm:$0xff] %v1311
    %v1313 = vpack.c.bf16 %v1311, %v1311
    %1314 = vmatprep.subr.bf16.mxu0 %v579
    %1315 = vmatpush1.bf16.msra.mxu0 %v578
    %1316 = vmatprep.subr.bf16.mxu0 %v583
    %1317 = vmatpush1.bf16.msra.mxu0 %v582
    %1318 = vmatprep.subr.bf16.mxu0 %v587
    %1319 = vmatpush1.bf16.msra.mxu0 %v586
    %1320 = vmatprep.subr.bf16.mxu0 %v591
    %1321 = vmatpush1.bf16.msra.mxu0 %v590
    %1322 = vmatprep.subr.bf16.mxu0 %v595
    %1323 = vmatpush1.bf16.msra.mxu0 %v594
    %1324 = vmatprep.subr.bf16.mxu0 %v599
    %1325 = vmatpush1.bf16.msra.mxu0 %v598
    %1326 = vmatprep.subr.bf16.mxu0 %v603
    %1327 = vmatpush1.bf16.msra.mxu0 %v602
    %1328 = vmatprep.subr.bf16.mxu0 %v607
    %1329 = vmatpush1.bf16.msra.mxu0 %v606
    %1330 = vmatprep.subr.bf16.mxu0 0
    %1331 = vmatpush1.bf16.msra.mxu0 0
    %1332 = vmatprep.subr.bf16.mxu0 0
    %1333 = vmatpush1.bf16.msra.mxu0 0
    %1334 = vmatprep.subr.bf16.mxu0 0
    %1335 = vmatpush1.bf16.msra.mxu0 0
    %1336 = vmatprep.subr.bf16.mxu0 0
    %1337 = vmatpush1.bf16.msra.mxu0 0
    %1338 = vmatprep.subr.bf16.mxu0 0
    %1339 = vmatpush1.bf16.msra.mxu0 0
    %1340 = vmatprep.subr.bf16.mxu0 0
    %1341 = vmatpush1.bf16.msra.mxu0 0
    %1342 = vmatprep.subr.bf16.mxu0 0
    %1343 = vmatpush1.bf16.msra.mxu0 0
    %1344 = vmatprep.subr.bf16.mxu0 0
    %1345 = vmatpush1.bf16.msra.mxu0 0
    %1346 = vmatprep.mubr.bf16.mxu0 0
    %1347 = vmatmul.mubr.bf16.gmra.mrb[0].mxu0 %v1313
    %v1348 = vpop.f32.mrb[0].mxu0
    %v1349 = vadd.f32 0.0, %v1348
    %v1350 = vpop.f32.mrb[0].mxu0
    %v1351 = vadd.f32 0.0, %v1350
    %v1352 = vpop.f32.mrb[0].mxu0
    %v1353 = vpop.f32.mrb[0].mxu0
    %1354 = vdwg.mxu0
    %1355 = vmatprep.subr.bf16.mxu0 %v581
    %1356 = vmatpush1.bf16.msra.mxu0 %v580
    %1357 = vmatprep.subr.bf16.mxu0 %v585
    %1358 = vmatpush1.bf16.msra.mxu0 %v584
    %1359 = vmatprep.subr.bf16.mxu0 %v589
    %1360 = vmatpush1.bf16.msra.mxu0 %v588
    %1361 = vmatprep.subr.bf16.mxu0 %v593
    %1362 = vmatpush1.bf16.msra.mxu0 %v592
    %1363 = vmatprep.subr.bf16.mxu0 %v597
    %1364 = vmatpush1.bf16.msra.mxu0 %v596
    %1365 = vmatprep.subr.bf16.mxu0 %v601
    %1366 = vmatpush1.bf16.msra.mxu0 %v600
    %1367 = vmatprep.subr.bf16.mxu0 %v605
    %1368 = vmatpush1.bf16.msra.mxu0 %v604
    %1369 = vmatprep.subr.bf16.mxu0 %v609
    %1370 = vmatpush1.bf16.msra.mxu0 %v608
    %1371 = vmatprep.subr.bf16.mxu0 0
    %1372 = vmatpush1.bf16.msra.mxu0 0
    %1373 = vmatprep.subr.bf16.mxu0 0
    %1374 = vmatpush1.bf16.msra.mxu0 0
    %1375 = vmatprep.subr.bf16.mxu0 0
    %1376 = vmatpush1.bf16.msra.mxu0 0
    %1377 = vmatprep.subr.bf16.mxu0 0
    %1378 = vmatpush1.bf16.msra.mxu0 0
    %1379 = vmatprep.subr.bf16.mxu0 0
    %1380 = vmatpush1.bf16.msra.mxu0 0
    %1381 = vmatprep.subr.bf16.mxu0 0
    %1382 = vmatpush1.bf16.msra.mxu0 0
    %1383 = vmatprep.subr.bf16.mxu0 0
    %1384 = vmatpush1.bf16.msra.mxu0 0
    %1385 = vmatprep.subr.bf16.mxu0 0
    %1386 = vmatpush1.bf16.msra.mxu0 0
    %1387 = vmatprep.mubr.bf16.mxu0 0
    %1388 = vmatmul.mubr.bf16.gmra.mrb[0].mxu0 %v1313
    %v1389 = vpop.f32.mrb[0].mxu0
    %v1390 = vadd.f32 0.0, %v1389
    %v1391 = vpop.f32.mrb[0].mxu0
    %v1392 = vadd.f32 0.0, %v1391
    %v1393 = vpop.f32.mrb[0].mxu0
    %v1394 = vpop.f32.mrb[0].mxu0
    %1395 = vdwg.mxu0
    %v1396 = vadd.f32 %v401, %v1349
    %v1397 = vadd.f32 %v403, %v1351
    %v1398 = vadd.f32 %v474, %v1390
    %v1399 = vadd.f32 %v476, %v1392
    %v1400 = vxor.u32 %v1396, 2147483648
    %v1401 = vmul.f32 %v1400, 1.442695
    %v1402 = vpow.pop %v1401
    %v1403 = vadd.f32 %v1402, 1.0
    %v1404 = vrcp.pop %v1403
    %v1405 = vmul.f32 1.0, %v1404
    %v1406 = vxor.u32 %v1397, 2147483648
    %v1407 = vmul.f32 %v1406, 1.442695
    %v1408 = vpow.pop %v1407
    %v1409 = vadd.f32 %v1408, 1.0
    %v1410 = vrcp.pop %v1409
    %v1411 = vmul.f32 1.0, %v1410
    %v1412 = vtanh.pop %v1398
    %v1413 = vxor.u32 %v1399, 2147483648
    %v1414 = vmul.f32 %v1413, 1.442695
    %v1415 = vpow.pop %v1414
    %v1416 = vadd.f32 %v1415, 1.0
    %v1417 = vrcp.pop %v1416
    %v1418 = vmul.f32 1.0, %v1417
    %v1419 = vmul.f32 %v1411, %v1309
    %v1420 = vmul.f32 %v1405, %v1412
    %v1421 = vadd.f32 %v1419, %v1420
    %v1422 = vtanh.pop %v1421
    %v1423 = vmul.f32 %v1418, %v1422
    %1424 = vst [vmem:[#allocation2 + $0x30] sm:$0xff] %v1423
    %v1425 = vpack.c.bf16 %v1423, %v1423
    %1426 = vmatprep.subr.bf16.mxu0 %v579
    %1427 = vmatpush1.bf16.msra.mxu0 %v578
    %1428 = vmatprep.subr.bf16.mxu0 %v583
    %1429 = vmatpush1.bf16.msra.mxu0 %v582
    %1430 = vmatprep.subr.bf16.mxu0 %v587
    %1431 = vmatpush1.bf16.msra.mxu0 %v586
    %1432 = vmatprep.subr.bf16.mxu0 %v591
    %1433 = vmatpush1.bf16.msra.mxu0 %v590
    %1434 = vmatprep.subr.bf16.mxu0 %v595
    %1435 = vmatpush1.bf16.msra.mxu0 %v594
    %1436 = vmatprep.subr.bf16.mxu0 %v599
    %1437 = vmatpush1.bf16.msra.mxu0 %v598
    %1438 = vmatprep.subr.bf16.mxu0 %v603
    %1439 = vmatpush1.bf16.msra.mxu0 %v602
    %1440 = vmatprep.subr.bf16.mxu0 %v607
    %1441 = vmatpush1.bf16.msra.mxu0 %v606
    %1442 = vmatprep.subr.bf16.mxu0 0
    %1443 = vmatpush1.bf16.msra.mxu0 0
    %1444 = vmatprep.subr.bf16.mxu0 0
    %1445 = vmatpush1.bf16.msra.mxu0 0
    %1446 = vmatprep.subr.bf16.mxu0 0
    %1447 = vmatpush1.bf16.msra.mxu0 0
    %1448 = vmatprep.subr.bf16.mxu0 0
    %1449 = vmatpush1.bf16.msra.mxu0 0
    %1450 = vmatprep.subr.bf16.mxu0 0
    %1451 = vmatpush1.bf16.msra.mxu0 0
    %1452 = vmatprep.subr.bf16.mxu0 0
    %1453 = vmatpush1.bf16.msra.mxu0 0
    %1454 = vmatprep.subr.bf16.mxu0 0
    %1455 = vmatpush1.bf16.msra.mxu0 0
    %1456 = vmatprep.subr.bf16.mxu0 0
    %1457 = vmatpush1.bf16.msra.mxu0 0
    %1458 = vmatprep.mubr.bf16.mxu0 0
    %1459 = vmatmul.mubr.bf16.gmra.mrb[0].mxu0 %v1425
    %v1460 = vpop.f32.mrb[0].mxu0
    %v1461 = vadd.f32 0.0, %v1460
    %v1462 = vpop.f32.mrb[0].mxu0
    %v1463 = vadd.f32 0.0, %v1462
    %v1464 = vpop.f32.mrb[0].mxu0
    %v1465 = vpop.f32.mrb[0].mxu0
    %1466 = vdwg.mxu0
    %1467 = vmatprep.subr.bf16.mxu0 %v581
    %1468 = vmatpush1.bf16.msra.mxu0 %v580
    %1469 = vmatprep.subr.bf16.mxu0 %v585
    %1470 = vmatpush1.bf16.msra.mxu0 %v584
    %1471 = vmatprep.subr.bf16.mxu0 %v589
    %1472 = vmatpush1.bf16.msra.mxu0 %v588
    %1473 = vmatprep.subr.bf16.mxu0 %v593
    %1474 = vmatpush1.bf16.msra.mxu0 %v592
    %1475 = vmatprep.subr.bf16.mxu0 %v597
    %1476 = vmatpush1.bf16.msra.mxu0 %v596
    %1477 = vmatprep.subr.bf16.mxu0 %v601
    %1478 = vmatpush1.bf16.msra.mxu0 %v600
    %1479 = vmatprep.subr.bf16.mxu0 %v605
    %1480 = vmatpush1.bf16.msra.mxu0 %v604
    %1481 = vmatprep.subr.bf16.mxu0 %v609
    %1482 = vmatpush1.bf16.msra.mxu0 %v608
    %1483 = vmatprep.subr.bf16.mxu0 0
    %1484 = vmatpush1.bf16.msra.mxu0 0
    %1485 = vmatprep.subr.bf16.mxu0 0
    %1486 = vmatpush1.bf16.msra.mxu0 0
    %1487 = vmatprep.subr.bf16.mxu0 0
    %1488 = vmatpush1.bf16.msra.mxu0 0
    %1489 = vmatprep.subr.bf16.mxu0 0
    %1490 = vmatpush1.bf16.msra.mxu0 0
    %1491 = vmatprep.subr.bf16.mxu0 0
    %1492 = vmatpush1.bf16.msra.mxu0 0
    %1493 = vmatprep.subr.bf16.mxu0 0
    %1494 = vmatpush1.bf16.msra.mxu0 0
    %1495 = vmatprep.subr.bf16.mxu0 0
    %1496 = vmatpush1.bf16.msra.mxu0 0
    %1497 = vmatprep.subr.bf16.mxu0 0
    %1498 = vmatpush1.bf16.msra.mxu0 0
    %1499 = vmatprep.mubr.bf16.mxu0 0
    %1500 = vmatmul.mubr.bf16.gmra.mrb[0].mxu0 %v1425
    %v1501 = vpop.f32.mrb[0].mxu0
    %v1502 = vadd.f32 0.0, %v1501
    %v1503 = vpop.f32.mrb[0].mxu0
    %v1504 = vadd.f32 0.0, %v1503
    %v1505 = vpop.f32.mrb[0].mxu0
    %v1506 = vpop.f32.mrb[0].mxu0
    %1507 = vdwg.mxu0
    %v1508 = vadd.f32 %v405, %v1461
    %v1509 = vadd.f32 %v407, %v1463
    %v1510 = vadd.f32 %v478, %v1502
    %v1511 = vadd.f32 %v480, %v1504
    %v1512 = vxor.u32 %v1508, 2147483648
    %v1513 = vmul.f32 %v1512, 1.442695
    %v1514 = vpow.pop %v1513
    %v1515 = vadd.f32 %v1514, 1.0
    %v1516 = vrcp.pop %v1515
    %v1517 = vmul.f32 1.0, %v1516
    %v1518 = vxor.u32 %v1509, 2147483648
    %v1519 = vmul.f32 %v1518, 1.442695
    %v1520 = vpow.pop %v1519
    %v1521 = vadd.f32 %v1520, 1.0
    %v1522 = vrcp.pop %v1521
    %v1523 = vmul.f32 1.0, %v1522
    %v1524 = vtanh.pop %v1510
    %v1525 = vxor.u32 %v1511, 2147483648
    %v1526 = vmul.f32 %v1525, 1.442695
    %v1527 = vpow.pop %v1526
    %v1528 = vadd.f32 %v1527, 1.0
    %v1529 = vrcp.pop %v1528
    %v1530 = vmul.f32 1.0, %v1529
    %v1531 = vmul.f32 %v1523, %v1421
    %v1532 = vmul.f32 %v1517, %v1524
    %v1533 = vadd.f32 %v1531, %v1532
    %v1534 = vtanh.pop %v1533
    %v1535 = vmul.f32 %v1530, %v1534
    %1536 = vst [vmem:[#allocation2 + $0x38] sm:$0xff] %v1535
    %1537 = vst [vmem:[#allocation12] sm:$0xff] %v1535
    %1538 = vst [vmem:[#allocation14] sm:$0xff] %v1533
    %s1539 = scalar_lea.vmem [#allocation6], 256
    %v1540 = vld [vmem:[%s1539] sm:$0xff]
    %v1541 = vld [vmem:[%s1539 + $0x8] sm:$0xff]
    %v1542 = vld [vmem:[%s1539 + $0x10] sm:$0xff]
    %v1543 = vld [vmem:[%s1539 + $0x18] sm:$0xff]
    %v1544 = vld [vmem:[%s1539 + $0x20] sm:$0xff]
    %v1545 = vld [vmem:[%s1539 + $0x28] sm:$0xff]
    %v1546 = vld [vmem:[%s1539 + $0x30] sm:$0xff]
    %v1547 = vld [vmem:[%s1539 + $0x38] sm:$0xff]
    %v1548 = vld [vmem:[%s1539 + $0x40] sm:$0xff]
    %v1549 = vld [vmem:[%s1539 + $0x48] sm:$0xff]
    %v1550 = vld [vmem:[%s1539 + $0x50] sm:$0xff]
    %v1551 = vld [vmem:[%s1539 + $0x58] sm:$0xff]
    %v1552 = vld [vmem:[%s1539 + $0x60] sm:$0xff]
    %v1553 = vld [vmem:[%s1539 + $0x68] sm:$0xff]
    %v1554 = vld [vmem:[%s1539 + $0x70] sm:$0xff]
    %v1555 = vld [vmem:[%s1539 + $0x78] sm:$0xff]
    %v1556 = vld [vmem:[%s1539 + $0x80] sm:$0xff]
    %v1557 = vld [vmem:[%s1539 + $0x88] sm:$0xff]
    %v1558 = vld [vmem:[%s1539 + $0x90] sm:$0xff]
    %v1559 = vld [vmem:[%s1539 + $0x98] sm:$0xff]
    %v1560 = vld [vmem:[%s1539 + $0xa0] sm:$0xff]
    %v1561 = vld [vmem:[%s1539 + $0xa8] sm:$0xff]
    %v1562 = vld [vmem:[%s1539 + $0xb0] sm:$0xff]
    %v1563 = vld [vmem:[%s1539 + $0xb8] sm:$0xff]
    %v1564 = vld [vmem:[%s1539 + $0xc0] sm:$0xff]
    %v1565 = vld [vmem:[%s1539 + $0xc8] sm:$0xff]
    %v1566 = vld [vmem:[%s1539 + $0xd0] sm:$0xff]
    %v1567 = vld [vmem:[%s1539 + $0xd8] sm:$0xff]
    %v1568 = vld [vmem:[%s1539 + $0xe0] sm:$0xff]
    %v1569 = vld [vmem:[%s1539 + $0xe8] sm:$0xff]
    %v1570 = vld [vmem:[%s1539 + $0xf0] sm:$0xff]
    %v1571 = vld [vmem:[%s1539 + $0xf8] sm:$0xff]
    %s1572 = scalar_lea.vmem [#allocation8], 256
    %v1573 = vld [vmem:[%s1572] sm:$0xff]
    %v1574 = vld [vmem:[%s1572 + $0x8] sm:$0xff]
    %v1575 = vld [vmem:[%s1572 + $0x10] sm:$0xff]
    %v1576 = vld [vmem:[%s1572 + $0x18] sm:$0xff]
    %v1577 = vld [vmem:[%s1572 + $0x20] sm:$0xff]
    %v1578 = vld [vmem:[%s1572 + $0x28] sm:$0xff]
    %v1579 = vld [vmem:[%s1572 + $0x30] sm:$0xff]
    %v1580 = vld [vmem:[%s1572 + $0x38] sm:$0xff]
    %v1581 = vld [vmem:[%s1572 + $0x40] sm:$0xff]
    %v1582 = vld [vmem:[%s1572 + $0x48] sm:$0xff]
    %v1583 = vld [vmem:[%s1572 + $0x50] sm:$0xff]
    %v1584 = vld [vmem:[%s1572 + $0x58] sm:$0xff]
    %v1585 = vld [vmem:[%s1572 + $0x60] sm:$0xff]
    %v1586 = vld [vmem:[%s1572 + $0x68] sm:$0xff]
    %v1587 = vld [vmem:[%s1572 + $0x70] sm:$0xff]
    %v1588 = vld [vmem:[%s1572 + $0x78] sm:$0xff]
    %v1589 = vld [vmem:[%s1572 + $0x80] sm:$0xff]
    %v1590 = vld [vmem:[%s1572 + $0x88] sm:$0xff]
    %v1591 = vld [vmem:[%s1572 + $0x90] sm:$0xff]
    %v1592 = vld [vmem:[%s1572 + $0x98] sm:$0xff]
    %v1593 = vld [vmem:[%s1572 + $0xa0] sm:$0xff]
    %v1594 = vld [vmem:[%s1572 + $0xa8] sm:$0xff]
    %v1595 = vld [vmem:[%s1572 + $0xb0] sm:$0xff]
    %v1596 = vld [vmem:[%s1572 + $0xb8] sm:$0xff]
    %v1597 = vld [vmem:[%s1572 + $0xc0] sm:$0xff]
    %v1598 = vld [vmem:[%s1572 + $0xc8] sm:$0xff]
    %v1599 = vld [vmem:[%s1572 + $0xd0] sm:$0xff]
    %v1600 = vld [vmem:[%s1572 + $0xd8] sm:$0xff]
    %v1601 = vld [vmem:[%s1572 + $0xe0] sm:$0xff]
    %v1602 = vld [vmem:[%s1572 + $0xe8] sm:$0xff]
    %v1603 = vld [vmem:[%s1572 + $0xf0] sm:$0xff]
    %v1604 = vld [vmem:[%s1572 + $0xf8] sm:$0xff]
    %s1605 = scalar_lea.vmem [#allocation9], 4
    %v1606 = vld [vmem:[%s1605] sm:$0xf]
    %v1607 = vld [vmem:[#allocation2] sm:$0xff]
    %v1608 = vld [vmem:[#allocation2 + $0x8] sm:$0xff]
    %v1609 = vld [vmem:[#allocation2 + $0x10] sm:$0xff]
    %v1610 = vld [vmem:[#allocation2 + $0x18] sm:$0xff]
    %v1611 = vld [vmem:[#allocation2 + $0x20] sm:$0xff]
    %v1612 = vld [vmem:[#allocation2 + $0x28] sm:$0xff]
    %v1613 = vld [vmem:[#allocation2 + $0x30] sm:$0xff]
    %v1614 = vld [vmem:[#allocation2 + $0x38] sm:$0xff]
    %v1615 = vpack.c.bf16 %v1608, %v1607
    %v1616 = vpack.c.bf16 %v1610, %v1609
    %v1617 = vpack.c.bf16 %v1612, %v1611
    %v1618 = vpack.c.bf16 %v1614, %v1613
    %v1620 = vlaneseq
    %v1621 = vshrl.u32 %v1620, 7
    %v1622 = vsub.s32 0, %v1621
    %v1623 = vrot.slane %v1606, %v1622
    %v1624 = vlaneseq
    %v1625 = vshrl.u32 %v1624, 7
    %v1626 = vsub.s32 1, %v1625
    %v1627 = vrot.slane %v1606, %v1626
    %v1628 = vlaneseq
    %v1629 = vshrl.u32 %v1628, 7
    %v1630 = vsub.s32 2, %v1629
    %v1631 = vrot.slane %v1606, %v1630
    %v1632 = vlaneseq
    %v1633 = vshrl.u32 %v1632, 7
    %v1634 = vsub.s32 3, %v1633
    %v1635 = vrot.slane %v1606, %v1634
    %v1672 = vunpack.c.l.b16 %v1540
    %v1673 = vunpack.c.h.b16 %v1540
    %v1674 = vunpack.c.l.b16 %v1541
    %v1675 = vunpack.c.h.b16 %v1541
    %v1676 = vunpack.c.l.b16 %v1542
    %v1677 = vunpack.c.h.b16 %v1542
    %v1678 = vunpack.c.l.b16 %v1543
    %v1679 = vunpack.c.h.b16 %v1543
    %v1680 = vunpack.c.l.b16 %v1544
    %v1681 = vunpack.c.h.b16 %v1544
    %v1682 = vunpack.c.l.b16 %v1545
    %v1683 = vunpack.c.h.b16 %v1545
    %v1684 = vunpack.c.l.b16 %v1546
    %v1685 = vunpack.c.h.b16 %v1546
    %v1686 = vunpack.c.l.b16 %v1547
    %v1687 = vunpack.c.h.b16 %v1547
    %v1688 = vunpack.c.l.b16 %v1548
    %v1689 = vunpack.c.h.b16 %v1548
    %v1690 = vunpack.c.l.b16 %v1549
    %v1691 = vunpack.c.h.b16 %v1549
    %v1692 = vunpack.c.l.b16 %v1550
    %v1693 = vunpack.c.h.b16 %v1550
    %v1694 = vunpack.c.l.b16 %v1551
    %v1695 = vunpack.c.h.b16 %v1551
    %v1696 = vunpack.c.l.b16 %v1552
    %v1697 = vunpack.c.h.b16 %v1552
    %v1698 = vunpack.c.l.b16 %v1553
    %v1699 = vunpack.c.h.b16 %v1553
    %v1700 = vunpack.c.l.b16 %v1554
    %v1701 = vunpack.c.h.b16 %v1554
    %v1702 = vunpack.c.l.b16 %v1555
    %v1703 = vunpack.c.h.b16 %v1555
    %v1704 = vunpack.c.l.b16 %v1556
    %v1705 = vunpack.c.h.b16 %v1556
    %v1706 = vunpack.c.l.b16 %v1557
    %v1707 = vunpack.c.h.b16 %v1557
    %v1708 = vunpack.c.l.b16 %v1558
    %v1709 = vunpack.c.h.b16 %v1558
    %v1710 = vunpack.c.l.b16 %v1559
    %v1711 = vunpack.c.h.b16 %v1559
    %v1712 = vunpack.c.l.b16 %v1560
    %v1713 = vunpack.c.h.b16 %v1560
    %v1714 = vunpack.c.l.b16 %v1561
    %v1715 = vunpack.c.h.b16 %v1561
    %v1716 = vunpack.c.l.b16 %v1562
    %v1717 = vunpack.c.h.b16 %v1562
    %v1718 = vunpack.c.l.b16 %v1563
    %v1719 = vunpack.c.h.b16 %v1563
    %v1720 = vunpack.c.l.b16 %v1564
    %v1721 = vunpack.c.h.b16 %v1564
    %v1722 = vunpack.c.l.b16 %v1565
    %v1723 = vunpack.c.h.b16 %v1565
    %v1724 = vunpack.c.l.b16 %v1566
    %v1725 = vunpack.c.h.b16 %v1566
    %v1726 = vunpack.c.l.b16 %v1567
    %v1727 = vunpack.c.h.b16 %v1567
    %v1728 = vunpack.c.l.b16 %v1568
    %v1729 = vunpack.c.h.b16 %v1568
    %v1730 = vunpack.c.l.b16 %v1569
    %v1731 = vunpack.c.h.b16 %v1569
    %v1732 = vunpack.c.l.b16 %v1570
    %v1733 = vunpack.c.h.b16 %v1570
    %v1734 = vunpack.c.l.b16 %v1571
    %v1735 = vunpack.c.h.b16 %v1571
    %v1736 = vpack.c.b16 %v1676, %v1672
    %v1737 = vpack.c.b16 %v1677, %v1673
    %v1738 = vpack.c.b16 %v1678, %v1674
    %v1739 = vpack.c.b16 %v1679, %v1675
    %v1740 = vpack.c.b16 %v1684, %v1680
    %v1741 = vpack.c.b16 %v1685, %v1681
    %v1742 = vpack.c.b16 %v1686, %v1682
    %v1743 = vpack.c.b16 %v1687, %v1683
    %v1744 = vpack.c.b16 %v1692, %v1688
    %v1745 = vpack.c.b16 %v1693, %v1689
    %v1746 = vpack.c.b16 %v1694, %v1690
    %v1747 = vpack.c.b16 %v1695, %v1691
    %v1748 = vpack.c.b16 %v1700, %v1696
    %v1749 = vpack.c.b16 %v1701, %v1697
    %v1750 = vpack.c.b16 %v1702, %v1698
    %v1751 = vpack.c.b16 %v1703, %v1699
    %v1752 = vpack.c.b16 %v1708, %v1704
    %v1753 = vpack.c.b16 %v1709, %v1705
    %v1754 = vpack.c.b16 %v1710, %v1706
    %v1755 = vpack.c.b16 %v1711, %v1707
    %v1756 = vpack.c.b16 %v1716, %v1712
    %v1757 = vpack.c.b16 %v1717, %v1713
    %v1758 = vpack.c.b16 %v1718, %v1714
    %v1759 = vpack.c.b16 %v1719, %v1715
    %v1760 = vpack.c.b16 %v1724, %v1720
    %v1761 = vpack.c.b16 %v1725, %v1721
    %v1762 = vpack.c.b16 %v1726, %v1722
    %v1763 = vpack.c.b16 %v1727, %v1723
    %v1764 = vpack.c.b16 %v1732, %v1728
    %v1765 = vpack.c.b16 %v1733, %v1729
    %v1766 = vpack.c.b16 %v1734, %v1730
    %v1767 = vpack.c.b16 %v1735, %v1731
    %1800 = vmatprep.subr.bf16.mxu0 %v1737
    %1801 = vmatpush1.bf16.msra.mxu0 %v1736
    %1802 = vmatprep.subr.bf16.mxu0 %v1741
    %1803 = vmatpush1.bf16.msra.mxu0 %v1740
    %1804 = vmatprep.subr.bf16.mxu0 %v1745
    %1805 = vmatpush1.bf16.msra.mxu0 %v1744
    %1806 = vmatprep.subr.bf16.mxu0 %v1749
    %1807 = vmatpush1.bf16.msra.mxu0 %v1748
    %1808 = vmatprep.subr.bf16.mxu0 %v1753
    %1809 = vmatpush1.bf16.msra.mxu0 %v1752
    %1810 = vmatprep.subr.bf16.mxu0 %v1757
    %1811 = vmatpush1.bf16.msra.mxu0 %v1756
    %1812 = vmatprep.subr.bf16.mxu0 %v1761
    %1813 = vmatpush1.bf16.msra.mxu0 %v1760
    %1814 = vmatprep.subr.bf16.mxu0 %v1765
    %1815 = vmatpush1.bf16.msra.mxu0 %v1764
    %1816 = vmatprep.subr.bf16.mxu0 0
    %1817 = vmatpush1.bf16.msra.mxu0 0
    %1818 = vmatprep.subr.bf16.mxu0 0
    %1819 = vmatpush1.bf16.msra.mxu0 0
    %1820 = vmatprep.subr.bf16.mxu0 0
    %1821 = vmatpush1.bf16.msra.mxu0 0
    %1822 = vmatprep.subr.bf16.mxu0 0
    %1823 = vmatpush1.bf16.msra.mxu0 0
    %1824 = vmatprep.subr.bf16.mxu0 0
    %1825 = vmatpush1.bf16.msra.mxu0 0
    %1826 = vmatprep.subr.bf16.mxu0 0
    %1827 = vmatpush1.bf16.msra.mxu0 0
    %1828 = vmatprep.subr.bf16.mxu0 0
    %1829 = vmatpush1.bf16.msra.mxu0 0
    %1830 = vmatprep.subr.bf16.mxu0 0
    %1831 = vmatpush1.bf16.msra.mxu0 0
    %1832 = vmatprep.mubr.bf16.mxu0 0
    %1833 = vmatmul.mubr.bf16.gmra.mrb[0].mxu0 %v1615
    %v1834 = vpop.f32.mrb[0].mxu0
    %v1835 = vadd.f32 %v1623, %v1834
    %v1836 = vpop.f32.mrb[0].mxu0
    %v1837 = vadd.f32 %v1627, %v1836
    %v1838 = vpop.f32.mrb[0].mxu0
    %v1839 = vadd.f32 %v1623, %v1838
    %v1840 = vpop.f32.mrb[0].mxu0
    %v1841 = vadd.f32 %v1627, %v1840
    %1842 = vmatprep.mubr.bf16.mxu0 0
    %1843 = vmatmul.mubr.bf16.gmra.mrb[0].mxu0 %v1616
    %v1844 = vpop.f32.mrb[0].mxu0
    %v1845 = vadd.f32 %v1623, %v1844
    %v1846 = vpop.f32.mrb[0].mxu0
    %v1847 = vadd.f32 %v1627, %v1846
    %v1848 = vpop.f32.mrb[0].mxu0
    %v1849 = vadd.f32 %v1623, %v1848
    %v1850 = vpop.f32.mrb[0].mxu0
    %v1851 = vadd.f32 %v1627, %v1850
    %1852 = vmatprep.mubr.bf16.mxu0 0
    %1853 = vmatmul.mubr.bf16.gmra.mrb[0].mxu0 %v1617
    %v1854 = vpop.f32.mrb[0].mxu0
    %v1855 = vadd.f32 %v1623, %v1854
    %v1856 = vpop.f32.mrb[0].mxu0
    %v1857 = vadd.f32 %v1627, %v1856
    %v1858 = vpop.f32.mrb[0].mxu0
    %v1859 = vadd.f32 %v1623, %v1858
    %v1860 = vpop.f32.mrb[0].mxu0
    %v1861 = vadd.f32 %v1627, %v1860
    %1862 = vmatprep.mubr.bf16.mxu0 0
    %1863 = vmatmul.mubr.bf16.gmra.mrb[0].mxu0 %v1618
    %v1864 = vpop.f32.mrb[0].mxu0
    %v1865 = vadd.f32 %v1623, %v1864
    %v1866 = vpop.f32.mrb[0].mxu0
    %v1867 = vadd.f32 %v1627, %v1866
    %v1868 = vpop.f32.mrb[0].mxu0
    %v1869 = vadd.f32 %v1623, %v1868
    %v1870 = vpop.f32.mrb[0].mxu0
    %v1871 = vadd.f32 %v1627, %v1870
    %1872 = vdwg.mxu0
    %1873 = vmatprep.subr.bf16.mxu0 %v1739
    %1874 = vmatpush1.bf16.msra.mxu0 %v1738
    %1875 = vmatprep.subr.bf16.mxu0 %v1743
    %1876 = vmatpush1.bf16.msra.mxu0 %v1742
    %1877 = vmatprep.subr.bf16.mxu0 %v1747
    %1878 = vmatpush1.bf16.msra.mxu0 %v1746
    %1879 = vmatprep.subr.bf16.mxu0 %v1751
    %1880 = vmatpush1.bf16.msra.mxu0 %v1750
    %1881 = vmatprep.subr.bf16.mxu0 %v1755
    %1882 = vmatpush1.bf16.msra.mxu0 %v1754
    %1883 = vmatprep.subr.bf16.mxu0 %v1759
    %1884 = vmatpush1.bf16.msra.mxu0 %v1758
    %1885 = vmatprep.subr.bf16.mxu0 %v1763
    %1886 = vmatpush1.bf16.msra.mxu0 %v1762
    %1887 = vmatprep.subr.bf16.mxu0 %v1767
    %1888 = vmatpush1.bf16.msra.mxu0 %v1766
    %1889 = vmatprep.subr.bf16.mxu0 0
    %1890 = vmatpush1.bf16.msra.mxu0 0
    %1891 = vmatprep.subr.bf16.mxu0 0
    %1892 = vmatpush1.bf16.msra.mxu0 0
    %1893 = vmatprep.subr.bf16.mxu0 0
    %1894 = vmatpush1.bf16.msra.mxu0 0
    %1895 = vmatprep.subr.bf16.mxu0 0
    %1896 = vmatpush1.bf16.msra.mxu0 0
    %1897 = vmatprep.subr.bf16.mxu0 0
    %1898 = vmatpush1.bf16.msra.mxu0 0
    %1899 = vmatprep.subr.bf16.mxu0 0
    %1900 = vmatpush1.bf16.msra.mxu0 0
    %1901 = vmatprep.subr.bf16.mxu0 0
    %1902 = vmatpush1.bf16.msra.mxu0 0
    %1903 = vmatprep.subr.bf16.mxu0 0
    %1904 = vmatpush1.bf16.msra.mxu0 0
    %1905 = vmatprep.mubr.bf16.mxu0 0
    %1906 = vmatmul.mubr.bf16.gmra.mrb[0].mxu0 %v1615
    %v1907 = vpop.f32.mrb[0].mxu0
    %v1908 = vadd.f32 %v1631, %v1907
    %v1909 = vpop.f32.mrb[0].mxu0
    %v1910 = vadd.f32 %v1635, %v1909
    %v1911 = vpop.f32.mrb[0].mxu0
    %v1912 = vadd.f32 %v1631, %v1911
    %v1913 = vpop.f32.mrb[0].mxu0
    %v1914 = vadd.f32 %v1635, %v1913
    %1915 = vmatprep.mubr.bf16.mxu0 0
    %1916 = vmatmul.mubr.bf16.gmra.mrb[0].mxu0 %v1616
    %v1917 = vpop.f32.mrb[0].mxu0
    %v1918 = vadd.f32 %v1631, %v1917
    %v1919 = vpop.f32.mrb[0].mxu0
    %v1920 = vadd.f32 %v1635, %v1919
    %v1921 = vpop.f32.mrb[0].mxu0
    %v1922 = vadd.f32 %v1631, %v1921
    %v1923 = vpop.f32.mrb[0].mxu0
    %v1924 = vadd.f32 %v1635, %v1923
    %1925 = vmatprep.mubr.bf16.mxu0 0
    %1926 = vmatmul.mubr.bf16.gmra.mrb[0].mxu0 %v1617
    %v1927 = vpop.f32.mrb[0].mxu0
    %v1928 = vadd.f32 %v1631, %v1927
    %v1929 = vpop.f32.mrb[0].mxu0
    %v1930 = vadd.f32 %v1635, %v1929
    %v1931 = vpop.f32.mrb[0].mxu0
    %v1932 = vadd.f32 %v1631, %v1931
    %v1933 = vpop.f32.mrb[0].mxu0
    %v1934 = vadd.f32 %v1635, %v1933
    %1935 = vmatprep.mubr.bf16.mxu0 0
    %1936 = vmatmul.mubr.bf16.gmra.mrb[0].mxu0 %v1618
    %v1937 = vpop.f32.mrb[0].mxu0
    %v1938 = vadd.f32 %v1631, %v1937
    %v1939 = vpop.f32.mrb[0].mxu0
    %v1940 = vadd.f32 %v1635, %v1939
    %v1941 = vpop.f32.mrb[0].mxu0
    %v1942 = vadd.f32 %v1631, %v1941
    %v1943 = vpop.f32.mrb[0].mxu0
    %v1944 = vadd.f32 %v1635, %v1943
    %1945 = vdwg.mxu0
    %v1978 = vunpack.c.l.b16 %v1573
    %v1979 = vunpack.c.h.b16 %v1573
    %v1980 = vunpack.c.l.b16 %v1574
    %v1981 = vunpack.c.h.b16 %v1574
    %v1982 = vunpack.c.l.b16 %v1575
    %v1983 = vunpack.c.h.b16 %v1575
    %v1984 = vunpack.c.l.b16 %v1576
    %v1985 = vunpack.c.h.b16 %v1576
    %v1986 = vunpack.c.l.b16 %v1577
    %v1987 = vunpack.c.h.b16 %v1577
    %v1988 = vunpack.c.l.b16 %v1578
    %v1989 = vunpack.c.h.b16 %v1578
    %v1990 = vunpack.c.l.b16 %v1579
    %v1991 = vunpack.c.h.b16 %v1579
    %v1992 = vunpack.c.l.b16 %v1580
    %v1993 = vunpack.c.h.b16 %v1580
    %v1994 = vunpack.c.l.b16 %v1581
    %v1995 = vunpack.c.h.b16 %v1581
    %v1996 = vunpack.c.l.b16 %v1582
    %v1997 = vunpack.c.h.b16 %v1582
    %v1998 = vunpack.c.l.b16 %v1583
    %v1999 = vunpack.c.h.b16 %v1583
    %v2000 = vunpack.c.l.b16 %v1584
    %v2001 = vunpack.c.h.b16 %v1584
    %v2002 = vunpack.c.l.b16 %v1585
    %v2003 = vunpack.c.h.b16 %v1585
    %v2004 = vunpack.c.l.b16 %v1586
    %v2005 = vunpack.c.h.b16 %v1586
    %v2006 = vunpack.c.l.b16 %v1587
    %v2007 = vunpack.c.h.b16 %v1587
    %v2008 = vunpack.c.l.b16 %v1588
    %v2009 = vunpack.c.h.b16 %v1588
    %v2010 = vunpack.c.l.b16 %v1589
    %v2011 = vunpack.c.h.b16 %v1589
    %v2012 = vunpack.c.l.b16 %v1590
    %v2013 = vunpack.c.h.b16 %v1590
    %v2014 = vunpack.c.l.b16 %v1591
    %v2015 = vunpack.c.h.b16 %v1591
    %v2016 = vunpack.c.l.b16 %v1592
    %v2017 = vunpack.c.h.b16 %v1592
    %v2018 = vunpack.c.l.b16 %v1593
    %v2019 = vunpack.c.h.b16 %v1593
    %v2020 = vunpack.c.l.b16 %v1594
    %v2021 = vunpack.c.h.b16 %v1594
    %v2022 = vunpack.c.l.b16 %v1595
    %v2023 = vunpack.c.h.b16 %v1595
    %v2024 = vunpack.c.l.b16 %v1596
    %v2025 = vunpack.c.h.b16 %v1596
    %v2026 = vunpack.c.l.b16 %v1597
    %v2027 = vunpack.c.h.b16 %v1597
    %v2028 = vunpack.c.l.b16 %v1598
    %v2029 = vunpack.c.h.b16 %v1598
    %v2030 = vunpack.c.l.b16 %v1599
    %v2031 = vunpack.c.h.b16 %v1599
    %v2032 = vunpack.c.l.b16 %v1600
    %v2033 = vunpack.c.h.b16 %v1600
    %v2034 = vunpack.c.l.b16 %v1601
    %v2035 = vunpack.c.h.b16 %v1601
    %v2036 = vunpack.c.l.b16 %v1602
    %v2037 = vunpack.c.h.b16 %v1602
    %v2038 = vunpack.c.l.b16 %v1603
    %v2039 = vunpack.c.h.b16 %v1603
    %v2040 = vunpack.c.l.b16 %v1604
    %v2041 = vunpack.c.h.b16 %v1604
    %v2042 = vpack.c.b16 %v1982, %v1978
    %v2043 = vpack.c.b16 %v1983, %v1979
    %v2044 = vpack.c.b16 %v1984, %v1980
    %v2045 = vpack.c.b16 %v1985, %v1981
    %v2046 = vpack.c.b16 %v1990, %v1986
    %v2047 = vpack.c.b16 %v1991, %v1987
    %v2048 = vpack.c.b16 %v1992, %v1988
    %v2049 = vpack.c.b16 %v1993, %v1989
    %v2050 = vpack.c.b16 %v1998, %v1994
    %v2051 = vpack.c.b16 %v1999, %v1995
    %v2052 = vpack.c.b16 %v2000, %v1996
    %v2053 = vpack.c.b16 %v2001, %v1997
    %v2054 = vpack.c.b16 %v2006, %v2002
    %v2055 = vpack.c.b16 %v2007, %v2003
    %v2056 = vpack.c.b16 %v2008, %v2004
    %v2057 = vpack.c.b16 %v2009, %v2005
    %v2058 = vpack.c.b16 %v2014, %v2010
    %v2059 = vpack.c.b16 %v2015, %v2011
    %v2060 = vpack.c.b16 %v2016, %v2012
    %v2061 = vpack.c.b16 %v2017, %v2013
    %v2062 = vpack.c.b16 %v2022, %v2018
    %v2063 = vpack.c.b16 %v2023, %v2019
    %v2064 = vpack.c.b16 %v2024, %v2020
    %v2065 = vpack.c.b16 %v2025, %v2021
    %v2066 = vpack.c.b16 %v2030, %v2026
    %v2067 = vpack.c.b16 %v2031, %v2027
    %v2068 = vpack.c.b16 %v2032, %v2028
    %v2069 = vpack.c.b16 %v2033, %v2029
    %v2070 = vpack.c.b16 %v2038, %v2034
    %v2071 = vpack.c.b16 %v2039, %v2035
    %v2072 = vpack.c.b16 %v2040, %v2036
    %v2073 = vpack.c.b16 %v2041, %v2037
    %2106 = vmatprep.subr.bf16.mxu0 %v2043
    %2107 = vmatpush1.bf16.msra.mxu0 %v2042
    %2108 = vmatprep.subr.bf16.mxu0 %v2047
    %2109 = vmatpush1.bf16.msra.mxu0 %v2046
    %2110 = vmatprep.subr.bf16.mxu0 %v2051
    %2111 = vmatpush1.bf16.msra.mxu0 %v2050
    %2112 = vmatprep.subr.bf16.mxu0 %v2055
    %2113 = vmatpush1.bf16.msra.mxu0 %v2054
    %2114 = vmatprep.subr.bf16.mxu0 %v2059
    %2115 = vmatpush1.bf16.msra.mxu0 %v2058
    %2116 = vmatprep.subr.bf16.mxu0 %v2063
    %2117 = vmatpush1.bf16.msra.mxu0 %v2062
    %2118 = vmatprep.subr.bf16.mxu0 %v2067
    %2119 = vmatpush1.bf16.msra.mxu0 %v2066
    %2120 = vmatprep.subr.bf16.mxu0 %v2071
    %2121 = vmatpush1.bf16.msra.mxu0 %v2070
    %2122 = vmatprep.subr.bf16.mxu0 0
    %2123 = vmatpush1.bf16.msra.mxu0 0
    %2124 = vmatprep.subr.bf16.mxu0 0
    %2125 = vmatpush1.bf16.msra.mxu0 0
    %2126 = vmatprep.subr.bf16.mxu0 0
    %2127 = vmatpush1.bf16.msra.mxu0 0
    %2128 = vmatprep.subr.bf16.mxu0 0
    %2129 = vmatpush1.bf16.msra.mxu0 0
    %2130 = vmatprep.subr.bf16.mxu0 0
    %2131 = vmatpush1.bf16.msra.mxu0 0
    %2132 = vmatprep.subr.bf16.mxu0 0
    %2133 = vmatpush1.bf16.msra.mxu0 0
    %2134 = vmatprep.subr.bf16.mxu0 0
    %2135 = vmatpush1.bf16.msra.mxu0 0
    %2136 = vmatprep.subr.bf16.mxu0 0
    %2137 = vmatpush1.bf16.msra.mxu0 0
    %2138 = vmatprep.mubr.bf16.mxu0 0
    %2139 = vmatmul.mubr.bf16.gmra.mrb[0].mxu0 0
    %v2140 = vpop.f32.mrb[0].mxu0
    %v2141 = vadd.f32 0.0, %v2140
    %v2142 = vpop.f32.mrb[0].mxu0
    %v2143 = vadd.f32 0.0, %v2142
    %v2144 = vpop.f32.mrb[0].mxu0
    %v2145 = vpop.f32.mrb[0].mxu0
    %2146 = vdwg.mxu0
    %2147 = vmatprep.subr.bf16.mxu0 %v2045
    %2148 = vmatpush1.bf16.msra.mxu0 %v2044
    %2149 = vmatprep.subr.bf16.mxu0 %v2049
    %2150 = vmatpush1.bf16.msra.mxu0 %v2048
    %2151 = vmatprep.subr.bf16.mxu0 %v2053
    %2152 = vmatpush1.bf16.msra.mxu0 %v2052
    %2153 = vmatprep.subr.bf16.mxu0 %v2057
    %2154 = vmatpush1.bf16.msra.mxu0 %v2056
    %2155 = vmatprep.subr.bf16.mxu0 %v2061
    %2156 = vmatpush1.bf16.msra.mxu0 %v2060
    %2157 = vmatprep.subr.bf16.mxu0 %v2065
    %2158 = vmatpush1.bf16.msra.mxu0 %v2064
    %2159 = vmatprep.subr.bf16.mxu0 %v2069
    %2160 = vmatpush1.bf16.msra.mxu0 %v2068
    %2161 = vmatprep.subr.bf16.mxu0 %v2073
    %2162 = vmatpush1.bf16.msra.mxu0 %v2072
    %2163 = vmatprep.subr.bf16.mxu0 0
    %2164 = vmatpush1.bf16.msra.mxu0 0
    %2165 = vmatprep.subr.bf16.mxu0 0
    %2166 = vmatpush1.bf16.msra.mxu0 0
    %2167 = vmatprep.subr.bf16.mxu0 0
    %2168 = vmatpush1.bf16.msra.mxu0 0
    %2169 = vmatprep.subr.bf16.mxu0 0
    %2170 = vmatpush1.bf16.msra.mxu0 0
    %2171 = vmatprep.subr.bf16.mxu0 0
    %2172 = vmatpush1.bf16.msra.mxu0 0
    %2173 = vmatprep.subr.bf16.mxu0 0
    %2174 = vmatpush1.bf16.msra.mxu0 0
    %2175 = vmatprep.subr.bf16.mxu0 0
    %2176 = vmatpush1.bf16.msra.mxu0 0
    %2177 = vmatprep.subr.bf16.mxu0 0
    %2178 = vmatpush1.bf16.msra.mxu0 0
    %2179 = vmatprep.mubr.bf16.mxu0 0
    %2180 = vmatmul.mubr.bf16.gmra.mrb[0].mxu0 0
    %v2181 = vpop.f32.mrb[0].mxu0
    %v2182 = vadd.f32 0.0, %v2181
    %v2183 = vpop.f32.mrb[0].mxu0
    %v2184 = vadd.f32 0.0, %v2183
    %v2185 = vpop.f32.mrb[0].mxu0
    %v2186 = vpop.f32.mrb[0].mxu0
    %2187 = vdwg.mxu0
    %v2188 = vadd.f32 %v1835, %v2141
    %v2189 = vadd.f32 %v1837, %v2143
    %v2190 = vadd.f32 %v1908, %v2182
    %v2191 = vadd.f32 %v1910, %v2184
    %v2192 = vxor.u32 %v2188, 2147483648
    %v2193 = vmul.f32 %v2192, 1.442695
    %v2194 = vpow.pop %v2193
    %v2195 = vadd.f32 %v2194, 1.0
    %v2196 = vrcp.pop %v2195
    %v2197 = vmul.f32 1.0, %v2196
    %v2198 = vxor.u32 %v2189, 2147483648
    %v2199 = vmul.f32 %v2198, 1.442695
    %v2200 = vpow.pop %v2199
    %v2201 = vadd.f32 %v2200, 1.0
    %v2202 = vrcp.pop %v2201
    %v2203 = vmul.f32 1.0, %v2202
    %v2204 = vtanh.pop %v2190
    %v2205 = vxor.u32 %v2191, 2147483648
    %v2206 = vmul.f32 %v2205, 1.442695
    %v2207 = vpow.pop %v2206
    %v2208 = vadd.f32 %v2207, 1.0
    %v2209 = vrcp.pop %v2208
    %v2210 = vmul.f32 1.0, %v2209
    %v2211 = vmul.f32 %v2203, 0.0
    %v2212 = vmul.f32 %v2197, %v2204
    %v2213 = vadd.f32 %v2211, %v2212
    %v2214 = vtanh.pop %v2213
    %v2215 = vmul.f32 %v2210, %v2214
    %2216 = vst [vmem:[#allocation2] sm:$0xff] %v2215
    %v2217 = vpack.c.bf16 %v2215, %v2215
    %2218 = vmatprep.subr.bf16.mxu0 %v2043
    %2219 = vmatpush1.bf16.msra.mxu0 %v2042
    %2220 = vmatprep.subr.bf16.mxu0 %v2047
    %2221 = vmatpush1.bf16.msra.mxu0 %v2046
    %2222 = vmatprep.subr.bf16.mxu0 %v2051
    %2223 = vmatpush1.bf16.msra.mxu0 %v2050
    %2224 = vmatprep.subr.bf16.mxu0 %v2055
    %2225 = vmatpush1.bf16.msra.mxu0 %v2054
    %2226 = vmatprep.subr.bf16.mxu0 %v2059
    %2227 = vmatpush1.bf16.msra.mxu0 %v2058
    %2228 = vmatprep.subr.bf16.mxu0 %v2063
    %2229 = vmatpush1.bf16.msra.mxu0 %v2062
    %2230 = vmatprep.subr.bf16.mxu0 %v2067
    %2231 = vmatpush1.bf16.msra.mxu0 %v2066
    %2232 = vmatprep.subr.bf16.mxu0 %v2071
    %2233 = vmatpush1.bf16.msra.mxu0 %v2070
    %2234 = vmatprep.subr.bf16.mxu0 0
    %2235 = vmatpush1.bf16.msra.mxu0 0
    %2236 = vmatprep.subr.bf16.mxu0 0
    %2237 = vmatpush1.bf16.msra.mxu0 0
    %2238 = vmatprep.subr.bf16.mxu0 0
    %2239 = vmatpush1.bf16.msra.mxu0 0
    %2240 = vmatprep.subr.bf16.mxu0 0
    %2241 = vmatpush1.bf16.msra.mxu0 0
    %2242 = vmatprep.subr.bf16.mxu0 0
    %2243 = vmatpush1.bf16.msra.mxu0 0
    %2244 = vmatprep.subr.bf16.mxu0 0
    %2245 = vmatpush1.bf16.msra.mxu0 0
    %2246 = vmatprep.subr.bf16.mxu0 0
    %2247 = vmatpush1.bf16.msra.mxu0 0
    %2248 = vmatprep.subr.bf16.mxu0 0
    %2249 = vmatpush1.bf16.msra.mxu0 0
    %2250 = vmatprep.mubr.bf16.mxu0 0
    %2251 = vmatmul.mubr.bf16.gmra.mrb[0].mxu0 %v2217
    %v2252 = vpop.f32.mrb[0].mxu0
    %v2253 = vadd.f32 0.0, %v2252
    %v2254 = vpop.f32.mrb[0].mxu0
    %v2255 = vadd.f32 0.0, %v2254
    %v2256 = vpop.f32.mrb[0].mxu0
    %v2257 = vpop.f32.mrb[0].mxu0
    %2258 = vdwg.mxu0
    %2259 = vmatprep.subr.bf16.mxu0 %v2045
    %2260 = vmatpush1.bf16.msra.mxu0 %v2044
    %2261 = vmatprep.subr.bf16.mxu0 %v2049
    %2262 = vmatpush1.bf16.msra.mxu0 %v2048
    %2263 = vmatprep.subr.bf16.mxu0 %v2053
    %2264 = vmatpush1.bf16.msra.mxu0 %v2052
    %2265 = vmatprep.subr.bf16.mxu0 %v2057
    %2266 = vmatpush1.bf16.msra.mxu0 %v2056
    %2267 = vmatprep.subr.bf16.mxu0 %v2061
    %2268 = vmatpush1.bf16.msra.mxu0 %v2060
    %2269 = vmatprep.subr.bf16.mxu0 %v2065
    %2270 = vmatpush1.bf16.msra.mxu0 %v2064
    %2271 = vmatprep.subr.bf16.mxu0 %v2069
    %2272 = vmatpush1.bf16.msra.mxu0 %v2068
    %2273 = vmatprep.subr.bf16.mxu0 %v2073
    %2274 = vmatpush1.bf16.msra.mxu0 %v2072
    %2275 = vmatprep.subr.bf16.mxu0 0
    %2276 = vmatpush1.bf16.msra.mxu0 0
    %2277 = vmatprep.subr.bf16.mxu0 0
    %2278 = vmatpush1.bf16.msra.mxu0 0
    %2279 = vmatprep.subr.bf16.mxu0 0
    %2280 = vmatpush1.bf16.msra.mxu0 0
    %2281 = vmatprep.subr.bf16.mxu0 0
    %2282 = vmatpush1.bf16.msra.mxu0 0
    %2283 = vmatprep.subr.bf16.mxu0 0
    %2284 = vmatpush1.bf16.msra.mxu0 0
    %2285 = vmatprep.subr.bf16.mxu0 0
    %2286 = vmatpush1.bf16.msra.mxu0 0
    %2287 = vmatprep.subr.bf16.mxu0 0
    %2288 = vmatpush1.bf16.msra.mxu0 0
    %2289 = vmatprep.subr.bf16.mxu0 0
    %2290 = vmatpush1.bf16.msra.mxu0 0
    %2291 = vmatprep.mubr.bf16.mxu0 0
    %2292 = vmatmul.mubr.bf16.gmra.mrb[0].mxu0 %v2217
    %v2293 = vpop.f32.mrb[0].mxu0
    %v2294 = vadd.f32 0.0, %v2293
    %v2295 = vpop.f32.mrb[0].mxu0
    %v2296 = vadd.f32 0.0, %v2295
    %v2297 = vpop.f32.mrb[0].mxu0
    %v2298 = vpop.f32.mrb[0].mxu0
    %2299 = vdwg.mxu0
    %v2300 = vadd.f32 %v1839, %v2253
    %v2301 = vadd.f32 %v1841, %v2255
    %v2302 = vadd.f32 %v1912, %v2294
    %v2303 = vadd.f32 %v1914, %v2296
    %v2304 = vxor.u32 %v2300, 2147483648
    %v2305 = vmul.f32 %v2304, 1.442695
    %v2306 = vpow.pop %v2305
    %v2307 = vadd.f32 %v2306, 1.0
    %v2308 = vrcp.pop %v2307
    %v2309 = vmul.f32 1.0, %v2308
    %v2310 = vxor.u32 %v2301, 2147483648
    %v2311 = vmul.f32 %v2310, 1.442695
    %v2312 = vpow.pop %v2311
    %v2313 = vadd.f32 %v2312, 1.0
    %v2314 = vrcp.pop %v2313
    %v2315 = vmul.f32 1.0, %v2314
    %v2316 = vtanh.pop %v2302
    %v2317 = vxor.u32 %v2303, 2147483648
    %v2318 = vmul.f32 %v2317, 1.442695
    %v2319 = vpow.pop %v2318
    %v2320 = vadd.f32 %v2319, 1.0
    %v2321 = vrcp.pop %v2320
    %v2322 = vmul.f32 1.0, %v2321
    %v2323 = vmul.f32 %v2315, %v2213
    %v2324 = vmul.f32 %v2309, %v2316
    %v2325 = vadd.f32 %v2323, %v2324
    %v2326 = vtanh.pop %v2325
    %v2327 = vmul.f32 %v2322, %v2326
    %2328 = vst [vmem:[#allocation2 + $0x8] sm:$0xff] %v2327
    %v2329 = vpack.c.bf16 %v2327, %v2327
    %2330 = vmatprep.subr.bf16.mxu0 %v2043
    %2331 = vmatpush1.bf16.msra.mxu0 %v2042
    %2332 = vmatprep.subr.bf16.mxu0 %v2047
    %2333 = vmatpush1.bf16.msra.mxu0 %v2046
    %2334 = vmatprep.subr.bf16.mxu0 %v2051
    %2335 = vmatpush1.bf16.msra.mxu0 %v2050
    %2336 = vmatprep.subr.bf16.mxu0 %v2055
    %2337 = vmatpush1.bf16.msra.mxu0 %v2054
    %2338 = vmatprep.subr.bf16.mxu0 %v2059
    %2339 = vmatpush1.bf16.msra.mxu0 %v2058
    %2340 = vmatprep.subr.bf16.mxu0 %v2063
    %2341 = vmatpush1.bf16.msra.mxu0 %v2062
    %2342 = vmatprep.subr.bf16.mxu0 %v2067
    %2343 = vmatpush1.bf16.msra.mxu0 %v2066
    %2344 = vmatprep.subr.bf16.mxu0 %v2071
    %2345 = vmatpush1.bf16.msra.mxu0 %v2070
    %2346 = vmatprep.subr.bf16.mxu0 0
    %2347 = vmatpush1.bf16.msra.mxu0 0
    %2348 = vmatprep.subr.bf16.mxu0 0
    %2349 = vmatpush1.bf16.msra.mxu0 0
    %2350 = vmatprep.subr.bf16.mxu0 0
    %2351 = vmatpush1.bf16.msra.mxu0 0
    %2352 = vmatprep.subr.bf16.mxu0 0
    %2353 = vmatpush1.bf16.msra.mxu0 0
    %2354 = vmatprep.subr.bf16.mxu0 0
    %2355 = vmatpush1.bf16.msra.mxu0 0
    %2356 = vmatprep.subr.bf16.mxu0 0
    %2357 = vmatpush1.bf16.msra.mxu0 0
    %2358 = vmatprep.subr.bf16.mxu0 0
    %2359 = vmatpush1.bf16.msra.mxu0 0
    %2360 = vmatprep.subr.bf16.mxu0 0
    %2361 = vmatpush1.bf16.msra.mxu0 0
    %2362 = vmatprep.mubr.bf16.mxu0 0
    %2363 = vmatmul.mubr.bf16.gmra.mrb[0].mxu0 %v2329
    %v2364 = vpop.f32.mrb[0].mxu0
    %v2365 = vadd.f32 0.0, %v2364
    %v2366 = vpop.f32.mrb[0].mxu0
    %v2367 = vadd.f32 0.0, %v2366
    %v2368 = vpop.f32.mrb[0].mxu0
    %v2369 = vpop.f32.mrb[0].mxu0
    %2370 = vdwg.mxu0
    %2371 = vmatprep.subr.bf16.mxu0 %v2045
    %2372 = vmatpush1.bf16.msra.mxu0 %v2044
    %2373 = vmatprep.subr.bf16.mxu0 %v2049
    %2374 = vmatpush1.bf16.msra.mxu0 %v2048
    %2375 = vmatprep.subr.bf16.mxu0 %v2053
    %2376 = vmatpush1.bf16.msra.mxu0 %v2052
    %2377 = vmatprep.subr.bf16.mxu0 %v2057
    %2378 = vmatpush1.bf16.msra.mxu0 %v2056
    %2379 = vmatprep.subr.bf16.mxu0 %v2061
    %2380 = vmatpush1.bf16.msra.mxu0 %v2060
    %2381 = vmatprep.subr.bf16.mxu0 %v2065
    %2382 = vmatpush1.bf16.msra.mxu0 %v2064
    %2383 = vmatprep.subr.bf16.mxu0 %v2069
    %2384 = vmatpush1.bf16.msra.mxu0 %v2068
    %2385 = vmatprep.subr.bf16.mxu0 %v2073
    %2386 = vmatpush1.bf16.msra.mxu0 %v2072
    %2387 = vmatprep.subr.bf16.mxu0 0
    %2388 = vmatpush1.bf16.msra.mxu0 0
    %2389 = vmatprep.subr.bf16.mxu0 0
    %2390 = vmatpush1.bf16.msra.mxu0 0
    %2391 = vmatprep.subr.bf16.mxu0 0
    %2392 = vmatpush1.bf16.msra.mxu0 0
    %2393 = vmatprep.subr.bf16.mxu0 0
    %2394 = vmatpush1.bf16.msra.mxu0 0
    %2395 = vmatprep.subr.bf16.mxu0 0
    %2396 = vmatpush1.bf16.msra.mxu0 0
    %2397 = vmatprep.subr.bf16.mxu0 0
    %2398 = vmatpush1.bf16.msra.mxu0 0
    %2399 = vmatprep.subr.bf16.mxu0 0
    %2400 = vmatpush1.bf16.msra.mxu0 0
    %2401 = vmatprep.subr.bf16.mxu0 0
    %2402 = vmatpush1.bf16.msra.mxu0 0
    %2403 = vmatprep.mubr.bf16.mxu0 0
    %2404 = vmatmul.mubr.bf16.gmra.mrb[0].mxu0 %v2329
    %v2405 = vpop.f32.mrb[0].mxu0
    %v2406 = vadd.f32 0.0, %v2405
    %v2407 = vpop.f32.mrb[0].mxu0
    %v2408 = vadd.f32 0.0, %v2407
    %v2409 = vpop.f32.mrb[0].mxu0
    %v2410 = vpop.f32.mrb[0].mxu0
    %2411 = vdwg.mxu0
    %v2412 = vadd.f32 %v1845, %v2365
    %v2413 = vadd.f32 %v1847, %v2367
    %v2414 = vadd.f32 %v1918, %v2406
    %v2415 = vadd.f32 %v1920, %v2408
    %v2416 = vxor.u32 %v2412, 2147483648
    %v2417 = vmul.f32 %v2416, 1.442695
    %v2418 = vpow.pop %v2417
    %v2419 = vadd.f32 %v2418, 1.0
    %v2420 = vrcp.pop %v2419
    %v2421 = vmul.f32 1.0, %v2420
    %v2422 = vxor.u32 %v2413, 2147483648
    %v2423 = vmul.f32 %v2422, 1.442695
    %v2424 = vpow.pop %v2423
    %v2425 = vadd.f32 %v2424, 1.0
    %v2426 = vrcp.pop %v2425
    %v2427 = vmul.f32 1.0, %v2426
    %v2428 = vtanh.pop %v2414
    %v2429 = vxor.u32 %v2415, 2147483648
    %v2430 = vmul.f32 %v2429, 1.442695
    %v2431 = vpow.pop %v2430
    %v2432 = vadd.f32 %v2431, 1.0
    %v2433 = vrcp.pop %v2432
    %v2434 = vmul.f32 1.0, %v2433
    %v2435 = vmul.f32 %v2427, %v2325
    %v2436 = vmul.f32 %v2421, %v2428
    %v2437 = vadd.f32 %v2435, %v2436
    %v2438 = vtanh.pop %v2437
    %v2439 = vmul.f32 %v2434, %v2438
    %2440 = vst [vmem:[#allocation2 + $0x10] sm:$0xff] %v2439
    %v2441 = vpack.c.bf16 %v2439, %v2439
    %2442 = vmatprep.subr.bf16.mxu0 %v2043
    %2443 = vmatpush1.bf16.msra.mxu0 %v2042
    %2444 = vmatprep.subr.bf16.mxu0 %v2047
    %2445 = vmatpush1.bf16.msra.mxu0 %v2046
    %2446 = vmatprep.subr.bf16.mxu0 %v2051
    %2447 = vmatpush1.bf16.msra.mxu0 %v2050
    %2448 = vmatprep.subr.bf16.mxu0 %v2055
    %2449 = vmatpush1.bf16.msra.mxu0 %v2054
    %2450 = vmatprep.subr.bf16.mxu0 %v2059
    %2451 = vmatpush1.bf16.msra.mxu0 %v2058
    %2452 = vmatprep.subr.bf16.mxu0 %v2063
    %2453 = vmatpush1.bf16.msra.mxu0 %v2062
    %2454 = vmatprep.subr.bf16.mxu0 %v2067
    %2455 = vmatpush1.bf16.msra.mxu0 %v2066
    %2456 = vmatprep.subr.bf16.mxu0 %v2071
    %2457 = vmatpush1.bf16.msra.mxu0 %v2070
    %2458 = vmatprep.subr.bf16.mxu0 0
    %2459 = vmatpush1.bf16.msra.mxu0 0
    %2460 = vmatprep.subr.bf16.mxu0 0
    %2461 = vmatpush1.bf16.msra.mxu0 0
    %2462 = vmatprep.subr.bf16.mxu0 0
    %2463 = vmatpush1.bf16.msra.mxu0 0
    %2464 = vmatprep.subr.bf16.mxu0 0
    %2465 = vmatpush1.bf16.msra.mxu0 0
    %2466 = vmatprep.subr.bf16.mxu0 0
    %2467 = vmatpush1.bf16.msra.mxu0 0
    %2468 = vmatprep.subr.bf16.mxu0 0
    %2469 = vmatpush1.bf16.msra.mxu0 0
    %2470 = vmatprep.subr.bf16.mxu0 0
    %2471 = vmatpush1.bf16.msra.mxu0 0
    %2472 = vmatprep.subr.bf16.mxu0 0
    %2473 = vmatpush1.bf16.msra.mxu0 0
    %2474 = vmatprep.mubr.bf16.mxu0 0
    %2475 = vmatmul.mubr.bf16.gmra.mrb[0].mxu0 %v2441
    %v2476 = vpop.f32.mrb[0].mxu0
    %v2477 = vadd.f32 0.0, %v2476
    %v2478 = vpop.f32.mrb[0].mxu0
    %v2479 = vadd.f32 0.0, %v2478
    %v2480 = vpop.f32.mrb[0].mxu0
    %v2481 = vpop.f32.mrb[0].mxu0
    %2482 = vdwg.mxu0
    %2483 = vmatprep.subr.bf16.mxu0 %v2045
    %2484 = vmatpush1.bf16.msra.mxu0 %v2044
    %2485 = vmatprep.subr.bf16.mxu0 %v2049
    %2486 = vmatpush1.bf16.msra.mxu0 %v2048
    %2487 = vmatprep.subr.bf16.mxu0 %v2053
    %2488 = vmatpush1.bf16.msra.mxu0 %v2052
    %2489 = vmatprep.subr.bf16.mxu0 %v2057
    %2490 = vmatpush1.bf16.msra.mxu0 %v2056
    %2491 = vmatprep.subr.bf16.mxu0 %v2061
    %2492 = vmatpush1.bf16.msra.mxu0 %v2060
    %2493 = vmatprep.subr.bf16.mxu0 %v2065
    %2494 = vmatpush1.bf16.msra.mxu0 %v2064
    %2495 = vmatprep.subr.bf16.mxu0 %v2069
    %2496 = vmatpush1.bf16.msra.mxu0 %v2068
    %2497 = vmatprep.subr.bf16.mxu0 %v2073
    %2498 = vmatpush1.bf16.msra.mxu0 %v2072
    %2499 = vmatprep.subr.bf16.mxu0 0
    %2500 = vmatpush1.bf16.msra.mxu0 0
    %2501 = vmatprep.subr.bf16.mxu0 0
    %2502 = vmatpush1.bf16.msra.mxu0 0
    %2503 = vmatprep.subr.bf16.mxu0 0
    %2504 = vmatpush1.bf16.msra.mxu0 0
    %2505 = vmatprep.subr.bf16.mxu0 0
    %2506 = vmatpush1.bf16.msra.mxu0 0
    %2507 = vmatprep.subr.bf16.mxu0 0
    %2508 = vmatpush1.bf16.msra.mxu0 0
    %2509 = vmatprep.subr.bf16.mxu0 0
    %2510 = vmatpush1.bf16.msra.mxu0 0
    %2511 = vmatprep.subr.bf16.mxu0 0
    %2512 = vmatpush1.bf16.msra.mxu0 0
    %2513 = vmatprep.subr.bf16.mxu0 0
    %2514 = vmatpush1.bf16.msra.mxu0 0
    %2515 = vmatprep.mubr.bf16.mxu0 0
    %2516 = vmatmul.mubr.bf16.gmra.mrb[0].mxu0 %v2441
    %v2517 = vpop.f32.mrb[0].mxu0
    %v2518 = vadd.f32 0.0, %v2517
    %v2519 = vpop.f32.mrb[0].mxu0
    %v2520 = vadd.f32 0.0, %v2519
    %v2521 = vpop.f32.mrb[0].mxu0
    %v2522 = vpop.f32.mrb[0].mxu0
    %2523 = vdwg.mxu0
    %v2524 = vadd.f32 %v1849, %v2477
    %v2525 = vadd.f32 %v1851, %v2479
    %v2526 = vadd.f32 %v1922, %v2518
    %v2527 = vadd.f32 %v1924, %v2520
    %v2528 = vxor.u32 %v2524, 2147483648
    %v2529 = vmul.f32 %v2528, 1.442695
    %v2530 = vpow.pop %v2529
    %v2531 = vadd.f32 %v2530, 1.0
    %v2532 = vrcp.pop %v2531
    %v2533 = vmul.f32 1.0, %v2532
    %v2534 = vxor.u32 %v2525, 2147483648
    %v2535 = vmul.f32 %v2534, 1.442695
    %v2536 = vpow.pop %v2535
    %v2537 = vadd.f32 %v2536, 1.0
    %v2538 = vrcp.pop %v2537
    %v2539 = vmul.f32 1.0, %v2538
    %v2540 = vtanh.pop %v2526
    %v2541 = vxor.u32 %v2527, 2147483648
    %v2542 = vmul.f32 %v2541, 1.442695
    %v2543 = vpow.pop %v2542
    %v2544 = vadd.f32 %v2543, 1.0
    %v2545 = vrcp.pop %v2544
    %v2546 = vmul.f32 1.0, %v2545
    %v2547 = vmul.f32 %v2539, %v2437
    %v2548 = vmul.f32 %v2533, %v2540
    %v2549 = vadd.f32 %v2547, %v2548
    %v2550 = vtanh.pop %v2549
    %v2551 = vmul.f32 %v2546, %v2550
    %2552 = vst [vmem:[#allocation2 + $0x18] sm:$0xff] %v2551
    %v2553 = vpack.c.bf16 %v2551, %v2551
    %2554 = vmatprep.subr.bf16.mxu0 %v2043
    %2555 = vmatpush1.bf16.msra.mxu0 %v2042
    %2556 = vmatprep.subr.bf16.mxu0 %v2047
    %2557 = vmatpush1.bf16.msra.mxu0 %v2046
    %2558 = vmatprep.subr.bf16.mxu0 %v2051
    %2559 = vmatpush1.bf16.msra.mxu0 %v2050
    %2560 = vmatprep.subr.bf16.mxu0 %v2055
    %2561 = vmatpush1.bf16.msra.mxu0 %v2054
    %2562 = vmatprep.subr.bf16.mxu0 %v2059
    %2563 = vmatpush1.bf16.msra.mxu0 %v2058
    %2564 = vmatprep.subr.bf16.mxu0 %v2063
    %2565 = vmatpush1.bf16.msra.mxu0 %v2062
    %2566 = vmatprep.subr.bf16.mxu0 %v2067
    %2567 = vmatpush1.bf16.msra.mxu0 %v2066
    %2568 = vmatprep.subr.bf16.mxu0 %v2071
    %2569 = vmatpush1.bf16.msra.mxu0 %v2070
    %2570 = vmatprep.subr.bf16.mxu0 0
    %2571 = vmatpush1.bf16.msra.mxu0 0
    %2572 = vmatprep.subr.bf16.mxu0 0
    %2573 = vmatpush1.bf16.msra.mxu0 0
    %2574 = vmatprep.subr.bf16.mxu0 0
    %2575 = vmatpush1.bf16.msra.mxu0 0
    %2576 = vmatprep.subr.bf16.mxu0 0
    %2577 = vmatpush1.bf16.msra.mxu0 0
    %2578 = vmatprep.subr.bf16.mxu0 0
    %2579 = vmatpush1.bf16.msra.mxu0 0
    %2580 = vmatprep.subr.bf16.mxu0 0
    %2581 = vmatpush1.bf16.msra.mxu0 0
    %2582 = vmatprep.subr.bf16.mxu0 0
    %2583 = vmatpush1.bf16.msra.mxu0 0
    %2584 = vmatprep.subr.bf16.mxu0 0
    %2585 = vmatpush1.bf16.msra.mxu0 0
    %2586 = vmatprep.mubr.bf16.mxu0 0
    %2587 = vmatmul.mubr.bf16.gmra.mrb[0].mxu0 %v2553
    %v2588 = vpop.f32.mrb[0].mxu0
    %v2589 = vadd.f32 0.0, %v2588
    %v2590 = vpop.f32.mrb[0].mxu0
    %v2591 = vadd.f32 0.0, %v2590
    %v2592 = vpop.f32.mrb[0].mxu0
    %v2593 = vpop.f32.mrb[0].mxu0
    %2594 = vdwg.mxu0
    %2595 = vmatprep.subr.bf16.mxu0 %v2045
    %2596 = vmatpush1.bf16.msra.mxu0 %v2044
    %2597 = vmatprep.subr.bf16.mxu0 %v2049
    %2598 = vmatpush1.bf16.msra.mxu0 %v2048
    %2599 = vmatprep.subr.bf16.mxu0 %v2053
    %2600 = vmatpush1.bf16.msra.mxu0 %v2052
    %2601 = vmatprep.subr.bf16.mxu0 %v2057
    %2602 = vmatpush1.bf16.msra.mxu0 %v2056
    %2603 = vmatprep.subr.bf16.mxu0 %v2061
    %2604 = vmatpush1.bf16.msra.mxu0 %v2060
    %2605 = vmatprep.subr.bf16.mxu0 %v2065
    %2606 = vmatpush1.bf16.msra.mxu0 %v2064
    %2607 = vmatprep.subr.bf16.mxu0 %v2069
    %2608 = vmatpush1.bf16.msra.mxu0 %v2068
    %2609 = vmatprep.subr.bf16.mxu0 %v2073
    %2610 = vmatpush1.bf16.msra.mxu0 %v2072
    %2611 = vmatprep.subr.bf16.mxu0 0
    %2612 = vmatpush1.bf16.msra.mxu0 0
    %2613 = vmatprep.subr.bf16.mxu0 0
    %2614 = vmatpush1.bf16.msra.mxu0 0
    %2615 = vmatprep.subr.bf16.mxu0 0
    %2616 = vmatpush1.bf16.msra.mxu0 0
    %2617 = vmatprep.subr.bf16.mxu0 0
    %2618 = vmatpush1.bf16.msra.mxu0 0
    %2619 = vmatprep.subr.bf16.mxu0 0
    %2620 = vmatpush1.bf16.msra.mxu0 0
    %2621 = vmatprep.subr.bf16.mxu0 0
    %2622 = vmatpush1.bf16.msra.mxu0 0
    %2623 = vmatprep.subr.bf16.mxu0 0
    %2624 = vmatpush1.bf16.msra.mxu0 0
    %2625 = vmatprep.subr.bf16.mxu0 0
    %2626 = vmatpush1.bf16.msra.mxu0 0
    %2627 = vmatprep.mubr.bf16.mxu0 0
    %2628 = vmatmul.mubr.bf16.gmra.mrb[0].mxu0 %v2553
    %v2629 = vpop.f32.mrb[0].mxu0
    %v2630 = vadd.f32 0.0, %v2629
    %v2631 = vpop.f32.mrb[0].mxu0
    %v2632 = vadd.f32 0.0, %v2631
    %v2633 = vpop.f32.mrb[0].mxu0
    %v2634 = vpop.f32.mrb[0].mxu0
    %2635 = vdwg.mxu0
    %v2636 = vadd.f32 %v1855, %v2589
    %v2637 = vadd.f32 %v1857, %v2591
    %v2638 = vadd.f32 %v1928, %v2630
    %v2639 = vadd.f32 %v1930, %v2632
    %v2640 = vxor.u32 %v2636, 2147483648
    %v2641 = vmul.f32 %v2640, 1.442695
    %v2642 = vpow.pop %v2641
    %v2643 = vadd.f32 %v2642, 1.0
    %v2644 = vrcp.pop %v2643
    %v2645 = vmul.f32 1.0, %v2644
    %v2646 = vxor.u32 %v2637, 2147483648
    %v2647 = vmul.f32 %v2646, 1.442695
    %v2648 = vpow.pop %v2647
    %v2649 = vadd.f32 %v2648, 1.0
    %v2650 = vrcp.pop %v2649
    %v2651 = vmul.f32 1.0, %v2650
    %v2652 = vtanh.pop %v2638
    %v2653 = vxor.u32 %v2639, 2147483648
    %v2654 = vmul.f32 %v2653, 1.442695
    %v2655 = vpow.pop %v2654
    %v2656 = vadd.f32 %v2655, 1.0
    %v2657 = vrcp.pop %v2656
    %v2658 = vmul.f32 1.0, %v2657
    %v2659 = vmul.f32 %v2651, %v2549
    %v2660 = vmul.f32 %v2645, %v2652
    %v2661 = vadd.f32 %v2659, %v2660
    %v2662 = vtanh.pop %v2661
    %v2663 = vmul.f32 %v2658, %v2662
    %2664 = vst [vmem:[#allocation2 + $0x20] sm:$0xff] %v2663
    %v2665 = vpack.c.bf16 %v2663, %v2663
    %2666 = vmatprep.subr.bf16.mxu0 %v2043
    %2667 = vmatpush1.bf16.msra.mxu0 %v2042
    %2668 = vmatprep.subr.bf16.mxu0 %v2047
    %2669 = vmatpush1.bf16.msra.mxu0 %v2046
    %2670 = vmatprep.subr.bf16.mxu0 %v2051
    %2671 = vmatpush1.bf16.msra.mxu0 %v2050
    %2672 = vmatprep.subr.bf16.mxu0 %v2055
    %2673 = vmatpush1.bf16.msra.mxu0 %v2054
    %2674 = vmatprep.subr.bf16.mxu0 %v2059
    %2675 = vmatpush1.bf16.msra.mxu0 %v2058
    %2676 = vmatprep.subr.bf16.mxu0 %v2063
    %2677 = vmatpush1.bf16.msra.mxu0 %v2062
    %2678 = vmatprep.subr.bf16.mxu0 %v2067
    %2679 = vmatpush1.bf16.msra.mxu0 %v2066
    %2680 = vmatprep.subr.bf16.mxu0 %v2071
    %2681 = vmatpush1.bf16.msra.mxu0 %v2070
    %2682 = vmatprep.subr.bf16.mxu0 0
    %2683 = vmatpush1.bf16.msra.mxu0 0
    %2684 = vmatprep.subr.bf16.mxu0 0
    %2685 = vmatpush1.bf16.msra.mxu0 0
    %2686 = vmatprep.subr.bf16.mxu0 0
    %2687 = vmatpush1.bf16.msra.mxu0 0
    %2688 = vmatprep.subr.bf16.mxu0 0
    %2689 = vmatpush1.bf16.msra.mxu0 0
    %2690 = vmatprep.subr.bf16.mxu0 0
    %2691 = vmatpush1.bf16.msra.mxu0 0
    %2692 = vmatprep.subr.bf16.mxu0 0
    %2693 = vmatpush1.bf16.msra.mxu0 0
    %2694 = vmatprep.subr.bf16.mxu0 0
    %2695 = vmatpush1.bf16.msra.mxu0 0
    %2696 = vmatprep.subr.bf16.mxu0 0
    %2697 = vmatpush1.bf16.msra.mxu0 0
    %2698 = vmatprep.mubr.bf16.mxu0 0
    %2699 = vmatmul.mubr.bf16.gmra.mrb[0].mxu0 %v2665
    %v2700 = vpop.f32.mrb[0].mxu0
    %v2701 = vadd.f32 0.0, %v2700
    %v2702 = vpop.f32.mrb[0].mxu0
    %v2703 = vadd.f32 0.0, %v2702
    %v2704 = vpop.f32.mrb[0].mxu0
    %v2705 = vpop.f32.mrb[0].mxu0
    %2706 = vdwg.mxu0
    %2707 = vmatprep.subr.bf16.mxu0 %v2045
    %2708 = vmatpush1.bf16.msra.mxu0 %v2044
    %2709 = vmatprep.subr.bf16.mxu0 %v2049
    %2710 = vmatpush1.bf16.msra.mxu0 %v2048
    %2711 = vmatprep.subr.bf16.mxu0 %v2053
    %2712 = vmatpush1.bf16.msra.mxu0 %v2052
    %2713 = vmatprep.subr.bf16.mxu0 %v2057
    %2714 = vmatpush1.bf16.msra.mxu0 %v2056
    %2715 = vmatprep.subr.bf16.mxu0 %v2061
    %2716 = vmatpush1.bf16.msra.mxu0 %v2060
    %2717 = vmatprep.subr.bf16.mxu0 %v2065
    %2718 = vmatpush1.bf16.msra.mxu0 %v2064
    %2719 = vmatprep.subr.bf16.mxu0 %v2069
    %2720 = vmatpush1.bf16.msra.mxu0 %v2068
    %2721 = vmatprep.subr.bf16.mxu0 %v2073
    %2722 = vmatpush1.bf16.msra.mxu0 %v2072
    %2723 = vmatprep.subr.bf16.mxu0 0
    %2724 = vmatpush1.bf16.msra.mxu0 0
    %2725 = vmatprep.subr.bf16.mxu0 0
    %2726 = vmatpush1.bf16.msra.mxu0 0
    %2727 = vmatprep.subr.bf16.mxu0 0
    %2728 = vmatpush1.bf16.msra.mxu0 0
    %2729 = vmatprep.subr.bf16.mxu0 0
    %2730 = vmatpush1.bf16.msra.mxu0 0
    %2731 = vmatprep.subr.bf16.mxu0 0
    %2732 = vmatpush1.bf16.msra.mxu0 0
    %2733 = vmatprep.subr.bf16.mxu0 0
    %2734 = vmatpush1.bf16.msra.mxu0 0
    %2735 = vmatprep.subr.bf16.mxu0 0
    %2736 = vmatpush1.bf16.msra.mxu0 0
    %2737 = vmatprep.subr.bf16.mxu0 0
    %2738 = vmatpush1.bf16.msra.mxu0 0
    %2739 = vmatprep.mubr.bf16.mxu0 0
    %2740 = vmatmul.mubr.bf16.gmra.mrb[0].mxu0 %v2665
    %v2741 = vpop.f32.mrb[0].mxu0
    %v2742 = vadd.f32 0.0, %v2741
    %v2743 = vpop.f32.mrb[0].mxu0
    %v2744 = vadd.f32 0.0, %v2743
    %v2745 = vpop.f32.mrb[0].mxu0
    %v2746 = vpop.f32.mrb[0].mxu0
    %2747 = vdwg.mxu0
    %v2748 = vadd.f32 %v1859, %v2701
    %v2749 = vadd.f32 %v1861, %v2703
    %v2750 = vadd.f32 %v1932, %v2742
    %v2751 = vadd.f32 %v1934, %v2744
    %v2752 = vxor.u32 %v2748, 2147483648
    %v2753 = vmul.f32 %v2752, 1.442695
    %v2754 = vpow.pop %v2753
    %v2755 = vadd.f32 %v2754, 1.0
    %v2756 = vrcp.pop %v2755
    %v2757 = vmul.f32 1.0, %v2756
    %v2758 = vxor.u32 %v2749, 2147483648
    %v2759 = vmul.f32 %v2758, 1.442695
    %v2760 = vpow.pop %v2759
    %v2761 = vadd.f32 %v2760, 1.0
    %v2762 = vrcp.pop %v2761
    %v2763 = vmul.f32 1.0, %v2762
    %v2764 = vtanh.pop %v2750
    %v2765 = vxor.u32 %v2751, 2147483648
    %v2766 = vmul.f32 %v2765, 1.442695
    %v2767 = vpow.pop %v2766
    %v2768 = vadd.f32 %v2767, 1.0
    %v2769 = vrcp.pop %v2768
    %v2770 = vmul.f32 1.0, %v2769
    %v2771 = vmul.f32 %v2763, %v2661
    %v2772 = vmul.f32 %v2757, %v2764
    %v2773 = vadd.f32 %v2771, %v2772
    %v2774 = vtanh.pop %v2773
    %v2775 = vmul.f32 %v2770, %v2774
    %2776 = vst [vmem:[#allocation2 + $0x28] sm:$0xff] %v2775
    %v2777 = vpack.c.bf16 %v2775, %v2775
    %2778 = vmatprep.subr.bf16.mxu0 %v2043
    %2779 = vmatpush1.bf16.msra.mxu0 %v2042
    %2780 = vmatprep.subr.bf16.mxu0 %v2047
    %2781 = vmatpush1.bf16.msra.mxu0 %v2046
    %2782 = vmatprep.subr.bf16.mxu0 %v2051
    %2783 = vmatpush1.bf16.msra.mxu0 %v2050
    %2784 = vmatprep.subr.bf16.mxu0 %v2055
    %2785 = vmatpush1.bf16.msra.mxu0 %v2054
    %2786 = vmatprep.subr.bf16.mxu0 %v2059
    %2787 = vmatpush1.bf16.msra.mxu0 %v2058
    %2788 = vmatprep.subr.bf16.mxu0 %v2063
    %2789 = vmatpush1.bf16.msra.mxu0 %v2062
    %2790 = vmatprep.subr.bf16.mxu0 %v2067
    %2791 = vmatpush1.bf16.msra.mxu0 %v2066
    %2792 = vmatprep.subr.bf16.mxu0 %v2071
    %2793 = vmatpush1.bf16.msra.mxu0 %v2070
    %2794 = vmatprep.subr.bf16.mxu0 0
    %2795 = vmatpush1.bf16.msra.mxu0 0
    %2796 = vmatprep.subr.bf16.mxu0 0
    %2797 = vmatpush1.bf16.msra.mxu0 0
    %2798 = vmatprep.subr.bf16.mxu0 0
    %2799 = vmatpush1.bf16.msra.mxu0 0
    %2800 = vmatprep.subr.bf16.mxu0 0
    %2801 = vmatpush1.bf16.msra.mxu0 0
    %2802 = vmatprep.subr.bf16.mxu0 0
    %2803 = vmatpush1.bf16.msra.mxu0 0
    %2804 = vmatprep.subr.bf16.mxu0 0
    %2805 = vmatpush1.bf16.msra.mxu0 0
    %2806 = vmatprep.subr.bf16.mxu0 0
    %2807 = vmatpush1.bf16.msra.mxu0 0
    %2808 = vmatprep.subr.bf16.mxu0 0
    %2809 = vmatpush1.bf16.msra.mxu0 0
    %2810 = vmatprep.mubr.bf16.mxu0 0
    %2811 = vmatmul.mubr.bf16.gmra.mrb[0].mxu0 %v2777
    %v2812 = vpop.f32.mrb[0].mxu0
    %v2813 = vadd.f32 0.0, %v2812
    %v2814 = vpop.f32.mrb[0].mxu0
    %v2815 = vadd.f32 0.0, %v2814
    %v2816 = vpop.f32.mrb[0].mxu0
    %v2817 = vpop.f32.mrb[0].mxu0
    %2818 = vdwg.mxu0
    %2819 = vmatprep.subr.bf16.mxu0 %v2045
    %2820 = vmatpush1.bf16.msra.mxu0 %v2044
    %2821 = vmatprep.subr.bf16.mxu0 %v2049
    %2822 = vmatpush1.bf16.msra.mxu0 %v2048
    %2823 = vmatprep.subr.bf16.mxu0 %v2053
    %2824 = vmatpush1.bf16.msra.mxu0 %v2052
    %2825 = vmatprep.subr.bf16.mxu0 %v2057
    %2826 = vmatpush1.bf16.msra.mxu0 %v2056
    %2827 = vmatprep.subr.bf16.mxu0 %v2061
    %2828 = vmatpush1.bf16.msra.mxu0 %v2060
    %2829 = vmatprep.subr.bf16.mxu0 %v2065
    %2830 = vmatpush1.bf16.msra.mxu0 %v2064
    %2831 = vmatprep.subr.bf16.mxu0 %v2069
    %2832 = vmatpush1.bf16.msra.mxu0 %v2068
    %2833 = vmatprep.subr.bf16.mxu0 %v2073
    %2834 = vmatpush1.bf16.msra.mxu0 %v2072
    %2835 = vmatprep.subr.bf16.mxu0 0
    %2836 = vmatpush1.bf16.msra.mxu0 0
    %2837 = vmatprep.subr.bf16.mxu0 0
    %2838 = vmatpush1.bf16.msra.mxu0 0
    %2839 = vmatprep.subr.bf16.mxu0 0
    %2840 = vmatpush1.bf16.msra.mxu0 0
    %2841 = vmatprep.subr.bf16.mxu0 0
    %2842 = vmatpush1.bf16.msra.mxu0 0
    %2843 = vmatprep.subr.bf16.mxu0 0
    %2844 = vmatpush1.bf16.msra.mxu0 0
    %2845 = vmatprep.subr.bf16.mxu0 0
    %2846 = vmatpush1.bf16.msra.mxu0 0
    %2847 = vmatprep.subr.bf16.mxu0 0
    %2848 = vmatpush1.bf16.msra.mxu0 0
    %2849 = vmatprep.subr.bf16.mxu0 0
    %2850 = vmatpush1.bf16.msra.mxu0 0
    %2851 = vmatprep.mubr.bf16.mxu0 0
    %2852 = vmatmul.mubr.bf16.gmra.mrb[0].mxu0 %v2777
    %v2853 = vpop.f32.mrb[0].mxu0
    %v2854 = vadd.f32 0.0, %v2853
    %v2855 = vpop.f32.mrb[0].mxu0
    %v2856 = vadd.f32 0.0, %v2855
    %v2857 = vpop.f32.mrb[0].mxu0
    %v2858 = vpop.f32.mrb[0].mxu0
    %2859 = vdwg.mxu0
    %v2860 = vadd.f32 %v1865, %v2813
    %v2861 = vadd.f32 %v1867, %v2815
    %v2862 = vadd.f32 %v1938, %v2854
    %v2863 = vadd.f32 %v1940, %v2856
    %v2864 = vxor.u32 %v2860, 2147483648
    %v2865 = vmul.f32 %v2864, 1.442695
    %v2866 = vpow.pop %v2865
    %v2867 = vadd.f32 %v2866, 1.0
    %v2868 = vrcp.pop %v2867
    %v2869 = vmul.f32 1.0, %v2868
    %v2870 = vxor.u32 %v2861, 2147483648
    %v2871 = vmul.f32 %v2870, 1.442695
    %v2872 = vpow.pop %v2871
    %v2873 = vadd.f32 %v2872, 1.0
    %v2874 = vrcp.pop %v2873
    %v2875 = vmul.f32 1.0, %v2874
    %v2876 = vtanh.pop %v2862
    %v2877 = vxor.u32 %v2863, 2147483648
    %v2878 = vmul.f32 %v2877, 1.442695
    %v2879 = vpow.pop %v2878
    %v2880 = vadd.f32 %v2879, 1.0
    %v2881 = vrcp.pop %v2880
    %v2882 = vmul.f32 1.0, %v2881
    %v2883 = vmul.f32 %v2875, %v2773
    %v2884 = vmul.f32 %v2869, %v2876
    %v2885 = vadd.f32 %v2883, %v2884
    %v2886 = vtanh.pop %v2885
    %v2887 = vmul.f32 %v2882, %v2886
    %2888 = vst [vmem:[#allocation2 + $0x30] sm:$0xff] %v2887
    %v2889 = vpack.c.bf16 %v2887, %v2887
    %2890 = vmatprep.subr.bf16.mxu0 %v2043
    %2891 = vmatpush1.bf16.msra.mxu0 %v2042
    %2892 = vmatprep.subr.bf16.mxu0 %v2047
    %2893 = vmatpush1.bf16.msra.mxu0 %v2046
    %2894 = vmatprep.subr.bf16.mxu0 %v2051
    %2895 = vmatpush1.bf16.msra.mxu0 %v2050
    %2896 = vmatprep.subr.bf16.mxu0 %v2055
    %2897 = vmatpush1.bf16.msra.mxu0 %v2054
    %2898 = vmatprep.subr.bf16.mxu0 %v2059
    %2899 = vmatpush1.bf16.msra.mxu0 %v2058
    %2900 = vmatprep.subr.bf16.mxu0 %v2063
    %2901 = vmatpush1.bf16.msra.mxu0 %v2062
    %2902 = vmatprep.subr.bf16.mxu0 %v2067
    %2903 = vmatpush1.bf16.msra.mxu0 %v2066
    %2904 = vmatprep.subr.bf16.mxu0 %v2071
    %2905 = vmatpush1.bf16.msra.mxu0 %v2070
    %2906 = vmatprep.subr.bf16.mxu0 0
    %2907 = vmatpush1.bf16.msra.mxu0 0
    %2908 = vmatprep.subr.bf16.mxu0 0
    %2909 = vmatpush1.bf16.msra.mxu0 0
    %2910 = vmatprep.subr.bf16.mxu0 0
    %2911 = vmatpush1.bf16.msra.mxu0 0
    %2912 = vmatprep.subr.bf16.mxu0 0
    %2913 = vmatpush1.bf16.msra.mxu0 0
    %2914 = vmatprep.subr.bf16.mxu0 0
    %2915 = vmatpush1.bf16.msra.mxu0 0
    %2916 = vmatprep.subr.bf16.mxu0 0
    %2917 = vmatpush1.bf16.msra.mxu0 0
    %2918 = vmatprep.subr.bf16.mxu0 0
    %2919 = vmatpush1.bf16.msra.mxu0 0
    %2920 = vmatprep.subr.bf16.mxu0 0
    %2921 = vmatpush1.bf16.msra.mxu0 0
    %2922 = vmatprep.mubr.bf16.mxu0 0
    %2923 = vmatmul.mubr.bf16.gmra.mrb[0].mxu0 %v2889
    %v2924 = vpop.f32.mrb[0].mxu0
    %v2925 = vadd.f32 0.0, %v2924
    %v2926 = vpop.f32.mrb[0].mxu0
    %v2927 = vadd.f32 0.0, %v2926
    %v2928 = vpop.f32.mrb[0].mxu0
    %v2929 = vpop.f32.mrb[0].mxu0
    %2930 = vdwg.mxu0
    %2931 = vmatprep.subr.bf16.mxu0 %v2045
    %2932 = vmatpush1.bf16.msra.mxu0 %v2044
    %2933 = vmatprep.subr.bf16.mxu0 %v2049
    %2934 = vmatpush1.bf16.msra.mxu0 %v2048
    %2935 = vmatprep.subr.bf16.mxu0 %v2053
    %2936 = vmatpush1.bf16.msra.mxu0 %v2052
    %2937 = vmatprep.subr.bf16.mxu0 %v2057
    %2938 = vmatpush1.bf16.msra.mxu0 %v2056
    %2939 = vmatprep.subr.bf16.mxu0 %v2061
    %2940 = vmatpush1.bf16.msra.mxu0 %v2060
    %2941 = vmatprep.subr.bf16.mxu0 %v2065
    %2942 = vmatpush1.bf16.msra.mxu0 %v2064
    %2943 = vmatprep.subr.bf16.mxu0 %v2069
    %2944 = vmatpush1.bf16.msra.mxu0 %v2068
    %2945 = vmatprep.subr.bf16.mxu0 %v2073
    %2946 = vmatpush1.bf16.msra.mxu0 %v2072
    %2947 = vmatprep.subr.bf16.mxu0 0
    %2948 = vmatpush1.bf16.msra.mxu0 0
    %2949 = vmatprep.subr.bf16.mxu0 0
    %2950 = vmatpush1.bf16.msra.mxu0 0
    %2951 = vmatprep.subr.bf16.mxu0 0
    %2952 = vmatpush1.bf16.msra.mxu0 0
    %2953 = vmatprep.subr.bf16.mxu0 0
    %2954 = vmatpush1.bf16.msra.mxu0 0
    %2955 = vmatprep.subr.bf16.mxu0 0
    %2956 = vmatpush1.bf16.msra.mxu0 0
    %2957 = vmatprep.subr.bf16.mxu0 0
    %2958 = vmatpush1.bf16.msra.mxu0 0
    %2959 = vmatprep.subr.bf16.mxu0 0
    %2960 = vmatpush1.bf16.msra.mxu0 0
    %2961 = vmatprep.subr.bf16.mxu0 0
    %2962 = vmatpush1.bf16.msra.mxu0 0
    %2963 = vmatprep.mubr.bf16.mxu0 0
    %2964 = vmatmul.mubr.bf16.gmra.mrb[0].mxu0 %v2889
    %v2965 = vpop.f32.mrb[0].mxu0
    %v2966 = vadd.f32 0.0, %v2965
    %v2967 = vpop.f32.mrb[0].mxu0
    %v2968 = vadd.f32 0.0, %v2967
    %v2969 = vpop.f32.mrb[0].mxu0
    %v2970 = vpop.f32.mrb[0].mxu0
    %2971 = vdwg.mxu0
    %v2972 = vadd.f32 %v1869, %v2925
    %v2973 = vadd.f32 %v1871, %v2927
    %v2974 = vadd.f32 %v1942, %v2966
    %v2975 = vadd.f32 %v1944, %v2968
    %v2976 = vxor.u32 %v2972, 2147483648
    %v2977 = vmul.f32 %v2976, 1.442695
    %v2978 = vpow.pop %v2977
    %v2979 = vadd.f32 %v2978, 1.0
    %v2980 = vrcp.pop %v2979
    %v2981 = vmul.f32 1.0, %v2980
    %v2982 = vxor.u32 %v2973, 2147483648
    %v2983 = vmul.f32 %v2982, 1.442695
    %v2984 = vpow.pop %v2983
    %v2985 = vadd.f32 %v2984, 1.0
    %v2986 = vrcp.pop %v2985
    %v2987 = vmul.f32 1.0, %v2986
    %v2988 = vtanh.pop %v2974
    %v2989 = vxor.u32 %v2975, 2147483648
    %v2990 = vmul.f32 %v2989, 1.442695
    %v2991 = vpow.pop %v2990
    %v2992 = vadd.f32 %v2991, 1.0
    %v2993 = vrcp.pop %v2992
    %v2994 = vmul.f32 1.0, %v2993
    %v2995 = vmul.f32 %v2987, %v2885
    %v2996 = vmul.f32 %v2981, %v2988
    %v2997 = vadd.f32 %v2995, %v2996
    %v2998 = vtanh.pop %v2997
    %v2999 = vmul.f32 %v2994, %v2998
    %3000 = vst [vmem:[#allocation2 + $0x38] sm:$0xff] %v2999
    %s3001 = scalar_lea.vmem [#allocation12], 8
    %3002 = vst [vmem:[%s3001] sm:$0xff] %v2999
    %s3003 = scalar_lea.vmem [#allocation14], 8
    %3004 = vst [vmem:[%s3003] sm:$0xff] %v2997
    %s3005 = scalar_lea.vmem [#allocation6], 512
    %v3006 = vld [vmem:[%s3005] sm:$0xff]
    %v3007 = vld [vmem:[%s3005 + $0x8] sm:$0xff]
    %v3008 = vld [vmem:[%s3005 + $0x10] sm:$0xff]
    %v3009 = vld [vmem:[%s3005 + $0x18] sm:$0xff]
    %v3010 = vld [vmem:[%s3005 + $0x20] sm:$0xff]
    %v3011 = vld [vmem:[%s3005 + $0x28] sm:$0xff]
    %v3012 = vld [vmem:[%s3005 + $0x30] sm:$0xff]
    %v3013 = vld [vmem:[%s3005 + $0x38] sm:$0xff]
    %v3014 = vld [vmem:[%s3005 + $0x40] sm:$0xff]
    %v3015 = vld [vmem:[%s3005 + $0x48] sm:$0xff]
    %v3016 = vld [vmem:[%s3005 + $0x50] sm:$0xff]
    %v3017 = vld [vmem:[%s3005 + $0x58] sm:$0xff]
    %v3018 = vld [vmem:[%s3005 + $0x60] sm:$0xff]
    %v3019 = vld [vmem:[%s3005 + $0x68] sm:$0xff]
    %v3020 = vld [vmem:[%s3005 + $0x70] sm:$0xff]
    %v3021 = vld [vmem:[%s3005 + $0x78] sm:$0xff]
    %v3022 = vld [vmem:[%s3005 + $0x80] sm:$0xff]
    %v3023 = vld [vmem:[%s3005 + $0x88] sm:$0xff]
    %v3024 = vld [vmem:[%s3005 + $0x90] sm:$0xff]
    %v3025 = vld [vmem:[%s3005 + $0x98] sm:$0xff]
    %v3026 = vld [vmem:[%s3005 + $0xa0] sm:$0xff]
    %v3027 = vld [vmem:[%s3005 + $0xa8] sm:$0xff]
    %v3028 = vld [vmem:[%s3005 + $0xb0] sm:$0xff]
    %v3029 = vld [vmem:[%s3005 + $0xb8] sm:$0xff]
    %v3030 = vld [vmem:[%s3005 + $0xc0] sm:$0xff]
    %v3031 = vld [vmem:[%s3005 + $0xc8] sm:$0xff]
    %v3032 = vld [vmem:[%s3005 + $0xd0] sm:$0xff]
    %v3033 = vld [vmem:[%s3005 + $0xd8] sm:$0xff]
    %v3034 = vld [vmem:[%s3005 + $0xe0] sm:$0xff]
    %v3035 = vld [vmem:[%s3005 + $0xe8] sm:$0xff]
    %v3036 = vld [vmem:[%s3005 + $0xf0] sm:$0xff]
    %v3037 = vld [vmem:[%s3005 + $0xf8] sm:$0xff]
    %s3038 = scalar_lea.vmem [#allocation8], 512
    %v3039 = vld [vmem:[%s3038] sm:$0xff]
    %v3040 = vld [vmem:[%s3038 + $0x8] sm:$0xff]
    %v3041 = vld [vmem:[%s3038 + $0x10] sm:$0xff]
    %v3042 = vld [vmem:[%s3038 + $0x18] sm:$0xff]
    %v3043 = vld [vmem:[%s3038 + $0x20] sm:$0xff]
    %v3044 = vld [vmem:[%s3038 + $0x28] sm:$0xff]
    %v3045 = vld [vmem:[%s3038 + $0x30] sm:$0xff]
    %v3046 = vld [vmem:[%s3038 + $0x38] sm:$0xff]
    %v3047 = vld [vmem:[%s3038 + $0x40] sm:$0xff]
    %v3048 = vld [vmem:[%s3038 + $0x48] sm:$0xff]
    %v3049 = vld [vmem:[%s3038 + $0x50] sm:$0xff]
    %v3050 = vld [vmem:[%s3038 + $0x58] sm:$0xff]
    %v3051 = vld [vmem:[%s3038 + $0x60] sm:$0xff]
    %v3052 = vld [vmem:[%s3038 + $0x68] sm:$0xff]
    %v3053 = vld [vmem:[%s3038 + $0x70] sm:$0xff]
    %v3054 = vld [vmem:[%s3038 + $0x78] sm:$0xff]
    %v3055 = vld [vmem:[%s3038 + $0x80] sm:$0xff]
    %v3056 = vld [vmem:[%s3038 + $0x88] sm:$0xff]
    %v3057 = vld [vmem:[%s3038 + $0x90] sm:$0xff]
    %v3058 = vld [vmem:[%s3038 + $0x98] sm:$0xff]
    %v3059 = vld [vmem:[%s3038 + $0xa0] sm:$0xff]
    %v3060 = vld [vmem:[%s3038 + $0xa8] sm:$0xff]
    %v3061 = vld [vmem:[%s3038 + $0xb0] sm:$0xff]
    %v3062 = vld [vmem:[%s3038 + $0xb8] sm:$0xff]
    %v3063 = vld [vmem:[%s3038 + $0xc0] sm:$0xff]
    %v3064 = vld [vmem:[%s3038 + $0xc8] sm:$0xff]
    %v3065 = vld [vmem:[%s3038 + $0xd0] sm:$0xff]
    %v3066 = vld [vmem:[%s3038 + $0xd8] sm:$0xff]
    %v3067 = vld [vmem:[%s3038 + $0xe0] sm:$0xff]
    %v3068 = vld [vmem:[%s3038 + $0xe8] sm:$0xff]
    %v3069 = vld [vmem:[%s3038 + $0xf0] sm:$0xff]
    %v3070 = vld [vmem:[%s3038 + $0xf8] sm:$0xff]
    %s3071 = scalar_lea.vmem [#allocation9], 8
    %v3072 = vld [vmem:[%s3071] sm:$0xf]
    %v3073 = vld [vmem:[#allocation2] sm:$0xff]
    %v3074 = vld [vmem:[#allocation2 + $0x8] sm:$0xff]
    %v3075 = vld [vmem:[#allocation2 + $0x10] sm:$0xff]
    %v3076 = vld [vmem:[#allocation2 + $0x18] sm:$0xff]
    %v3077 = vld [vmem:[#allocation2 + $0x20] sm:$0xff]
    %v3078 = vld [vmem:[#allocation2 + $0x28] sm:$0xff]
    %v3079 = vld [vmem:[#allocation2 + $0x30] sm:$0xff]
    %v3080 = vld [vmem:[#allocation2 + $0x38] sm:$0xff]
    %v3081 = vpack.c.bf16 %v3074, %v3073
    %v3082 = vpack.c.bf16 %v3076, %v3075
    %v3083 = vpack.c.bf16 %v3078, %v3077
    %v3084 = vpack.c.bf16 %v3080, %v3079
    %v3086 = vlaneseq
    %v3087 = vshrl.u32 %v3086, 7
    %v3088 = vsub.s32 0, %v3087
    %v3089 = vrot.slane %v3072, %v3088
    %v3090 = vlaneseq
    %v3091 = vshrl.u32 %v3090, 7
    %v3092 = vsub.s32 1, %v3091
    %v3093 = vrot.slane %v3072, %v3092
    %v3094 = vlaneseq
    %v3095 = vshrl.u32 %v3094, 7
    %v3096 = vsub.s32 2, %v3095
    %v3097 = vrot.slane %v3072, %v3096
    %v3098 = vlaneseq
    %v3099 = vshrl.u32 %v3098, 7
    %v3100 = vsub.s32 3, %v3099
    %v3101 = vrot.slane %v3072, %v3100
    %v3138 = vunpack.c.l.b16 %v3006
    %v3139 = vunpack.c.h.b16 %v3006
    %v3140 = vunpack.c.l.b16 %v3007
    %v3141 = vunpack.c.h.b16 %v3007
    %v3142 = vunpack.c.l.b16 %v3008
    %v3143 = vunpack.c.h.b16 %v3008
    %v3144 = vunpack.c.l.b16 %v3009
    %v3145 = vunpack.c.h.b16 %v3009
    %v3146 = vunpack.c.l.b16 %v3010
    %v3147 = vunpack.c.h.b16 %v3010
    %v3148 = vunpack.c.l.b16 %v3011
    %v3149 = vunpack.c.h.b16 %v3011
    %v3150 = vunpack.c.l.b16 %v3012
    %v3151 = vunpack.c.h.b16 %v3012
    %v3152 = vunpack.c.l.b16 %v3013
    %v3153 = vunpack.c.h.b16 %v3013
    %v3154 = vunpack.c.l.b16 %v3014
    %v3155 = vunpack.c.h.b16 %v3014
    %v3156 = vunpack.c.l.b16 %v3015
    %v3157 = vunpack.c.h.b16 %v3015
    %v3158 = vunpack.c.l.b16 %v3016
    %v3159 = vunpack.c.h.b16 %v3016
    %v3160 = vunpack.c.l.b16 %v3017
    %v3161 = vunpack.c.h.b16 %v3017
    %v3162 = vunpack.c.l.b16 %v3018
    %v3163 = vunpack.c.h.b16 %v3018
    %v3164 = vunpack.c.l.b16 %v3019
    %v3165 = vunpack.c.h.b16 %v3019
    %v3166 = vunpack.c.l.b16 %v3020
    %v3167 = vunpack.c.h.b16 %v3020
    %v3168 = vunpack.c.l.b16 %v3021
    %v3169 = vunpack.c.h.b16 %v3021
    %v3170 = vunpack.c.l.b16 %v3022
    %v3171 = vunpack.c.h.b16 %v3022
    %v3172 = vunpack.c.l.b16 %v3023
    %v3173 = vunpack.c.h.b16 %v3023
    %v3174 = vunpack.c.l.b16 %v3024
    %v3175 = vunpack.c.h.b16 %v3024
    %v3176 = vunpack.c.l.b16 %v3025
    %v3177 = vunpack.c.h.b16 %v3025
    %v3178 = vunpack.c.l.b16 %v3026
    %v3179 = vunpack.c.h.b16 %v3026
    %v3180 = vunpack.c.l.b16 %v3027
    %v3181 = vunpack.c.h.b16 %v3027
    %v3182 = vunpack.c.l.b16 %v3028
    %v3183 = vunpack.c.h.b16 %v3028
    %v3184 = vunpack.c.l.b16 %v3029
    %v3185 = vunpack.c.h.b16 %v3029
    %v3186 = vunpack.c.l.b16 %v3030
    %v3187 = vunpack.c.h.b16 %v3030
    %v3188 = vunpack.c.l.b16 %v3031
    %v3189 = vunpack.c.h.b16 %v3031
    %v3190 = vunpack.c.l.b16 %v3032
    %v3191 = vunpack.c.h.b16 %v3032
    %v3192 = vunpack.c.l.b16 %v3033
    %v3193 = vunpack.c.h.b16 %v3033
    %v3194 = vunpack.c.l.b16 %v3034
    %v3195 = vunpack.c.h.b16 %v3034
    %v3196 = vunpack.c.l.b16 %v3035
    %v3197 = vunpack.c.h.b16 %v3035
    %v3198 = vunpack.c.l.b16 %v3036
    %v3199 = vunpack.c.h.b16 %v3036
    %v3200 = vunpack.c.l.b16 %v3037
    %v3201 = vunpack.c.h.b16 %v3037
    %v3202 = vpack.c.b16 %v3142, %v3138
    %v3203 = vpack.c.b16 %v3143, %v3139
    %v3204 = vpack.c.b16 %v3144, %v3140
    %v3205 = vpack.c.b16 %v3145, %v3141
    %v3206 = vpack.c.b16 %v3150, %v3146
    %v3207 = vpack.c.b16 %v3151, %v3147
    %v3208 = vpack.c.b16 %v3152, %v3148
    %v3209 = vpack.c.b16 %v3153, %v3149
    %v3210 = vpack.c.b16 %v3158, %v3154
    %v3211 = vpack.c.b16 %v3159, %v3155
    %v3212 = vpack.c.b16 %v3160, %v3156
    %v3213 = vpack.c.b16 %v3161, %v3157
    %v3214 = vpack.c.b16 %v3166, %v3162
    %v3215 = vpack.c.b16 %v3167, %v3163
    %v3216 = vpack.c.b16 %v3168, %v3164
    %v3217 = vpack.c.b16 %v3169, %v3165
    %v3218 = vpack.c.b16 %v3174, %v3170
    %v3219 = vpack.c.b16 %v3175, %v3171
    %v3220 = vpack.c.b16 %v3176, %v3172
    %v3221 = vpack.c.b16 %v3177, %v3173
    %v3222 = vpack.c.b16 %v3182, %v3178
    %v3223 = vpack.c.b16 %v3183, %v3179
    %v3224 = vpack.c.b16 %v3184, %v3180
    %v3225 = vpack.c.b16 %v3185, %v3181
    %v3226 = vpack.c.b16 %v3190, %v3186
    %v3227 = vpack.c.b16 %v3191, %v3187
    %v3228 = vpack.c.b16 %v3192, %v3188
    %v3229 = vpack.c.b16 %v3193, %v3189
    %v3230 = vpack.c.b16 %v3198, %v3194
    %v3231 = vpack.c.b16 %v3199, %v3195
    %v3232 = vpack.c.b16 %v3200, %v3196
    %v3233 = vpack.c.b16 %v3201, %v3197
    %3266 = vmatprep.subr.bf16.mxu0 %v3203
    %3267 = vmatpush1.bf16.msra.mxu0 %v3202
    %3268 = vmatprep.subr.bf16.mxu0 %v3207
    %3269 = vmatpush1.bf16.msra.mxu0 %v3206
    %3270 = vmatprep.subr.bf16.mxu0 %v3211
    %3271 = vmatpush1.bf16.msra.mxu0 %v3210
    %3272 = vmatprep.subr.bf16.mxu0 %v3215
    %3273 = vmatpush1.bf16.msra.mxu0 %v3214
    %3274 = vmatprep.subr.bf16.mxu0 %v3219
    %3275 = vmatpush1.bf16.msra.mxu0 %v3218
    %3276 = vmatprep.subr.bf16.mxu0 %v3223
    %3277 = vmatpush1.bf16.msra.mxu0 %v3222
    %3278 = vmatprep.subr.bf16.mxu0 %v3227
    %3279 = vmatpush1.bf16.msra.mxu0 %v3226
    %3280 = vmatprep.subr.bf16.mxu0 %v3231
    %3281 = vmatpush1.bf16.msra.mxu0 %v3230
    %3282 = vmatprep.subr.bf16.mxu0 0
    %3283 = vmatpush1.bf16.msra.mxu0 0
    %3284 = vmatprep.subr.bf16.mxu0 0
    %3285 = vmatpush1.bf16.msra.mxu0 0
    %3286 = vmatprep.subr.bf16.mxu0 0
    %3287 = vmatpush1.bf16.msra.mxu0 0
    %3288 = vmatprep.subr.bf16.mxu0 0
    %3289 = vmatpush1.bf16.msra.mxu0 0
    %3290 = vmatprep.subr.bf16.mxu0 0
    %3291 = vmatpush1.bf16.msra.mxu0 0
    %3292 = vmatprep.subr.bf16.mxu0 0
    %3293 = vmatpush1.bf16.msra.mxu0 0
    %3294 = vmatprep.subr.bf16.mxu0 0
    %3295 = vmatpush1.bf16.msra.mxu0 0
    %3296 = vmatprep.subr.bf16.mxu0 0
    %3297 = vmatpush1.bf16.msra.mxu0 0
    %3298 = vmatprep.mubr.bf16.mxu0 0
    %3299 = vmatmul.mubr.bf16.gmra.mrb[0].mxu0 %v3081
    %v3300 = vpop.f32.mrb[0].mxu0
    %v3301 = vadd.f32 %v3089, %v3300
    %v3302 = vpop.f32.mrb[0].mxu0
    %v3303 = vadd.f32 %v3093, %v3302
    %v3304 = vpop.f32.mrb[0].mxu0
    %v3305 = vadd.f32 %v3089, %v3304
    %v3306 = vpop.f32.mrb[0].mxu0
    %v3307 = vadd.f32 %v3093, %v3306
    %3308 = vmatprep.mubr.bf16.mxu0 0
    %3309 = vmatmul.mubr.bf16.gmra.mrb[0].mxu0 %v3082
    %v3310 = vpop.f32.mrb[0].mxu0
    %v3311 = vadd.f32 %v3089, %v3310
    %v3312 = vpop.f32.mrb[0].mxu0
    %v3313 = vadd.f32 %v3093, %v3312
    %v3314 = vpop.f32.mrb[0].mxu0
    %v3315 = vadd.f32 %v3089, %v3314
    %v3316 = vpop.f32.mrb[0].mxu0
    %v3317 = vadd.f32 %v3093, %v3316
    %3318 = vmatprep.mubr.bf16.mxu0 0
    %3319 = vmatmul.mubr.bf16.gmra.mrb[0].mxu0 %v3083
    %v3320 = vpop.f32.mrb[0].mxu0
    %v3321 = vadd.f32 %v3089, %v3320
    %v3322 = vpop.f32.mrb[0].mxu0
    %v3323 = vadd.f32 %v3093, %v3322
    %v3324 = vpop.f32.mrb[0].mxu0
    %v3325 = vadd.f32 %v3089, %v3324
    %v3326 = vpop.f32.mrb[0].mxu0
    %v3327 = vadd.f32 %v3093, %v3326
    %3328 = vmatprep.mubr.bf16.mxu0 0
    %3329 = vmatmul.mubr.bf16.gmra.mrb[0].mxu0 %v3084
    %v3330 = vpop.f32.mrb[0].mxu0
    %v3331 = vadd.f32 %v3089, %v3330
    %v3332 = vpop.f32.mrb[0].mxu0
    %v3333 = vadd.f32 %v3093, %v3332
    %v3334 = vpop.f32.mrb[0].mxu0
    %v3335 = vadd.f32 %v3089, %v3334
    %v3336 = vpop.f32.mrb[0].mxu0
    %v3337 = vadd.f32 %v3093, %v3336
    %3338 = vdwg.mxu0
    %3339 = vmatprep.subr.bf16.mxu0 %v3205
    %3340 = vmatpush1.bf16.msra.mxu0 %v3204
    %3341 = vmatprep.subr.bf16.mxu0 %v3209
    %3342 = vmatpush1.bf16.msra.mxu0 %v3208
    %3343 = vmatprep.subr.bf16.mxu0 %v3213
    %3344 = vmatpush1.bf16.msra.mxu0 %v3212
    %3345 = vmatprep.subr.bf16.mxu0 %v3217
    %3346 = vmatpush1.bf16.msra.mxu0 %v3216
    %3347 = vmatprep.subr.bf16.mxu0 %v3221
    %3348 = vmatpush1.bf16.msra.mxu0 %v3220
    %3349 = vmatprep.subr.bf16.mxu0 %v3225
    %3350 = vmatpush1.bf16.msra.mxu0 %v3224
    %3351 = vmatprep.subr.bf16.mxu0 %v3229
    %3352 = vmatpush1.bf16.msra.mxu0 %v3228
    %3353 = vmatprep.subr.bf16.mxu0 %v3233
    %3354 = vmatpush1.bf16.msra.mxu0 %v3232
    %3355 = vmatprep.subr.bf16.mxu0 0
    %3356 = vmatpush1.bf16.msra.mxu0 0
    %3357 = vmatprep.subr.bf16.mxu0 0
    %3358 = vmatpush1.bf16.msra.mxu0 0
    %3359 = vmatprep.subr.bf16.mxu0 0
    %3360 = vmatpush1.bf16.msra.mxu0 0
    %3361 = vmatprep.subr.bf16.mxu0 0
    %3362 = vmatpush1.bf16.msra.mxu0 0
    %3363 = vmatprep.subr.bf16.mxu0 0
    %3364 = vmatpush1.bf16.msra.mxu0 0
    %3365 = vmatprep.subr.bf16.mxu0 0
    %3366 = vmatpush1.bf16.msra.mxu0 0
    %3367 = vmatprep.subr.bf16.mxu0 0
    %3368 = vmatpush1.bf16.msra.mxu0 0
    %3369 = vmatprep.subr.bf16.mxu0 0
    %3370 = vmatpush1.bf16.msra.mxu0 0
    %3371 = vmatprep.mubr.bf16.mxu0 0
    %3372 = vmatmul.mubr.bf16.gmra.mrb[0].mxu0 %v3081
    %v3373 = vpop.f32.mrb[0].mxu0
    %v3374 = vadd.f32 %v3097, %v3373
    %v3375 = vpop.f32.mrb[0].mxu0
    %v3376 = vadd.f32 %v3101, %v3375
    %v3377 = vpop.f32.mrb[0].mxu0
    %v3378 = vadd.f32 %v3097, %v3377
    %v3379 = vpop.f32.mrb[0].mxu0
    %v3380 = vadd.f32 %v3101, %v3379
    %3381 = vmatprep.mubr.bf16.mxu0 0
    %3382 = vmatmul.mubr.bf16.gmra.mrb[0].mxu0 %v3082
    %v3383 = vpop.f32.mrb[0].mxu0
    %v3384 = vadd.f32 %v3097, %v3383
    %v3385 = vpop.f32.mrb[0].mxu0
    %v3386 = vadd.f32 %v3101, %v3385
    %v3387 = vpop.f32.mrb[0].mxu0
    %v3388 = vadd.f32 %v3097, %v3387
    %v3389 = vpop.f32.mrb[0].mxu0
    %v3390 = vadd.f32 %v3101, %v3389
    %3391 = vmatprep.mubr.bf16.mxu0 0
    %3392 = vmatmul.mubr.bf16.gmra.mrb[0].mxu0 %v3083
    %v3393 = vpop.f32.mrb[0].mxu0
    %v3394 = vadd.f32 %v3097, %v3393
    %v3395 = vpop.f32.mrb[0].mxu0
    %v3396 = vadd.f32 %v3101, %v3395
    %v3397 = vpop.f32.mrb[0].mxu0
    %v3398 = vadd.f32 %v3097, %v3397
    %v3399 = vpop.f32.mrb[0].mxu0
    %v3400 = vadd.f32 %v3101, %v3399
    %3401 = vmatprep.mubr.bf16.mxu0 0
    %3402 = vmatmul.mubr.bf16.gmra.mrb[0].mxu0 %v3084
    %v3403 = vpop.f32.mrb[0].mxu0
    %v3404 = vadd.f32 %v3097, %v3403
    %v3405 = vpop.f32.mrb[0].mxu0
    %v3406 = vadd.f32 %v3101, %v3405
    %v3407 = vpop.f32.mrb[0].mxu0
    %v3408 = vadd.f32 %v3097, %v3407
    %v3409 = vpop.f32.mrb[0].mxu0
    %v3410 = vadd.f32 %v3101, %v3409
    %3411 = vdwg.mxu0
    %v3444 = vunpack.c.l.b16 %v3039
    %v3445 = vunpack.c.h.b16 %v3039
    %v3446 = vunpack.c.l.b16 %v3040
    %v3447 = vunpack.c.h.b16 %v3040
    %v3448 = vunpack.c.l.b16 %v3041
    %v3449 = vunpack.c.h.b16 %v3041
    %v3450 = vunpack.c.l.b16 %v3042
    %v3451 = vunpack.c.h.b16 %v3042
    %v3452 = vunpack.c.l.b16 %v3043
    %v3453 = vunpack.c.h.b16 %v3043
    %v3454 = vunpack.c.l.b16 %v3044
    %v3455 = vunpack.c.h.b16 %v3044
    %v3456 = vunpack.c.l.b16 %v3045
    %v3457 = vunpack.c.h.b16 %v3045
    %v3458 = vunpack.c.l.b16 %v3046
    %v3459 = vunpack.c.h.b16 %v3046
    %v3460 = vunpack.c.l.b16 %v3047
    %v3461 = vunpack.c.h.b16 %v3047
    %v3462 = vunpack.c.l.b16 %v3048
    %v3463 = vunpack.c.h.b16 %v3048
    %v3464 = vunpack.c.l.b16 %v3049
    %v3465 = vunpack.c.h.b16 %v3049
    %v3466 = vunpack.c.l.b16 %v3050
    %v3467 = vunpack.c.h.b16 %v3050
    %v3468 = vunpack.c.l.b16 %v3051
    %v3469 = vunpack.c.h.b16 %v3051
    %v3470 = vunpack.c.l.b16 %v3052
    %v3471 = vunpack.c.h.b16 %v3052
    %v3472 = vunpack.c.l.b16 %v3053
    %v3473 = vunpack.c.h.b16 %v3053
    %v3474 = vunpack.c.l.b16 %v3054
    %v3475 = vunpack.c.h.b16 %v3054
    %v3476 = vunpack.c.l.b16 %v3055
    %v3477 = vunpack.c.h.b16 %v3055
    %v3478 = vunpack.c.l.b16 %v3056
    %v3479 = vunpack.c.h.b16 %v3056
    %v3480 = vunpack.c.l.b16 %v3057
    %v3481 = vunpack.c.h.b16 %v3057
    %v3482 = vunpack.c.l.b16 %v3058
    %v3483 = vunpack.c.h.b16 %v3058
    %v3484 = vunpack.c.l.b16 %v3059
    %v3485 = vunpack.c.h.b16 %v3059
    %v3486 = vunpack.c.l.b16 %v3060
    %v3487 = vunpack.c.h.b16 %v3060
    %v3488 = vunpack.c.l.b16 %v3061
    %v3489 = vunpack.c.h.b16 %v3061
    %v3490 = vunpack.c.l.b16 %v3062
    %v3491 = vunpack.c.h.b16 %v3062
    %v3492 = vunpack.c.l.b16 %v3063
    %v3493 = vunpack.c.h.b16 %v3063
    %v3494 = vunpack.c.l.b16 %v3064
    %v3495 = vunpack.c.h.b16 %v3064
    %v3496 = vunpack.c.l.b16 %v3065
    %v3497 = vunpack.c.h.b16 %v3065
    %v3498 = vunpack.c.l.b16 %v3066
    %v3499 = vunpack.c.h.b16 %v3066
    %v3500 = vunpack.c.l.b16 %v3067
    %v3501 = vunpack.c.h.b16 %v3067
    %v3502 = vunpack.c.l.b16 %v3068
    %v3503 = vunpack.c.h.b16 %v3068
    %v3504 = vunpack.c.l.b16 %v3069
    %v3505 = vunpack.c.h.b16 %v3069
    %v3506 = vunpack.c.l.b16 %v3070
    %v3507 = vunpack.c.h.b16 %v3070
    %v3508 = vpack.c.b16 %v3448, %v3444
    %v3509 = vpack.c.b16 %v3449, %v3445
    %v3510 = vpack.c.b16 %v3450, %v3446
    %v3511 = vpack.c.b16 %v3451, %v3447
    %v3512 = vpack.c.b16 %v3456, %v3452
    %v3513 = vpack.c.b16 %v3457, %v3453
    %v3514 = vpack.c.b16 %v3458, %v3454
    %v3515 = vpack.c.b16 %v3459, %v3455
    %v3516 = vpack.c.b16 %v3464, %v3460
    %v3517 = vpack.c.b16 %v3465, %v3461
    %v3518 = vpack.c.b16 %v3466, %v3462
    %v3519 = vpack.c.b16 %v3467, %v3463
    %v3520 = vpack.c.b16 %v3472, %v3468
    %v3521 = vpack.c.b16 %v3473, %v3469
    %v3522 = vpack.c.b16 %v3474, %v3470
    %v3523 = vpack.c.b16 %v3475, %v3471
    %v3524 = vpack.c.b16 %v3480, %v3476
    %v3525 = vpack.c.b16 %v3481, %v3477
    %v3526 = vpack.c.b16 %v3482, %v3478
    %v3527 = vpack.c.b16 %v3483, %v3479
    %v3528 = vpack.c.b16 %v3488, %v3484
    %v3529 = vpack.c.b16 %v3489, %v3485
    %v3530 = vpack.c.b16 %v3490, %v3486
    %v3531 = vpack.c.b16 %v3491, %v3487
    %v3532 = vpack.c.b16 %v3496, %v3492
    %v3533 = vpack.c.b16 %v3497, %v3493
    %v3534 = vpack.c.b16 %v3498, %v3494
    %v3535 = vpack.c.b16 %v3499, %v3495
    %v3536 = vpack.c.b16 %v3504, %v3500
    %v3537 = vpack.c.b16 %v3505, %v3501
    %v3538 = vpack.c.b16 %v3506, %v3502
    %v3539 = vpack.c.b16 %v3507, %v3503
    %3572 = vmatprep.subr.bf16.mxu0 %v3509
    %3573 = vmatpush1.bf16.msra.mxu0 %v3508
    %3574 = vmatprep.subr.bf16.mxu0 %v3513
    %3575 = vmatpush1.bf16.msra.mxu0 %v3512
    %3576 = vmatprep.subr.bf16.mxu0 %v3517
    %3577 = vmatpush1.bf16.msra.mxu0 %v3516
    %3578 = vmatprep.subr.bf16.mxu0 %v3521
    %3579 = vmatpush1.bf16.msra.mxu0 %v3520
    %3580 = vmatprep.subr.bf16.mxu0 %v3525
    %3581 = vmatpush1.bf16.msra.mxu0 %v3524
    %3582 = vmatprep.subr.bf16.mxu0 %v3529
    %3583 = vmatpush1.bf16.msra.mxu0 %v3528
    %3584 = vmatprep.subr.bf16.mxu0 %v3533
    %3585 = vmatpush1.bf16.msra.mxu0 %v3532
    %3586 = vmatprep.subr.bf16.mxu0 %v3537
    %3587 = vmatpush1.bf16.msra.mxu0 %v3536
    %3588 = vmatprep.subr.bf16.mxu0 0
    %3589 = vmatpush1.bf16.msra.mxu0 0
    %3590 = vmatprep.subr.bf16.mxu0 0
    %3591 = vmatpush1.bf16.msra.mxu0 0
    %3592 = vmatprep.subr.bf16.mxu0 0
    %3593 = vmatpush1.bf16.msra.mxu0 0
    %3594 = vmatprep.subr.bf16.mxu0 0
    %3595 = vmatpush1.bf16.msra.mxu0 0
    %3596 = vmatprep.subr.bf16.mxu0 0
    %3597 = vmatpush1.bf16.msra.mxu0 0
    %3598 = vmatprep.subr.bf16.mxu0 0
    %3599 = vmatpush1.bf16.msra.mxu0 0
    %3600 = vmatprep.subr.bf16.mxu0 0
    %3601 = vmatpush1.bf16.msra.mxu0 0
    %3602 = vmatprep.subr.bf16.mxu0 0
    %3603 = vmatpush1.bf16.msra.mxu0 0
    %3604 = vmatprep.mubr.bf16.mxu0 0
    %3605 = vmatmul.mubr.bf16.gmra.mrb[0].mxu0 0
    %v3606 = vpop.f32.mrb[0].mxu0
    %v3607 = vadd.f32 0.0, %v3606
    %v3608 = vpop.f32.mrb[0].mxu0
    %v3609 = vadd.f32 0.0, %v3608
    %v3610 = vpop.f32.mrb[0].mxu0
    %v3611 = vpop.f32.mrb[0].mxu0
    %3612 = vdwg.mxu0
    %3613 = vmatprep.subr.bf16.mxu0 %v3511
    %3614 = vmatpush1.bf16.msra.mxu0 %v3510
    %3615 = vmatprep.subr.bf16.mxu0 %v3515
    %3616 = vmatpush1.bf16.msra.mxu0 %v3514
    %3617 = vmatprep.subr.bf16.mxu0 %v3519
    %3618 = vmatpush1.bf16.msra.mxu0 %v3518
    %3619 = vmatprep.subr.bf16.mxu0 %v3523
    %3620 = vmatpush1.bf16.msra.mxu0 %v3522
    %3621 = vmatprep.subr.bf16.mxu0 %v3527
    %3622 = vmatpush1.bf16.msra.mxu0 %v3526
    %3623 = vmatprep.subr.bf16.mxu0 %v3531
    %3624 = vmatpush1.bf16.msra.mxu0 %v3530
    %3625 = vmatprep.subr.bf16.mxu0 %v3535
    %3626 = vmatpush1.bf16.msra.mxu0 %v3534
    %3627 = vmatprep.subr.bf16.mxu0 %v3539
    %3628 = vmatpush1.bf16.msra.mxu0 %v3538
    %3629 = vmatprep.subr.bf16.mxu0 0
    %3630 = vmatpush1.bf16.msra.mxu0 0
    %3631 = vmatprep.subr.bf16.mxu0 0
    %3632 = vmatpush1.bf16.msra.mxu0 0
    %3633 = vmatprep.subr.bf16.mxu0 0
    %3634 = vmatpush1.bf16.msra.mxu0 0
    %3635 = vmatprep.subr.bf16.mxu0 0
    %3636 = vmatpush1.bf16.msra.mxu0 0
    %3637 = vmatprep.subr.bf16.mxu0 0
    %3638 = vmatpush1.bf16.msra.mxu0 0
    %3639 = vmatprep.subr.bf16.mxu0 0
    %3640 = vmatpush1.bf16.msra.mxu0 0
    %3641 = vmatprep.subr.bf16.mxu0 0
    %3642 = vmatpush1.bf16.msra.mxu0 0
    %3643 = vmatprep.subr.bf16.mxu0 0
    %3644 = vmatpush1.bf16.msra.mxu0 0
    %3645 = vmatprep.mubr.bf16.mxu0 0
    %3646 = vmatmul.mubr.bf16.gmra.mrb[0].mxu0 0
    %v3647 = vpop.f32.mrb[0].mxu0
    %v3648 = vadd.f32 0.0, %v3647
    %v3649 = vpop.f32.mrb[0].mxu0
    %v3650 = vadd.f32 0.0, %v3649
    %v3651 = vpop.f32.mrb[0].mxu0
    %v3652 = vpop.f32.mrb[0].mxu0
    %3653 = vdwg.mxu0
    %v3654 = vadd.f32 %v3301, %v3607
    %v3655 = vadd.f32 %v3303, %v3609
    %v3656 = vadd.f32 %v3374, %v3648
    %v3657 = vadd.f32 %v3376, %v3650
    %v3658 = vxor.u32 %v3654, 2147483648
    %v3659 = vmul.f32 %v3658, 1.442695
    %v3660 = vpow.pop %v3659
    %v3661 = vadd.f32 %v3660, 1.0
    %v3662 = vrcp.pop %v3661
    %v3663 = vmul.f32 1.0, %v3662
    %v3664 = vxor.u32 %v3655, 2147483648
    %v3665 = vmul.f32 %v3664, 1.442695
    %v3666 = vpow.pop %v3665
    %v3667 = vadd.f32 %v3666, 1.0
    %v3668 = vrcp.pop %v3667
    %v3669 = vmul.f32 1.0, %v3668
    %v3670 = vtanh.pop %v3656
    %v3671 = vxor.u32 %v3657, 2147483648
    %v3672 = vmul.f32 %v3671, 1.442695
    %v3673 = vpow.pop %v3672
    %v3674 = vadd.f32 %v3673, 1.0
    %v3675 = vrcp.pop %v3674
    %v3676 = vmul.f32 1.0, %v3675
    %v3677 = vmul.f32 %v3669, 0.0
    %v3678 = vmul.f32 %v3663, %v3670
    %v3679 = vadd.f32 %v3677, %v3678
    %v3680 = vtanh.pop %v3679
    %v3681 = vmul.f32 %v3676, %v3680
    %3682 = vst [vmem:[#allocation2] sm:$0xff] %v3681
    %v3683 = vpack.c.bf16 %v3681, %v3681
    %3684 = vmatprep.subr.bf16.mxu0 %v3509
    %3685 = vmatpush1.bf16.msra.mxu0 %v3508
    %3686 = vmatprep.subr.bf16.mxu0 %v3513
    %3687 = vmatpush1.bf16.msra.mxu0 %v3512
    %3688 = vmatprep.subr.bf16.mxu0 %v3517
    %3689 = vmatpush1.bf16.msra.mxu0 %v3516
    %3690 = vmatprep.subr.bf16.mxu0 %v3521
    %3691 = vmatpush1.bf16.msra.mxu0 %v3520
    %3692 = vmatprep.subr.bf16.mxu0 %v3525
    %3693 = vmatpush1.bf16.msra.mxu0 %v3524
    %3694 = vmatprep.subr.bf16.mxu0 %v3529
    %3695 = vmatpush1.bf16.msra.mxu0 %v3528
    %3696 = vmatprep.subr.bf16.mxu0 %v3533
    %3697 = vmatpush1.bf16.msra.mxu0 %v3532
    %3698 = vmatprep.subr.bf16.mxu0 %v3537
    %3699 = vmatpush1.bf16.msra.mxu0 %v3536
    %3700 = vmatprep.subr.bf16.mxu0 0
    %3701 = vmatpush1.bf16.msra.mxu0 0
    %3702 = vmatprep.subr.bf16.mxu0 0
    %3703 = vmatpush1.bf16.msra.mxu0 0
    %3704 = vmatprep.subr.bf16.mxu0 0
    %3705 = vmatpush1.bf16.msra.mxu0 0
    %3706 = vmatprep.subr.bf16.mxu0 0
    %3707 = vmatpush1.bf16.msra.mxu0 0
    %3708 = vmatprep.subr.bf16.mxu0 0
    %3709 = vmatpush1.bf16.msra.mxu0 0
    %3710 = vmatprep.subr.bf16.mxu0 0
    %3711 = vmatpush1.bf16.msra.mxu0 0
    %3712 = vmatprep.subr.bf16.mxu0 0
    %3713 = vmatpush1.bf16.msra.mxu0 0
    %3714 = vmatprep.subr.bf16.mxu0 0
    %3715 = vmatpush1.bf16.msra.mxu0 0
    %3716 = vmatprep.mubr.bf16.mxu0 0
    %3717 = vmatmul.mubr.bf16.gmra.mrb[0].mxu0 %v3683
    %v3718 = vpop.f32.mrb[0].mxu0
    %v3719 = vadd.f32 0.0, %v3718
    %v3720 = vpop.f32.mrb[0].mxu0
    %v3721 = vadd.f32 0.0, %v3720
    %v3722 = vpop.f32.mrb[0].mxu0
    %v3723 = vpop.f32.mrb[0].mxu0
    %3724 = vdwg.mxu0
    %3725 = vmatprep.subr.bf16.mxu0 %v3511
    %3726 = vmatpush1.bf16.msra.mxu0 %v3510
    %3727 = vmatprep.subr.bf16.mxu0 %v3515
    %3728 = vmatpush1.bf16.msra.mxu0 %v3514
    %3729 = vmatprep.subr.bf16.mxu0 %v3519
    %3730 = vmatpush1.bf16.msra.mxu0 %v3518
    %3731 = vmatprep.subr.bf16.mxu0 %v3523
    %3732 = vmatpush1.bf16.msra.mxu0 %v3522
    %3733 = vmatprep.subr.bf16.mxu0 %v3527
    %3734 = vmatpush1.bf16.msra.mxu0 %v3526
    %3735 = vmatprep.subr.bf16.mxu0 %v3531
    %3736 = vmatpush1.bf16.msra.mxu0 %v3530
    %3737 = vmatprep.subr.bf16.mxu0 %v3535
    %3738 = vmatpush1.bf16.msra.mxu0 %v3534
    %3739 = vmatprep.subr.bf16.mxu0 %v3539
    %3740 = vmatpush1.bf16.msra.mxu0 %v3538
    %3741 = vmatprep.subr.bf16.mxu0 0
    %3742 = vmatpush1.bf16.msra.mxu0 0
    %3743 = vmatprep.subr.bf16.mxu0 0
    %3744 = vmatpush1.bf16.msra.mxu0 0
    %3745 = vmatprep.subr.bf16.mxu0 0
    %3746 = vmatpush1.bf16.msra.mxu0 0
    %3747 = vmatprep.subr.bf16.mxu0 0
    %3748 = vmatpush1.bf16.msra.mxu0 0
    %3749 = vmatprep.subr.bf16.mxu0 0
    %3750 = vmatpush1.bf16.msra.mxu0 0
    %3751 = vmatprep.subr.bf16.mxu0 0
    %3752 = vmatpush1.bf16.msra.mxu0 0
    %3753 = vmatprep.subr.bf16.mxu0 0
    %3754 = vmatpush1.bf16.msra.mxu0 0
    %3755 = vmatprep.subr.bf16.mxu0 0
    %3756 = vmatpush1.bf16.msra.mxu0 0
    %3757 = vmatprep.mubr.bf16.mxu0 0
    %3758 = vmatmul.mubr.bf16.gmra.mrb[0].mxu0 %v3683
    %v3759 = vpop.f32.mrb[0].mxu0
    %v3760 = vadd.f32 0.0, %v3759
    %v3761 = vpop.f32.mrb[0].mxu0
    %v3762 = vadd.f32 0.0, %v3761
    %v3763 = vpop.f32.mrb[0].mxu0
    %v3764 = vpop.f32.mrb[0].mxu0
    %3765 = vdwg.mxu0
    %v3766 = vadd.f32 %v3305, %v3719
    %v3767 = vadd.f32 %v3307, %v3721
    %v3768 = vadd.f32 %v3378, %v3760
    %v3769 = vadd.f32 %v3380, %v3762
    %v3770 = vxor.u32 %v3766, 2147483648
    %v3771 = vmul.f32 %v3770, 1.442695
    %v3772 = vpow.pop %v3771
    %v3773 = vadd.f32 %v3772, 1.0
    %v3774 = vrcp.pop %v3773
    %v3775 = vmul.f32 1.0, %v3774
    %v3776 = vxor.u32 %v3767, 2147483648
    %v3777 = vmul.f32 %v3776, 1.442695
    %v3778 = vpow.pop %v3777
    %v3779 = vadd.f32 %v3778, 1.0
    %v3780 = vrcp.pop %v3779
    %v3781 = vmul.f32 1.0, %v3780
    %v3782 = vtanh.pop %v3768
    %v3783 = vxor.u32 %v3769, 2147483648
    %v3784 = vmul.f32 %v3783, 1.442695
    %v3785 = vpow.pop %v3784
    %v3786 = vadd.f32 %v3785, 1.0
    %v3787 = vrcp.pop %v3786
    %v3788 = vmul.f32 1.0, %v3787
    %v3789 = vmul.f32 %v3781, %v3679
    %v3790 = vmul.f32 %v3775, %v3782
    %v3791 = vadd.f32 %v3789, %v3790
    %v3792 = vtanh.pop %v3791
    %v3793 = vmul.f32 %v3788, %v3792
    %3794 = vst [vmem:[#allocation2 + $0x8] sm:$0xff] %v3793
    %v3795 = vpack.c.bf16 %v3793, %v3793
    %3796 = vmatprep.subr.bf16.mxu0 %v3509
    %3797 = vmatpush1.bf16.msra.mxu0 %v3508
    %3798 = vmatprep.subr.bf16.mxu0 %v3513
    %3799 = vmatpush1.bf16.msra.mxu0 %v3512
    %3800 = vmatprep.subr.bf16.mxu0 %v3517
    %3801 = vmatpush1.bf16.msra.mxu0 %v3516
    %3802 = vmatprep.subr.bf16.mxu0 %v3521
    %3803 = vmatpush1.bf16.msra.mxu0 %v3520
    %3804 = vmatprep.subr.bf16.mxu0 %v3525
    %3805 = vmatpush1.bf16.msra.mxu0 %v3524
    %3806 = vmatprep.subr.bf16.mxu0 %v3529
    %3807 = vmatpush1.bf16.msra.mxu0 %v3528
    %3808 = vmatprep.subr.bf16.mxu0 %v3533
    %3809 = vmatpush1.bf16.msra.mxu0 %v3532
    %3810 = vmatprep.subr.bf16.mxu0 %v3537
    %3811 = vmatpush1.bf16.msra.mxu0 %v3536
    %3812 = vmatprep.subr.bf16.mxu0 0
    %3813 = vmatpush1.bf16.msra.mxu0 0
    %3814 = vmatprep.subr.bf16.mxu0 0
    %3815 = vmatpush1.bf16.msra.mxu0 0
    %3816 = vmatprep.subr.bf16.mxu0 0
    %3817 = vmatpush1.bf16.msra.mxu0 0
    %3818 = vmatprep.subr.bf16.mxu0 0
    %3819 = vmatpush1.bf16.msra.mxu0 0
    %3820 = vmatprep.subr.bf16.mxu0 0
    %3821 = vmatpush1.bf16.msra.mxu0 0
    %3822 = vmatprep.subr.bf16.mxu0 0
    %3823 = vmatpush1.bf16.msra.mxu0 0
    %3824 = vmatprep.subr.bf16.mxu0 0
    %3825 = vmatpush1.bf16.msra.mxu0 0
    %3826 = vmatprep.subr.bf16.mxu0 0
    %3827 = vmatpush1.bf16.msra.mxu0 0
    %3828 = vmatprep.mubr.bf16.mxu0 0
    %3829 = vmatmul.mubr.bf16.gmra.mrb[0].mxu0 %v3795
    %v3830 = vpop.f32.mrb[0].mxu0
    %v3831 = vadd.f32 0.0, %v3830
    %v3832 = vpop.f32.mrb[0].mxu0
    %v3833 = vadd.f32 0.0, %v3832
    %v3834 = vpop.f32.mrb[0].mxu0
    %v3835 = vpop.f32.mrb[0].mxu0
    %3836 = vdwg.mxu0
    %3837 = vmatprep.subr.bf16.mxu0 %v3511
    %3838 = vmatpush1.bf16.msra.mxu0 %v3510
    %3839 = vmatprep.subr.bf16.mxu0 %v3515
    %3840 = vmatpush1.bf16.msra.mxu0 %v3514
    %3841 = vmatprep.subr.bf16.mxu0 %v3519
    %3842 = vmatpush1.bf16.msra.mxu0 %v3518
    %3843 = vmatprep.subr.bf16.mxu0 %v3523
    %3844 = vmatpush1.bf16.msra.mxu0 %v3522
    %3845 = vmatprep.subr.bf16.mxu0 %v3527
    %3846 = vmatpush1.bf16.msra.mxu0 %v3526
    %3847 = vmatprep.subr.bf16.mxu0 %v3531
    %3848 = vmatpush1.bf16.msra.mxu0 %v3530
    %3849 = vmatprep.subr.bf16.mxu0 %v3535
    %3850 = vmatpush1.bf16.msra.mxu0 %v3534
    %3851 = vmatprep.subr.bf16.mxu0 %v3539
    %3852 = vmatpush1.bf16.msra.mxu0 %v3538
    %3853 = vmatprep.subr.bf16.mxu0 0
    %3854 = vmatpush1.bf16.msra.mxu0 0
    %3855 = vmatprep.subr.bf16.mxu0 0
    %3856 = vmatpush1.bf16.msra.mxu0 0
    %3857 = vmatprep.subr.bf16.mxu0 0
    %3858 = vmatpush1.bf16.msra.mxu0 0
    %3859 = vmatprep.subr.bf16.mxu0 0
    %3860 = vmatpush1.bf16.msra.mxu0 0
    %3861 = vmatprep.subr.bf16.mxu0 0
    %3862 = vmatpush1.bf16.msra.mxu0 0
    %3863 = vmatprep.subr.bf16.mxu0 0
    %3864 = vmatpush1.bf16.msra.mxu0 0
    %3865 = vmatprep.subr.bf16.mxu0 0
    %3866 = vmatpush1.bf16.msra.mxu0 0
    %3867 = vmatprep.subr.bf16.mxu0 0
    %3868 = vmatpush1.bf16.msra.mxu0 0
    %3869 = vmatprep.mubr.bf16.mxu0 0
    %3870 = vmatmul.mubr.bf16.gmra.mrb[0].mxu0 %v3795
    %v3871 = vpop.f32.mrb[0].mxu0
    %v3872 = vadd.f32 0.0, %v3871
    %v3873 = vpop.f32.mrb[0].mxu0
    %v3874 = vadd.f32 0.0, %v3873
    %v3875 = vpop.f32.mrb[0].mxu0
    %v3876 = vpop.f32.mrb[0].mxu0
    %3877 = vdwg.mxu0
    %v3878 = vadd.f32 %v3311, %v3831
    %v3879 = vadd.f32 %v3313, %v3833
    %v3880 = vadd.f32 %v3384, %v3872
    %v3881 = vadd.f32 %v3386, %v3874
    %v3882 = vxor.u32 %v3878, 2147483648
    %v3883 = vmul.f32 %v3882, 1.442695
    %v3884 = vpow.pop %v3883
    %v3885 = vadd.f32 %v3884, 1.0
    %v3886 = vrcp.pop %v3885
    %v3887 = vmul.f32 1.0, %v3886
    %v3888 = vxor.u32 %v3879, 2147483648
    %v3889 = vmul.f32 %v3888, 1.442695
    %v3890 = vpow.pop %v3889
    %v3891 = vadd.f32 %v3890, 1.0
    %v3892 = vrcp.pop %v3891
    %v3893 = vmul.f32 1.0, %v3892
    %v3894 = vtanh.pop %v3880
    %v3895 = vxor.u32 %v3881, 2147483648
    %v3896 = vmul.f32 %v3895, 1.442695
    %v3897 = vpow.pop %v3896
    %v3898 = vadd.f32 %v3897, 1.0
    %v3899 = vrcp.pop %v3898
    %v3900 = vmul.f32 1.0, %v3899
    %v3901 = vmul.f32 %v3893, %v3791
    %v3902 = vmul.f32 %v3887, %v3894
    %v3903 = vadd.f32 %v3901, %v3902
    %v3904 = vtanh.pop %v3903
    %v3905 = vmul.f32 %v3900, %v3904
    %3906 = vst [vmem:[#allocation2 + $0x10] sm:$0xff] %v3905
    %v3907 = vpack.c.bf16 %v3905, %v3905
    %3908 = vmatprep.subr.bf16.mxu0 %v3509
    %3909 = vmatpush1.bf16.msra.mxu0 %v3508
    %3910 = vmatprep.subr.bf16.mxu0 %v3513
    %3911 = vmatpush1.bf16.msra.mxu0 %v3512
    %3912 = vmatprep.subr.bf16.mxu0 %v3517
    %3913 = vmatpush1.bf16.msra.mxu0 %v3516
    %3914 = vmatprep.subr.bf16.mxu0 %v3521
    %3915 = vmatpush1.bf16.msra.mxu0 %v3520
    %3916 = vmatprep.subr.bf16.mxu0 %v3525
    %3917 = vmatpush1.bf16.msra.mxu0 %v3524
    %3918 = vmatprep.subr.bf16.mxu0 %v3529
    %3919 = vmatpush1.bf16.msra.mxu0 %v3528
    %3920 = vmatprep.subr.bf16.mxu0 %v3533
    %3921 = vmatpush1.bf16.msra.mxu0 %v3532
    %3922 = vmatprep.subr.bf16.mxu0 %v3537
    %3923 = vmatpush1.bf16.msra.mxu0 %v3536
    %3924 = vmatprep.subr.bf16.mxu0 0
    %3925 = vmatpush1.bf16.msra.mxu0 0
    %3926 = vmatprep.subr.bf16.mxu0 0
    %3927 = vmatpush1.bf16.msra.mxu0 0
    %3928 = vmatprep.subr.bf16.mxu0 0
    %3929 = vmatpush1.bf16.msra.mxu0 0
    %3930 = vmatprep.subr.bf16.mxu0 0
    %3931 = vmatpush1.bf16.msra.mxu0 0
    %3932 = vmatprep.subr.bf16.mxu0 0
    %3933 = vmatpush1.bf16.msra.mxu0 0
    %3934 = vmatprep.subr.bf16.mxu0 0
    %3935 = vmatpush1.bf16.msra.mxu0 0
    %3936 = vmatprep.subr.bf16.mxu0 0
    %3937 = vmatpush1.bf16.msra.mxu0 0
    %3938 = vmatprep.subr.bf16.mxu0 0
    %3939 = vmatpush1.bf16.msra.mxu0 0
    %3940 = vmatprep.mubr.bf16.mxu0 0
    %3941 = vmatmul.mubr.bf16.gmra.mrb[0].mxu0 %v3907
    %v3942 = vpop.f32.mrb[0].mxu0
    %v3943 = vadd.f32 0.0, %v3942
    %v3944 = vpop.f32.mrb[0].mxu0
    %v3945 = vadd.f32 0.0, %v3944
    %v3946 = vpop.f32.mrb[0].mxu0
    %v3947 = vpop.f32.mrb[0].mxu0
    %3948 = vdwg.mxu0
    %3949 = vmatprep.subr.bf16.mxu0 %v3511
    %3950 = vmatpush1.bf16.msra.mxu0 %v3510
    %3951 = vmatprep.subr.bf16.mxu0 %v3515
    %3952 = vmatpush1.bf16.msra.mxu0 %v3514
    %3953 = vmatprep.subr.bf16.mxu0 %v3519
    %3954 = vmatpush1.bf16.msra.mxu0 %v3518
    %3955 = vmatprep.subr.bf16.mxu0 %v3523
    %3956 = vmatpush1.bf16.msra.mxu0 %v3522
    %3957 = vmatprep.subr.bf16.mxu0 %v3527
    %3958 = vmatpush1.bf16.msra.mxu0 %v3526
    %3959 = vmatprep.subr.bf16.mxu0 %v3531
    %3960 = vmatpush1.bf16.msra.mxu0 %v3530
    %3961 = vmatprep.subr.bf16.mxu0 %v3535
    %3962 = vmatpush1.bf16.msra.mxu0 %v3534
    %3963 = vmatprep.subr.bf16.mxu0 %v3539
    %3964 = vmatpush1.bf16.msra.mxu0 %v3538
    %3965 = vmatprep.subr.bf16.mxu0 0
    %3966 = vmatpush1.bf16.msra.mxu0 0
    %3967 = vmatprep.subr.bf16.mxu0 0
    %3968 = vmatpush1.bf16.msra.mxu0 0
    %3969 = vmatprep.subr.bf16.mxu0 0
    %3970 = vmatpush1.bf16.msra.mxu0 0
    %3971 = vmatprep.subr.bf16.mxu0 0
    %3972 = vmatpush1.bf16.msra.mxu0 0
    %3973 = vmatprep.subr.bf16.mxu0 0
    %3974 = vmatpush1.bf16.msra.mxu0 0
    %3975 = vmatprep.subr.bf16.mxu0 0
    %3976 = vmatpush1.bf16.msra.mxu0 0
    %3977 = vmatprep.subr.bf16.mxu0 0
    %3978 = vmatpush1.bf16.msra.mxu0 0
    %3979 = vmatprep.subr.bf16.mxu0 0
    %3980 = vmatpush1.bf16.msra.mxu0 0
    %3981 = vmatprep.mubr.bf16.mxu0 0
    %3982 = vmatmul.mubr.bf16.gmra.mrb[0].mxu0 %v3907
    %v3983 = vpop.f32.mrb[0].mxu0
    %v3984 = vadd.f32 0.0, %v3983
    %v3985 = vpop.f32.mrb[0].mxu0
    %v3986 = vadd.f32 0.0, %v3985
    %v3987 = vpop.f32.mrb[0].mxu0
    %v3988 = vpop.f32.mrb[0].mxu0
    %3989 = vdwg.mxu0
    %v3990 = vadd.f32 %v3315, %v3943
    %v3991 = vadd.f32 %v3317, %v3945
    %v3992 = vadd.f32 %v3388, %v3984
    %v3993 = vadd.f32 %v3390, %v3986
    %v3994 = vxor.u32 %v3990, 2147483648
    %v3995 = vmul.f32 %v3994, 1.442695
    %v3996 = vpow.pop %v3995
    %v3997 = vadd.f32 %v3996, 1.0
    %v3998 = vrcp.pop %v3997
    %v3999 = vmul.f32 1.0, %v3998
    %v4000 = vxor.u32 %v3991, 2147483648
    %v4001 = vmul.f32 %v4000, 1.442695
    %v4002 = vpow.pop %v4001
    %v4003 = vadd.f32 %v4002, 1.0
    %v4004 = vrcp.pop %v4003
    %v4005 = vmul.f32 1.0, %v4004
    %v4006 = vtanh.pop %v3992
    %v4007 = vxor.u32 %v3993, 2147483648
    %v4008 = vmul.f32 %v4007, 1.442695
    %v4009 = vpow.pop %v4008
    %v4010 = vadd.f32 %v4009, 1.0
    %v4011 = vrcp.pop %v4010
    %v4012 = vmul.f32 1.0, %v4011
    %v4013 = vmul.f32 %v4005, %v3903
    %v4014 = vmul.f32 %v3999, %v4006
    %v4015 = vadd.f32 %v4013, %v4014
    %v4016 = vtanh.pop %v4015
    %v4017 = vmul.f32 %v4012, %v4016
    %4018 = vst [vmem:[#allocation2 + $0x18] sm:$0xff] %v4017
    %v4019 = vpack.c.bf16 %v4017, %v4017
    %4020 = vmatprep.subr.bf16.mxu0 %v3509
    %4021 = vmatpush1.bf16.msra.mxu0 %v3508
    %4022 = vmatprep.subr.bf16.mxu0 %v3513
    %4023 = vmatpush1.bf16.msra.mxu0 %v3512
    %4024 = vmatprep.subr.bf16.mxu0 %v3517
    %4025 = vmatpush1.bf16.msra.mxu0 %v3516
    %4026 = vmatprep.subr.bf16.mxu0 %v3521
    %4027 = vmatpush1.bf16.msra.mxu0 %v3520
    %4028 = vmatprep.subr.bf16.mxu0 %v3525
    %4029 = vmatpush1.bf16.msra.mxu0 %v3524
    %4030 = vmatprep.subr.bf16.mxu0 %v3529
    %4031 = vmatpush1.bf16.msra.mxu0 %v3528
    %4032 = vmatprep.subr.bf16.mxu0 %v3533
    %4033 = vmatpush1.bf16.msra.mxu0 %v3532
    %4034 = vmatprep.subr.bf16.mxu0 %v3537
    %4035 = vmatpush1.bf16.msra.mxu0 %v3536
    %4036 = vmatprep.subr.bf16.mxu0 0
    %4037 = vmatpush1.bf16.msra.mxu0 0
    %4038 = vmatprep.subr.bf16.mxu0 0
    %4039 = vmatpush1.bf16.msra.mxu0 0
    %4040 = vmatprep.subr.bf16.mxu0 0
    %4041 = vmatpush1.bf16.msra.mxu0 0
    %4042 = vmatprep.subr.bf16.mxu0 0
    %4043 = vmatpush1.bf16.msra.mxu0 0
    %4044 = vmatprep.subr.bf16.mxu0 0
    %4045 = vmatpush1.bf16.msra.mxu0 0
    %4046 = vmatprep.subr.bf16.mxu0 0
    %4047 = vmatpush1.bf16.msra.mxu0 0
    %4048 = vmatprep.subr.bf16.mxu0 0
    %4049 = vmatpush1.bf16.msra.mxu0 0
    %4050 = vmatprep.subr.bf16.mxu0 0
    %4051 = vmatpush1.bf16.msra.mxu0 0
    %4052 = vmatprep.mubr.bf16.mxu0 0
    %4053 = vmatmul.mubr.bf16.gmra.mrb[0].mxu0 %v4019
    %v4054 = vpop.f32.mrb[0].mxu0
    %v4055 = vadd.f32 0.0, %v4054
    %v4056 = vpop.f32.mrb[0].mxu0
    %v4057 = vadd.f32 0.0, %v4056
    %v4058 = vpop.f32.mrb[0].mxu0
    %v4059 = vpop.f32.mrb[0].mxu0
    %4060 = vdwg.mxu0
    %4061 = vmatprep.subr.bf16.mxu0 %v3511
    %4062 = vmatpush1.bf16.msra.mxu0 %v3510
    %4063 = vmatprep.subr.bf16.mxu0 %v3515
    %4064 = vmatpush1.bf16.msra.mxu0 %v3514
    %4065 = vmatprep.subr.bf16.mxu0 %v3519
    %4066 = vmatpush1.bf16.msra.mxu0 %v3518
    %4067 = vmatprep.subr.bf16.mxu0 %v3523
    %4068 = vmatpush1.bf16.msra.mxu0 %v3522
    %4069 = vmatprep.subr.bf16.mxu0 %v3527
    %4070 = vmatpush1.bf16.msra.mxu0 %v3526
    %4071 = vmatprep.subr.bf16.mxu0 %v3531
    %4072 = vmatpush1.bf16.msra.mxu0 %v3530
    %4073 = vmatprep.subr.bf16.mxu0 %v3535
    %4074 = vmatpush1.bf16.msra.mxu0 %v3534
    %4075 = vmatprep.subr.bf16.mxu0 %v3539
    %4076 = vmatpush1.bf16.msra.mxu0 %v3538
    %4077 = vmatprep.subr.bf16.mxu0 0
    %4078 = vmatpush1.bf16.msra.mxu0 0
    %4079 = vmatprep.subr.bf16.mxu0 0
    %4080 = vmatpush1.bf16.msra.mxu0 0
    %4081 = vmatprep.subr.bf16.mxu0 0
    %4082 = vmatpush1.bf16.msra.mxu0 0
    %4083 = vmatprep.subr.bf16.mxu0 0
    %4084 = vmatpush1.bf16.msra.mxu0 0
    %4085 = vmatprep.subr.bf16.mxu0 0
    %4086 = vmatpush1.bf16.msra.mxu0 0
    %4087 = vmatprep.subr.bf16.mxu0 0
    %4088 = vmatpush1.bf16.msra.mxu0 0
    %4089 = vmatprep.subr.bf16.mxu0 0
    %4090 = vmatpush1.bf16.msra.mxu0 0
    %4091 = vmatprep.subr.bf16.mxu0 0
    %4092 = vmatpush1.bf16.msra.mxu0 0
    %4093 = vmatprep.mubr.bf16.mxu0 0
    %4094 = vmatmul.mubr.bf16.gmra.mrb[0].mxu0 %v4019
    %v4095 = vpop.f32.mrb[0].mxu0
    %v4096 = vadd.f32 0.0, %v4095
    %v4097 = vpop.f32.mrb[0].mxu0
    %v4098 = vadd.f32 0.0, %v4097
    %v4099 = vpop.f32.mrb[0].mxu0
    %v4100 = vpop.f32.mrb[0].mxu0
    %4101 = vdwg.mxu0
    %v4102 = vadd.f32 %v3321, %v4055
    %v4103 = vadd.f32 %v3323, %v4057
    %v4104 = vadd.f32 %v3394, %v4096
    %v4105 = vadd.f32 %v3396, %v4098
    %v4106 = vxor.u32 %v4102, 2147483648
    %v4107 = vmul.f32 %v4106, 1.442695
    %v4108 = vpow.pop %v4107
    %v4109 = vadd.f32 %v4108, 1.0
    %v4110 = vrcp.pop %v4109
    %v4111 = vmul.f32 1.0, %v4110
    %v4112 = vxor.u32 %v4103, 2147483648
    %v4113 = vmul.f32 %v4112, 1.442695
    %v4114 = vpow.pop %v4113
    %v4115 = vadd.f32 %v4114, 1.0
    %v4116 = vrcp.pop %v4115
    %v4117 = vmul.f32 1.0, %v4116
    %v4118 = vtanh.pop %v4104
    %v4119 = vxor.u32 %v4105, 2147483648
    %v4120 = vmul.f32 %v4119, 1.442695
    %v4121 = vpow.pop %v4120
    %v4122 = vadd.f32 %v4121, 1.0
    %v4123 = vrcp.pop %v4122
    %v4124 = vmul.f32 1.0, %v4123
    %v4125 = vmul.f32 %v4117, %v4015
    %v4126 = vmul.f32 %v4111, %v4118
    %v4127 = vadd.f32 %v4125, %v4126
    %v4128 = vtanh.pop %v4127
    %v4129 = vmul.f32 %v4124, %v4128
    %4130 = vst [vmem:[#allocation2 + $0x20] sm:$0xff] %v4129
    %v4131 = vpack.c.bf16 %v4129, %v4129
    %4132 = vmatprep.subr.bf16.mxu0 %v3509
    %4133 = vmatpush1.bf16.msra.mxu0 %v3508
    %4134 = vmatprep.subr.bf16.mxu0 %v3513
    %4135 = vmatpush1.bf16.msra.mxu0 %v3512
    %4136 = vmatprep.subr.bf16.mxu0 %v3517
    %4137 = vmatpush1.bf16.msra.mxu0 %v3516
    %4138 = vmatprep.subr.bf16.mxu0 %v3521
    %4139 = vmatpush1.bf16.msra.mxu0 %v3520
    %4140 = vmatprep.subr.bf16.mxu0 %v3525
    %4141 = vmatpush1.bf16.msra.mxu0 %v3524
    %4142 = vmatprep.subr.bf16.mxu0 %v3529
    %4143 = vmatpush1.bf16.msra.mxu0 %v3528
    %4144 = vmatprep.subr.bf16.mxu0 %v3533
    %4145 = vmatpush1.bf16.msra.mxu0 %v3532
    %4146 = vmatprep.subr.bf16.mxu0 %v3537
    %4147 = vmatpush1.bf16.msra.mxu0 %v3536
    %4148 = vmatprep.subr.bf16.mxu0 0
    %4149 = vmatpush1.bf16.msra.mxu0 0
    %4150 = vmatprep.subr.bf16.mxu0 0
    %4151 = vmatpush1.bf16.msra.mxu0 0
    %4152 = vmatprep.subr.bf16.mxu0 0
    %4153 = vmatpush1.bf16.msra.mxu0 0
    %4154 = vmatprep.subr.bf16.mxu0 0
    %4155 = vmatpush1.bf16.msra.mxu0 0
    %4156 = vmatprep.subr.bf16.mxu0 0
    %4157 = vmatpush1.bf16.msra.mxu0 0
    %4158 = vmatprep.subr.bf16.mxu0 0
    %4159 = vmatpush1.bf16.msra.mxu0 0
    %4160 = vmatprep.subr.bf16.mxu0 0
    %4161 = vmatpush1.bf16.msra.mxu0 0
    %4162 = vmatprep.subr.bf16.mxu0 0
    %4163 = vmatpush1.bf16.msra.mxu0 0
    %4164 = vmatprep.mubr.bf16.mxu0 0
    %4165 = vmatmul.mubr.bf16.gmra.mrb[0].mxu0 %v4131
    %v4166 = vpop.f32.mrb[0].mxu0
    %v4167 = vadd.f32 0.0, %v4166
    %v4168 = vpop.f32.mrb[0].mxu0
    %v4169 = vadd.f32 0.0, %v4168
    %v4170 = vpop.f32.mrb[0].mxu0
    %v4171 = vpop.f32.mrb[0].mxu0
    %4172 = vdwg.mxu0
    %4173 = vmatprep.subr.bf16.mxu0 %v3511
    %4174 = vmatpush1.bf16.msra.mxu0 %v3510
    %4175 = vmatprep.subr.bf16.mxu0 %v3515
    %4176 = vmatpush1.bf16.msra.mxu0 %v3514
    %4177 = vmatprep.subr.bf16.mxu0 %v3519
    %4178 = vmatpush1.bf16.msra.mxu0 %v3518
    %4179 = vmatprep.subr.bf16.mxu0 %v3523
    %4180 = vmatpush1.bf16.msra.mxu0 %v3522
    %4181 = vmatprep.subr.bf16.mxu0 %v3527
    %4182 = vmatpush1.bf16.msra.mxu0 %v3526
    %4183 = vmatprep.subr.bf16.mxu0 %v3531
    %4184 = vmatpush1.bf16.msra.mxu0 %v3530
    %4185 = vmatprep.subr.bf16.mxu0 %v3535
    %4186 = vmatpush1.bf16.msra.mxu0 %v3534
    %4187 = vmatprep.subr.bf16.mxu0 %v3539
    %4188 = vmatpush1.bf16.msra.mxu0 %v3538
    %4189 = vmatprep.subr.bf16.mxu0 0
    %4190 = vmatpush1.bf16.msra.mxu0 0
    %4191 = vmatprep.subr.bf16.mxu0 0
    %4192 = vmatpush1.bf16.msra.mxu0 0
    %4193 = vmatprep.subr.bf16.mxu0 0
    %4194 = vmatpush1.bf16.msra.mxu0 0
    %4195 = vmatprep.subr.bf16.mxu0 0
    %4196 = vmatpush1.bf16.msra.mxu0 0
    %4197 = vmatprep.subr.bf16.mxu0 0
    %4198 = vmatpush1.bf16.msra.mxu0 0
    %4199 = vmatprep.subr.bf16.mxu0 0
    %4200 = vmatpush1.bf16.msra.mxu0 0
    %4201 = vmatprep.subr.bf16.mxu0 0
    %4202 = vmatpush1.bf16.msra.mxu0 0
    %4203 = vmatprep.subr.bf16.mxu0 0
    %4204 = vmatpush1.bf16.msra.mxu0 0
    %4205 = vmatprep.mubr.bf16.mxu0 0
    %4206 = vmatmul.mubr.bf16.gmra.mrb[0].mxu0 %v4131
    %v4207 = vpop.f32.mrb[0].mxu0
    %v4208 = vadd.f32 0.0, %v4207
    %v4209 = vpop.f32.mrb[0].mxu0
    %v4210 = vadd.f32 0.0, %v4209
    %v4211 = vpop.f32.mrb[0].mxu0
    %v4212 = vpop.f32.mrb[0].mxu0
    %4213 = vdwg.mxu0
    %v4214 = vadd.f32 %v3325, %v4167
    %v4215 = vadd.f32 %v3327, %v4169
    %v4216 = vadd.f32 %v3398, %v4208
    %v4217 = vadd.f32 %v3400, %v4210
    %v4218 = vxor.u32 %v4214, 2147483648
    %v4219 = vmul.f32 %v4218, 1.442695
    %v4220 = vpow.pop %v4219
    %v4221 = vadd.f32 %v4220, 1.0
    %v4222 = vrcp.pop %v4221
    %v4223 = vmul.f32 1.0, %v4222
    %v4224 = vxor.u32 %v4215, 2147483648
    %v4225 = vmul.f32 %v4224, 1.442695
    %v4226 = vpow.pop %v4225
    %v4227 = vadd.f32 %v4226, 1.0
    %v4228 = vrcp.pop %v4227
    %v4229 = vmul.f32 1.0, %v4228
    %v4230 = vtanh.pop %v4216
    %v4231 = vxor.u32 %v4217, 2147483648
    %v4232 = vmul.f32 %v4231, 1.442695
    %v4233 = vpow.pop %v4232
    %v4234 = vadd.f32 %v4233, 1.0
    %v4235 = vrcp.pop %v4234
    %v4236 = vmul.f32 1.0, %v4235
    %v4237 = vmul.f32 %v4229, %v4127
    %v4238 = vmul.f32 %v4223, %v4230
    %v4239 = vadd.f32 %v4237, %v4238
    %v4240 = vtanh.pop %v4239
    %v4241 = vmul.f32 %v4236, %v4240
    %4242 = vst [vmem:[#allocation2 + $0x28] sm:$0xff] %v4241
    %v4243 = vpack.c.bf16 %v4241, %v4241
    %4244 = vmatprep.subr.bf16.mxu0 %v3509
    %4245 = vmatpush1.bf16.msra.mxu0 %v3508
    %4246 = vmatprep.subr.bf16.mxu0 %v3513
    %4247 = vmatpush1.bf16.msra.mxu0 %v3512
    %4248 = vmatprep.subr.bf16.mxu0 %v3517
    %4249 = vmatpush1.bf16.msra.mxu0 %v3516
    %4250 = vmatprep.subr.bf16.mxu0 %v3521
    %4251 = vmatpush1.bf16.msra.mxu0 %v3520
    %4252 = vmatprep.subr.bf16.mxu0 %v3525
    %4253 = vmatpush1.bf16.msra.mxu0 %v3524
    %4254 = vmatprep.subr.bf16.mxu0 %v3529
    %4255 = vmatpush1.bf16.msra.mxu0 %v3528
    %4256 = vmatprep.subr.bf16.mxu0 %v3533
    %4257 = vmatpush1.bf16.msra.mxu0 %v3532
    %4258 = vmatprep.subr.bf16.mxu0 %v3537
    %4259 = vmatpush1.bf16.msra.mxu0 %v3536
    %4260 = vmatprep.subr.bf16.mxu0 0
    %4261 = vmatpush1.bf16.msra.mxu0 0
    %4262 = vmatprep.subr.bf16.mxu0 0
    %4263 = vmatpush1.bf16.msra.mxu0 0
    %4264 = vmatprep.subr.bf16.mxu0 0
    %4265 = vmatpush1.bf16.msra.mxu0 0
    %4266 = vmatprep.subr.bf16.mxu0 0
    %4267 = vmatpush1.bf16.msra.mxu0 0
    %4268 = vmatprep.subr.bf16.mxu0 0
    %4269 = vmatpush1.bf16.msra.mxu0 0
    %4270 = vmatprep.subr.bf16.mxu0 0
    %4271 = vmatpush1.bf16.msra.mxu0 0
    %4272 = vmatprep.subr.bf16.mxu0 0
    %4273 = vmatpush1.bf16.msra.mxu0 0
    %4274 = vmatprep.subr.bf16.mxu0 0
    %4275 = vmatpush1.bf16.msra.mxu0 0
    %4276 = vmatprep.mubr.bf16.mxu0 0
    %4277 = vmatmul.mubr.bf16.gmra.mrb[0].mxu0 %v4243
    %v4278 = vpop.f32.mrb[0].mxu0
    %v4279 = vadd.f32 0.0, %v4278
    %v4280 = vpop.f32.mrb[0].mxu0
    %v4281 = vadd.f32 0.0, %v4280
    %v4282 = vpop.f32.mrb[0].mxu0
    %v4283 = vpop.f32.mrb[0].mxu0
    %4284 = vdwg.mxu0
    %4285 = vmatprep.subr.bf16.mxu0 %v3511
    %4286 = vmatpush1.bf16.msra.mxu0 %v3510
    %4287 = vmatprep.subr.bf16.mxu0 %v3515
    %4288 = vmatpush1.bf16.msra.mxu0 %v3514
    %4289 = vmatprep.subr.bf16.mxu0 %v3519
    %4290 = vmatpush1.bf16.msra.mxu0 %v3518
    %4291 = vmatprep.subr.bf16.mxu0 %v3523
    %4292 = vmatpush1.bf16.msra.mxu0 %v3522
    %4293 = vmatprep.subr.bf16.mxu0 %v3527
    %4294 = vmatpush1.bf16.msra.mxu0 %v3526
    %4295 = vmatprep.subr.bf16.mxu0 %v3531
    %4296 = vmatpush1.bf16.msra.mxu0 %v3530
    %4297 = vmatprep.subr.bf16.mxu0 %v3535
    %4298 = vmatpush1.bf16.msra.mxu0 %v3534
    %4299 = vmatprep.subr.bf16.mxu0 %v3539
    %4300 = vmatpush1.bf16.msra.mxu0 %v3538
    %4301 = vmatprep.subr.bf16.mxu0 0
    %4302 = vmatpush1.bf16.msra.mxu0 0
    %4303 = vmatprep.subr.bf16.mxu0 0
    %4304 = vmatpush1.bf16.msra.mxu0 0
    %4305 = vmatprep.subr.bf16.mxu0 0
    %4306 = vmatpush1.bf16.msra.mxu0 0
    %4307 = vmatprep.subr.bf16.mxu0 0
    %4308 = vmatpush1.bf16.msra.mxu0 0
    %4309 = vmatprep.subr.bf16.mxu0 0
    %4310 = vmatpush1.bf16.msra.mxu0 0
    %4311 = vmatprep.subr.bf16.mxu0 0
    %4312 = vmatpush1.bf16.msra.mxu0 0
    %4313 = vmatprep.subr.bf16.mxu0 0
    %4314 = vmatpush1.bf16.msra.mxu0 0
    %4315 = vmatprep.subr.bf16.mxu0 0
    %4316 = vmatpush1.bf16.msra.mxu0 0
    %4317 = vmatprep.mubr.bf16.mxu0 0
    %4318 = vmatmul.mubr.bf16.gmra.mrb[0].mxu0 %v4243
    %v4319 = vpop.f32.mrb[0].mxu0
    %v4320 = vadd.f32 0.0, %v4319
    %v4321 = vpop.f32.mrb[0].mxu0
    %v4322 = vadd.f32 0.0, %v4321
    %v4323 = vpop.f32.mrb[0].mxu0
    %v4324 = vpop.f32.mrb[0].mxu0
    %4325 = vdwg.mxu0
    %v4326 = vadd.f32 %v3331, %v4279
    %v4327 = vadd.f32 %v3333, %v4281
    %v4328 = vadd.f32 %v3404, %v4320
    %v4329 = vadd.f32 %v3406, %v4322
    %v4330 = vxor.u32 %v4326, 2147483648
    %v4331 = vmul.f32 %v4330, 1.442695
    %v4332 = vpow.pop %v4331
    %v4333 = vadd.f32 %v4332, 1.0
    %v4334 = vrcp.pop %v4333
    %v4335 = vmul.f32 1.0, %v4334
    %v4336 = vxor.u32 %v4327, 2147483648
    %v4337 = vmul.f32 %v4336, 1.442695
    %v4338 = vpow.pop %v4337
    %v4339 = vadd.f32 %v4338, 1.0
    %v4340 = vrcp.pop %v4339
    %v4341 = vmul.f32 1.0, %v4340
    %v4342 = vtanh.pop %v4328
    %v4343 = vxor.u32 %v4329, 2147483648
    %v4344 = vmul.f32 %v4343, 1.442695
    %v4345 = vpow.pop %v4344
    %v4346 = vadd.f32 %v4345, 1.0
    %v4347 = vrcp.pop %v4346
    %v4348 = vmul.f32 1.0, %v4347
    %v4349 = vmul.f32 %v4341, %v4239
    %v4350 = vmul.f32 %v4335, %v4342
    %v4351 = vadd.f32 %v4349, %v4350
    %v4352 = vtanh.pop %v4351
    %v4353 = vmul.f32 %v4348, %v4352
    %4354 = vst [vmem:[#allocation2 + $0x30] sm:$0xff] %v4353
    %v4355 = vpack.c.bf16 %v4353, %v4353
    %4356 = vmatprep.subr.bf16.mxu0 %v3509
    %4357 = vmatpush1.bf16.msra.mxu0 %v3508
    %4358 = vmatprep.subr.bf16.mxu0 %v3513
    %4359 = vmatpush1.bf16.msra.mxu0 %v3512
    %4360 = vmatprep.subr.bf16.mxu0 %v3517
    %4361 = vmatpush1.bf16.msra.mxu0 %v3516
    %4362 = vmatprep.subr.bf16.mxu0 %v3521
    %4363 = vmatpush1.bf16.msra.mxu0 %v3520
    %4364 = vmatprep.subr.bf16.mxu0 %v3525
    %4365 = vmatpush1.bf16.msra.mxu0 %v3524
    %4366 = vmatprep.subr.bf16.mxu0 %v3529
    %4367 = vmatpush1.bf16.msra.mxu0 %v3528
    %4368 = vmatprep.subr.bf16.mxu0 %v3533
    %4369 = vmatpush1.bf16.msra.mxu0 %v3532
    %4370 = vmatprep.subr.bf16.mxu0 %v3537
    %4371 = vmatpush1.bf16.msra.mxu0 %v3536
    %4372 = vmatprep.subr.bf16.mxu0 0
    %4373 = vmatpush1.bf16.msra.mxu0 0
    %4374 = vmatprep.subr.bf16.mxu0 0
    %4375 = vmatpush1.bf16.msra.mxu0 0
    %4376 = vmatprep.subr.bf16.mxu0 0
    %4377 = vmatpush1.bf16.msra.mxu0 0
    %4378 = vmatprep.subr.bf16.mxu0 0
    %4379 = vmatpush1.bf16.msra.mxu0 0
    %4380 = vmatprep.subr.bf16.mxu0 0
    %4381 = vmatpush1.bf16.msra.mxu0 0
    %4382 = vmatprep.subr.bf16.mxu0 0
    %4383 = vmatpush1.bf16.msra.mxu0 0
    %4384 = vmatprep.subr.bf16.mxu0 0
    %4385 = vmatpush1.bf16.msra.mxu0 0
    %4386 = vmatprep.subr.bf16.mxu0 0
    %4387 = vmatpush1.bf16.msra.mxu0 0
    %4388 = vmatprep.mubr.bf16.mxu0 0
    %4389 = vmatmul.mubr.bf16.gmra.mrb[0].mxu0 %v4355
    %v4390 = vpop.f32.mrb[0].mxu0
    %v4391 = vadd.f32 0.0, %v4390
    %v4392 = vpop.f32.mrb[0].mxu0
    %v4393 = vadd.f32 0.0, %v4392
    %v4394 = vpop.f32.mrb[0].mxu0
    %v4395 = vpop.f32.mrb[0].mxu0
    %4396 = vdwg.mxu0
    %4397 = vmatprep.subr.bf16.mxu0 %v3511
    %4398 = vmatpush1.bf16.msra.mxu0 %v3510
    %4399 = vmatprep.subr.bf16.mxu0 %v3515
    %4400 = vmatpush1.bf16.msra.mxu0 %v3514
    %4401 = vmatprep.subr.bf16.mxu0 %v3519
    %4402 = vmatpush1.bf16.msra.mxu0 %v3518
    %4403 = vmatprep.subr.bf16.mxu0 %v3523
    %4404 = vmatpush1.bf16.msra.mxu0 %v3522
    %4405 = vmatprep.subr.bf16.mxu0 %v3527
    %4406 = vmatpush1.bf16.msra.mxu0 %v3526
    %4407 = vmatprep.subr.bf16.mxu0 %v3531
    %4408 = vmatpush1.bf16.msra.mxu0 %v3530
    %4409 = vmatprep.subr.bf16.mxu0 %v3535
    %4410 = vmatpush1.bf16.msra.mxu0 %v3534
    %4411 = vmatprep.subr.bf16.mxu0 %v3539
    %4412 = vmatpush1.bf16.msra.mxu0 %v3538
    %4413 = vmatprep.subr.bf16.mxu0 0
    %4414 = vmatpush1.bf16.msra.mxu0 0
    %4415 = vmatprep.subr.bf16.mxu0 0
    %4416 = vmatpush1.bf16.msra.mxu0 0
    %4417 = vmatprep.subr.bf16.mxu0 0
    %4418 = vmatpush1.bf16.msra.mxu0 0
    %4419 = vmatprep.subr.bf16.mxu0 0
    %4420 = vmatpush1.bf16.msra.mxu0 0
    %4421 = vmatprep.subr.bf16.mxu0 0
    %4422 = vmatpush1.bf16.msra.mxu0 0
    %4423 = vmatprep.subr.bf16.mxu0 0
    %4424 = vmatpush1.bf16.msra.mxu0 0
    %4425 = vmatprep.subr.bf16.mxu0 0
    %4426 = vmatpush1.bf16.msra.mxu0 0
    %4427 = vmatprep.subr.bf16.mxu0 0
    %4428 = vmatpush1.bf16.msra.mxu0 0
    %4429 = vmatprep.mubr.bf16.mxu0 0
    %4430 = vmatmul.mubr.bf16.gmra.mrb[0].mxu0 %v4355
    %v4431 = vpop.f32.mrb[0].mxu0
    %v4432 = vadd.f32 0.0, %v4431
    %v4433 = vpop.f32.mrb[0].mxu0
    %v4434 = vadd.f32 0.0, %v4433
    %v4435 = vpop.f32.mrb[0].mxu0
    %v4436 = vpop.f32.mrb[0].mxu0
    %4437 = vdwg.mxu0
    %v4438 = vadd.f32 %v3335, %v4391
    %v4439 = vadd.f32 %v3337, %v4393
    %v4440 = vadd.f32 %v3408, %v4432
    %v4441 = vadd.f32 %v3410, %v4434
    %v4442 = vxor.u32 %v4438, 2147483648
    %v4443 = vmul.f32 %v4442, 1.442695
    %v4444 = vpow.pop %v4443
    %v4445 = vadd.f32 %v4444, 1.0
    %v4446 = vrcp.pop %v4445
    %v4447 = vmul.f32 1.0, %v4446
    %v4448 = vxor.u32 %v4439, 2147483648
    %v4449 = vmul.f32 %v4448, 1.442695
    %v4450 = vpow.pop %v4449
    %v4451 = vadd.f32 %v4450, 1.0
    %v4452 = vrcp.pop %v4451
    %v4453 = vmul.f32 1.0, %v4452
    %v4454 = vtanh.pop %v4440
    %v4455 = vxor.u32 %v4441, 2147483648
    %v4456 = vmul.f32 %v4455, 1.442695
    %v4457 = vpow.pop %v4456
    %v4458 = vadd.f32 %v4457, 1.0
    %v4459 = vrcp.pop %v4458
    %v4460 = vmul.f32 1.0, %v4459
    %v4461 = vmul.f32 %v4453, %v4351
    %v4462 = vmul.f32 %v4447, %v4454
    %v4463 = vadd.f32 %v4461, %v4462
    %v4464 = vtanh.pop %v4463
    %v4465 = vmul.f32 %v4460, %v4464
    %4466 = vst [vmem:[#allocation2 + $0x38] sm:$0xff] %v4465
    %s4467 = scalar_lea.vmem [#allocation12], 16
    %4468 = vst [vmem:[%s4467] sm:$0xff] %v4465
    %s4469 = scalar_lea.vmem [#allocation14], 16
    %4470 = vst [vmem:[%s4469] sm:$0xff] %v4463
    %s4471 = scalar_lea.vmem [#allocation6], 768
    %v4472 = vld [vmem:[%s4471] sm:$0xff]
    %v4473 = vld [vmem:[%s4471 + $0x8] sm:$0xff]
    %v4474 = vld [vmem:[%s4471 + $0x10] sm:$0xff]
    %v4475 = vld [vmem:[%s4471 + $0x18] sm:$0xff]
    %v4476 = vld [vmem:[%s4471 + $0x20] sm:$0xff]
    %v4477 = vld [vmem:[%s4471 + $0x28] sm:$0xff]
    %v4478 = vld [vmem:[%s4471 + $0x30] sm:$0xff]
    %v4479 = vld [vmem:[%s4471 + $0x38] sm:$0xff]
    %v4480 = vld [vmem:[%s4471 + $0x40] sm:$0xff]
    %v4481 = vld [vmem:[%s4471 + $0x48] sm:$0xff]
    %v4482 = vld [vmem:[%s4471 + $0x50] sm:$0xff]
    %v4483 = vld [vmem:[%s4471 + $0x58] sm:$0xff]
    %v4484 = vld [vmem:[%s4471 + $0x60] sm:$0xff]
    %v4485 = vld [vmem:[%s4471 + $0x68] sm:$0xff]
    %v4486 = vld [vmem:[%s4471 + $0x70] sm:$0xff]
    %v4487 = vld [vmem:[%s4471 + $0x78] sm:$0xff]
    %v4488 = vld [vmem:[%s4471 + $0x80] sm:$0xff]
    %v4489 = vld [vmem:[%s4471 + $0x88] sm:$0xff]
    %v4490 = vld [vmem:[%s4471 + $0x90] sm:$0xff]
    %v4491 = vld [vmem:[%s4471 + $0x98] sm:$0xff]
    %v4492 = vld [vmem:[%s4471 + $0xa0] sm:$0xff]
    %v4493 = vld [vmem:[%s4471 + $0xa8] sm:$0xff]
    %v4494 = vld [vmem:[%s4471 + $0xb0] sm:$0xff]
    %v4495 = vld [vmem:[%s4471 + $0xb8] sm:$0xff]
    %v4496 = vld [vmem:[%s4471 + $0xc0] sm:$0xff]
    %v4497 = vld [vmem:[%s4471 + $0xc8] sm:$0xff]
    %v4498 = vld [vmem:[%s4471 + $0xd0] sm:$0xff]
    %v4499 = vld [vmem:[%s4471 + $0xd8] sm:$0xff]
    %v4500 = vld [vmem:[%s4471 + $0xe0] sm:$0xff]
    %v4501 = vld [vmem:[%s4471 + $0xe8] sm:$0xff]
    %v4502 = vld [vmem:[%s4471 + $0xf0] sm:$0xff]
    %v4503 = vld [vmem:[%s4471 + $0xf8] sm:$0xff]
    %s4504 = scalar_lea.vmem [#allocation8], 768
    %v4505 = vld [vmem:[%s4504] sm:$0xff]
    %v4506 = vld [vmem:[%s4504 + $0x8] sm:$0xff]
    %v4507 = vld [vmem:[%s4504 + $0x10] sm:$0xff]
    %v4508 = vld [vmem:[%s4504 + $0x18] sm:$0xff]
    %v4509 = vld [vmem:[%s4504 + $0x20] sm:$0xff]
    %v4510 = vld [vmem:[%s4504 + $0x28] sm:$0xff]
    %v4511 = vld [vmem:[%s4504 + $0x30] sm:$0xff]
    %v4512 = vld [vmem:[%s4504 + $0x38] sm:$0xff]
    %v4513 = vld [vmem:[%s4504 + $0x40] sm:$0xff]
    %v4514 = vld [vmem:[%s4504 + $0x48] sm:$0xff]
    %v4515 = vld [vmem:[%s4504 + $0x50] sm:$0xff]
    %v4516 = vld [vmem:[%s4504 + $0x58] sm:$0xff]
    %v4517 = vld [vmem:[%s4504 + $0x60] sm:$0xff]
    %v4518 = vld [vmem:[%s4504 + $0x68] sm:$0xff]
    %v4519 = vld [vmem:[%s4504 + $0x70] sm:$0xff]
    %v4520 = vld [vmem:[%s4504 + $0x78] sm:$0xff]
    %v4521 = vld [vmem:[%s4504 + $0x80] sm:$0xff]
    %v4522 = vld [vmem:[%s4504 + $0x88] sm:$0xff]
    %v4523 = vld [vmem:[%s4504 + $0x90] sm:$0xff]
    %v4524 = vld [vmem:[%s4504 + $0x98] sm:$0xff]
    %v4525 = vld [vmem:[%s4504 + $0xa0] sm:$0xff]
    %v4526 = vld [vmem:[%s4504 + $0xa8] sm:$0xff]
    %v4527 = vld [vmem:[%s4504 + $0xb0] sm:$0xff]
    %v4528 = vld [vmem:[%s4504 + $0xb8] sm:$0xff]
    %v4529 = vld [vmem:[%s4504 + $0xc0] sm:$0xff]
    %v4530 = vld [vmem:[%s4504 + $0xc8] sm:$0xff]
    %v4531 = vld [vmem:[%s4504 + $0xd0] sm:$0xff]
    %v4532 = vld [vmem:[%s4504 + $0xd8] sm:$0xff]
    %v4533 = vld [vmem:[%s4504 + $0xe0] sm:$0xff]
    %v4534 = vld [vmem:[%s4504 + $0xe8] sm:$0xff]
    %v4535 = vld [vmem:[%s4504 + $0xf0] sm:$0xff]
    %v4536 = vld [vmem:[%s4504 + $0xf8] sm:$0xff]
    %s4537 = scalar_lea.vmem [#allocation9], 12
    %v4538 = vld [vmem:[%s4537] sm:$0xf]
    %v4539 = vld [vmem:[#allocation2] sm:$0xff]
    %v4540 = vld [vmem:[#allocation2 + $0x8] sm:$0xff]
    %v4541 = vld [vmem:[#allocation2 + $0x10] sm:$0xff]
    %v4542 = vld [vmem:[#allocation2 + $0x18] sm:$0xff]
    %v4543 = vld [vmem:[#allocation2 + $0x20] sm:$0xff]
    %v4544 = vld [vmem:[#allocation2 + $0x28] sm:$0xff]
    %v4545 = vld [vmem:[#allocation2 + $0x30] sm:$0xff]
    %v4546 = vld [vmem:[#allocation2 + $0x38] sm:$0xff]
    %v4547 = vpack.c.bf16 %v4540, %v4539
    %v4548 = vpack.c.bf16 %v4542, %v4541
    %v4549 = vpack.c.bf16 %v4544, %v4543
    %v4550 = vpack.c.bf16 %v4546, %v4545
    %v4552 = vlaneseq
    %v4553 = vshrl.u32 %v4552, 7
    %v4554 = vsub.s32 0, %v4553
    %v4555 = vrot.slane %v4538, %v4554
    %v4556 = vlaneseq
    %v4557 = vshrl.u32 %v4556, 7
    %v4558 = vsub.s32 1, %v4557
    %v4559 = vrot.slane %v4538, %v4558
    %v4560 = vlaneseq
    %v4561 = vshrl.u32 %v4560, 7
    %v4562 = vsub.s32 2, %v4561
    %v4563 = vrot.slane %v4538, %v4562
    %v4564 = vlaneseq
    %v4565 = vshrl.u32 %v4564, 7
    %v4566 = vsub.s32 3, %v4565
    %v4567 = vrot.slane %v4538, %v4566
    %v4604 = vunpack.c.l.b16 %v4472
    %v4605 = vunpack.c.h.b16 %v4472
    %v4606 = vunpack.c.l.b16 %v4473
    %v4607 = vunpack.c.h.b16 %v4473
    %v4608 = vunpack.c.l.b16 %v4474
    %v4609 = vunpack.c.h.b16 %v4474
    %v4610 = vunpack.c.l.b16 %v4475
    %v4611 = vunpack.c.h.b16 %v4475
    %v4612 = vunpack.c.l.b16 %v4476
    %v4613 = vunpack.c.h.b16 %v4476
    %v4614 = vunpack.c.l.b16 %v4477
    %v4615 = vunpack.c.h.b16 %v4477
    %v4616 = vunpack.c.l.b16 %v4478
    %v4617 = vunpack.c.h.b16 %v4478
    %v4618 = vunpack.c.l.b16 %v4479
    %v4619 = vunpack.c.h.b16 %v4479
    %v4620 = vunpack.c.l.b16 %v4480
    %v4621 = vunpack.c.h.b16 %v4480
    %v4622 = vunpack.c.l.b16 %v4481
    %v4623 = vunpack.c.h.b16 %v4481
    %v4624 = vunpack.c.l.b16 %v4482
    %v4625 = vunpack.c.h.b16 %v4482
    %v4626 = vunpack.c.l.b16 %v4483
    %v4627 = vunpack.c.h.b16 %v4483
    %v4628 = vunpack.c.l.b16 %v4484
    %v4629 = vunpack.c.h.b16 %v4484
    %v4630 = vunpack.c.l.b16 %v4485
    %v4631 = vunpack.c.h.b16 %v4485
    %v4632 = vunpack.c.l.b16 %v4486
    %v4633 = vunpack.c.h.b16 %v4486
    %v4634 = vunpack.c.l.b16 %v4487
    %v4635 = vunpack.c.h.b16 %v4487
    %v4636 = vunpack.c.l.b16 %v4488
    %v4637 = vunpack.c.h.b16 %v4488
    %v4638 = vunpack.c.l.b16 %v4489
    %v4639 = vunpack.c.h.b16 %v4489
    %v4640 = vunpack.c.l.b16 %v4490
    %v4641 = vunpack.c.h.b16 %v4490
    %v4642 = vunpack.c.l.b16 %v4491
    %v4643 = vunpack.c.h.b16 %v4491
    %v4644 = vunpack.c.l.b16 %v4492
    %v4645 = vunpack.c.h.b16 %v4492
    %v4646 = vunpack.c.l.b16 %v4493
    %v4647 = vunpack.c.h.b16 %v4493
    %v4648 = vunpack.c.l.b16 %v4494
    %v4649 = vunpack.c.h.b16 %v4494
    %v4650 = vunpack.c.l.b16 %v4495
    %v4651 = vunpack.c.h.b16 %v4495
    %v4652 = vunpack.c.l.b16 %v4496
    %v4653 = vunpack.c.h.b16 %v4496
    %v4654 = vunpack.c.l.b16 %v4497
    %v4655 = vunpack.c.h.b16 %v4497
    %v4656 = vunpack.c.l.b16 %v4498
    %v4657 = vunpack.c.h.b16 %v4498
    %v4658 = vunpack.c.l.b16 %v4499
    %v4659 = vunpack.c.h.b16 %v4499
    %v4660 = vunpack.c.l.b16 %v4500
    %v4661 = vunpack.c.h.b16 %v4500
    %v4662 = vunpack.c.l.b16 %v4501
    %v4663 = vunpack.c.h.b16 %v4501
    %v4664 = vunpack.c.l.b16 %v4502
    %v4665 = vunpack.c.h.b16 %v4502
    %v4666 = vunpack.c.l.b16 %v4503
    %v4667 = vunpack.c.h.b16 %v4503
    %v4668 = vpack.c.b16 %v4608, %v4604
    %v4669 = vpack.c.b16 %v4609, %v4605
    %v4670 = vpack.c.b16 %v4610, %v4606
    %v4671 = vpack.c.b16 %v4611, %v4607
    %v4672 = vpack.c.b16 %v4616, %v4612
    %v4673 = vpack.c.b16 %v4617, %v4613
    %v4674 = vpack.c.b16 %v4618, %v4614
    %v4675 = vpack.c.b16 %v4619, %v4615
    %v4676 = vpack.c.b16 %v4624, %v4620
    %v4677 = vpack.c.b16 %v4625, %v4621
    %v4678 = vpack.c.b16 %v4626, %v4622
    %v4679 = vpack.c.b16 %v4627, %v4623
    %v4680 = vpack.c.b16 %v4632, %v4628
    %v4681 = vpack.c.b16 %v4633, %v4629
    %v4682 = vpack.c.b16 %v4634, %v4630
    %v4683 = vpack.c.b16 %v4635, %v4631
    %v4684 = vpack.c.b16 %v4640, %v4636
    %v4685 = vpack.c.b16 %v4641, %v4637
    %v4686 = vpack.c.b16 %v4642, %v4638
    %v4687 = vpack.c.b16 %v4643, %v4639
    %v4688 = vpack.c.b16 %v4648, %v4644
    %v4689 = vpack.c.b16 %v4649, %v4645
    %v4690 = vpack.c.b16 %v4650, %v4646
    %v4691 = vpack.c.b16 %v4651, %v4647
    %v4692 = vpack.c.b16 %v4656, %v4652
    %v4693 = vpack.c.b16 %v4657, %v4653
    %v4694 = vpack.c.b16 %v4658, %v4654
    %v4695 = vpack.c.b16 %v4659, %v4655
    %v4696 = vpack.c.b16 %v4664, %v4660
    %v4697 = vpack.c.b16 %v4665, %v4661
    %v4698 = vpack.c.b16 %v4666, %v4662
    %v4699 = vpack.c.b16 %v4667, %v4663
    %4732 = vmatprep.subr.bf16.mxu0 %v4669
    %4733 = vmatpush1.bf16.msra.mxu0 %v4668
    %4734 = vmatprep.subr.bf16.mxu0 %v4673
    %4735 = vmatpush1.bf16.msra.mxu0 %v4672
    %4736 = vmatprep.subr.bf16.mxu0 %v4677
    %4737 = vmatpush1.bf16.msra.mxu0 %v4676
    %4738 = vmatprep.subr.bf16.mxu0 %v4681
    %4739 = vmatpush1.bf16.msra.mxu0 %v4680
    %4740 = vmatprep.subr.bf16.mxu0 %v4685
    %4741 = vmatpush1.bf16.msra.mxu0 %v4684
    %4742 = vmatprep.subr.bf16.mxu0 %v4689
    %4743 = vmatpush1.bf16.msra.mxu0 %v4688
    %4744 = vmatprep.subr.bf16.mxu0 %v4693
    %4745 = vmatpush1.bf16.msra.mxu0 %v4692
    %4746 = vmatprep.subr.bf16.mxu0 %v4697
    %4747 = vmatpush1.bf16.msra.mxu0 %v4696
    %4748 = vmatprep.subr.bf16.mxu0 0
    %4749 = vmatpush1.bf16.msra.mxu0 0
    %4750 = vmatprep.subr.bf16.mxu0 0
    %4751 = vmatpush1.bf16.msra.mxu0 0
    %4752 = vmatprep.subr.bf16.mxu0 0
    %4753 = vmatpush1.bf16.msra.mxu0 0
    %4754 = vmatprep.subr.bf16.mxu0 0
    %4755 = vmatpush1.bf16.msra.mxu0 0
    %4756 = vmatprep.subr.bf16.mxu0 0
    %4757 = vmatpush1.bf16.msra.mxu0 0
    %4758 = vmatprep.subr.bf16.mxu0 0
    %4759 = vmatpush1.bf16.msra.mxu0 0
    %4760 = vmatprep.subr.bf16.mxu0 0
    %4761 = vmatpush1.bf16.msra.mxu0 0
    %4762 = vmatprep.subr.bf16.mxu0 0
    %4763 = vmatpush1.bf16.msra.mxu0 0
    %4764 = vmatprep.mubr.bf16.mxu0 0
    %4765 = vmatmul.mubr.bf16.gmra.mrb[0].mxu0 %v4547
    %v4766 = vpop.f32.mrb[0].mxu0
    %v4767 = vadd.f32 %v4555, %v4766
    %v4768 = vpop.f32.mrb[0].mxu0
    %v4769 = vadd.f32 %v4559, %v4768
    %v4770 = vpop.f32.mrb[0].mxu0
    %v4771 = vadd.f32 %v4555, %v4770
    %v4772 = vpop.f32.mrb[0].mxu0
    %v4773 = vadd.f32 %v4559, %v4772
    %4774 = vmatprep.mubr.bf16.mxu0 0
    %4775 = vmatmul.mubr.bf16.gmra.mrb[0].mxu0 %v4548
    %v4776 = vpop.f32.mrb[0].mxu0
    %v4777 = vadd.f32 %v4555, %v4776
    %v4778 = vpop.f32.mrb[0].mxu0
    %v4779 = vadd.f32 %v4559, %v4778
    %v4780 = vpop.f32.mrb[0].mxu0
    %v4781 = vadd.f32 %v4555, %v4780
    %v4782 = vpop.f32.mrb[0].mxu0
    %v4783 = vadd.f32 %v4559, %v4782
    %4784 = vmatprep.mubr.bf16.mxu0 0
    %4785 = vmatmul.mubr.bf16.gmra.mrb[0].mxu0 %v4549
    %v4786 = vpop.f32.mrb[0].mxu0
    %v4787 = vadd.f32 %v4555, %v4786
    %v4788 = vpop.f32.mrb[0].mxu0
    %v4789 = vadd.f32 %v4559, %v4788
    %v4790 = vpop.f32.mrb[0].mxu0
    %v4791 = vadd.f32 %v4555, %v4790
    %v4792 = vpop.f32.mrb[0].mxu0
    %v4793 = vadd.f32 %v4559, %v4792
    %4794 = vmatprep.mubr.bf16.mxu0 0
    %4795 = vmatmul.mubr.bf16.gmra.mrb[0].mxu0 %v4550
    %v4796 = vpop.f32.mrb[0].mxu0
    %v4797 = vadd.f32 %v4555, %v4796
    %v4798 = vpop.f32.mrb[0].mxu0
    %v4799 = vadd.f32 %v4559, %v4798
    %v4800 = vpop.f32.mrb[0].mxu0
    %v4801 = vadd.f32 %v4555, %v4800
    %v4802 = vpop.f32.mrb[0].mxu0
    %v4803 = vadd.f32 %v4559, %v4802
    %4804 = vdwg.mxu0
    %4805 = vmatprep.subr.bf16.mxu0 %v4671
    %4806 = vmatpush1.bf16.msra.mxu0 %v4670
    %4807 = vmatprep.subr.bf16.mxu0 %v4675
    %4808 = vmatpush1.bf16.msra.mxu0 %v4674
    %4809 = vmatprep.subr.bf16.mxu0 %v4679
    %4810 = vmatpush1.bf16.msra.mxu0 %v4678
    %4811 = vmatprep.subr.bf16.mxu0 %v4683
    %4812 = vmatpush1.bf16.msra.mxu0 %v4682
    %4813 = vmatprep.subr.bf16.mxu0 %v4687
    %4814 = vmatpush1.bf16.msra.mxu0 %v4686
    %4815 = vmatprep.subr.bf16.mxu0 %v4691
    %4816 = vmatpush1.bf16.msra.mxu0 %v4690
    %4817 = vmatprep.subr.bf16.mxu0 %v4695
    %4818 = vmatpush1.bf16.msra.mxu0 %v4694
    %4819 = vmatprep.subr.bf16.mxu0 %v4699
    %4820 = vmatpush1.bf16.msra.mxu0 %v4698
    %4821 = vmatprep.subr.bf16.mxu0 0
    %4822 = vmatpush1.bf16.msra.mxu0 0
    %4823 = vmatprep.subr.bf16.mxu0 0
    %4824 = vmatpush1.bf16.msra.mxu0 0
    %4825 = vmatprep.subr.bf16.mxu0 0
    %4826 = vmatpush1.bf16.msra.mxu0 0
    %4827 = vmatprep.subr.bf16.mxu0 0
    %4828 = vmatpush1.bf16.msra.mxu0 0
    %4829 = vmatprep.subr.bf16.mxu0 0
    %4830 = vmatpush1.bf16.msra.mxu0 0
    %4831 = vmatprep.subr.bf16.mxu0 0
    %4832 = vmatpush1.bf16.msra.mxu0 0
    %4833 = vmatprep.subr.bf16.mxu0 0
    %4834 = vmatpush1.bf16.msra.mxu0 0
    %4835 = vmatprep.subr.bf16.mxu0 0
    %4836 = vmatpush1.bf16.msra.mxu0 0
    %4837 = vmatprep.mubr.bf16.mxu0 0
    %4838 = vmatmul.mubr.bf16.gmra.mrb[0].mxu0 %v4547
    %v4839 = vpop.f32.mrb[0].mxu0
    %v4840 = vadd.f32 %v4563, %v4839
    %v4841 = vpop.f32.mrb[0].mxu0
    %v4842 = vadd.f32 %v4567, %v4841
    %v4843 = vpop.f32.mrb[0].mxu0
    %v4844 = vadd.f32 %v4563, %v4843
    %v4845 = vpop.f32.mrb[0].mxu0
    %v4846 = vadd.f32 %v4567, %v4845
    %4847 = vmatprep.mubr.bf16.mxu0 0
    %4848 = vmatmul.mubr.bf16.gmra.mrb[0].mxu0 %v4548
    %v4849 = vpop.f32.mrb[0].mxu0
    %v4850 = vadd.f32 %v4563, %v4849
    %v4851 = vpop.f32.mrb[0].mxu0
    %v4852 = vadd.f32 %v4567, %v4851
    %v4853 = vpop.f32.mrb[0].mxu0
    %v4854 = vadd.f32 %v4563, %v4853
    %v4855 = vpop.f32.mrb[0].mxu0
    %v4856 = vadd.f32 %v4567, %v4855
    %4857 = vmatprep.mubr.bf16.mxu0 0
    %4858 = vmatmul.mubr.bf16.gmra.mrb[0].mxu0 %v4549
    %v4859 = vpop.f32.mrb[0].mxu0
    %v4860 = vadd.f32 %v4563, %v4859
    %v4861 = vpop.f32.mrb[0].mxu0
    %v4862 = vadd.f32 %v4567, %v4861
    %v4863 = vpop.f32.mrb[0].mxu0
    %v4864 = vadd.f32 %v4563, %v4863
    %v4865 = vpop.f32.mrb[0].mxu0
    %v4866 = vadd.f32 %v4567, %v4865
    %4867 = vmatprep.mubr.bf16.mxu0 0
    %4868 = vmatmul.mubr.bf16.gmra.mrb[0].mxu0 %v4550
    %v4869 = vpop.f32.mrb[0].mxu0
    %v4870 = vadd.f32 %v4563, %v4869
    %v4871 = vpop.f32.mrb[0].mxu0
    %v4872 = vadd.f32 %v4567, %v4871
    %v4873 = vpop.f32.mrb[0].mxu0
    %v4874 = vadd.f32 %v4563, %v4873
    %v4875 = vpop.f32.mrb[0].mxu0
    %v4876 = vadd.f32 %v4567, %v4875
    %4877 = vdwg.mxu0
    %v4910 = vunpack.c.l.b16 %v4505
    %v4911 = vunpack.c.h.b16 %v4505
    %v4912 = vunpack.c.l.b16 %v4506
    %v4913 = vunpack.c.h.b16 %v4506
    %v4914 = vunpack.c.l.b16 %v4507
    %v4915 = vunpack.c.h.b16 %v4507
    %v4916 = vunpack.c.l.b16 %v4508
    %v4917 = vunpack.c.h.b16 %v4508
    %v4918 = vunpack.c.l.b16 %v4509
    %v4919 = vunpack.c.h.b16 %v4509
    %v4920 = vunpack.c.l.b16 %v4510
    %v4921 = vunpack.c.h.b16 %v4510
    %v4922 = vunpack.c.l.b16 %v4511
    %v4923 = vunpack.c.h.b16 %v4511
    %v4924 = vunpack.c.l.b16 %v4512
    %v4925 = vunpack.c.h.b16 %v4512
    %v4926 = vunpack.c.l.b16 %v4513
    %v4927 = vunpack.c.h.b16 %v4513
    %v4928 = vunpack.c.l.b16 %v4514
    %v4929 = vunpack.c.h.b16 %v4514
    %v4930 = vunpack.c.l.b16 %v4515
    %v4931 = vunpack.c.h.b16 %v4515
    %v4932 = vunpack.c.l.b16 %v4516
    %v4933 = vunpack.c.h.b16 %v4516
    %v4934 = vunpack.c.l.b16 %v4517
    %v4935 = vunpack.c.h.b16 %v4517
    %v4936 = vunpack.c.l.b16 %v4518
    %v4937 = vunpack.c.h.b16 %v4518
    %v4938 = vunpack.c.l.b16 %v4519
    %v4939 = vunpack.c.h.b16 %v4519
    %v4940 = vunpack.c.l.b16 %v4520
    %v4941 = vunpack.c.h.b16 %v4520
    %v4942 = vunpack.c.l.b16 %v4521
    %v4943 = vunpack.c.h.b16 %v4521
    %v4944 = vunpack.c.l.b16 %v4522
    %v4945 = vunpack.c.h.b16 %v4522
    %v4946 = vunpack.c.l.b16 %v4523
    %v4947 = vunpack.c.h.b16 %v4523
    %v4948 = vunpack.c.l.b16 %v4524
    %v4949 = vunpack.c.h.b16 %v4524
    %v4950 = vunpack.c.l.b16 %v4525
    %v4951 = vunpack.c.h.b16 %v4525
    %v4952 = vunpack.c.l.b16 %v4526
    %v4953 = vunpack.c.h.b16 %v4526
    %v4954 = vunpack.c.l.b16 %v4527
    %v4955 = vunpack.c.h.b16 %v4527
    %v4956 = vunpack.c.l.b16 %v4528
    %v4957 = vunpack.c.h.b16 %v4528
    %v4958 = vunpack.c.l.b16 %v4529
    %v4959 = vunpack.c.h.b16 %v4529
    %v4960 = vunpack.c.l.b16 %v4530
    %v4961 = vunpack.c.h.b16 %v4530
    %v4962 = vunpack.c.l.b16 %v4531
    %v4963 = vunpack.c.h.b16 %v4531
    %v4964 = vunpack.c.l.b16 %v4532
    %v4965 = vunpack.c.h.b16 %v4532
    %v4966 = vunpack.c.l.b16 %v4533
    %v4967 = vunpack.c.h.b16 %v4533
    %v4968 = vunpack.c.l.b16 %v4534
    %v4969 = vunpack.c.h.b16 %v4534
    %v4970 = vunpack.c.l.b16 %v4535
    %v4971 = vunpack.c.h.b16 %v4535
    %v4972 = vunpack.c.l.b16 %v4536
    %v4973 = vunpack.c.h.b16 %v4536
    %v4974 = vpack.c.b16 %v4914, %v4910
    %v4975 = vpack.c.b16 %v4915, %v4911
    %v4976 = vpack.c.b16 %v4916, %v4912
    %v4977 = vpack.c.b16 %v4917, %v4913
    %v4978 = vpack.c.b16 %v4922, %v4918
    %v4979 = vpack.c.b16 %v4923, %v4919
    %v4980 = vpack.c.b16 %v4924, %v4920
    %v4981 = vpack.c.b16 %v4925, %v4921
    %v4982 = vpack.c.b16 %v4930, %v4926
    %v4983 = vpack.c.b16 %v4931, %v4927
    %v4984 = vpack.c.b16 %v4932, %v4928
    %v4985 = vpack.c.b16 %v4933, %v4929
    %v4986 = vpack.c.b16 %v4938, %v4934
    %v4987 = vpack.c.b16 %v4939, %v4935
    %v4988 = vpack.c.b16 %v4940, %v4936
    %v4989 = vpack.c.b16 %v4941, %v4937
    %v4990 = vpack.c.b16 %v4946, %v4942
    %v4991 = vpack.c.b16 %v4947, %v4943
    %v4992 = vpack.c.b16 %v4948, %v4944
    %v4993 = vpack.c.b16 %v4949, %v4945
    %v4994 = vpack.c.b16 %v4954, %v4950
    %v4995 = vpack.c.b16 %v4955, %v4951
    %v4996 = vpack.c.b16 %v4956, %v4952
    %v4997 = vpack.c.b16 %v4957, %v4953
    %v4998 = vpack.c.b16 %v4962, %v4958
    %v4999 = vpack.c.b16 %v4963, %v4959
    %v5000 = vpack.c.b16 %v4964, %v4960
    %v5001 = vpack.c.b16 %v4965, %v4961
    %v5002 = vpack.c.b16 %v4970, %v4966
    %v5003 = vpack.c.b16 %v4971, %v4967
    %v5004 = vpack.c.b16 %v4972, %v4968
    %v5005 = vpack.c.b16 %v4973, %v4969
    %5038 = vmatprep.subr.bf16.mxu0 %v4975
    %5039 = vmatpush1.bf16.msra.mxu0 %v4974
    %5040 = vmatprep.subr.bf16.mxu0 %v4979
    %5041 = vmatpush1.bf16.msra.mxu0 %v4978
    %5042 = vmatprep.subr.bf16.mxu0 %v4983
    %5043 = vmatpush1.bf16.msra.mxu0 %v4982
    %5044 = vmatprep.subr.bf16.mxu0 %v4987
    %5045 = vmatpush1.bf16.msra.mxu0 %v4986
    %5046 = vmatprep.subr.bf16.mxu0 %v4991
    %5047 = vmatpush1.bf16.msra.mxu0 %v4990
    %5048 = vmatprep.subr.bf16.mxu0 %v4995
    %5049 = vmatpush1.bf16.msra.mxu0 %v4994
    %5050 = vmatprep.subr.bf16.mxu0 %v4999
    %5051 = vmatpush1.bf16.msra.mxu0 %v4998
    %5052 = vmatprep.subr.bf16.mxu0 %v5003
    %5053 = vmatpush1.bf16.msra.mxu0 %v5002
    %5054 = vmatprep.subr.bf16.mxu0 0
    %5055 = vmatpush1.bf16.msra.mxu0 0
    %5056 = vmatprep.subr.bf16.mxu0 0
    %5057 = vmatpush1.bf16.msra.mxu0 0
    %5058 = vmatprep.subr.bf16.mxu0 0
    %5059 = vmatpush1.bf16.msra.mxu0 0
    %5060 = vmatprep.subr.bf16.mxu0 0
    %5061 = vmatpush1.bf16.msra.mxu0 0
    %5062 = vmatprep.subr.bf16.mxu0 0
    %5063 = vmatpush1.bf16.msra.mxu0 0
    %5064 = vmatprep.subr.bf16.mxu0 0
    %5065 = vmatpush1.bf16.msra.mxu0 0
    %5066 = vmatprep.subr.bf16.mxu0 0
    %5067 = vmatpush1.bf16.msra.mxu0 0
    %5068 = vmatprep.subr.bf16.mxu0 0
    %5069 = vmatpush1.bf16.msra.mxu0 0
    %5070 = vmatprep.mubr.bf16.mxu0 0
    %5071 = vmatmul.mubr.bf16.gmra.mrb[0].mxu0 0
    %v5072 = vpop.f32.mrb[0].mxu0
    %v5073 = vadd.f32 0.0, %v5072
    %v5074 = vpop.f32.mrb[0].mxu0
    %v5075 = vadd.f32 0.0, %v5074
    %v5076 = vpop.f32.mrb[0].mxu0
    %v5077 = vpop.f32.mrb[0].mxu0
    %5078 = vdwg.mxu0
    %5079 = vmatprep.subr.bf16.mxu0 %v4977
    %5080 = vmatpush1.bf16.msra.mxu0 %v4976
    %5081 = vmatprep.subr.bf16.mxu0 %v4981
    %5082 = vmatpush1.bf16.msra.mxu0 %v4980
    %5083 = vmatprep.subr.bf16.mxu0 %v4985
    %5084 = vmatpush1.bf16.msra.mxu0 %v4984
    %5085 = vmatprep.subr.bf16.mxu0 %v4989
    %5086 = vmatpush1.bf16.msra.mxu0 %v4988
    %5087 = vmatprep.subr.bf16.mxu0 %v4993
    %5088 = vmatpush1.bf16.msra.mxu0 %v4992
    %5089 = vmatprep.subr.bf16.mxu0 %v4997
    %5090 = vmatpush1.bf16.msra.mxu0 %v4996
    %5091 = vmatprep.subr.bf16.mxu0 %v5001
    %5092 = vmatpush1.bf16.msra.mxu0 %v5000
    %5093 = vmatprep.subr.bf16.mxu0 %v5005
    %5094 = vmatpush1.bf16.msra.mxu0 %v5004
    %5095 = vmatprep.subr.bf16.mxu0 0
    %5096 = vmatpush1.bf16.msra.mxu0 0
    %5097 = vmatprep.subr.bf16.mxu0 0
    %5098 = vmatpush1.bf16.msra.mxu0 0
    %5099 = vmatprep.subr.bf16.mxu0 0
    %5100 = vmatpush1.bf16.msra.mxu0 0
    %5101 = vmatprep.subr.bf16.mxu0 0
    %5102 = vmatpush1.bf16.msra.mxu0 0
    %5103 = vmatprep.subr.bf16.mxu0 0
    %5104 = vmatpush1.bf16.msra.mxu0 0
    %5105 = vmatprep.subr.bf16.mxu0 0
    %5106 = vmatpush1.bf16.msra.mxu0 0
    %5107 = vmatprep.subr.bf16.mxu0 0
    %5108 = vmatpush1.bf16.msra.mxu0 0
    %5109 = vmatprep.subr.bf16.mxu0 0
    %5110 = vmatpush1.bf16.msra.mxu0 0
    %5111 = vmatprep.mubr.bf16.mxu0 0
    %5112 = vmatmul.mubr.bf16.gmra.mrb[0].mxu0 0
    %v5113 = vpop.f32.mrb[0].mxu0
    %v5114 = vadd.f32 0.0, %v5113
    %v5115 = vpop.f32.mrb[0].mxu0
    %v5116 = vadd.f32 0.0, %v5115
    %v5117 = vpop.f32.mrb[0].mxu0
    %v5118 = vpop.f32.mrb[0].mxu0
    %5119 = vdwg.mxu0
    %v5120 = vadd.f32 %v4767, %v5073
    %v5121 = vadd.f32 %v4769, %v5075
    %v5122 = vadd.f32 %v4840, %v5114
    %v5123 = vadd.f32 %v4842, %v5116
    %v5124 = vxor.u32 %v5120, 2147483648
    %v5125 = vmul.f32 %v5124, 1.442695
    %v5126 = vpow.pop %v5125
    %v5127 = vadd.f32 %v5126, 1.0
    %v5128 = vrcp.pop %v5127
    %v5129 = vmul.f32 1.0, %v5128
    %v5130 = vxor.u32 %v5121, 2147483648
    %v5131 = vmul.f32 %v5130, 1.442695
    %v5132 = vpow.pop %v5131
    %v5133 = vadd.f32 %v5132, 1.0
    %v5134 = vrcp.pop %v5133
    %v5135 = vmul.f32 1.0, %v5134
    %v5136 = vtanh.pop %v5122
    %v5137 = vxor.u32 %v5123, 2147483648
    %v5138 = vmul.f32 %v5137, 1.442695
    %v5139 = vpow.pop %v5138
    %v5140 = vadd.f32 %v5139, 1.0
    %v5141 = vrcp.pop %v5140
    %v5142 = vmul.f32 1.0, %v5141
    %v5143 = vmul.f32 %v5135, 0.0
    %v5144 = vmul.f32 %v5129, %v5136
    %v5145 = vadd.f32 %v5143, %v5144
    %v5146 = vtanh.pop %v5145
    %v5147 = vmul.f32 %v5142, %v5146
    %5148 = vst [vmem:[#allocation2] sm:$0xff] %v5147
    %v5149 = vpack.c.bf16 %v5147, %v5147
    %5150 = vmatprep.subr.bf16.mxu0 %v4975
    %5151 = vmatpush1.bf16.msra.mxu0 %v4974
    %5152 = vmatprep.subr.bf16.mxu0 %v4979
    %5153 = vmatpush1.bf16.msra.mxu0 %v4978
    %5154 = vmatprep.subr.bf16.mxu0 %v4983
    %5155 = vmatpush1.bf16.msra.mxu0 %v4982
    %5156 = vmatprep.subr.bf16.mxu0 %v4987
    %5157 = vmatpush1.bf16.msra.mxu0 %v4986
    %5158 = vmatprep.subr.bf16.mxu0 %v4991
    %5159 = vmatpush1.bf16.msra.mxu0 %v4990
    %5160 = vmatprep.subr.bf16.mxu0 %v4995
    %5161 = vmatpush1.bf16.msra.mxu0 %v4994
    %5162 = vmatprep.subr.bf16.mxu0 %v4999
    %5163 = vmatpush1.bf16.msra.mxu0 %v4998
    %5164 = vmatprep.subr.bf16.mxu0 %v5003
    %5165 = vmatpush1.bf16.msra.mxu0 %v5002
    %5166 = vmatprep.subr.bf16.mxu0 0
    %5167 = vmatpush1.bf16.msra.mxu0 0
    %5168 = vmatprep.subr.bf16.mxu0 0
    %5169 = vmatpush1.bf16.msra.mxu0 0
    %5170 = vmatprep.subr.bf16.mxu0 0
    %5171 = vmatpush1.bf16.msra.mxu0 0
    %5172 = vmatprep.subr.bf16.mxu0 0
    %5173 = vmatpush1.bf16.msra.mxu0 0
    %5174 = vmatprep.subr.bf16.mxu0 0
    %5175 = vmatpush1.bf16.msra.mxu0 0
    %5176 = vmatprep.subr.bf16.mxu0 0
    %5177 = vmatpush1.bf16.msra.mxu0 0
    %5178 = vmatprep.subr.bf16.mxu0 0
    %5179 = vmatpush1.bf16.msra.mxu0 0
    %5180 = vmatprep.subr.bf16.mxu0 0
    %5181 = vmatpush1.bf16.msra.mxu0 0
    %5182 = vmatprep.mubr.bf16.mxu0 0
    %5183 = vmatmul.mubr.bf16.gmra.mrb[0].mxu0 %v5149
    %v5184 = vpop.f32.mrb[0].mxu0
    %v5185 = vadd.f32 0.0, %v5184
    %v5186 = vpop.f32.mrb[0].mxu0
    %v5187 = vadd.f32 0.0, %v5186
    %v5188 = vpop.f32.mrb[0].mxu0
    %v5189 = vpop.f32.mrb[0].mxu0
    %5190 = vdwg.mxu0
    %5191 = vmatprep.subr.bf16.mxu0 %v4977
    %5192 = vmatpush1.bf16.msra.mxu0 %v4976
    %5193 = vmatprep.subr.bf16.mxu0 %v4981
    %5194 = vmatpush1.bf16.msra.mxu0 %v4980
    %5195 = vmatprep.subr.bf16.mxu0 %v4985
    %5196 = vmatpush1.bf16.msra.mxu0 %v4984
    %5197 = vmatprep.subr.bf16.mxu0 %v4989
    %5198 = vmatpush1.bf16.msra.mxu0 %v4988
    %5199 = vmatprep.subr.bf16.mxu0 %v4993
    %5200 = vmatpush1.bf16.msra.mxu0 %v4992
    %5201 = vmatprep.subr.bf16.mxu0 %v4997
    %5202 = vmatpush1.bf16.msra.mxu0 %v4996
    %5203 = vmatprep.subr.bf16.mxu0 %v5001
    %5204 = vmatpush1.bf16.msra.mxu0 %v5000
    %5205 = vmatprep.subr.bf16.mxu0 %v5005
    %5206 = vmatpush1.bf16.msra.mxu0 %v5004
    %5207 = vmatprep.subr.bf16.mxu0 0
    %5208 = vmatpush1.bf16.msra.mxu0 0
    %5209 = vmatprep.subr.bf16.mxu0 0
    %5210 = vmatpush1.bf16.msra.mxu0 0
    %5211 = vmatprep.subr.bf16.mxu0 0
    %5212 = vmatpush1.bf16.msra.mxu0 0
    %5213 = vmatprep.subr.bf16.mxu0 0
    %5214 = vmatpush1.bf16.msra.mxu0 0
    %5215 = vmatprep.subr.bf16.mxu0 0
    %5216 = vmatpush1.bf16.msra.mxu0 0
    %5217 = vmatprep.subr.bf16.mxu0 0
    %5218 = vmatpush1.bf16.msra.mxu0 0
    %5219 = vmatprep.subr.bf16.mxu0 0
    %5220 = vmatpush1.bf16.msra.mxu0 0
    %5221 = vmatprep.subr.bf16.mxu0 0
    %5222 = vmatpush1.bf16.msra.mxu0 0
    %5223 = vmatprep.mubr.bf16.mxu0 0
    %5224 = vmatmul.mubr.bf16.gmra.mrb[0].mxu0 %v5149
    %v5225 = vpop.f32.mrb[0].mxu0
    %v5226 = vadd.f32 0.0, %v5225
    %v5227 = vpop.f32.mrb[0].mxu0
    %v5228 = vadd.f32 0.0, %v5227
    %v5229 = vpop.f32.mrb[0].mxu0
    %v5230 = vpop.f32.mrb[0].mxu0
    %5231 = vdwg.mxu0
    %v5232 = vadd.f32 %v4771, %v5185
    %v5233 = vadd.f32 %v4773, %v5187
    %v5234 = vadd.f32 %v4844, %v5226
    %v5235 = vadd.f32 %v4846, %v5228
    %v5236 = vxor.u32 %v5232, 2147483648
    %v5237 = vmul.f32 %v5236, 1.442695
    %v5238 = vpow.pop %v5237
    %v5239 = vadd.f32 %v5238, 1.0
    %v5240 = vrcp.pop %v5239
    %v5241 = vmul.f32 1.0, %v5240
    %v5242 = vxor.u32 %v5233, 2147483648
    %v5243 = vmul.f32 %v5242, 1.442695
    %v5244 = vpow.pop %v5243
    %v5245 = vadd.f32 %v5244, 1.0
    %v5246 = vrcp.pop %v5245
    %v5247 = vmul.f32 1.0, %v5246
    %v5248 = vtanh.pop %v5234
    %v5249 = vxor.u32 %v5235, 2147483648
    %v5250 = vmul.f32 %v5249, 1.442695
    %v5251 = vpow.pop %v5250
    %v5252 = vadd.f32 %v5251, 1.0
    %v5253 = vrcp.pop %v5252
    %v5254 = vmul.f32 1.0, %v5253
    %v5255 = vmul.f32 %v5247, %v5145
    %v5256 = vmul.f32 %v5241, %v5248
    %v5257 = vadd.f32 %v5255, %v5256
    %v5258 = vtanh.pop %v5257
    %v5259 = vmul.f32 %v5254, %v5258
    %5260 = vst [vmem:[#allocation2 + $0x8] sm:$0xff] %v5259
    %v5261 = vpack.c.bf16 %v5259, %v5259
    %5262 = vmatprep.subr.bf16.mxu0 %v4975
    %5263 = vmatpush1.bf16.msra.mxu0 %v4974
    %5264 = vmatprep.subr.bf16.mxu0 %v4979
    %5265 = vmatpush1.bf16.msra.mxu0 %v4978
    %5266 = vmatprep.subr.bf16.mxu0 %v4983
    %5267 = vmatpush1.bf16.msra.mxu0 %v4982
    %5268 = vmatprep.subr.bf16.mxu0 %v4987
    %5269 = vmatpush1.bf16.msra.mxu0 %v4986
    %5270 = vmatprep.subr.bf16.mxu0 %v4991
    %5271 = vmatpush1.bf16.msra.mxu0 %v4990
    %5272 = vmatprep.subr.bf16.mxu0 %v4995
    %5273 = vmatpush1.bf16.msra.mxu0 %v4994
    %5274 = vmatprep.subr.bf16.mxu0 %v4999
    %5275 = vmatpush1.bf16.msra.mxu0 %v4998
    %5276 = vmatprep.subr.bf16.mxu0 %v5003
    %5277 = vmatpush1.bf16.msra.mxu0 %v5002
    %5278 = vmatprep.subr.bf16.mxu0 0
    %5279 = vmatpush1.bf16.msra.mxu0 0
    %5280 = vmatprep.subr.bf16.mxu0 0
    %5281 = vmatpush1.bf16.msra.mxu0 0
    %5282 = vmatprep.subr.bf16.mxu0 0
    %5283 = vmatpush1.bf16.msra.mxu0 0
    %5284 = vmatprep.subr.bf16.mxu0 0
    %5285 = vmatpush1.bf16.msra.mxu0 0
    %5286 = vmatprep.subr.bf16.mxu0 0
    %5287 = vmatpush1.bf16.msra.mxu0 0
    %5288 = vmatprep.subr.bf16.mxu0 0
    %5289 = vmatpush1.bf16.msra.mxu0 0
    %5290 = vmatprep.subr.bf16.mxu0 0
    %5291 = vmatpush1.bf16.msra.mxu0 0
    %5292 = vmatprep.subr.bf16.mxu0 0
    %5293 = vmatpush1.bf16.msra.mxu0 0
    %5294 = vmatprep.mubr.bf16.mxu0 0
    %5295 = vmatmul.mubr.bf16.gmra.mrb[0].mxu0 %v5261
    %v5296 = vpop.f32.mrb[0].mxu0
    %v5297 = vadd.f32 0.0, %v5296
    %v5298 = vpop.f32.mrb[0].mxu0
    %v5299 = vadd.f32 0.0, %v5298
    %v5300 = vpop.f32.mrb[0].mxu0
    %v5301 = vpop.f32.mrb[0].mxu0
    %5302 = vdwg.mxu0
    %5303 = vmatprep.subr.bf16.mxu0 %v4977
    %5304 = vmatpush1.bf16.msra.mxu0 %v4976
    %5305 = vmatprep.subr.bf16.mxu0 %v4981
    %5306 = vmatpush1.bf16.msra.mxu0 %v4980
    %5307 = vmatprep.subr.bf16.mxu0 %v4985
    %5308 = vmatpush1.bf16.msra.mxu0 %v4984
    %5309 = vmatprep.subr.bf16.mxu0 %v4989
    %5310 = vmatpush1.bf16.msra.mxu0 %v4988
    %5311 = vmatprep.subr.bf16.mxu0 %v4993
    %5312 = vmatpush1.bf16.msra.mxu0 %v4992
    %5313 = vmatprep.subr.bf16.mxu0 %v4997
    %5314 = vmatpush1.bf16.msra.mxu0 %v4996
    %5315 = vmatprep.subr.bf16.mxu0 %v5001
    %5316 = vmatpush1.bf16.msra.mxu0 %v5000
    %5317 = vmatprep.subr.bf16.mxu0 %v5005
    %5318 = vmatpush1.bf16.msra.mxu0 %v5004
    %5319 = vmatprep.subr.bf16.mxu0 0
    %5320 = vmatpush1.bf16.msra.mxu0 0
    %5321 = vmatprep.subr.bf16.mxu0 0
    %5322 = vmatpush1.bf16.msra.mxu0 0
    %5323 = vmatprep.subr.bf16.mxu0 0
    %5324 = vmatpush1.bf16.msra.mxu0 0
    %5325 = vmatprep.subr.bf16.mxu0 0
    %5326 = vmatpush1.bf16.msra.mxu0 0
    %5327 = vmatprep.subr.bf16.mxu0 0
    %5328 = vmatpush1.bf16.msra.mxu0 0
    %5329 = vmatprep.subr.bf16.mxu0 0
    %5330 = vmatpush1.bf16.msra.mxu0 0
    %5331 = vmatprep.subr.bf16.mxu0 0
    %5332 = vmatpush1.bf16.msra.mxu0 0
    %5333 = vmatprep.subr.bf16.mxu0 0
    %5334 = vmatpush1.bf16.msra.mxu0 0
    %5335 = vmatprep.mubr.bf16.mxu0 0
    %5336 = vmatmul.mubr.bf16.gmra.mrb[0].mxu0 %v5261
    %v5337 = vpop.f32.mrb[0].mxu0
    %v5338 = vadd.f32 0.0, %v5337
    %v5339 = vpop.f32.mrb[0].mxu0
    %v5340 = vadd.f32 0.0, %v5339
    %v5341 = vpop.f32.mrb[0].mxu0
    %v5342 = vpop.f32.mrb[0].mxu0
    %5343 = vdwg.mxu0
    %v5344 = vadd.f32 %v4777, %v5297
    %v5345 = vadd.f32 %v4779, %v5299
    %v5346 = vadd.f32 %v4850, %v5338
    %v5347 = vadd.f32 %v4852, %v5340
    %v5348 = vxor.u32 %v5344, 2147483648
    %v5349 = vmul.f32 %v5348, 1.442695
    %v5350 = vpow.pop %v5349
    %v5351 = vadd.f32 %v5350, 1.0
    %v5352 = vrcp.pop %v5351
    %v5353 = vmul.f32 1.0, %v5352
    %v5354 = vxor.u32 %v5345, 2147483648
    %v5355 = vmul.f32 %v5354, 1.442695
    %v5356 = vpow.pop %v5355
    %v5357 = vadd.f32 %v5356, 1.0
    %v5358 = vrcp.pop %v5357
    %v5359 = vmul.f32 1.0, %v5358
    %v5360 = vtanh.pop %v5346
    %v5361 = vxor.u32 %v5347, 2147483648
    %v5362 = vmul.f32 %v5361, 1.442695
    %v5363 = vpow.pop %v5362
    %v5364 = vadd.f32 %v5363, 1.0
    %v5365 = vrcp.pop %v5364
    %v5366 = vmul.f32 1.0, %v5365
    %v5367 = vmul.f32 %v5359, %v5257
    %v5368 = vmul.f32 %v5353, %v5360
    %v5369 = vadd.f32 %v5367, %v5368
    %v5370 = vtanh.pop %v5369
    %v5371 = vmul.f32 %v5366, %v5370
    %5372 = vst [vmem:[#allocation2 + $0x10] sm:$0xff] %v5371
    %v5373 = vpack.c.bf16 %v5371, %v5371
    %5374 = vmatprep.subr.bf16.mxu0 %v4975
    %5375 = vmatpush1.bf16.msra.mxu0 %v4974
    %5376 = vmatprep.subr.bf16.mxu0 %v4979
    %5377 = vmatpush1.bf16.msra.mxu0 %v4978
    %5378 = vmatprep.subr.bf16.mxu0 %v4983
    %5379 = vmatpush1.bf16.msra.mxu0 %v4982
    %5380 = vmatprep.subr.bf16.mxu0 %v4987
    %5381 = vmatpush1.bf16.msra.mxu0 %v4986
    %5382 = vmatprep.subr.bf16.mxu0 %v4991
    %5383 = vmatpush1.bf16.msra.mxu0 %v4990
    %5384 = vmatprep.subr.bf16.mxu0 %v4995
    %5385 = vmatpush1.bf16.msra.mxu0 %v4994
    %5386 = vmatprep.subr.bf16.mxu0 %v4999
    %5387 = vmatpush1.bf16.msra.mxu0 %v4998
    %5388 = vmatprep.subr.bf16.mxu0 %v5003
    %5389 = vmatpush1.bf16.msra.mxu0 %v5002
    %5390 = vmatprep.subr.bf16.mxu0 0
    %5391 = vmatpush1.bf16.msra.mxu0 0
    %5392 = vmatprep.subr.bf16.mxu0 0
    %5393 = vmatpush1.bf16.msra.mxu0 0
    %5394 = vmatprep.subr.bf16.mxu0 0
    %5395 = vmatpush1.bf16.msra.mxu0 0
    %5396 = vmatprep.subr.bf16.mxu0 0
    %5397 = vmatpush1.bf16.msra.mxu0 0
    %5398 = vmatprep.subr.bf16.mxu0 0
    %5399 = vmatpush1.bf16.msra.mxu0 0
    %5400 = vmatprep.subr.bf16.mxu0 0
    %5401 = vmatpush1.bf16.msra.mxu0 0
    %5402 = vmatprep.subr.bf16.mxu0 0
    %5403 = vmatpush1.bf16.msra.mxu0 0
    %5404 = vmatprep.subr.bf16.mxu0 0
    %5405 = vmatpush1.bf16.msra.mxu0 0
    %5406 = vmatprep.mubr.bf16.mxu0 0
    %5407 = vmatmul.mubr.bf16.gmra.mrb[0].mxu0 %v5373
    %v5408 = vpop.f32.mrb[0].mxu0
    %v5409 = vadd.f32 0.0, %v5408
    %v5410 = vpop.f32.mrb[0].mxu0
    %v5411 = vadd.f32 0.0, %v5410
    %v5412 = vpop.f32.mrb[0].mxu0
    %v5413 = vpop.f32.mrb[0].mxu0
    %5414 = vdwg.mxu0
    %5415 = vmatprep.subr.bf16.mxu0 %v4977
    %5416 = vmatpush1.bf16.msra.mxu0 %v4976
    %5417 = vmatprep.subr.bf16.mxu0 %v4981
    %5418 = vmatpush1.bf16.msra.mxu0 %v4980
    %5419 = vmatprep.subr.bf16.mxu0 %v4985
    %5420 = vmatpush1.bf16.msra.mxu0 %v4984
    %5421 = vmatprep.subr.bf16.mxu0 %v4989
    %5422 = vmatpush1.bf16.msra.mxu0 %v4988
    %5423 = vmatprep.subr.bf16.mxu0 %v4993
    %5424 = vmatpush1.bf16.msra.mxu0 %v4992
    %5425 = vmatprep.subr.bf16.mxu0 %v4997
    %5426 = vmatpush1.bf16.msra.mxu0 %v4996
    %5427 = vmatprep.subr.bf16.mxu0 %v5001
    %5428 = vmatpush1.bf16.msra.mxu0 %v5000
    %5429 = vmatprep.subr.bf16.mxu0 %v5005
    %5430 = vmatpush1.bf16.msra.mxu0 %v5004
    %5431 = vmatprep.subr.bf16.mxu0 0
    %5432 = vmatpush1.bf16.msra.mxu0 0
    %5433 = vmatprep.subr.bf16.mxu0 0
    %5434 = vmatpush1.bf16.msra.mxu0 0
    %5435 = vmatprep.subr.bf16.mxu0 0
    %5436 = vmatpush1.bf16.msra.mxu0 0
    %5437 = vmatprep.subr.bf16.mxu0 0
    %5438 = vmatpush1.bf16.msra.mxu0 0
    %5439 = vmatprep.subr.bf16.mxu0 0
    %5440 = vmatpush1.bf16.msra.mxu0 0
    %5441 = vmatprep.subr.bf16.mxu0 0
    %5442 = vmatpush1.bf16.msra.mxu0 0
    %5443 = vmatprep.subr.bf16.mxu0 0
    %5444 = vmatpush1.bf16.msra.mxu0 0
    %5445 = vmatprep.subr.bf16.mxu0 0
    %5446 = vmatpush1.bf16.msra.mxu0 0
    %5447 = vmatprep.mubr.bf16.mxu0 0
    %5448 = vmatmul.mubr.bf16.gmra.mrb[0].mxu0 %v5373
    %v5449 = vpop.f32.mrb[0].mxu0
    %v5450 = vadd.f32 0.0, %v5449
    %v5451 = vpop.f32.mrb[0].mxu0
    %v5452 = vadd.f32 0.0, %v5451
    %v5453 = vpop.f32.mrb[0].mxu0
    %v5454 = vpop.f32.mrb[0].mxu0
    %5455 = vdwg.mxu0
    %v5456 = vadd.f32 %v4781, %v5409
    %v5457 = vadd.f32 %v4783, %v5411
    %v5458 = vadd.f32 %v4854, %v5450
    %v5459 = vadd.f32 %v4856, %v5452
    %v5460 = vxor.u32 %v5456, 2147483648
    %v5461 = vmul.f32 %v5460, 1.442695
    %v5462 = vpow.pop %v5461
    %v5463 = vadd.f32 %v5462, 1.0
    %v5464 = vrcp.pop %v5463
    %v5465 = vmul.f32 1.0, %v5464
    %v5466 = vxor.u32 %v5457, 2147483648
    %v5467 = vmul.f32 %v5466, 1.442695
    %v5468 = vpow.pop %v5467
    %v5469 = vadd.f32 %v5468, 1.0
    %v5470 = vrcp.pop %v5469
    %v5471 = vmul.f32 1.0, %v5470
    %v5472 = vtanh.pop %v5458
    %v5473 = vxor.u32 %v5459, 2147483648
    %v5474 = vmul.f32 %v5473, 1.442695
    %v5475 = vpow.pop %v5474
    %v5476 = vadd.f32 %v5475, 1.0
    %v5477 = vrcp.pop %v5476
    %v5478 = vmul.f32 1.0, %v5477
    %v5479 = vmul.f32 %v5471, %v5369
    %v5480 = vmul.f32 %v5465, %v5472
    %v5481 = vadd.f32 %v5479, %v5480
    %v5482 = vtanh.pop %v5481
    %v5483 = vmul.f32 %v5478, %v5482
    %5484 = vst [vmem:[#allocation2 + $0x18] sm:$0xff] %v5483
    %v5485 = vpack.c.bf16 %v5483, %v5483
    %5486 = vmatprep.subr.bf16.mxu0 %v4975
    %5487 = vmatpush1.bf16.msra.mxu0 %v4974
    %5488 = vmatprep.subr.bf16.mxu0 %v4979
    %5489 = vmatpush1.bf16.msra.mxu0 %v4978
    %5490 = vmatprep.subr.bf16.mxu0 %v4983
    %5491 = vmatpush1.bf16.msra.mxu0 %v4982
    %5492 = vmatprep.subr.bf16.mxu0 %v4987
    %5493 = vmatpush1.bf16.msra.mxu0 %v4986
    %5494 = vmatprep.subr.bf16.mxu0 %v4991
    %5495 = vmatpush1.bf16.msra.mxu0 %v4990
    %5496 = vmatprep.subr.bf16.mxu0 %v4995
    %5497 = vmatpush1.bf16.msra.mxu0 %v4994
    %5498 = vmatprep.subr.bf16.mxu0 %v4999
    %5499 = vmatpush1.bf16.msra.mxu0 %v4998
    %5500 = vmatprep.subr.bf16.mxu0 %v5003
    %5501 = vmatpush1.bf16.msra.mxu0 %v5002
    %5502 = vmatprep.subr.bf16.mxu0 0
    %5503 = vmatpush1.bf16.msra.mxu0 0
    %5504 = vmatprep.subr.bf16.mxu0 0
    %5505 = vmatpush1.bf16.msra.mxu0 0
    %5506 = vmatprep.subr.bf16.mxu0 0
    %5507 = vmatpush1.bf16.msra.mxu0 0
    %5508 = vmatprep.subr.bf16.mxu0 0
    %5509 = vmatpush1.bf16.msra.mxu0 0
    %5510 = vmatprep.subr.bf16.mxu0 0
    %5511 = vmatpush1.bf16.msra.mxu0 0
    %5512 = vmatprep.subr.bf16.mxu0 0
    %5513 = vmatpush1.bf16.msra.mxu0 0
    %5514 = vmatprep.subr.bf16.mxu0 0
    %5515 = vmatpush1.bf16.msra.mxu0 0
    %5516 = vmatprep.subr.bf16.mxu0 0
    %5517 = vmatpush1.bf16.msra.mxu0 0
    %5518 = vmatprep.mubr.bf16.mxu0 0
    %5519 = vmatmul.mubr.bf16.gmra.mrb[0].mxu0 %v5485
    %v5520 = vpop.f32.mrb[0].mxu0
    %v5521 = vadd.f32 0.0, %v5520
    %v5522 = vpop.f32.mrb[0].mxu0
    %v5523 = vadd.f32 0.0, %v5522
    %v5524 = vpop.f32.mrb[0].mxu0
    %v5525 = vpop.f32.mrb[0].mxu0
    %5526 = vdwg.mxu0
    %5527 = vmatprep.subr.bf16.mxu0 %v4977
    %5528 = vmatpush1.bf16.msra.mxu0 %v4976
    %5529 = vmatprep.subr.bf16.mxu0 %v4981
    %5530 = vmatpush1.bf16.msra.mxu0 %v4980
    %5531 = vmatprep.subr.bf16.mxu0 %v4985
    %5532 = vmatpush1.bf16.msra.mxu0 %v4984
    %5533 = vmatprep.subr.bf16.mxu0 %v4989
    %5534 = vmatpush1.bf16.msra.mxu0 %v4988
    %5535 = vmatprep.subr.bf16.mxu0 %v4993
    %5536 = vmatpush1.bf16.msra.mxu0 %v4992
    %5537 = vmatprep.subr.bf16.mxu0 %v4997
    %5538 = vmatpush1.bf16.msra.mxu0 %v4996
    %5539 = vmatprep.subr.bf16.mxu0 %v5001
    %5540 = vmatpush1.bf16.msra.mxu0 %v5000
    %5541 = vmatprep.subr.bf16.mxu0 %v5005
    %5542 = vmatpush1.bf16.msra.mxu0 %v5004
    %5543 = vmatprep.subr.bf16.mxu0 0
    %5544 = vmatpush1.bf16.msra.mxu0 0
    %5545 = vmatprep.subr.bf16.mxu0 0
    %5546 = vmatpush1.bf16.msra.mxu0 0
    %5547 = vmatprep.subr.bf16.mxu0 0
    %5548 = vmatpush1.bf16.msra.mxu0 0
    %5549 = vmatprep.subr.bf16.mxu0 0
    %5550 = vmatpush1.bf16.msra.mxu0 0
    %5551 = vmatprep.subr.bf16.mxu0 0
    %5552 = vmatpush1.bf16.msra.mxu0 0
    %5553 = vmatprep.subr.bf16.mxu0 0
    %5554 = vmatpush1.bf16.msra.mxu0 0
    %5555 = vmatprep.subr.bf16.mxu0 0
    %5556 = vmatpush1.bf16.msra.mxu0 0
    %5557 = vmatprep.subr.bf16.mxu0 0
    %5558 = vmatpush1.bf16.msra.mxu0 0
    %5559 = vmatprep.mubr.bf16.mxu0 0
    %5560 = vmatmul.mubr.bf16.gmra.mrb[0].mxu0 %v5485
    %v5561 = vpop.f32.mrb[0].mxu0
    %v5562 = vadd.f32 0.0, %v5561
    %v5563 = vpop.f32.mrb[0].mxu0
    %v5564 = vadd.f32 0.0, %v5563
    %v5565 = vpop.f32.mrb[0].mxu0
    %v5566 = vpop.f32.mrb[0].mxu0
    %5567 = vdwg.mxu0
    %v5568 = vadd.f32 %v4787, %v5521
    %v5569 = vadd.f32 %v4789, %v5523
    %v5570 = vadd.f32 %v4860, %v5562
    %v5571 = vadd.f32 %v4862, %v5564
    %v5572 = vxor.u32 %v5568, 2147483648
    %v5573 = vmul.f32 %v5572, 1.442695
    %v5574 = vpow.pop %v5573
    %v5575 = vadd.f32 %v5574, 1.0
    %v5576 = vrcp.pop %v5575
    %v5577 = vmul.f32 1.0, %v5576
    %v5578 = vxor.u32 %v5569, 2147483648
    %v5579 = vmul.f32 %v5578, 1.442695
    %v5580 = vpow.pop %v5579
    %v5581 = vadd.f32 %v5580, 1.0
    %v5582 = vrcp.pop %v5581
    %v5583 = vmul.f32 1.0, %v5582
    %v5584 = vtanh.pop %v5570
    %v5585 = vxor.u32 %v5571, 2147483648
    %v5586 = vmul.f32 %v5585, 1.442695
    %v5587 = vpow.pop %v5586
    %v5588 = vadd.f32 %v5587, 1.0
    %v5589 = vrcp.pop %v5588
    %v5590 = vmul.f32 1.0, %v5589
    %v5591 = vmul.f32 %v5583, %v5481
    %v5592 = vmul.f32 %v5577, %v5584
    %v5593 = vadd.f32 %v5591, %v5592
    %v5594 = vtanh.pop %v5593
    %v5595 = vmul.f32 %v5590, %v5594
    %5596 = vst [vmem:[#allocation2 + $0x20] sm:$0xff] %v5595
    %v5597 = vpack.c.bf16 %v5595, %v5595
    %5598 = vmatprep.subr.bf16.mxu0 %v4975
    %5599 = vmatpush1.bf16.msra.mxu0 %v4974
    %5600 = vmatprep.subr.bf16.mxu0 %v4979
    %5601 = vmatpush1.bf16.msra.mxu0 %v4978
    %5602 = vmatprep.subr.bf16.mxu0 %v4983
    %5603 = vmatpush1.bf16.msra.mxu0 %v4982
    %5604 = vmatprep.subr.bf16.mxu0 %v4987
    %5605 = vmatpush1.bf16.msra.mxu0 %v4986
    %5606 = vmatprep.subr.bf16.mxu0 %v4991
    %5607 = vmatpush1.bf16.msra.mxu0 %v4990
    %5608 = vmatprep.subr.bf16.mxu0 %v4995
    %5609 = vmatpush1.bf16.msra.mxu0 %v4994
    %5610 = vmatprep.subr.bf16.mxu0 %v4999
    %5611 = vmatpush1.bf16.msra.mxu0 %v4998
    %5612 = vmatprep.subr.bf16.mxu0 %v5003
    %5613 = vmatpush1.bf16.msra.mxu0 %v5002
    %5614 = vmatprep.subr.bf16.mxu0 0
    %5615 = vmatpush1.bf16.msra.mxu0 0
    %5616 = vmatprep.subr.bf16.mxu0 0
    %5617 = vmatpush1.bf16.msra.mxu0 0
    %5618 = vmatprep.subr.bf16.mxu0 0
    %5619 = vmatpush1.bf16.msra.mxu0 0
    %5620 = vmatprep.subr.bf16.mxu0 0
    %5621 = vmatpush1.bf16.msra.mxu0 0
    %5622 = vmatprep.subr.bf16.mxu0 0
    %5623 = vmatpush1.bf16.msra.mxu0 0
    %5624 = vmatprep.subr.bf16.mxu0 0
    %5625 = vmatpush1.bf16.msra.mxu0 0
    %5626 = vmatprep.subr.bf16.mxu0 0
    %5627 = vmatpush1.bf16.msra.mxu0 0
    %5628 = vmatprep.subr.bf16.mxu0 0
    %5629 = vmatpush1.bf16.msra.mxu0 0
    %5630 = vmatprep.mubr.bf16.mxu0 0
    %5631 = vmatmul.mubr.bf16.gmra.mrb[0].mxu0 %v5597
    %v5632 = vpop.f32.mrb[0].mxu0
    %v5633 = vadd.f32 0.0, %v5632
    %v5634 = vpop.f32.mrb[0].mxu0
    %v5635 = vadd.f32 0.0, %v5634
    %v5636 = vpop.f32.mrb[0].mxu0
    %v5637 = vpop.f32.mrb[0].mxu0
    %5638 = vdwg.mxu0
    %5639 = vmatprep.subr.bf16.mxu0 %v4977
    %5640 = vmatpush1.bf16.msra.mxu0 %v4976
    %5641 = vmatprep.subr.bf16.mxu0 %v4981
    %5642 = vmatpush1.bf16.msra.mxu0 %v4980
    %5643 = vmatprep.subr.bf16.mxu0 %v4985
    %5644 = vmatpush1.bf16.msra.mxu0 %v4984
    %5645 = vmatprep.subr.bf16.mxu0 %v4989
    %5646 = vmatpush1.bf16.msra.mxu0 %v4988
    %5647 = vmatprep.subr.bf16.mxu0 %v4993
    %5648 = vmatpush1.bf16.msra.mxu0 %v4992
    %5649 = vmatprep.subr.bf16.mxu0 %v4997
    %5650 = vmatpush1.bf16.msra.mxu0 %v4996
    %5651 = vmatprep.subr.bf16.mxu0 %v5001
    %5652 = vmatpush1.bf16.msra.mxu0 %v5000
    %5653 = vmatprep.subr.bf16.mxu0 %v5005
    %5654 = vmatpush1.bf16.msra.mxu0 %v5004
    %5655 = vmatprep.subr.bf16.mxu0 0
    %5656 = vmatpush1.bf16.msra.mxu0 0
    %5657 = vmatprep.subr.bf16.mxu0 0
    %5658 = vmatpush1.bf16.msra.mxu0 0
    %5659 = vmatprep.subr.bf16.mxu0 0
    %5660 = vmatpush1.bf16.msra.mxu0 0
    %5661 = vmatprep.subr.bf16.mxu0 0
    %5662 = vmatpush1.bf16.msra.mxu0 0
    %5663 = vmatprep.subr.bf16.mxu0 0
    %5664 = vmatpush1.bf16.msra.mxu0 0
    %5665 = vmatprep.subr.bf16.mxu0 0
    %5666 = vmatpush1.bf16.msra.mxu0 0
    %5667 = vmatprep.subr.bf16.mxu0 0
    %5668 = vmatpush1.bf16.msra.mxu0 0
    %5669 = vmatprep.subr.bf16.mxu0 0
    %5670 = vmatpush1.bf16.msra.mxu0 0
    %5671 = vmatprep.mubr.bf16.mxu0 0
    %5672 = vmatmul.mubr.bf16.gmra.mrb[0].mxu0 %v5597
    %v5673 = vpop.f32.mrb[0].mxu0
    %v5674 = vadd.f32 0.0, %v5673
    %v5675 = vpop.f32.mrb[0].mxu0
    %v5676 = vadd.f32 0.0, %v5675
    %v5677 = vpop.f32.mrb[0].mxu0
    %v5678 = vpop.f32.mrb[0].mxu0
    %5679 = vdwg.mxu0
    %v5680 = vadd.f32 %v4791, %v5633
    %v5681 = vadd.f32 %v4793, %v5635
    %v5682 = vadd.f32 %v4864, %v5674
    %v5683 = vadd.f32 %v4866, %v5676
    %v5684 = vxor.u32 %v5680, 2147483648
    %v5685 = vmul.f32 %v5684, 1.442695
    %v5686 = vpow.pop %v5685
    %v5687 = vadd.f32 %v5686, 1.0
    %v5688 = vrcp.pop %v5687
    %v5689 = vmul.f32 1.0, %v5688
    %v5690 = vxor.u32 %v5681, 2147483648
    %v5691 = vmul.f32 %v5690, 1.442695
    %v5692 = vpow.pop %v5691
    %v5693 = vadd.f32 %v5692, 1.0
    %v5694 = vrcp.pop %v5693
    %v5695 = vmul.f32 1.0, %v5694
    %v5696 = vtanh.pop %v5682
    %v5697 = vxor.u32 %v5683, 2147483648
    %v5698 = vmul.f32 %v5697, 1.442695
    %v5699 = vpow.pop %v5698
    %v5700 = vadd.f32 %v5699, 1.0
    %v5701 = vrcp.pop %v5700
    %v5702 = vmul.f32 1.0, %v5701
    %v5703 = vmul.f32 %v5695, %v5593
    %v5704 = vmul.f32 %v5689, %v5696
    %v5705 = vadd.f32 %v5703, %v5704
    %v5706 = vtanh.pop %v5705
    %v5707 = vmul.f32 %v5702, %v5706
    %5708 = vst [vmem:[#allocation2 + $0x28] sm:$0xff] %v5707
    %v5709 = vpack.c.bf16 %v5707, %v5707
    %5710 = vmatprep.subr.bf16.mxu0 %v4975
    %5711 = vmatpush1.bf16.msra.mxu0 %v4974
    %5712 = vmatprep.subr.bf16.mxu0 %v4979
    %5713 = vmatpush1.bf16.msra.mxu0 %v4978
    %5714 = vmatprep.subr.bf16.mxu0 %v4983
    %5715 = vmatpush1.bf16.msra.mxu0 %v4982
    %5716 = vmatprep.subr.bf16.mxu0 %v4987
    %5717 = vmatpush1.bf16.msra.mxu0 %v4986
    %5718 = vmatprep.subr.bf16.mxu0 %v4991
    %5719 = vmatpush1.bf16.msra.mxu0 %v4990
    %5720 = vmatprep.subr.bf16.mxu0 %v4995
    %5721 = vmatpush1.bf16.msra.mxu0 %v4994
    %5722 = vmatprep.subr.bf16.mxu0 %v4999
    %5723 = vmatpush1.bf16.msra.mxu0 %v4998
    %5724 = vmatprep.subr.bf16.mxu0 %v5003
    %5725 = vmatpush1.bf16.msra.mxu0 %v5002
    %5726 = vmatprep.subr.bf16.mxu0 0
    %5727 = vmatpush1.bf16.msra.mxu0 0
    %5728 = vmatprep.subr.bf16.mxu0 0
    %5729 = vmatpush1.bf16.msra.mxu0 0
    %5730 = vmatprep.subr.bf16.mxu0 0
    %5731 = vmatpush1.bf16.msra.mxu0 0
    %5732 = vmatprep.subr.bf16.mxu0 0
    %5733 = vmatpush1.bf16.msra.mxu0 0
    %5734 = vmatprep.subr.bf16.mxu0 0
    %5735 = vmatpush1.bf16.msra.mxu0 0
    %5736 = vmatprep.subr.bf16.mxu0 0
    %5737 = vmatpush1.bf16.msra.mxu0 0
    %5738 = vmatprep.subr.bf16.mxu0 0
    %5739 = vmatpush1.bf16.msra.mxu0 0
    %5740 = vmatprep.subr.bf16.mxu0 0
    %5741 = vmatpush1.bf16.msra.mxu0 0
    %5742 = vmatprep.mubr.bf16.mxu0 0
    %5743 = vmatmul.mubr.bf16.gmra.mrb[0].mxu0 %v5709
    %v5744 = vpop.f32.mrb[0].mxu0
    %v5745 = vadd.f32 0.0, %v5744
    %v5746 = vpop.f32.mrb[0].mxu0
    %v5747 = vadd.f32 0.0, %v5746
    %v5748 = vpop.f32.mrb[0].mxu0
    %v5749 = vpop.f32.mrb[0].mxu0
    %5750 = vdwg.mxu0
    %5751 = vmatprep.subr.bf16.mxu0 %v4977
    %5752 = vmatpush1.bf16.msra.mxu0 %v4976
    %5753 = vmatprep.subr.bf16.mxu0 %v4981
    %5754 = vmatpush1.bf16.msra.mxu0 %v4980
    %5755 = vmatprep.subr.bf16.mxu0 %v4985
    %5756 = vmatpush1.bf16.msra.mxu0 %v4984
    %5757 = vmatprep.subr.bf16.mxu0 %v4989
    %5758 = vmatpush1.bf16.msra.mxu0 %v4988
    %5759 = vmatprep.subr.bf16.mxu0 %v4993
    %5760 = vmatpush1.bf16.msra.mxu0 %v4992
    %5761 = vmatprep.subr.bf16.mxu0 %v4997
    %5762 = vmatpush1.bf16.msra.mxu0 %v4996
    %5763 = vmatprep.subr.bf16.mxu0 %v5001
    %5764 = vmatpush1.bf16.msra.mxu0 %v5000
    %5765 = vmatprep.subr.bf16.mxu0 %v5005
    %5766 = vmatpush1.bf16.msra.mxu0 %v5004
    %5767 = vmatprep.subr.bf16.mxu0 0
    %5768 = vmatpush1.bf16.msra.mxu0 0
    %5769 = vmatprep.subr.bf16.mxu0 0
    %5770 = vmatpush1.bf16.msra.mxu0 0
    %5771 = vmatprep.subr.bf16.mxu0 0
    %5772 = vmatpush1.bf16.msra.mxu0 0
    %5773 = vmatprep.subr.bf16.mxu0 0
    %5774 = vmatpush1.bf16.msra.mxu0 0
    %5775 = vmatprep.subr.bf16.mxu0 0
    %5776 = vmatpush1.bf16.msra.mxu0 0
    %5777 = vmatprep.subr.bf16.mxu0 0
    %5778 = vmatpush1.bf16.msra.mxu0 0
    %5779 = vmatprep.subr.bf16.mxu0 0
    %5780 = vmatpush1.bf16.msra.mxu0 0
    %5781 = vmatprep.subr.bf16.mxu0 0
    %5782 = vmatpush1.bf16.msra.mxu0 0
    %5783 = vmatprep.mubr.bf16.mxu0 0
    %5784 = vmatmul.mubr.bf16.gmra.mrb[0].mxu0 %v5709
    %v5785 = vpop.f32.mrb[0].mxu0
    %v5786 = vadd.f32 0.0, %v5785
    %v5787 = vpop.f32.mrb[0].mxu0
    %v5788 = vadd.f32 0.0, %v5787
    %v5789 = vpop.f32.mrb[0].mxu0
    %v5790 = vpop.f32.mrb[0].mxu0
    %5791 = vdwg.mxu0
    %v5792 = vadd.f32 %v4797, %v5745
    %v5793 = vadd.f32 %v4799, %v5747
    %v5794 = vadd.f32 %v4870, %v5786
    %v5795 = vadd.f32 %v4872, %v5788
    %v5796 = vxor.u32 %v5792, 2147483648
    %v5797 = vmul.f32 %v5796, 1.442695
    %v5798 = vpow.pop %v5797
    %v5799 = vadd.f32 %v5798, 1.0
    %v5800 = vrcp.pop %v5799
    %v5801 = vmul.f32 1.0, %v5800
    %v5802 = vxor.u32 %v5793, 2147483648
    %v5803 = vmul.f32 %v5802, 1.442695
    %v5804 = vpow.pop %v5803
    %v5805 = vadd.f32 %v5804, 1.0
    %v5806 = vrcp.pop %v5805
    %v5807 = vmul.f32 1.0, %v5806
    %v5808 = vtanh.pop %v5794
    %v5809 = vxor.u32 %v5795, 2147483648
    %v5810 = vmul.f32 %v5809, 1.442695
    %v5811 = vpow.pop %v5810
    %v5812 = vadd.f32 %v5811, 1.0
    %v5813 = vrcp.pop %v5812
    %v5814 = vmul.f32 1.0, %v5813
    %v5815 = vmul.f32 %v5807, %v5705
    %v5816 = vmul.f32 %v5801, %v5808
    %v5817 = vadd.f32 %v5815, %v5816
    %v5818 = vtanh.pop %v5817
    %v5819 = vmul.f32 %v5814, %v5818
    %5820 = vst [vmem:[#allocation2 + $0x30] sm:$0xff] %v5819
    %v5821 = vpack.c.bf16 %v5819, %v5819
    %5822 = vmatprep.subr.bf16.mxu0 %v4975
    %5823 = vmatpush1.bf16.msra.mxu0 %v4974
    %5824 = vmatprep.subr.bf16.mxu0 %v4979
    %5825 = vmatpush1.bf16.msra.mxu0 %v4978
    %5826 = vmatprep.subr.bf16.mxu0 %v4983
    %5827 = vmatpush1.bf16.msra.mxu0 %v4982
    %5828 = vmatprep.subr.bf16.mxu0 %v4987
    %5829 = vmatpush1.bf16.msra.mxu0 %v4986
    %5830 = vmatprep.subr.bf16.mxu0 %v4991
    %5831 = vmatpush1.bf16.msra.mxu0 %v4990
    %5832 = vmatprep.subr.bf16.mxu0 %v4995
    %5833 = vmatpush1.bf16.msra.mxu0 %v4994
    %5834 = vmatprep.subr.bf16.mxu0 %v4999
    %5835 = vmatpush1.bf16.msra.mxu0 %v4998
    %5836 = vmatprep.subr.bf16.mxu0 %v5003
    %5837 = vmatpush1.bf16.msra.mxu0 %v5002
    %5838 = vmatprep.subr.bf16.mxu0 0
    %5839 = vmatpush1.bf16.msra.mxu0 0
    %5840 = vmatprep.subr.bf16.mxu0 0
    %5841 = vmatpush1.bf16.msra.mxu0 0
    %5842 = vmatprep.subr.bf16.mxu0 0
    %5843 = vmatpush1.bf16.msra.mxu0 0
    %5844 = vmatprep.subr.bf16.mxu0 0
    %5845 = vmatpush1.bf16.msra.mxu0 0
    %5846 = vmatprep.subr.bf16.mxu0 0
    %5847 = vmatpush1.bf16.msra.mxu0 0
    %5848 = vmatprep.subr.bf16.mxu0 0
    %5849 = vmatpush1.bf16.msra.mxu0 0
    %5850 = vmatprep.subr.bf16.mxu0 0
    %5851 = vmatpush1.bf16.msra.mxu0 0
    %5852 = vmatprep.subr.bf16.mxu0 0
    %5853 = vmatpush1.bf16.msra.mxu0 0
    %5854 = vmatprep.mubr.bf16.mxu0 0
    %5855 = vmatmul.mubr.bf16.gmra.mrb[0].mxu0 %v5821
    %v5856 = vpop.f32.mrb[0].mxu0
    %v5857 = vadd.f32 0.0, %v5856
    %v5858 = vpop.f32.mrb[0].mxu0
    %v5859 = vadd.f32 0.0, %v5858
    %v5860 = vpop.f32.mrb[0].mxu0
    %v5861 = vpop.f32.mrb[0].mxu0
    %5862 = vdwg.mxu0
    %5863 = vmatprep.subr.bf16.mxu0 %v4977
    %5864 = vmatpush1.bf16.msra.mxu0 %v4976
    %5865 = vmatprep.subr.bf16.mxu0 %v4981
    %5866 = vmatpush1.bf16.msra.mxu0 %v4980
    %5867 = vmatprep.subr.bf16.mxu0 %v4985
    %5868 = vmatpush1.bf16.msra.mxu0 %v4984
    %5869 = vmatprep.subr.bf16.mxu0 %v4989
    %5870 = vmatpush1.bf16.msra.mxu0 %v4988
    %5871 = vmatprep.subr.bf16.mxu0 %v4993
    %5872 = vmatpush1.bf16.msra.mxu0 %v4992
    %5873 = vmatprep.subr.bf16.mxu0 %v4997
    %5874 = vmatpush1.bf16.msra.mxu0 %v4996
    %5875 = vmatprep.subr.bf16.mxu0 %v5001
    %5876 = vmatpush1.bf16.msra.mxu0 %v5000
    %5877 = vmatprep.subr.bf16.mxu0 %v5005
    %5878 = vmatpush1.bf16.msra.mxu0 %v5004
    %5879 = vmatprep.subr.bf16.mxu0 0
    %5880 = vmatpush1.bf16.msra.mxu0 0
    %5881 = vmatprep.subr.bf16.mxu0 0
    %5882 = vmatpush1.bf16.msra.mxu0 0
    %5883 = vmatprep.subr.bf16.mxu0 0
    %5884 = vmatpush1.bf16.msra.mxu0 0
    %5885 = vmatprep.subr.bf16.mxu0 0
    %5886 = vmatpush1.bf16.msra.mxu0 0
    %5887 = vmatprep.subr.bf16.mxu0 0
    %5888 = vmatpush1.bf16.msra.mxu0 0
    %5889 = vmatprep.subr.bf16.mxu0 0
    %5890 = vmatpush1.bf16.msra.mxu0 0
    %5891 = vmatprep.subr.bf16.mxu0 0
    %5892 = vmatpush1.bf16.msra.mxu0 0
    %5893 = vmatprep.subr.bf16.mxu0 0
    %5894 = vmatpush1.bf16.msra.mxu0 0
    %5895 = vmatprep.mubr.bf16.mxu0 0
    %5896 = vmatmul.mubr.bf16.gmra.mrb[0].mxu0 %v5821
    %v5897 = vpop.f32.mrb[0].mxu0
    %v5898 = vadd.f32 0.0, %v5897
    %v5899 = vpop.f32.mrb[0].mxu0
    %v5900 = vadd.f32 0.0, %v5899
    %v5901 = vpop.f32.mrb[0].mxu0
    %v5902 = vpop.f32.mrb[0].mxu0
    %5903 = vdwg.mxu0
    %v5904 = vadd.f32 %v4801, %v5857
    %v5905 = vadd.f32 %v4803, %v5859
    %v5906 = vadd.f32 %v4874, %v5898
    %v5907 = vadd.f32 %v4876, %v5900
    %v5908 = vxor.u32 %v5904, 2147483648
    %v5909 = vmul.f32 %v5908, 1.442695
    %v5910 = vpow.pop %v5909
    %v5911 = vadd.f32 %v5910, 1.0
    %v5912 = vrcp.pop %v5911
    %v5913 = vmul.f32 1.0, %v5912
    %v5914 = vxor.u32 %v5905, 2147483648
    %v5915 = vmul.f32 %v5914, 1.442695
    %v5916 = vpow.pop %v5915
    %v5917 = vadd.f32 %v5916, 1.0
    %v5918 = vrcp.pop %v5917
    %v5919 = vmul.f32 1.0, %v5918
    %v5920 = vtanh.pop %v5906
    %v5921 = vxor.u32 %v5907, 2147483648
    %v5922 = vmul.f32 %v5921, 1.442695
    %v5923 = vpow.pop %v5922
    %v5924 = vadd.f32 %v5923, 1.0
    %v5925 = vrcp.pop %v5924
    %v5926 = vmul.f32 1.0, %v5925
    %v5927 = vmul.f32 %v5919, %v5817
    %v5928 = vmul.f32 %v5913, %v5920
    %v5929 = vadd.f32 %v5927, %v5928
    %v5930 = vtanh.pop %v5929
    %v5931 = vmul.f32 %v5926, %v5930
    %5932 = vst [vmem:[#allocation2 + $0x38] sm:$0xff] %v5931
    %s5933 = scalar_lea.vmem [#allocation12], 24
    %5934 = vst [vmem:[%s5933] sm:$0xff] %v5931
    %s5935 = scalar_lea.vmem [#allocation14], 24
    %5936 = vst [vmem:[%s5935] sm:$0xff] %v5929
    %s5937 = scalar_lea.vmem [#allocation6], 1024
    %v5938 = vld [vmem:[%s5937] sm:$0xff]
    %v5939 = vld [vmem:[%s5937 + $0x8] sm:$0xff]
    %v5940 = vld [vmem:[%s5937 + $0x10] sm:$0xff]
    %v5941 = vld [vmem:[%s5937 + $0x18] sm:$0xff]
    %v5942 = vld [vmem:[%s5937 + $0x20] sm:$0xff]
    %v5943 = vld [vmem:[%s5937 + $0x28] sm:$0xff]
    %v5944 = vld [vmem:[%s5937 + $0x30] sm:$0xff]
    %v5945 = vld [vmem:[%s5937 + $0x38] sm:$0xff]
    %v5946 = vld [vmem:[%s5937 + $0x40] sm:$0xff]
    %v5947 = vld [vmem:[%s5937 + $0x48] sm:$0xff]
    %v5948 = vld [vmem:[%s5937 + $0x50] sm:$0xff]
    %v5949 = vld [vmem:[%s5937 + $0x58] sm:$0xff]
    %v5950 = vld [vmem:[%s5937 + $0x60] sm:$0xff]
    %v5951 = vld [vmem:[%s5937 + $0x68] sm:$0xff]
    %v5952 = vld [vmem:[%s5937 + $0x70] sm:$0xff]
    %v5953 = vld [vmem:[%s5937 + $0x78] sm:$0xff]
    %v5954 = vld [vmem:[%s5937 + $0x80] sm:$0xff]
    %v5955 = vld [vmem:[%s5937 + $0x88] sm:$0xff]
    %v5956 = vld [vmem:[%s5937 + $0x90] sm:$0xff]
    %v5957 = vld [vmem:[%s5937 + $0x98] sm:$0xff]
    %v5958 = vld [vmem:[%s5937 + $0xa0] sm:$0xff]
    %v5959 = vld [vmem:[%s5937 + $0xa8] sm:$0xff]
    %v5960 = vld [vmem:[%s5937 + $0xb0] sm:$0xff]
    %v5961 = vld [vmem:[%s5937 + $0xb8] sm:$0xff]
    %v5962 = vld [vmem:[%s5937 + $0xc0] sm:$0xff]
    %v5963 = vld [vmem:[%s5937 + $0xc8] sm:$0xff]
    %v5964 = vld [vmem:[%s5937 + $0xd0] sm:$0xff]
    %v5965 = vld [vmem:[%s5937 + $0xd8] sm:$0xff]
    %v5966 = vld [vmem:[%s5937 + $0xe0] sm:$0xff]
    %v5967 = vld [vmem:[%s5937 + $0xe8] sm:$0xff]
    %v5968 = vld [vmem:[%s5937 + $0xf0] sm:$0xff]
    %v5969 = vld [vmem:[%s5937 + $0xf8] sm:$0xff]
    %s5970 = scalar_lea.vmem [#allocation8], 1024
    %v5971 = vld [vmem:[%s5970] sm:$0xff]
    %v5972 = vld [vmem:[%s5970 + $0x8] sm:$0xff]
    %v5973 = vld [vmem:[%s5970 + $0x10] sm:$0xff]
    %v5974 = vld [vmem:[%s5970 + $0x18] sm:$0xff]
    %v5975 = vld [vmem:[%s5970 + $0x20] sm:$0xff]
    %v5976 = vld [vmem:[%s5970 + $0x28] sm:$0xff]
    %v5977 = vld [vmem:[%s5970 + $0x30] sm:$0xff]
    %v5978 = vld [vmem:[%s5970 + $0x38] sm:$0xff]
    %v5979 = vld [vmem:[%s5970 + $0x40] sm:$0xff]
    %v5980 = vld [vmem:[%s5970 + $0x48] sm:$0xff]
    %v5981 = vld [vmem:[%s5970 + $0x50] sm:$0xff]
    %v5982 = vld [vmem:[%s5970 + $0x58] sm:$0xff]
    %v5983 = vld [vmem:[%s5970 + $0x60] sm:$0xff]
    %v5984 = vld [vmem:[%s5970 + $0x68] sm:$0xff]
    %v5985 = vld [vmem:[%s5970 + $0x70] sm:$0xff]
    %v5986 = vld [vmem:[%s5970 + $0x78] sm:$0xff]
    %v5987 = vld [vmem:[%s5970 + $0x80] sm:$0xff]
    %v5988 = vld [vmem:[%s5970 + $0x88] sm:$0xff]
    %v5989 = vld [vmem:[%s5970 + $0x90] sm:$0xff]
    %v5990 = vld [vmem:[%s5970 + $0x98] sm:$0xff]
    %v5991 = vld [vmem:[%s5970 + $0xa0] sm:$0xff]
    %v5992 = vld [vmem:[%s5970 + $0xa8] sm:$0xff]
    %v5993 = vld [vmem:[%s5970 + $0xb0] sm:$0xff]
    %v5994 = vld [vmem:[%s5970 + $0xb8] sm:$0xff]
    %v5995 = vld [vmem:[%s5970 + $0xc0] sm:$0xff]
    %v5996 = vld [vmem:[%s5970 + $0xc8] sm:$0xff]
    %v5997 = vld [vmem:[%s5970 + $0xd0] sm:$0xff]
    %v5998 = vld [vmem:[%s5970 + $0xd8] sm:$0xff]
    %v5999 = vld [vmem:[%s5970 + $0xe0] sm:$0xff]
    %v6000 = vld [vmem:[%s5970 + $0xe8] sm:$0xff]
    %v6001 = vld [vmem:[%s5970 + $0xf0] sm:$0xff]
    %v6002 = vld [vmem:[%s5970 + $0xf8] sm:$0xff]
    %s6003 = scalar_lea.vmem [#allocation9], 16
    %v6004 = vld [vmem:[%s6003] sm:$0xf]
    %v6005 = vld [vmem:[#allocation2] sm:$0xff]
    %v6006 = vld [vmem:[#allocation2 + $0x8] sm:$0xff]
    %v6007 = vld [vmem:[#allocation2 + $0x10] sm:$0xff]
    %v6008 = vld [vmem:[#allocation2 + $0x18] sm:$0xff]
    %v6009 = vld [vmem:[#allocation2 + $0x20] sm:$0xff]
    %v6010 = vld [vmem:[#allocation2 + $0x28] sm:$0xff]
    %v6011 = vld [vmem:[#allocation2 + $0x30] sm:$0xff]
    %v6012 = vld [vmem:[#allocation2 + $0x38] sm:$0xff]
    %v6013 = vpack.c.bf16 %v6006, %v6005
    %v6014 = vpack.c.bf16 %v6008, %v6007
    %v6015 = vpack.c.bf16 %v6010, %v6009
    %v6016 = vpack.c.bf16 %v6012, %v6011
    %v6018 = vlaneseq
    %v6019 = vshrl.u32 %v6018, 7
    %v6020 = vsub.s32 0, %v6019
    %v6021 = vrot.slane %v6004, %v6020
    %v6022 = vlaneseq
    %v6023 = vshrl.u32 %v6022, 7
    %v6024 = vsub.s32 1, %v6023
    %v6025 = vrot.slane %v6004, %v6024
    %v6026 = vlaneseq
    %v6027 = vshrl.u32 %v6026, 7
    %v6028 = vsub.s32 2, %v6027
    %v6029 = vrot.slane %v6004, %v6028
    %v6030 = vlaneseq
    %v6031 = vshrl.u32 %v6030, 7
    %v6032 = vsub.s32 3, %v6031
    %v6033 = vrot.slane %v6004, %v6032
    %v6070 = vunpack.c.l.b16 %v5938
    %v6071 = vunpack.c.h.b16 %v5938
    %v6072 = vunpack.c.l.b16 %v5939
    %v6073 = vunpack.c.h.b16 %v5939
    %v6074 = vunpack.c.l.b16 %v5940
    %v6075 = vunpack.c.h.b16 %v5940
    %v6076 = vunpack.c.l.b16 %v5941
    %v6077 = vunpack.c.h.b16 %v5941
    %v6078 = vunpack.c.l.b16 %v5942
    %v6079 = vunpack.c.h.b16 %v5942
    %v6080 = vunpack.c.l.b16 %v5943
    %v6081 = vunpack.c.h.b16 %v5943
    %v6082 = vunpack.c.l.b16 %v5944
    %v6083 = vunpack.c.h.b16 %v5944
    %v6084 = vunpack.c.l.b16 %v5945
    %v6085 = vunpack.c.h.b16 %v5945
    %v6086 = vunpack.c.l.b16 %v5946
    %v6087 = vunpack.c.h.b16 %v5946
    %v6088 = vunpack.c.l.b16 %v5947
    %v6089 = vunpack.c.h.b16 %v5947
    %v6090 = vunpack.c.l.b16 %v5948
    %v6091 = vunpack.c.h.b16 %v5948
    %v6092 = vunpack.c.l.b16 %v5949
    %v6093 = vunpack.c.h.b16 %v5949
    %v6094 = vunpack.c.l.b16 %v5950
    %v6095 = vunpack.c.h.b16 %v5950
    %v6096 = vunpack.c.l.b16 %v5951
    %v6097 = vunpack.c.h.b16 %v5951
    %v6098 = vunpack.c.l.b16 %v5952
    %v6099 = vunpack.c.h.b16 %v5952
    %v6100 = vunpack.c.l.b16 %v5953
    %v6101 = vunpack.c.h.b16 %v5953
    %v6102 = vunpack.c.l.b16 %v5954
    %v6103 = vunpack.c.h.b16 %v5954
    %v6104 = vunpack.c.l.b16 %v5955
    %v6105 = vunpack.c.h.b16 %v5955
    %v6106 = vunpack.c.l.b16 %v5956
    %v6107 = vunpack.c.h.b16 %v5956
    %v6108 = vunpack.c.l.b16 %v5957
    %v6109 = vunpack.c.h.b16 %v5957
    %v6110 = vunpack.c.l.b16 %v5958
    %v6111 = vunpack.c.h.b16 %v5958
    %v6112 = vunpack.c.l.b16 %v5959
    %v6113 = vunpack.c.h.b16 %v5959
    %v6114 = vunpack.c.l.b16 %v5960
    %v6115 = vunpack.c.h.b16 %v5960
    %v6116 = vunpack.c.l.b16 %v5961
    %v6117 = vunpack.c.h.b16 %v5961
    %v6118 = vunpack.c.l.b16 %v5962
    %v6119 = vunpack.c.h.b16 %v5962
    %v6120 = vunpack.c.l.b16 %v5963
    %v6121 = vunpack.c.h.b16 %v5963
    %v6122 = vunpack.c.l.b16 %v5964
    %v6123 = vunpack.c.h.b16 %v5964
    %v6124 = vunpack.c.l.b16 %v5965
    %v6125 = vunpack.c.h.b16 %v5965
    %v6126 = vunpack.c.l.b16 %v5966
    %v6127 = vunpack.c.h.b16 %v5966
    %v6128 = vunpack.c.l.b16 %v5967
    %v6129 = vunpack.c.h.b16 %v5967
    %v6130 = vunpack.c.l.b16 %v5968
    %v6131 = vunpack.c.h.b16 %v5968
    %v6132 = vunpack.c.l.b16 %v5969
    %v6133 = vunpack.c.h.b16 %v5969
    %v6134 = vpack.c.b16 %v6074, %v6070
    %v6135 = vpack.c.b16 %v6075, %v6071
    %v6136 = vpack.c.b16 %v6076, %v6072
    %v6137 = vpack.c.b16 %v6077, %v6073
    %v6138 = vpack.c.b16 %v6082, %v6078
    %v6139 = vpack.c.b16 %v6083, %v6079
    %v6140 = vpack.c.b16 %v6084, %v6080
    %v6141 = vpack.c.b16 %v6085, %v6081
    %v6142 = vpack.c.b16 %v6090, %v6086
    %v6143 = vpack.c.b16 %v6091, %v6087
    %v6144 = vpack.c.b16 %v6092, %v6088
    %v6145 = vpack.c.b16 %v6093, %v6089
    %v6146 = vpack.c.b16 %v6098, %v6094
    %v6147 = vpack.c.b16 %v6099, %v6095
    %v6148 = vpack.c.b16 %v6100, %v6096
    %v6149 = vpack.c.b16 %v6101, %v6097
    %v6150 = vpack.c.b16 %v6106, %v6102
    %v6151 = vpack.c.b16 %v6107, %v6103
    %v6152 = vpack.c.b16 %v6108, %v6104
    %v6153 = vpack.c.b16 %v6109, %v6105
    %v6154 = vpack.c.b16 %v6114, %v6110
    %v6155 = vpack.c.b16 %v6115, %v6111
    %v6156 = vpack.c.b16 %v6116, %v6112
    %v6157 = vpack.c.b16 %v6117, %v6113
    %v6158 = vpack.c.b16 %v6122, %v6118
    %v6159 = vpack.c.b16 %v6123, %v6119
    %v6160 = vpack.c.b16 %v6124, %v6120
    %v6161 = vpack.c.b16 %v6125, %v6121
    %v6162 = vpack.c.b16 %v6130, %v6126
    %v6163 = vpack.c.b16 %v6131, %v6127
    %v6164 = vpack.c.b16 %v6132, %v6128
    %v6165 = vpack.c.b16 %v6133, %v6129
    %6198 = vmatprep.subr.bf16.mxu0 %v6135
    %6199 = vmatpush1.bf16.msra.mxu0 %v6134
    %6200 = vmatprep.subr.bf16.mxu0 %v6139
    %6201 = vmatpush1.bf16.msra.mxu0 %v6138
    %6202 = vmatprep.subr.bf16.mxu0 %v6143
    %6203 = vmatpush1.bf16.msra.mxu0 %v6142
    %6204 = vmatprep.subr.bf16.mxu0 %v6147
    %6205 = vmatpush1.bf16.msra.mxu0 %v6146
    %6206 = vmatprep.subr.bf16.mxu0 %v6151
    %6207 = vmatpush1.bf16.msra.mxu0 %v6150
    %6208 = vmatprep.subr.bf16.mxu0 %v6155
    %6209 = vmatpush1.bf16.msra.mxu0 %v6154
    %6210 = vmatprep.subr.bf16.mxu0 %v6159
    %6211 = vmatpush1.bf16.msra.mxu0 %v6158
    %6212 = vmatprep.subr.bf16.mxu0 %v6163
    %6213 = vmatpush1.bf16.msra.mxu0 %v6162
    %6214 = vmatprep.subr.bf16.mxu0 0
    %6215 = vmatpush1.bf16.msra.mxu0 0
    %6216 = vmatprep.subr.bf16.mxu0 0
    %6217 = vmatpush1.bf16.msra.mxu0 0
    %6218 = vmatprep.subr.bf16.mxu0 0
    %6219 = vmatpush1.bf16.msra.mxu0 0
    %6220 = vmatprep.subr.bf16.mxu0 0
    %6221 = vmatpush1.bf16.msra.mxu0 0
    %6222 = vmatprep.subr.bf16.mxu0 0
    %6223 = vmatpush1.bf16.msra.mxu0 0
    %6224 = vmatprep.subr.bf16.mxu0 0
    %6225 = vmatpush1.bf16.msra.mxu0 0
    %6226 = vmatprep.subr.bf16.mxu0 0
    %6227 = vmatpush1.bf16.msra.mxu0 0
    %6228 = vmatprep.subr.bf16.mxu0 0
    %6229 = vmatpush1.bf16.msra.mxu0 0
    %6230 = vmatprep.mubr.bf16.mxu0 0
    %6231 = vmatmul.mubr.bf16.gmra.mrb[0].mxu0 %v6013
    %v6232 = vpop.f32.mrb[0].mxu0
    %v6233 = vadd.f32 %v6021, %v6232
    %v6234 = vpop.f32.mrb[0].mxu0
    %v6235 = vadd.f32 %v6025, %v6234
    %v6236 = vpop.f32.mrb[0].mxu0
    %v6237 = vadd.f32 %v6021, %v6236
    %v6238 = vpop.f32.mrb[0].mxu0
    %v6239 = vadd.f32 %v6025, %v6238
    %6240 = vmatprep.mubr.bf16.mxu0 0
    %6241 = vmatmul.mubr.bf16.gmra.mrb[0].mxu0 %v6014
    %v6242 = vpop.f32.mrb[0].mxu0
    %v6243 = vadd.f32 %v6021, %v6242
    %v6244 = vpop.f32.mrb[0].mxu0
    %v6245 = vadd.f32 %v6025, %v6244
    %v6246 = vpop.f32.mrb[0].mxu0
    %v6247 = vadd.f32 %v6021, %v6246
    %v6248 = vpop.f32.mrb[0].mxu0
    %v6249 = vadd.f32 %v6025, %v6248
    %6250 = vmatprep.mubr.bf16.mxu0 0
    %6251 = vmatmul.mubr.bf16.gmra.mrb[0].mxu0 %v6015
    %v6252 = vpop.f32.mrb[0].mxu0
    %v6253 = vadd.f32 %v6021, %v6252
    %v6254 = vpop.f32.mrb[0].mxu0
    %v6255 = vadd.f32 %v6025, %v6254
    %v6256 = vpop.f32.mrb[0].mxu0
    %v6257 = vadd.f32 %v6021, %v6256
    %v6258 = vpop.f32.mrb[0].mxu0
    %v6259 = vadd.f32 %v6025, %v6258
    %6260 = vmatprep.mubr.bf16.mxu0 0
    %6261 = vmatmul.mubr.bf16.gmra.mrb[0].mxu0 %v6016
    %v6262 = vpop.f32.mrb[0].mxu0
    %v6263 = vadd.f32 %v6021, %v6262
    %v6264 = vpop.f32.mrb[0].mxu0
    %v6265 = vadd.f32 %v6025, %v6264
    %v6266 = vpop.f32.mrb[0].mxu0
    %v6267 = vadd.f32 %v6021, %v6266
    %v6268 = vpop.f32.mrb[0].mxu0
    %v6269 = vadd.f32 %v6025, %v6268
    %6270 = vdwg.mxu0
    %6271 = vmatprep.subr.bf16.mxu0 %v6137
    %6272 = vmatpush1.bf16.msra.mxu0 %v6136
    %6273 = vmatprep.subr.bf16.mxu0 %v6141
    %6274 = vmatpush1.bf16.msra.mxu0 %v6140
    %6275 = vmatprep.subr.bf16.mxu0 %v6145
    %6276 = vmatpush1.bf16.msra.mxu0 %v6144
    %6277 = vmatprep.subr.bf16.mxu0 %v6149
    %6278 = vmatpush1.bf16.msra.mxu0 %v6148
    %6279 = vmatprep.subr.bf16.mxu0 %v6153
    %6280 = vmatpush1.bf16.msra.mxu0 %v6152
    %6281 = vmatprep.subr.bf16.mxu0 %v6157
    %6282 = vmatpush1.bf16.msra.mxu0 %v6156
    %6283 = vmatprep.subr.bf16.mxu0 %v6161
    %6284 = vmatpush1.bf16.msra.mxu0 %v6160
    %6285 = vmatprep.subr.bf16.mxu0 %v6165
    %6286 = vmatpush1.bf16.msra.mxu0 %v6164
    %6287 = vmatprep.subr.bf16.mxu0 0
    %6288 = vmatpush1.bf16.msra.mxu0 0
    %6289 = vmatprep.subr.bf16.mxu0 0
    %6290 = vmatpush1.bf16.msra.mxu0 0
    %6291 = vmatprep.subr.bf16.mxu0 0
    %6292 = vmatpush1.bf16.msra.mxu0 0
    %6293 = vmatprep.subr.bf16.mxu0 0
    %6294 = vmatpush1.bf16.msra.mxu0 0
    %6295 = vmatprep.subr.bf16.mxu0 0
    %6296 = vmatpush1.bf16.msra.mxu0 0
    %6297 = vmatprep.subr.bf16.mxu0 0
    %6298 = vmatpush1.bf16.msra.mxu0 0
    %6299 = vmatprep.subr.bf16.mxu0 0
    %6300 = vmatpush1.bf16.msra.mxu0 0
    %6301 = vmatprep.subr.bf16.mxu0 0
    %6302 = vmatpush1.bf16.msra.mxu0 0
    %6303 = vmatprep.mubr.bf16.mxu0 0
    %6304 = vmatmul.mubr.bf16.gmra.mrb[0].mxu0 %v6013
    %v6305 = vpop.f32.mrb[0].mxu0
    %v6306 = vadd.f32 %v6029, %v6305
    %v6307 = vpop.f32.mrb[0].mxu0
    %v6308 = vadd.f32 %v6033, %v6307
    %v6309 = vpop.f32.mrb[0].mxu0
    %v6310 = vadd.f32 %v6029, %v6309
    %v6311 = vpop.f32.mrb[0].mxu0
    %v6312 = vadd.f32 %v6033, %v6311
    %6313 = vmatprep.mubr.bf16.mxu0 0
    %6314 = vmatmul.mubr.bf16.gmra.mrb[0].mxu0 %v6014
    %v6315 = vpop.f32.mrb[0].mxu0
    %v6316 = vadd.f32 %v6029, %v6315
    %v6317 = vpop.f32.mrb[0].mxu0
    %v6318 = vadd.f32 %v6033, %v6317
    %v6319 = vpop.f32.mrb[0].mxu0
    %v6320 = vadd.f32 %v6029, %v6319
    %v6321 = vpop.f32.mrb[0].mxu0
    %v6322 = vadd.f32 %v6033, %v6321
    %6323 = vmatprep.mubr.bf16.mxu0 0
    %6324 = vmatmul.mubr.bf16.gmra.mrb[0].mxu0 %v6015
    %v6325 = vpop.f32.mrb[0].mxu0
    %v6326 = vadd.f32 %v6029, %v6325
    %v6327 = vpop.f32.mrb[0].mxu0
    %v6328 = vadd.f32 %v6033, %v6327
    %v6329 = vpop.f32.mrb[0].mxu0
    %v6330 = vadd.f32 %v6029, %v6329
    %v6331 = vpop.f32.mrb[0].mxu0
    %v6332 = vadd.f32 %v6033, %v6331
    %6333 = vmatprep.mubr.bf16.mxu0 0
    %6334 = vmatmul.mubr.bf16.gmra.mrb[0].mxu0 %v6016
    %v6335 = vpop.f32.mrb[0].mxu0
    %v6336 = vadd.f32 %v6029, %v6335
    %v6337 = vpop.f32.mrb[0].mxu0
    %v6338 = vadd.f32 %v6033, %v6337
    %v6339 = vpop.f32.mrb[0].mxu0
    %v6340 = vadd.f32 %v6029, %v6339
    %v6341 = vpop.f32.mrb[0].mxu0
    %v6342 = vadd.f32 %v6033, %v6341
    %6343 = vdwg.mxu0
    %v6376 = vunpack.c.l.b16 %v5971
    %v6377 = vunpack.c.h.b16 %v5971
    %v6378 = vunpack.c.l.b16 %v5972
    %v6379 = vunpack.c.h.b16 %v5972
    %v6380 = vunpack.c.l.b16 %v5973
    %v6381 = vunpack.c.h.b16 %v5973
    %v6382 = vunpack.c.l.b16 %v5974
    %v6383 = vunpack.c.h.b16 %v5974
    %v6384 = vunpack.c.l.b16 %v5975
    %v6385 = vunpack.c.h.b16 %v5975
    %v6386 = vunpack.c.l.b16 %v5976
    %v6387 = vunpack.c.h.b16 %v5976
    %v6388 = vunpack.c.l.b16 %v5977
    %v6389 = vunpack.c.h.b16 %v5977
    %v6390 = vunpack.c.l.b16 %v5978
    %v6391 = vunpack.c.h.b16 %v5978
    %v6392 = vunpack.c.l.b16 %v5979
    %v6393 = vunpack.c.h.b16 %v5979
    %v6394 = vunpack.c.l.b16 %v5980
    %v6395 = vunpack.c.h.b16 %v5980
    %v6396 = vunpack.c.l.b16 %v5981
    %v6397 = vunpack.c.h.b16 %v5981
    %v6398 = vunpack.c.l.b16 %v5982
    %v6399 = vunpack.c.h.b16 %v5982
    %v6400 = vunpack.c.l.b16 %v5983
    %v6401 = vunpack.c.h.b16 %v5983
    %v6402 = vunpack.c.l.b16 %v5984
    %v6403 = vunpack.c.h.b16 %v5984
    %v6404 = vunpack.c.l.b16 %v5985
    %v6405 = vunpack.c.h.b16 %v5985
    %v6406 = vunpack.c.l.b16 %v5986
    %v6407 = vunpack.c.h.b16 %v5986
    %v6408 = vunpack.c.l.b16 %v5987
    %v6409 = vunpack.c.h.b16 %v5987
    %v6410 = vunpack.c.l.b16 %v5988
    %v6411 = vunpack.c.h.b16 %v5988
    %v6412 = vunpack.c.l.b16 %v5989
    %v6413 = vunpack.c.h.b16 %v5989
    %v6414 = vunpack.c.l.b16 %v5990
    %v6415 = vunpack.c.h.b16 %v5990
    %v6416 = vunpack.c.l.b16 %v5991
    %v6417 = vunpack.c.h.b16 %v5991
    %v6418 = vunpack.c.l.b16 %v5992
    %v6419 = vunpack.c.h.b16 %v5992
    %v6420 = vunpack.c.l.b16 %v5993
    %v6421 = vunpack.c.h.b16 %v5993
    %v6422 = vunpack.c.l.b16 %v5994
    %v6423 = vunpack.c.h.b16 %v5994
    %v6424 = vunpack.c.l.b16 %v5995
    %v6425 = vunpack.c.h.b16 %v5995
    %v6426 = vunpack.c.l.b16 %v5996
    %v6427 = vunpack.c.h.b16 %v5996
    %v6428 = vunpack.c.l.b16 %v5997
    %v6429 = vunpack.c.h.b16 %v5997
    %v6430 = vunpack.c.l.b16 %v5998
    %v6431 = vunpack.c.h.b16 %v5998
    %v6432 = vunpack.c.l.b16 %v5999
    %v6433 = vunpack.c.h.b16 %v5999
    %v6434 = vunpack.c.l.b16 %v6000
    %v6435 = vunpack.c.h.b16 %v6000
    %v6436 = vunpack.c.l.b16 %v6001
    %v6437 = vunpack.c.h.b16 %v6001
    %v6438 = vunpack.c.l.b16 %v6002
    %v6439 = vunpack.c.h.b16 %v6002
    %v6440 = vpack.c.b16 %v6380, %v6376
    %v6441 = vpack.c.b16 %v6381, %v6377
    %v6442 = vpack.c.b16 %v6382, %v6378
    %v6443 = vpack.c.b16 %v6383, %v6379
    %v6444 = vpack.c.b16 %v6388, %v6384
    %v6445 = vpack.c.b16 %v6389, %v6385
    %v6446 = vpack.c.b16 %v6390, %v6386
    %v6447 = vpack.c.b16 %v6391, %v6387
    %v6448 = vpack.c.b16 %v6396, %v6392
    %v6449 = vpack.c.b16 %v6397, %v6393
    %v6450 = vpack.c.b16 %v6398, %v6394
    %v6451 = vpack.c.b16 %v6399, %v6395
    %v6452 = vpack.c.b16 %v6404, %v6400
    %v6453 = vpack.c.b16 %v6405, %v6401
    %v6454 = vpack.c.b16 %v6406, %v6402
    %v6455 = vpack.c.b16 %v6407, %v6403
    %v6456 = vpack.c.b16 %v6412, %v6408
    %v6457 = vpack.c.b16 %v6413, %v6409
    %v6458 = vpack.c.b16 %v6414, %v6410
    %v6459 = vpack.c.b16 %v6415, %v6411
    %v6460 = vpack.c.b16 %v6420, %v6416
    %v6461 = vpack.c.b16 %v6421, %v6417
    %v6462 = vpack.c.b16 %v6422, %v6418
    %v6463 = vpack.c.b16 %v6423, %v6419
    %v6464 = vpack.c.b16 %v6428, %v6424
    %v6465 = vpack.c.b16 %v6429, %v6425
    %v6466 = vpack.c.b16 %v6430, %v6426
    %v6467 = vpack.c.b16 %v6431, %v6427
    %v6468 = vpack.c.b16 %v6436, %v6432
    %v6469 = vpack.c.b16 %v6437, %v6433
    %v6470 = vpack.c.b16 %v6438, %v6434
    %v6471 = vpack.c.b16 %v6439, %v6435
    %6504 = vmatprep.subr.bf16.mxu0 %v6441
    %6505 = vmatpush1.bf16.msra.mxu0 %v6440
    %6506 = vmatprep.subr.bf16.mxu0 %v6445
    %6507 = vmatpush1.bf16.msra.mxu0 %v6444
    %6508 = vmatprep.subr.bf16.mxu0 %v6449
    %6509 = vmatpush1.bf16.msra.mxu0 %v6448
    %6510 = vmatprep.subr.bf16.mxu0 %v6453
    %6511 = vmatpush1.bf16.msra.mxu0 %v6452
    %6512 = vmatprep.subr.bf16.mxu0 %v6457
    %6513 = vmatpush1.bf16.msra.mxu0 %v6456
    %6514 = vmatprep.subr.bf16.mxu0 %v6461
    %6515 = vmatpush1.bf16.msra.mxu0 %v6460
    %6516 = vmatprep.subr.bf16.mxu0 %v6465
    %6517 = vmatpush1.bf16.msra.mxu0 %v6464
    %6518 = vmatprep.subr.bf16.mxu0 %v6469
    %6519 = vmatpush1.bf16.msra.mxu0 %v6468
    %6520 = vmatprep.subr.bf16.mxu0 0
    %6521 = vmatpush1.bf16.msra.mxu0 0
    %6522 = vmatprep.subr.bf16.mxu0 0
    %6523 = vmatpush1.bf16.msra.mxu0 0
    %6524 = vmatprep.subr.bf16.mxu0 0
    %6525 = vmatpush1.bf16.msra.mxu0 0
    %6526 = vmatprep.subr.bf16.mxu0 0
    %6527 = vmatpush1.bf16.msra.mxu0 0
    %6528 = vmatprep.subr.bf16.mxu0 0
    %6529 = vmatpush1.bf16.msra.mxu0 0
    %6530 = vmatprep.subr.bf16.mxu0 0
    %6531 = vmatpush1.bf16.msra.mxu0 0
    %6532 = vmatprep.subr.bf16.mxu0 0
    %6533 = vmatpush1.bf16.msra.mxu0 0
    %6534 = vmatprep.subr.bf16.mxu0 0
    %6535 = vmatpush1.bf16.msra.mxu0 0
    %6536 = vmatprep.mubr.bf16.mxu0 0
    %6537 = vmatmul.mubr.bf16.gmra.mrb[0].mxu0 0
    %v6538 = vpop.f32.mrb[0].mxu0
    %v6539 = vadd.f32 0.0, %v6538
    %v6540 = vpop.f32.mrb[0].mxu0
    %v6541 = vadd.f32 0.0, %v6540
    %v6542 = vpop.f32.mrb[0].mxu0
    %v6543 = vpop.f32.mrb[0].mxu0
    %6544 = vdwg.mxu0
    %6545 = vmatprep.subr.bf16.mxu0 %v6443
    %6546 = vmatpush1.bf16.msra.mxu0 %v6442
    %6547 = vmatprep.subr.bf16.mxu0 %v6447
    %6548 = vmatpush1.bf16.msra.mxu0 %v6446
    %6549 = vmatprep.subr.bf16.mxu0 %v6451
    %6550 = vmatpush1.bf16.msra.mxu0 %v6450
    %6551 = vmatprep.subr.bf16.mxu0 %v6455
    %6552 = vmatpush1.bf16.msra.mxu0 %v6454
    %6553 = vmatprep.subr.bf16.mxu0 %v6459
    %6554 = vmatpush1.bf16.msra.mxu0 %v6458
    %6555 = vmatprep.subr.bf16.mxu0 %v6463
    %6556 = vmatpush1.bf16.msra.mxu0 %v6462
    %6557 = vmatprep.subr.bf16.mxu0 %v6467
    %6558 = vmatpush1.bf16.msra.mxu0 %v6466
    %6559 = vmatprep.subr.bf16.mxu0 %v6471
    %6560 = vmatpush1.bf16.msra.mxu0 %v6470
    %6561 = vmatprep.subr.bf16.mxu0 0
    %6562 = vmatpush1.bf16.msra.mxu0 0
    %6563 = vmatprep.subr.bf16.mxu0 0
    %6564 = vmatpush1.bf16.msra.mxu0 0
    %6565 = vmatprep.subr.bf16.mxu0 0
    %6566 = vmatpush1.bf16.msra.mxu0 0
    %6567 = vmatprep.subr.bf16.mxu0 0
    %6568 = vmatpush1.bf16.msra.mxu0 0
    %6569 = vmatprep.subr.bf16.mxu0 0
    %6570 = vmatpush1.bf16.msra.mxu0 0
    %6571 = vmatprep.subr.bf16.mxu0 0
    %6572 = vmatpush1.bf16.msra.mxu0 0
    %6573 = vmatprep.subr.bf16.mxu0 0
    %6574 = vmatpush1.bf16.msra.mxu0 0
    %6575 = vmatprep.subr.bf16.mxu0 0
    %6576 = vmatpush1.bf16.msra.mxu0 0
    %6577 = vmatprep.mubr.bf16.mxu0 0
    %6578 = vmatmul.mubr.bf16.gmra.mrb[0].mxu0 0
    %v6579 = vpop.f32.mrb[0].mxu0
    %v6580 = vadd.f32 0.0, %v6579
    %v6581 = vpop.f32.mrb[0].mxu0
    %v6582 = vadd.f32 0.0, %v6581
    %v6583 = vpop.f32.mrb[0].mxu0
    %v6584 = vpop.f32.mrb[0].mxu0
    %6585 = vdwg.mxu0
    %v6586 = vadd.f32 %v6233, %v6539
    %v6587 = vadd.f32 %v6235, %v6541
    %v6588 = vadd.f32 %v6306, %v6580
    %v6589 = vadd.f32 %v6308, %v6582
    %v6590 = vxor.u32 %v6586, 2147483648
    %v6591 = vmul.f32 %v6590, 1.442695
    %v6592 = vpow.pop %v6591
    %v6593 = vadd.f32 %v6592, 1.0
    %v6594 = vrcp.pop %v6593
    %v6595 = vmul.f32 1.0, %v6594
    %v6596 = vxor.u32 %v6587, 2147483648
    %v6597 = vmul.f32 %v6596, 1.442695
    %v6598 = vpow.pop %v6597
    %v6599 = vadd.f32 %v6598, 1.0
    %v6600 = vrcp.pop %v6599
    %v6601 = vmul.f32 1.0, %v6600
    %v6602 = vtanh.pop %v6588
    %v6603 = vxor.u32 %v6589, 2147483648
    %v6604 = vmul.f32 %v6603, 1.442695
    %v6605 = vpow.pop %v6604
    %v6606 = vadd.f32 %v6605, 1.0
    %v6607 = vrcp.pop %v6606
    %v6608 = vmul.f32 1.0, %v6607
    %v6609 = vmul.f32 %v6601, 0.0
    %v6610 = vmul.f32 %v6595, %v6602
    %v6611 = vadd.f32 %v6609, %v6610
    %v6612 = vtanh.pop %v6611
    %v6613 = vmul.f32 %v6608, %v6612
    %6614 = vst [vmem:[#allocation11] sm:$0xff] %v6613
    %v6615 = vpack.c.bf16 %v6613, %v6613
    %6616 = vmatprep.subr.bf16.mxu0 %v6441
    %6617 = vmatpush1.bf16.msra.mxu0 %v6440
    %6618 = vmatprep.subr.bf16.mxu0 %v6445
    %6619 = vmatpush1.bf16.msra.mxu0 %v6444
    %6620 = vmatprep.subr.bf16.mxu0 %v6449
    %6621 = vmatpush1.bf16.msra.mxu0 %v6448
    %6622 = vmatprep.subr.bf16.mxu0 %v6453
    %6623 = vmatpush1.bf16.msra.mxu0 %v6452
    %6624 = vmatprep.subr.bf16.mxu0 %v6457
    %6625 = vmatpush1.bf16.msra.mxu0 %v6456
    %6626 = vmatprep.subr.bf16.mxu0 %v6461
    %6627 = vmatpush1.bf16.msra.mxu0 %v6460
    %6628 = vmatprep.subr.bf16.mxu0 %v6465
    %6629 = vmatpush1.bf16.msra.mxu0 %v6464
    %6630 = vmatprep.subr.bf16.mxu0 %v6469
    %6631 = vmatpush1.bf16.msra.mxu0 %v6468
    %6632 = vmatprep.subr.bf16.mxu0 0
    %6633 = vmatpush1.bf16.msra.mxu0 0
    %6634 = vmatprep.subr.bf16.mxu0 0
    %6635 = vmatpush1.bf16.msra.mxu0 0
    %6636 = vmatprep.subr.bf16.mxu0 0
    %6637 = vmatpush1.bf16.msra.mxu0 0
    %6638 = vmatprep.subr.bf16.mxu0 0
    %6639 = vmatpush1.bf16.msra.mxu0 0
    %6640 = vmatprep.subr.bf16.mxu0 0
    %6641 = vmatpush1.bf16.msra.mxu0 0
    %6642 = vmatprep.subr.bf16.mxu0 0
    %6643 = vmatpush1.bf16.msra.mxu0 0
    %6644 = vmatprep.subr.bf16.mxu0 0
    %6645 = vmatpush1.bf16.msra.mxu0 0
    %6646 = vmatprep.subr.bf16.mxu0 0
    %6647 = vmatpush1.bf16.msra.mxu0 0
    %6648 = vmatprep.mubr.bf16.mxu0 0
    %6649 = vmatmul.mubr.bf16.gmra.mrb[0].mxu0 %v6615
    %v6650 = vpop.f32.mrb[0].mxu0
    %v6651 = vadd.f32 0.0, %v6650
    %v6652 = vpop.f32.mrb[0].mxu0
    %v6653 = vadd.f32 0.0, %v6652
    %v6654 = vpop.f32.mrb[0].mxu0
    %v6655 = vpop.f32.mrb[0].mxu0
    %6656 = vdwg.mxu0
    %6657 = vmatprep.subr.bf16.mxu0 %v6443
    %6658 = vmatpush1.bf16.msra.mxu0 %v6442
    %6659 = vmatprep.subr.bf16.mxu0 %v6447
    %6660 = vmatpush1.bf16.msra.mxu0 %v6446
    %6661 = vmatprep.subr.bf16.mxu0 %v6451
    %6662 = vmatpush1.bf16.msra.mxu0 %v6450
    %6663 = vmatprep.subr.bf16.mxu0 %v6455
    %6664 = vmatpush1.bf16.msra.mxu0 %v6454
    %6665 = vmatprep.subr.bf16.mxu0 %v6459
    %6666 = vmatpush1.bf16.msra.mxu0 %v6458
    %6667 = vmatprep.subr.bf16.mxu0 %v6463
    %6668 = vmatpush1.bf16.msra.mxu0 %v6462
    %6669 = vmatprep.subr.bf16.mxu0 %v6467
    %6670 = vmatpush1.bf16.msra.mxu0 %v6466
    %6671 = vmatprep.subr.bf16.mxu0 %v6471
    %6672 = vmatpush1.bf16.msra.mxu0 %v6470
    %6673 = vmatprep.subr.bf16.mxu0 0
    %6674 = vmatpush1.bf16.msra.mxu0 0
    %6675 = vmatprep.subr.bf16.mxu0 0
    %6676 = vmatpush1.bf16.msra.mxu0 0
    %6677 = vmatprep.subr.bf16.mxu0 0
    %6678 = vmatpush1.bf16.msra.mxu0 0
    %6679 = vmatprep.subr.bf16.mxu0 0
    %6680 = vmatpush1.bf16.msra.mxu0 0
    %6681 = vmatprep.subr.bf16.mxu0 0
    %6682 = vmatpush1.bf16.msra.mxu0 0
    %6683 = vmatprep.subr.bf16.mxu0 0
    %6684 = vmatpush1.bf16.msra.mxu0 0
    %6685 = vmatprep.subr.bf16.mxu0 0
    %6686 = vmatpush1.bf16.msra.mxu0 0
    %6687 = vmatprep.subr.bf16.mxu0 0
    %6688 = vmatpush1.bf16.msra.mxu0 0
    %6689 = vmatprep.mubr.bf16.mxu0 0
    %6690 = vmatmul.mubr.bf16.gmra.mrb[0].mxu0 %v6615
    %v6691 = vpop.f32.mrb[0].mxu0
    %v6692 = vadd.f32 0.0, %v6691
    %v6693 = vpop.f32.mrb[0].mxu0
    %v6694 = vadd.f32 0.0, %v6693
    %v6695 = vpop.f32.mrb[0].mxu0
    %v6696 = vpop.f32.mrb[0].mxu0
    %6697 = vdwg.mxu0
    %v6698 = vadd.f32 %v6237, %v6651
    %v6699 = vadd.f32 %v6239, %v6653
    %v6700 = vadd.f32 %v6310, %v6692
    %v6701 = vadd.f32 %v6312, %v6694
    %v6702 = vxor.u32 %v6698, 2147483648
    %v6703 = vmul.f32 %v6702, 1.442695
    %v6704 = vpow.pop %v6703
    %v6705 = vadd.f32 %v6704, 1.0
    %v6706 = vrcp.pop %v6705
    %v6707 = vmul.f32 1.0, %v6706
    %v6708 = vxor.u32 %v6699, 2147483648
    %v6709 = vmul.f32 %v6708, 1.442695
    %v6710 = vpow.pop %v6709
    %v6711 = vadd.f32 %v6710, 1.0
    %v6712 = vrcp.pop %v6711
    %v6713 = vmul.f32 1.0, %v6712
    %v6714 = vtanh.pop %v6700
    %v6715 = vxor.u32 %v6701, 2147483648
    %v6716 = vmul.f32 %v6715, 1.442695
    %v6717 = vpow.pop %v6716
    %v6718 = vadd.f32 %v6717, 1.0
    %v6719 = vrcp.pop %v6718
    %v6720 = vmul.f32 1.0, %v6719
    %v6721 = vmul.f32 %v6713, %v6611
    %v6722 = vmul.f32 %v6707, %v6714
    %v6723 = vadd.f32 %v6721, %v6722
    %v6724 = vtanh.pop %v6723
    %v6725 = vmul.f32 %v6720, %v6724
    %6726 = vst [vmem:[#allocation11 + $0x8] sm:$0xff] %v6725
    %v6727 = vpack.c.bf16 %v6725, %v6725
    %6728 = vmatprep.subr.bf16.mxu0 %v6441
    %6729 = vmatpush1.bf16.msra.mxu0 %v6440
    %6730 = vmatprep.subr.bf16.mxu0 %v6445
    %6731 = vmatpush1.bf16.msra.mxu0 %v6444
    %6732 = vmatprep.subr.bf16.mxu0 %v6449
    %6733 = vmatpush1.bf16.msra.mxu0 %v6448
    %6734 = vmatprep.subr.bf16.mxu0 %v6453
    %6735 = vmatpush1.bf16.msra.mxu0 %v6452
    %6736 = vmatprep.subr.bf16.mxu0 %v6457
    %6737 = vmatpush1.bf16.msra.mxu0 %v6456
    %6738 = vmatprep.subr.bf16.mxu0 %v6461
    %6739 = vmatpush1.bf16.msra.mxu0 %v6460
    %6740 = vmatprep.subr.bf16.mxu0 %v6465
    %6741 = vmatpush1.bf16.msra.mxu0 %v6464
    %6742 = vmatprep.subr.bf16.mxu0 %v6469
    %6743 = vmatpush1.bf16.msra.mxu0 %v6468
    %6744 = vmatprep.subr.bf16.mxu0 0
    %6745 = vmatpush1.bf16.msra.mxu0 0
    %6746 = vmatprep.subr.bf16.mxu0 0
    %6747 = vmatpush1.bf16.msra.mxu0 0
    %6748 = vmatprep.subr.bf16.mxu0 0
    %6749 = vmatpush1.bf16.msra.mxu0 0
    %6750 = vmatprep.subr.bf16.mxu0 0
    %6751 = vmatpush1.bf16.msra.mxu0 0
    %6752 = vmatprep.subr.bf16.mxu0 0
    %6753 = vmatpush1.bf16.msra.mxu0 0
    %6754 = vmatprep.subr.bf16.mxu0 0
    %6755 = vmatpush1.bf16.msra.mxu0 0
    %6756 = vmatprep.subr.bf16.mxu0 0
    %6757 = vmatpush1.bf16.msra.mxu0 0
    %6758 = vmatprep.subr.bf16.mxu0 0
    %6759 = vmatpush1.bf16.msra.mxu0 0
    %6760 = vmatprep.mubr.bf16.mxu0 0
    %6761 = vmatmul.mubr.bf16.gmra.mrb[0].mxu0 %v6727
    %v6762 = vpop.f32.mrb[0].mxu0
    %v6763 = vadd.f32 0.0, %v6762
    %v6764 = vpop.f32.mrb[0].mxu0
    %v6765 = vadd.f32 0.0, %v6764
    %v6766 = vpop.f32.mrb[0].mxu0
    %v6767 = vpop.f32.mrb[0].mxu0
    %6768 = vdwg.mxu0
    %6769 = vmatprep.subr.bf16.mxu0 %v6443
    %6770 = vmatpush1.bf16.msra.mxu0 %v6442
    %6771 = vmatprep.subr.bf16.mxu0 %v6447
    %6772 = vmatpush1.bf16.msra.mxu0 %v6446
    %6773 = vmatprep.subr.bf16.mxu0 %v6451
    %6774 = vmatpush1.bf16.msra.mxu0 %v6450
    %6775 = vmatprep.subr.bf16.mxu0 %v6455
    %6776 = vmatpush1.bf16.msra.mxu0 %v6454
    %6777 = vmatprep.subr.bf16.mxu0 %v6459
    %6778 = vmatpush1.bf16.msra.mxu0 %v6458
    %6779 = vmatprep.subr.bf16.mxu0 %v6463
    %6780 = vmatpush1.bf16.msra.mxu0 %v6462
    %6781 = vmatprep.subr.bf16.mxu0 %v6467
    %6782 = vmatpush1.bf16.msra.mxu0 %v6466
    %6783 = vmatprep.subr.bf16.mxu0 %v6471
    %6784 = vmatpush1.bf16.msra.mxu0 %v6470
    %6785 = vmatprep.subr.bf16.mxu0 0
    %6786 = vmatpush1.bf16.msra.mxu0 0
    %6787 = vmatprep.subr.bf16.mxu0 0
    %6788 = vmatpush1.bf16.msra.mxu0 0
    %6789 = vmatprep.subr.bf16.mxu0 0
    %6790 = vmatpush1.bf16.msra.mxu0 0
    %6791 = vmatprep.subr.bf16.mxu0 0
    %6792 = vmatpush1.bf16.msra.mxu0 0
    %6793 = vmatprep.subr.bf16.mxu0 0
    %6794 = vmatpush1.bf16.msra.mxu0 0
    %6795 = vmatprep.subr.bf16.mxu0 0
    %6796 = vmatpush1.bf16.msra.mxu0 0
    %6797 = vmatprep.subr.bf16.mxu0 0
    %6798 = vmatpush1.bf16.msra.mxu0 0
    %6799 = vmatprep.subr.bf16.mxu0 0
    %6800 = vmatpush1.bf16.msra.mxu0 0
    %6801 = vmatprep.mubr.bf16.mxu0 0
    %6802 = vmatmul.mubr.bf16.gmra.mrb[0].mxu0 %v6727
    %v6803 = vpop.f32.mrb[0].mxu0
    %v6804 = vadd.f32 0.0, %v6803
    %v6805 = vpop.f32.mrb[0].mxu0
    %v6806 = vadd.f32 0.0, %v6805
    %v6807 = vpop.f32.mrb[0].mxu0
    %v6808 = vpop.f32.mrb[0].mxu0
    %6809 = vdwg.mxu0
    %v6810 = vadd.f32 %v6243, %v6763
    %v6811 = vadd.f32 %v6245, %v6765
    %v6812 = vadd.f32 %v6316, %v6804
    %v6813 = vadd.f32 %v6318, %v6806
    %v6814 = vxor.u32 %v6810, 2147483648
    %v6815 = vmul.f32 %v6814, 1.442695
    %v6816 = vpow.pop %v6815
    %v6817 = vadd.f32 %v6816, 1.0
    %v6818 = vrcp.pop %v6817
    %v6819 = vmul.f32 1.0, %v6818
    %v6820 = vxor.u32 %v6811, 2147483648
    %v6821 = vmul.f32 %v6820, 1.442695
    %v6822 = vpow.pop %v6821
    %v6823 = vadd.f32 %v6822, 1.0
    %v6824 = vrcp.pop %v6823
    %v6825 = vmul.f32 1.0, %v6824
    %v6826 = vtanh.pop %v6812
    %v6827 = vxor.u32 %v6813, 2147483648
    %v6828 = vmul.f32 %v6827, 1.442695
    %v6829 = vpow.pop %v6828
    %v6830 = vadd.f32 %v6829, 1.0
    %v6831 = vrcp.pop %v6830
    %v6832 = vmul.f32 1.0, %v6831
    %v6833 = vmul.f32 %v6825, %v6723
    %v6834 = vmul.f32 %v6819, %v6826
    %v6835 = vadd.f32 %v6833, %v6834
    %v6836 = vtanh.pop %v6835
    %v6837 = vmul.f32 %v6832, %v6836
    %6838 = vst [vmem:[#allocation11 + $0x10] sm:$0xff] %v6837
    %v6839 = vpack.c.bf16 %v6837, %v6837
    %6840 = vmatprep.subr.bf16.mxu0 %v6441
    %6841 = vmatpush1.bf16.msra.mxu0 %v6440
    %6842 = vmatprep.subr.bf16.mxu0 %v6445
    %6843 = vmatpush1.bf16.msra.mxu0 %v6444
    %6844 = vmatprep.subr.bf16.mxu0 %v6449
    %6845 = vmatpush1.bf16.msra.mxu0 %v6448
    %6846 = vmatprep.subr.bf16.mxu0 %v6453
    %6847 = vmatpush1.bf16.msra.mxu0 %v6452
    %6848 = vmatprep.subr.bf16.mxu0 %v6457
    %6849 = vmatpush1.bf16.msra.mxu0 %v6456
    %6850 = vmatprep.subr.bf16.mxu0 %v6461
    %6851 = vmatpush1.bf16.msra.mxu0 %v6460
    %6852 = vmatprep.subr.bf16.mxu0 %v6465
    %6853 = vmatpush1.bf16.msra.mxu0 %v6464
    %6854 = vmatprep.subr.bf16.mxu0 %v6469
    %6855 = vmatpush1.bf16.msra.mxu0 %v6468
    %6856 = vmatprep.subr.bf16.mxu0 0
    %6857 = vmatpush1.bf16.msra.mxu0 0
    %6858 = vmatprep.subr.bf16.mxu0 0
    %6859 = vmatpush1.bf16.msra.mxu0 0
    %6860 = vmatprep.subr.bf16.mxu0 0
    %6861 = vmatpush1.bf16.msra.mxu0 0
    %6862 = vmatprep.subr.bf16.mxu0 0
    %6863 = vmatpush1.bf16.msra.mxu0 0
    %6864 = vmatprep.subr.bf16.mxu0 0
    %6865 = vmatpush1.bf16.msra.mxu0 0
    %6866 = vmatprep.subr.bf16.mxu0 0
    %6867 = vmatpush1.bf16.msra.mxu0 0
    %6868 = vmatprep.subr.bf16.mxu0 0
    %6869 = vmatpush1.bf16.msra.mxu0 0
    %6870 = vmatprep.subr.bf16.mxu0 0
    %6871 = vmatpush1.bf16.msra.mxu0 0
    %6872 = vmatprep.mubr.bf16.mxu0 0
    %6873 = vmatmul.mubr.bf16.gmra.mrb[0].mxu0 %v6839
    %v6874 = vpop.f32.mrb[0].mxu0
    %v6875 = vadd.f32 0.0, %v6874
    %v6876 = vpop.f32.mrb[0].mxu0
    %v6877 = vadd.f32 0.0, %v6876
    %v6878 = vpop.f32.mrb[0].mxu0
    %v6879 = vpop.f32.mrb[0].mxu0
    %6880 = vdwg.mxu0
    %6881 = vmatprep.subr.bf16.mxu0 %v6443
    %6882 = vmatpush1.bf16.msra.mxu0 %v6442
    %6883 = vmatprep.subr.bf16.mxu0 %v6447
    %6884 = vmatpush1.bf16.msra.mxu0 %v6446
    %6885 = vmatprep.subr.bf16.mxu0 %v6451
    %6886 = vmatpush1.bf16.msra.mxu0 %v6450
    %6887 = vmatprep.subr.bf16.mxu0 %v6455
    %6888 = vmatpush1.bf16.msra.mxu0 %v6454
    %6889 = vmatprep.subr.bf16.mxu0 %v6459
    %6890 = vmatpush1.bf16.msra.mxu0 %v6458
    %6891 = vmatprep.subr.bf16.mxu0 %v6463
    %6892 = vmatpush1.bf16.msra.mxu0 %v6462
    %6893 = vmatprep.subr.bf16.mxu0 %v6467
    %6894 = vmatpush1.bf16.msra.mxu0 %v6466
    %6895 = vmatprep.subr.bf16.mxu0 %v6471
    %6896 = vmatpush1.bf16.msra.mxu0 %v6470
    %6897 = vmatprep.subr.bf16.mxu0 0
    %6898 = vmatpush1.bf16.msra.mxu0 0
    %6899 = vmatprep.subr.bf16.mxu0 0
    %6900 = vmatpush1.bf16.msra.mxu0 0
    %6901 = vmatprep.subr.bf16.mxu0 0
    %6902 = vmatpush1.bf16.msra.mxu0 0
    %6903 = vmatprep.subr.bf16.mxu0 0
    %6904 = vmatpush1.bf16.msra.mxu0 0
    %6905 = vmatprep.subr.bf16.mxu0 0
    %6906 = vmatpush1.bf16.msra.mxu0 0
    %6907 = vmatprep.subr.bf16.mxu0 0
    %6908 = vmatpush1.bf16.msra.mxu0 0
    %6909 = vmatprep.subr.bf16.mxu0 0
    %6910 = vmatpush1.bf16.msra.mxu0 0
    %6911 = vmatprep.subr.bf16.mxu0 0
    %6912 = vmatpush1.bf16.msra.mxu0 0
    %6913 = vmatprep.mubr.bf16.mxu0 0
    %6914 = vmatmul.mubr.bf16.gmra.mrb[0].mxu0 %v6839
    %v6915 = vpop.f32.mrb[0].mxu0
    %v6916 = vadd.f32 0.0, %v6915
    %v6917 = vpop.f32.mrb[0].mxu0
    %v6918 = vadd.f32 0.0, %v6917
    %v6919 = vpop.f32.mrb[0].mxu0
    %v6920 = vpop.f32.mrb[0].mxu0
    %6921 = vdwg.mxu0
    %v6922 = vadd.f32 %v6247, %v6875
    %v6923 = vadd.f32 %v6249, %v6877
    %v6924 = vadd.f32 %v6320, %v6916
    %v6925 = vadd.f32 %v6322, %v6918
    %v6926 = vxor.u32 %v6922, 2147483648
    %v6927 = vmul.f32 %v6926, 1.442695
    %v6928 = vpow.pop %v6927
    %v6929 = vadd.f32 %v6928, 1.0
    %v6930 = vrcp.pop %v6929
    %v6931 = vmul.f32 1.0, %v6930
    %v6932 = vxor.u32 %v6923, 2147483648
    %v6933 = vmul.f32 %v6932, 1.442695
    %v6934 = vpow.pop %v6933
    %v6935 = vadd.f32 %v6934, 1.0
    %v6936 = vrcp.pop %v6935
    %v6937 = vmul.f32 1.0, %v6936
    %v6938 = vtanh.pop %v6924
    %v6939 = vxor.u32 %v6925, 2147483648
    %v6940 = vmul.f32 %v6939, 1.442695
    %v6941 = vpow.pop %v6940
    %v6942 = vadd.f32 %v6941, 1.0
    %v6943 = vrcp.pop %v6942
    %v6944 = vmul.f32 1.0, %v6943
    %v6945 = vmul.f32 %v6937, %v6835
    %v6946 = vmul.f32 %v6931, %v6938
    %v6947 = vadd.f32 %v6945, %v6946
    %v6948 = vtanh.pop %v6947
    %v6949 = vmul.f32 %v6944, %v6948
    %6950 = vst [vmem:[#allocation11 + $0x18] sm:$0xff] %v6949
    %v6951 = vpack.c.bf16 %v6949, %v6949
    %6952 = vmatprep.subr.bf16.mxu0 %v6441
    %6953 = vmatpush1.bf16.msra.mxu0 %v6440
    %6954 = vmatprep.subr.bf16.mxu0 %v6445
    %6955 = vmatpush1.bf16.msra.mxu0 %v6444
    %6956 = vmatprep.subr.bf16.mxu0 %v6449
    %6957 = vmatpush1.bf16.msra.mxu0 %v6448
    %6958 = vmatprep.subr.bf16.mxu0 %v6453
    %6959 = vmatpush1.bf16.msra.mxu0 %v6452
    %6960 = vmatprep.subr.bf16.mxu0 %v6457
    %6961 = vmatpush1.bf16.msra.mxu0 %v6456
    %6962 = vmatprep.subr.bf16.mxu0 %v6461
    %6963 = vmatpush1.bf16.msra.mxu0 %v6460
    %6964 = vmatprep.subr.bf16.mxu0 %v6465
    %6965 = vmatpush1.bf16.msra.mxu0 %v6464
    %6966 = vmatprep.subr.bf16.mxu0 %v6469
    %6967 = vmatpush1.bf16.msra.mxu0 %v6468
    %6968 = vmatprep.subr.bf16.mxu0 0
    %6969 = vmatpush1.bf16.msra.mxu0 0
    %6970 = vmatprep.subr.bf16.mxu0 0
    %6971 = vmatpush1.bf16.msra.mxu0 0
    %6972 = vmatprep.subr.bf16.mxu0 0
    %6973 = vmatpush1.bf16.msra.mxu0 0
    %6974 = vmatprep.subr.bf16.mxu0 0
    %6975 = vmatpush1.bf16.msra.mxu0 0
    %6976 = vmatprep.subr.bf16.mxu0 0
    %6977 = vmatpush1.bf16.msra.mxu0 0
    %6978 = vmatprep.subr.bf16.mxu0 0
    %6979 = vmatpush1.bf16.msra.mxu0 0
    %6980 = vmatprep.subr.bf16.mxu0 0
    %6981 = vmatpush1.bf16.msra.mxu0 0
    %6982 = vmatprep.subr.bf16.mxu0 0
    %6983 = vmatpush1.bf16.msra.mxu0 0
    %6984 = vmatprep.mubr.bf16.mxu0 0
    %6985 = vmatmul.mubr.bf16.gmra.mrb[0].mxu0 %v6951
    %v6986 = vpop.f32.mrb[0].mxu0
    %v6987 = vadd.f32 0.0, %v6986
    %v6988 = vpop.f32.mrb[0].mxu0
    %v6989 = vadd.f32 0.0, %v6988
    %v6990 = vpop.f32.mrb[0].mxu0
    %v6991 = vpop.f32.mrb[0].mxu0
    %6992 = vdwg.mxu0
    %6993 = vmatprep.subr.bf16.mxu0 %v6443
    %6994 = vmatpush1.bf16.msra.mxu0 %v6442
    %6995 = vmatprep.subr.bf16.mxu0 %v6447
    %6996 = vmatpush1.bf16.msra.mxu0 %v6446
    %6997 = vmatprep.subr.bf16.mxu0 %v6451
    %6998 = vmatpush1.bf16.msra.mxu0 %v6450
    %6999 = vmatprep.subr.bf16.mxu0 %v6455
    %7000 = vmatpush1.bf16.msra.mxu0 %v6454
    %7001 = vmatprep.subr.bf16.mxu0 %v6459
    %7002 = vmatpush1.bf16.msra.mxu0 %v6458
    %7003 = vmatprep.subr.bf16.mxu0 %v6463
    %7004 = vmatpush1.bf16.msra.mxu0 %v6462
    %7005 = vmatprep.subr.bf16.mxu0 %v6467
    %7006 = vmatpush1.bf16.msra.mxu0 %v6466
    %7007 = vmatprep.subr.bf16.mxu0 %v6471
    %7008 = vmatpush1.bf16.msra.mxu0 %v6470
    %7009 = vmatprep.subr.bf16.mxu0 0
    %7010 = vmatpush1.bf16.msra.mxu0 0
    %7011 = vmatprep.subr.bf16.mxu0 0
    %7012 = vmatpush1.bf16.msra.mxu0 0
    %7013 = vmatprep.subr.bf16.mxu0 0
    %7014 = vmatpush1.bf16.msra.mxu0 0
    %7015 = vmatprep.subr.bf16.mxu0 0
    %7016 = vmatpush1.bf16.msra.mxu0 0
    %7017 = vmatprep.subr.bf16.mxu0 0
    %7018 = vmatpush1.bf16.msra.mxu0 0
    %7019 = vmatprep.subr.bf16.mxu0 0
    %7020 = vmatpush1.bf16.msra.mxu0 0
    %7021 = vmatprep.subr.bf16.mxu0 0
    %7022 = vmatpush1.bf16.msra.mxu0 0
    %7023 = vmatprep.subr.bf16.mxu0 0
    %7024 = vmatpush1.bf16.msra.mxu0 0
    %7025 = vmatprep.mubr.bf16.mxu0 0
    %7026 = vmatmul.mubr.bf16.gmra.mrb[0].mxu0 %v6951
    %v7027 = vpop.f32.mrb[0].mxu0
    %v7028 = vadd.f32 0.0, %v7027
    %v7029 = vpop.f32.mrb[0].mxu0
    %v7030 = vadd.f32 0.0, %v7029
    %v7031 = vpop.f32.mrb[0].mxu0
    %v7032 = vpop.f32.mrb[0].mxu0
    %7033 = vdwg.mxu0
    %v7034 = vadd.f32 %v6253, %v6987
    %v7035 = vadd.f32 %v6255, %v6989
    %v7036 = vadd.f32 %v6326, %v7028
    %v7037 = vadd.f32 %v6328, %v7030
    %v7038 = vxor.u32 %v7034, 2147483648
    %v7039 = vmul.f32 %v7038, 1.442695
    %v7040 = vpow.pop %v7039
    %v7041 = vadd.f32 %v7040, 1.0
    %v7042 = vrcp.pop %v7041
    %v7043 = vmul.f32 1.0, %v7042
    %v7044 = vxor.u32 %v7035, 2147483648
    %v7045 = vmul.f32 %v7044, 1.442695
    %v7046 = vpow.pop %v7045
    %v7047 = vadd.f32 %v7046, 1.0
    %v7048 = vrcp.pop %v7047
    %v7049 = vmul.f32 1.0, %v7048
    %v7050 = vtanh.pop %v7036
    %v7051 = vxor.u32 %v7037, 2147483648
    %v7052 = vmul.f32 %v7051, 1.442695
    %v7053 = vpow.pop %v7052
    %v7054 = vadd.f32 %v7053, 1.0
    %v7055 = vrcp.pop %v7054
    %v7056 = vmul.f32 1.0, %v7055
    %v7057 = vmul.f32 %v7049, %v6947
    %v7058 = vmul.f32 %v7043, %v7050
    %v7059 = vadd.f32 %v7057, %v7058
    %v7060 = vtanh.pop %v7059
    %v7061 = vmul.f32 %v7056, %v7060
    %7062 = vst [vmem:[#allocation11 + $0x20] sm:$0xff] %v7061
    %v7063 = vpack.c.bf16 %v7061, %v7061
    %7064 = vmatprep.subr.bf16.mxu0 %v6441
    %7065 = vmatpush1.bf16.msra.mxu0 %v6440
    %7066 = vmatprep.subr.bf16.mxu0 %v6445
    %7067 = vmatpush1.bf16.msra.mxu0 %v6444
    %7068 = vmatprep.subr.bf16.mxu0 %v6449
    %7069 = vmatpush1.bf16.msra.mxu0 %v6448
    %7070 = vmatprep.subr.bf16.mxu0 %v6453
    %7071 = vmatpush1.bf16.msra.mxu0 %v6452
    %7072 = vmatprep.subr.bf16.mxu0 %v6457
    %7073 = vmatpush1.bf16.msra.mxu0 %v6456
    %7074 = vmatprep.subr.bf16.mxu0 %v6461
    %7075 = vmatpush1.bf16.msra.mxu0 %v6460
    %7076 = vmatprep.subr.bf16.mxu0 %v6465
    %7077 = vmatpush1.bf16.msra.mxu0 %v6464
    %7078 = vmatprep.subr.bf16.mxu0 %v6469
    %7079 = vmatpush1.bf16.msra.mxu0 %v6468
    %7080 = vmatprep.subr.bf16.mxu0 0
    %7081 = vmatpush1.bf16.msra.mxu0 0
    %7082 = vmatprep.subr.bf16.mxu0 0
    %7083 = vmatpush1.bf16.msra.mxu0 0
    %7084 = vmatprep.subr.bf16.mxu0 0
    %7085 = vmatpush1.bf16.msra.mxu0 0
    %7086 = vmatprep.subr.bf16.mxu0 0
    %7087 = vmatpush1.bf16.msra.mxu0 0
    %7088 = vmatprep.subr.bf16.mxu0 0
    %7089 = vmatpush1.bf16.msra.mxu0 0
    %7090 = vmatprep.subr.bf16.mxu0 0
    %7091 = vmatpush1.bf16.msra.mxu0 0
    %7092 = vmatprep.subr.bf16.mxu0 0
    %7093 = vmatpush1.bf16.msra.mxu0 0
    %7094 = vmatprep.subr.bf16.mxu0 0
    %7095 = vmatpush1.bf16.msra.mxu0 0
    %7096 = vmatprep.mubr.bf16.mxu0 0
    %7097 = vmatmul.mubr.bf16.gmra.mrb[0].mxu0 %v7063
    %v7098 = vpop.f32.mrb[0].mxu0
    %v7099 = vadd.f32 0.0, %v7098
    %v7100 = vpop.f32.mrb[0].mxu0
    %v7101 = vadd.f32 0.0, %v7100
    %v7102 = vpop.f32.mrb[0].mxu0
    %v7103 = vpop.f32.mrb[0].mxu0
    %7104 = vdwg.mxu0
    %7105 = vmatprep.subr.bf16.mxu0 %v6443
    %7106 = vmatpush1.bf16.msra.mxu0 %v6442
    %7107 = vmatprep.subr.bf16.mxu0 %v6447
    %7108 = vmatpush1.bf16.msra.mxu0 %v6446
    %7109 = vmatprep.subr.bf16.mxu0 %v6451
    %7110 = vmatpush1.bf16.msra.mxu0 %v6450
    %7111 = vmatprep.subr.bf16.mxu0 %v6455
    %7112 = vmatpush1.bf16.msra.mxu0 %v6454
    %7113 = vmatprep.subr.bf16.mxu0 %v6459
    %7114 = vmatpush1.bf16.msra.mxu0 %v6458
    %7115 = vmatprep.subr.bf16.mxu0 %v6463
    %7116 = vmatpush1.bf16.msra.mxu0 %v6462
    %7117 = vmatprep.subr.bf16.mxu0 %v6467
    %7118 = vmatpush1.bf16.msra.mxu0 %v6466
    %7119 = vmatprep.subr.bf16.mxu0 %v6471
    %7120 = vmatpush1.bf16.msra.mxu0 %v6470
    %7121 = vmatprep.subr.bf16.mxu0 0
    %7122 = vmatpush1.bf16.msra.mxu0 0
    %7123 = vmatprep.subr.bf16.mxu0 0
    %7124 = vmatpush1.bf16.msra.mxu0 0
    %7125 = vmatprep.subr.bf16.mxu0 0
    %7126 = vmatpush1.bf16.msra.mxu0 0
    %7127 = vmatprep.subr.bf16.mxu0 0
    %7128 = vmatpush1.bf16.msra.mxu0 0
    %7129 = vmatprep.subr.bf16.mxu0 0
    %7130 = vmatpush1.bf16.msra.mxu0 0
    %7131 = vmatprep.subr.bf16.mxu0 0
    %7132 = vmatpush1.bf16.msra.mxu0 0
    %7133 = vmatprep.subr.bf16.mxu0 0
    %7134 = vmatpush1.bf16.msra.mxu0 0
    %7135 = vmatprep.subr.bf16.mxu0 0
    %7136 = vmatpush1.bf16.msra.mxu0 0
    %7137 = vmatprep.mubr.bf16.mxu0 0
    %7138 = vmatmul.mubr.bf16.gmra.mrb[0].mxu0 %v7063
    %v7139 = vpop.f32.mrb[0].mxu0
    %v7140 = vadd.f32 0.0, %v7139
    %v7141 = vpop.f32.mrb[0].mxu0
    %v7142 = vadd.f32 0.0, %v7141
    %v7143 = vpop.f32.mrb[0].mxu0
    %v7144 = vpop.f32.mrb[0].mxu0
    %7145 = vdwg.mxu0
    %v7146 = vadd.f32 %v6257, %v7099
    %v7147 = vadd.f32 %v6259, %v7101
    %v7148 = vadd.f32 %v6330, %v7140
    %v7149 = vadd.f32 %v6332, %v7142
    %v7150 = vxor.u32 %v7146, 2147483648
    %v7151 = vmul.f32 %v7150, 1.442695
    %v7152 = vpow.pop %v7151
    %v7153 = vadd.f32 %v7152, 1.0
    %v7154 = vrcp.pop %v7153
    %v7155 = vmul.f32 1.0, %v7154
    %v7156 = vxor.u32 %v7147, 2147483648
    %v7157 = vmul.f32 %v7156, 1.442695
    %v7158 = vpow.pop %v7157
    %v7159 = vadd.f32 %v7158, 1.0
    %v7160 = vrcp.pop %v7159
    %v7161 = vmul.f32 1.0, %v7160
    %v7162 = vtanh.pop %v7148
    %v7163 = vxor.u32 %v7149, 2147483648
    %v7164 = vmul.f32 %v7163, 1.442695
    %v7165 = vpow.pop %v7164
    %v7166 = vadd.f32 %v7165, 1.0
    %v7167 = vrcp.pop %v7166
    %v7168 = vmul.f32 1.0, %v7167
    %v7169 = vmul.f32 %v7161, %v7059
    %v7170 = vmul.f32 %v7155, %v7162
    %v7171 = vadd.f32 %v7169, %v7170
    %v7172 = vtanh.pop %v7171
    %v7173 = vmul.f32 %v7168, %v7172
    %7174 = vst [vmem:[#allocation11 + $0x28] sm:$0xff] %v7173
    %v7175 = vpack.c.bf16 %v7173, %v7173
    %7176 = vmatprep.subr.bf16.mxu0 %v6441
    %7177 = vmatpush1.bf16.msra.mxu0 %v6440
    %7178 = vmatprep.subr.bf16.mxu0 %v6445
    %7179 = vmatpush1.bf16.msra.mxu0 %v6444
    %7180 = vmatprep.subr.bf16.mxu0 %v6449
    %7181 = vmatpush1.bf16.msra.mxu0 %v6448
    %7182 = vmatprep.subr.bf16.mxu0 %v6453
    %7183 = vmatpush1.bf16.msra.mxu0 %v6452
    %7184 = vmatprep.subr.bf16.mxu0 %v6457
    %7185 = vmatpush1.bf16.msra.mxu0 %v6456
    %7186 = vmatprep.subr.bf16.mxu0 %v6461
    %7187 = vmatpush1.bf16.msra.mxu0 %v6460
    %7188 = vmatprep.subr.bf16.mxu0 %v6465
    %7189 = vmatpush1.bf16.msra.mxu0 %v6464
    %7190 = vmatprep.subr.bf16.mxu0 %v6469
    %7191 = vmatpush1.bf16.msra.mxu0 %v6468
    %7192 = vmatprep.subr.bf16.mxu0 0
    %7193 = vmatpush1.bf16.msra.mxu0 0
    %7194 = vmatprep.subr.bf16.mxu0 0
    %7195 = vmatpush1.bf16.msra.mxu0 0
    %7196 = vmatprep.subr.bf16.mxu0 0
    %7197 = vmatpush1.bf16.msra.mxu0 0
    %7198 = vmatprep.subr.bf16.mxu0 0
    %7199 = vmatpush1.bf16.msra.mxu0 0
    %7200 = vmatprep.subr.bf16.mxu0 0
    %7201 = vmatpush1.bf16.msra.mxu0 0
    %7202 = vmatprep.subr.bf16.mxu0 0
    %7203 = vmatpush1.bf16.msra.mxu0 0
    %7204 = vmatprep.subr.bf16.mxu0 0
    %7205 = vmatpush1.bf16.msra.mxu0 0
    %7206 = vmatprep.subr.bf16.mxu0 0
    %7207 = vmatpush1.bf16.msra.mxu0 0
    %7208 = vmatprep.mubr.bf16.mxu0 0
    %7209 = vmatmul.mubr.bf16.gmra.mrb[0].mxu0 %v7175
    %v7210 = vpop.f32.mrb[0].mxu0
    %v7211 = vadd.f32 0.0, %v7210
    %v7212 = vpop.f32.mrb[0].mxu0
    %v7213 = vadd.f32 0.0, %v7212
    %v7214 = vpop.f32.mrb[0].mxu0
    %v7215 = vpop.f32.mrb[0].mxu0
    %7216 = vdwg.mxu0
    %7217 = vmatprep.subr.bf16.mxu0 %v6443
    %7218 = vmatpush1.bf16.msra.mxu0 %v6442
    %7219 = vmatprep.subr.bf16.mxu0 %v6447
    %7220 = vmatpush1.bf16.msra.mxu0 %v6446
    %7221 = vmatprep.subr.bf16.mxu0 %v6451
    %7222 = vmatpush1.bf16.msra.mxu0 %v6450
    %7223 = vmatprep.subr.bf16.mxu0 %v6455
    %7224 = vmatpush1.bf16.msra.mxu0 %v6454
    %7225 = vmatprep.subr.bf16.mxu0 %v6459
    %7226 = vmatpush1.bf16.msra.mxu0 %v6458
    %7227 = vmatprep.subr.bf16.mxu0 %v6463
    %7228 = vmatpush1.bf16.msra.mxu0 %v6462
    %7229 = vmatprep.subr.bf16.mxu0 %v6467
    %7230 = vmatpush1.bf16.msra.mxu0 %v6466
    %7231 = vmatprep.subr.bf16.mxu0 %v6471
    %7232 = vmatpush1.bf16.msra.mxu0 %v6470
    %7233 = vmatprep.subr.bf16.mxu0 0
    %7234 = vmatpush1.bf16.msra.mxu0 0
    %7235 = vmatprep.subr.bf16.mxu0 0
    %7236 = vmatpush1.bf16.msra.mxu0 0
    %7237 = vmatprep.subr.bf16.mxu0 0
    %7238 = vmatpush1.bf16.msra.mxu0 0
    %7239 = vmatprep.subr.bf16.mxu0 0
    %7240 = vmatpush1.bf16.msra.mxu0 0
    %7241 = vmatprep.subr.bf16.mxu0 0
    %7242 = vmatpush1.bf16.msra.mxu0 0
    %7243 = vmatprep.subr.bf16.mxu0 0
    %7244 = vmatpush1.bf16.msra.mxu0 0
    %7245 = vmatprep.subr.bf16.mxu0 0
    %7246 = vmatpush1.bf16.msra.mxu0 0
    %7247 = vmatprep.subr.bf16.mxu0 0
    %7248 = vmatpush1.bf16.msra.mxu0 0
    %7249 = vmatprep.mubr.bf16.mxu0 0
    %7250 = vmatmul.mubr.bf16.gmra.mrb[0].mxu0 %v7175
    %v7251 = vpop.f32.mrb[0].mxu0
    %v7252 = vadd.f32 0.0, %v7251
    %v7253 = vpop.f32.mrb[0].mxu0
    %v7254 = vadd.f32 0.0, %v7253
    %v7255 = vpop.f32.mrb[0].mxu0
    %v7256 = vpop.f32.mrb[0].mxu0
    %7257 = vdwg.mxu0
    %v7258 = vadd.f32 %v6263, %v7211
    %v7259 = vadd.f32 %v6265, %v7213
    %v7260 = vadd.f32 %v6336, %v7252
    %v7261 = vadd.f32 %v6338, %v7254
    %v7262 = vxor.u32 %v7258, 2147483648
    %v7263 = vmul.f32 %v7262, 1.442695
    %v7264 = vpow.pop %v7263
    %v7265 = vadd.f32 %v7264, 1.0
    %v7266 = vrcp.pop %v7265
    %v7267 = vmul.f32 1.0, %v7266
    %v7268 = vxor.u32 %v7259, 2147483648
    %v7269 = vmul.f32 %v7268, 1.442695
    %v7270 = vpow.pop %v7269
    %v7271 = vadd.f32 %v7270, 1.0
    %v7272 = vrcp.pop %v7271
    %v7273 = vmul.f32 1.0, %v7272
    %v7274 = vtanh.pop %v7260
    %v7275 = vxor.u32 %v7261, 2147483648
    %v7276 = vmul.f32 %v7275, 1.442695
    %v7277 = vpow.pop %v7276
    %v7278 = vadd.f32 %v7277, 1.0
    %v7279 = vrcp.pop %v7278
    %v7280 = vmul.f32 1.0, %v7279
    %v7281 = vmul.f32 %v7273, %v7171
    %v7282 = vmul.f32 %v7267, %v7274
    %v7283 = vadd.f32 %v7281, %v7282
    %v7284 = vtanh.pop %v7283
    %v7285 = vmul.f32 %v7280, %v7284
    %7286 = vst [vmem:[#allocation11 + $0x30] sm:$0xff] %v7285
    %v7287 = vpack.c.bf16 %v7285, %v7285
    %7288 = vmatprep.subr.bf16.mxu0 %v6441
    %7289 = vmatpush1.bf16.msra.mxu0 %v6440
    %7290 = vmatprep.subr.bf16.mxu0 %v6445
    %7291 = vmatpush1.bf16.msra.mxu0 %v6444
    %7292 = vmatprep.subr.bf16.mxu0 %v6449
    %7293 = vmatpush1.bf16.msra.mxu0 %v6448
    %7294 = vmatprep.subr.bf16.mxu0 %v6453
    %7295 = vmatpush1.bf16.msra.mxu0 %v6452
    %7296 = vmatprep.subr.bf16.mxu0 %v6457
    %7297 = vmatpush1.bf16.msra.mxu0 %v6456
    %7298 = vmatprep.subr.bf16.mxu0 %v6461
    %7299 = vmatpush1.bf16.msra.mxu0 %v6460
    %7300 = vmatprep.subr.bf16.mxu0 %v6465
    %7301 = vmatpush1.bf16.msra.mxu0 %v6464
    %7302 = vmatprep.subr.bf16.mxu0 %v6469
    %7303 = vmatpush1.bf16.msra.mxu0 %v6468
    %7304 = vmatprep.subr.bf16.mxu0 0
    %7305 = vmatpush1.bf16.msra.mxu0 0
    %7306 = vmatprep.subr.bf16.mxu0 0
    %7307 = vmatpush1.bf16.msra.mxu0 0
    %7308 = vmatprep.subr.bf16.mxu0 0
    %7309 = vmatpush1.bf16.msra.mxu0 0
    %7310 = vmatprep.subr.bf16.mxu0 0
    %7311 = vmatpush1.bf16.msra.mxu0 0
    %7312 = vmatprep.subr.bf16.mxu0 0
    %7313 = vmatpush1.bf16.msra.mxu0 0
    %7314 = vmatprep.subr.bf16.mxu0 0
    %7315 = vmatpush1.bf16.msra.mxu0 0
    %7316 = vmatprep.subr.bf16.mxu0 0
    %7317 = vmatpush1.bf16.msra.mxu0 0
    %7318 = vmatprep.subr.bf16.mxu0 0
    %7319 = vmatpush1.bf16.msra.mxu0 0
    %7320 = vmatprep.mubr.bf16.mxu0 0
    %7321 = vmatmul.mubr.bf16.gmra.mrb[0].mxu0 %v7287
    %v7322 = vpop.f32.mrb[0].mxu0
    %v7323 = vadd.f32 0.0, %v7322
    %v7324 = vpop.f32.mrb[0].mxu0
    %v7325 = vadd.f32 0.0, %v7324
    %v7326 = vpop.f32.mrb[0].mxu0
    %v7327 = vpop.f32.mrb[0].mxu0
    %7328 = vdwg.mxu0
    %7329 = vmatprep.subr.bf16.mxu0 %v6443
    %7330 = vmatpush1.bf16.msra.mxu0 %v6442
    %7331 = vmatprep.subr.bf16.mxu0 %v6447
    %7332 = vmatpush1.bf16.msra.mxu0 %v6446
    %7333 = vmatprep.subr.bf16.mxu0 %v6451
    %7334 = vmatpush1.bf16.msra.mxu0 %v6450
    %7335 = vmatprep.subr.bf16.mxu0 %v6455
    %7336 = vmatpush1.bf16.msra.mxu0 %v6454
    %7337 = vmatprep.subr.bf16.mxu0 %v6459
    %7338 = vmatpush1.bf16.msra.mxu0 %v6458
    %7339 = vmatprep.subr.bf16.mxu0 %v6463
    %7340 = vmatpush1.bf16.msra.mxu0 %v6462
    %7341 = vmatprep.subr.bf16.mxu0 %v6467
    %7342 = vmatpush1.bf16.msra.mxu0 %v6466
    %7343 = vmatprep.subr.bf16.mxu0 %v6471
    %7344 = vmatpush1.bf16.msra.mxu0 %v6470
    %7345 = vmatprep.subr.bf16.mxu0 0
    %7346 = vmatpush1.bf16.msra.mxu0 0
    %7347 = vmatprep.subr.bf16.mxu0 0
    %7348 = vmatpush1.bf16.msra.mxu0 0
    %7349 = vmatprep.subr.bf16.mxu0 0
    %7350 = vmatpush1.bf16.msra.mxu0 0
    %7351 = vmatprep.subr.bf16.mxu0 0
    %7352 = vmatpush1.bf16.msra.mxu0 0
    %7353 = vmatprep.subr.bf16.mxu0 0
    %7354 = vmatpush1.bf16.msra.mxu0 0
    %7355 = vmatprep.subr.bf16.mxu0 0
    %7356 = vmatpush1.bf16.msra.mxu0 0
    %7357 = vmatprep.subr.bf16.mxu0 0
    %7358 = vmatpush1.bf16.msra.mxu0 0
    %7359 = vmatprep.subr.bf16.mxu0 0
    %7360 = vmatpush1.bf16.msra.mxu0 0
    %7361 = vmatprep.mubr.bf16.mxu0 0
    %7362 = vmatmul.mubr.bf16.gmra.mrb[0].mxu0 %v7287
    %v7363 = vpop.f32.mrb[0].mxu0
    %v7364 = vadd.f32 0.0, %v7363
    %v7365 = vpop.f32.mrb[0].mxu0
    %v7366 = vadd.f32 0.0, %v7365
    %v7367 = vpop.f32.mrb[0].mxu0
    %v7368 = vpop.f32.mrb[0].mxu0
    %7369 = vdwg.mxu0
    %v7370 = vadd.f32 %v6267, %v7323
    %v7371 = vadd.f32 %v6269, %v7325
    %v7372 = vadd.f32 %v6340, %v7364
    %v7373 = vadd.f32 %v6342, %v7366
    %v7374 = vxor.u32 %v7370, 2147483648
    %v7375 = vmul.f32 %v7374, 1.442695
    %v7376 = vpow.pop %v7375
    %v7377 = vadd.f32 %v7376, 1.0
    %v7378 = vrcp.pop %v7377
    %v7379 = vmul.f32 1.0, %v7378
    %v7380 = vxor.u32 %v7371, 2147483648
    %v7381 = vmul.f32 %v7380, 1.442695
    %v7382 = vpow.pop %v7381
    %v7383 = vadd.f32 %v7382, 1.0
    %v7384 = vrcp.pop %v7383
    %v7385 = vmul.f32 1.0, %v7384
    %v7386 = vtanh.pop %v7372
    %v7387 = vxor.u32 %v7373, 2147483648
    %v7388 = vmul.f32 %v7387, 1.442695
    %v7389 = vpow.pop %v7388
    %v7390 = vadd.f32 %v7389, 1.0
    %v7391 = vrcp.pop %v7390
    %v7392 = vmul.f32 1.0, %v7391
    %v7393 = vmul.f32 %v7385, %v7283
    %v7394 = vmul.f32 %v7379, %v7386
    %v7395 = vadd.f32 %v7393, %v7394
    %v7396 = vtanh.pop %v7395
    %v7397 = vmul.f32 %v7392, %v7396
    %7398 = vst [vmem:[#allocation11 + $0x38] sm:$0xff] %v7397
    %s7399 = scalar_lea.vmem [#allocation12], 32
    %7400 = vst [vmem:[%s7399] sm:$0xff] %v7397
    %s7401 = scalar_lea.vmem [#allocation14], 32
    %7402 = vst [vmem:[%s7401] sm:$0xff] %v7395
    // Predicated region
    $region34: #{tpu_custom_call.1} parent=1 // pred_check
      _
    $region35: #{tpu_custom_call.1} parent=1 // pred_check_branch
      %7404 = sbr.rel (0) target = $region37
    $region36: #{tpu_custom_call.1} parent=1 // pred_region
      %s7406 = ssub.s32 1024, 1024
      %7407 = vsyncadd [#allocation5], %s7406
      %s7408 = sshll.u32 [#allocation11], 4
      %s7409 = int_to_ptr.vmem [resolvable:$true] %s7408
      %7414 = dma.vmem_to_hbm [thread:$0]  %s7409, 1024, %s4, [#allocation5], 128, 128, 8
    $region37: #{tpu_custom_call.1} parent=1 // pred_fallthru
      _
    // Predicated region
    $region38: #{tpu_custom_call.1} parent=1 // pred_check
      _
    $region39: #{tpu_custom_call.1} parent=1 // pred_check_branch
      %7416 = sbr.rel (0) target = $region41
    $region40: #{tpu_custom_call.1} parent=1 // pred_region
      %s7418 = ssub.s32 640, 640
      %7419 = vsyncadd [#allocation13], %s7418
      %s7420 = sshll.u32 [#allocation12], 4
      %s7421 = int_to_ptr.vmem [resolvable:$true] %s7420
      %7426 = dma.vmem_to_hbm [thread:$0]  %s7421, 640, %s5, [#allocation13], 128, 128, 8
    $region41: #{tpu_custom_call.1} parent=1 // pred_fallthru
      _
    // Predicated region
    $region42: #{tpu_custom_call.1} parent=1 // pred_check
      _
    $region43: #{tpu_custom_call.1} parent=1 // pred_check_branch
      %7428 = sbr.rel (0) target = $region45
    $region44: #{tpu_custom_call.1} parent=1 // pred_region
      %s7430 = ssub.s32 640, 640
      %7431 = vsyncadd [#allocation13], %s7430
      %s7432 = sshll.u32 [#allocation14], 4
      %s7433 = int_to_ptr.vmem [resolvable:$true] %s7432
      %7438 = dma.vmem_to_hbm [thread:$0]  %s7433, 640, %s6, [#allocation13], 128, 128, 8
    $region45: #{tpu_custom_call.1} parent=1 // pred_fallthru
      _
    // Predicated region
    $region46: #{tpu_custom_call.1} parent=1 // pred_check
      _
    $region47: #{tpu_custom_call.1} parent=1 // pred_check_branch
      %7440 = sbr.rel (0) target = $region49
    $region48: #{tpu_custom_call.1} parent=1 // pred_region
      %7441 = dma.done [#allocation5], 1024
    $region49: #{tpu_custom_call.1} parent=1 // pred_fallthru
      _
    // Predicated region
    $region50: #{tpu_custom_call.1} parent=1 // pred_check
      _
    $region51: #{tpu_custom_call.1} parent=1 // pred_check_branch
      %7443 = sbr.rel (0) target = $region53
    $region52: #{tpu_custom_call.1} parent=1 // pred_region
      %7444 = dma.done [#allocation13], 640
    $region53: #{tpu_custom_call.1} parent=1 // pred_fallthru
      _
    // Predicated region
    $region54: #{tpu_custom_call.1} parent=1 // pred_check
      _
    $region55: #{tpu_custom_call.1} parent=1 // pred_check_branch
      %7446 = sbr.rel (0) target = $region57
    $region56: #{tpu_custom_call.1} parent=1 // pred_region
      %7447 = dma.done [#allocation13], 640
    $region57: #{tpu_custom_call.1} parent=1 // pred_fallthru
      _
    %7448 = vsyncpa [#allocation4], 1
    %7449 = vsyncpa [#allocation7], 1
    %7450 = vsyncpa [#allocation10], 1
    %7451 = vsyncpa [#allocation5], 1
    %7452 = vsyncpa [#allocation13], 1

</llo_original>
